<compile_context>
chip_gen: v7x
topology: tpu7x:2x2x1
jax: 0.10.0
libtpu: 0.0.40
codegen_flags: <defaults>
</compile_context>

<pallas_src>
import functools

import jax
import jax.numpy as jnp
from jax.experimental import pallas as pl
from jax.experimental.pallas import tpu as pltpu


# ---------------------------------------------------------------------------
# XLA-side im2col for the 1-channel stage-1 input only (tiny: (N, H*W, 9) bf16).
# ---------------------------------------------------------------------------
def im2col_3x3_c1(x):
    """'same'-padded 3x3 im2col of a single-channel image: (N,H,W) -> (N, H*W, 9)."""
    N, H, W = x.shape
    xp = jnp.pad(x, ((0, 0), (1, 1), (1, 1)))
    cols = [xp[:, dh:dh + H, dw:dw + W] for dh in range(3) for dw in range(3)]
    return jnp.stack(cols, axis=-1).reshape(N, H * W, 9).astype(jnp.bfloat16)


# ---------------------------------------------------------------------------
# Fully fused CNN: conv1+BN+ReLU+pool -> conv2 -> conv3 -> Linear(512,64)+ReLU.
# One grid step per batch element ("parallel" -> megacore shards on v7x).
# ---------------------------------------------------------------------------
def cnn_kernel(x_ref, w1_ref, s1_ref, t1_ref, w2_ref, s2_ref, t2_ref,
               w3_ref, s3_ref, t3_ref, fcw_ref, fcb_ref, o_ref,
               p2_ref, p3_ref, wp1_ref, wp2_ref, wp3_ref, *, H, W, rc1):
    C1 = w1_ref.shape[1]
    C2 = w2_ref.shape[2]
    C3 = w3_ref.shape[2]
    FD = fcw_ref.shape[2]
    H2, W2 = H // 2, W // 2
    H4, W4 = H // 4, W // 4
    H8, W8 = H // 8, W // 8

    # Zero the padded inter-stage buffers so the one-pixel halo of the 'same'
    # convs reads as zero padding (the interior is overwritten below).
    p2_ref[...] = jnp.zeros(p2_ref.shape, p2_ref.dtype)
    p3_ref[...] = jnp.zeros(p3_ref.shape, p3_ref.dtype)

    def pool2x2(y, rows, cols, ch, wp_ref):
        """2x2 max-pool of y: (rows*cols, ch) row-major -> (rows//2, cols//2, ch)."""
        y = y.reshape(rows // 2, 2, cols, ch)
        y = jnp.maximum(y[:, 0], y[:, 1])                 # pool row pairs (outer-dim split)
        wp_ref[...] = y.reshape((rows // 2) * cols, ch)   # flat; even/odd cols interleaved
        half = (rows // 2) * (cols // 2)
        y = jnp.maximum(wp_ref[pl.ds(0, half, 2), :],     # pool column pairs (strided read)
                        wp_ref[pl.ds(1, half, 2), :])
        return y.reshape(rows // 2, cols // 2, ch)

    # ---- stage 1: conv1 (im2col matmul) + BN + ReLU + pool, row-chunked -------------
    w1 = w1_ref[...]
    s1, b1 = s1_ref[...], t1_ref[...]                     # hoisted (no per-chunk reload)
    for c in range(H // rc1):
        lhs = x_ref[0, c * rc1 * W:(c + 1) * rc1 * W, :]              # (rc1*W, 9) bf16
        y = jnp.dot(lhs, w1, preferred_element_type=jnp.float32)      # (rc1*W, C1)
        y = jnp.maximum(y * s1 + b1, 0.0)                             # folded BN + ReLU
        y = pool2x2(y, rc1, W, C1, wp1_ref)                           # (rc1//2, W2, C1)
        r0 = 1 + c * (rc1 // 2)
        p2_ref[r0:r0 + rc1 // 2, 1:1 + W2, :] = y

    # ---- stage 2: conv2 as 9 shifted-tap matmuls + BN + ReLU + pool ------------------
    s2, b2 = s2_ref[...], t2_ref[...]
    acc = jnp.zeros((H2 * W2, C2), jnp.float32)
    for dh in range(3):
        for dw in range(3):
            tap = p2_ref[dh:dh + H2, dw:dw + W2, :].astype(jnp.bfloat16)
            acc = acc + jnp.dot(tap.reshape(H2 * W2, C1), w2_ref[dh * 3 + dw],
                                preferred_element_type=jnp.float32)
    y = jnp.maximum(acc * s2 + b2, 0.0)
    y = pool2x2(y, H2, W2, C2, wp2_ref)                               # (H4, W4, C2)
    p3_ref[1:1 + H4, 1:1 + W4, :] = y

    # ---- stage 3: conv3 + BN + ReLU + pool --------------------------------------------
    s3, b3 = s3_ref[...], t3_ref[...]
    acc = jnp.zeros((H4 * W4, C3), jnp.float32)
    for dh in range(3):
        for dw in range(3):
            tap = p3_ref[dh:dh + H4, dw:dw + W4, :].astype(jnp.bfloat16)
            acc = acc + jnp.dot(tap.reshape(H4 * W4, C2), w3_ref[dh * 3 + dw],
                                preferred_element_type=jnp.float32)
    y = jnp.maximum(acc * s3 + b3, 0.0)
    y = pool2x2(y, H4, W4, C3, wp3_ref)                               # (H8, W8, C3)

    # ---- CNN head: seq[w] = relu( sum_h pooled[h, w, :] @ fc_w[h] + fc_b ) -----------
    # Equivalent to torch's permute(0,3,2,1)+reshape+Linear(512,64); no transpose needed.
    acc = jnp.zeros((W8, FD), jnp.float32)
    for hh in range(H8):
        acc = acc + jnp.dot(y[hh].astype(jnp.bfloat16), fcw_ref[hh],
                            preferred_element_type=jnp.float32)
    o_ref[0] = jnp.maximum(acc + fcb_ref[...], 0.0)


def cnn_forward(x_nchw, params, *, rc1=8):
    N, Cin, H, W = x_nchw.shape
    assert Cin == 1 and H % 8 == 0 and W % 8 == 0 and H % rc1 == 0 and rc1 % 2 == 0
    C1, C2, C3 = 32, 64, 128
    H2, W2, H4, W4, H8, W8 = H // 2, W // 2, H // 4, W // 4, H // 8, W // 8
    fdim = params["cnn_fc_b"].shape[-1]
    assert params["cnn_fc_w"].shape == (H8, C3, fdim)     # torch fc(512, 64) => H == 32
    cols1 = im2col_3x3_c1(x_nchw.reshape(N, H, W))        # (N, H*W, 9) bf16

    kernel = functools.partial(cnn_kernel, H=H, W=W, rc1=rc1)
    return pl.pallas_call(
        kernel,
        out_shape=jax.ShapeDtypeStruct((N, W8, fdim), jnp.float32),
        grid=(N,),
        in_specs=[
            pl.BlockSpec((1, H * W, 9), lambda n: (n, 0, 0)),
            pl.BlockSpec((9, C1), lambda n: (0, 0)),
            pl.BlockSpec((1, C1), lambda n: (0, 0)),
            pl.BlockSpec((1, C1), lambda n: (0, 0)),
            pl.BlockSpec((9, C1, C2), lambda n: (0, 0, 0)),
            pl.BlockSpec((1, C2), lambda n: (0, 0)),
            pl.BlockSpec((1, C2), lambda n: (0, 0)),
            pl.BlockSpec((9, C2, C3), lambda n: (0, 0, 0)),
            pl.BlockSpec((1, C3), lambda n: (0, 0)),
            pl.BlockSpec((1, C3), lambda n: (0, 0)),
            pl.BlockSpec((H8, C3, fdim), lambda n: (0, 0, 0)),
            pl.BlockSpec((1, fdim), lambda n: (0, 0)),
        ],
        out_specs=pl.BlockSpec((1, W8, fdim), lambda n: (n, 0, 0)),
        scratch_shapes=[
            pltpu.VMEM((H2 + 2, W2 + 2, C1), jnp.float32),   # zero-padded conv2 input
            pltpu.VMEM((H4 + 2, W4 + 2, C2), jnp.float32),   # zero-padded conv3 input
            pltpu.VMEM(((rc1 // 2) * W, C1), jnp.float32),   # col-pool staging, stage 1
            pltpu.VMEM((H4 * W2, C2), jnp.float32),          # col-pool staging, stage 2
            pltpu.VMEM((H8 * W4, C3), jnp.float32),          # col-pool staging, stage 3
        ],
        compiler_params=pltpu.CompilerParams(dimension_semantics=("parallel",)),
        # TODO(synk): if production batch is N=1 on v7x, re-grid over row chunks so
        # both TensorCores stay busy (the "parallel" batch axis only covers N>=2).
    )(cols1,
      params["conv1_w"], params["conv1_scale"], params["conv1_shift"],
      params["conv2_w"], params["conv2_scale"], params["conv2_shift"],
      params["conv3_w"], params["conv3_scale"], params["conv3_shift"],
      params["cnn_fc_w"], params["cnn_fc_b"])


# ---------------------------------------------------------------------------
# One kernel for the whole bidirectional multi-layer LSTM + Linear + LogSoftmax.
# Input projections and the head are batched over all T timesteps; only h@W_hh
# stays on the (fully unrolled) serial recurrence chain.
# ---------------------------------------------------------------------------
def blstm_kernel(x_ref, *refs, num_layers, hid, T, N):
    w_refs = refs[:6 * num_layers]
    fw_ref = refs[6 * num_layers]
    fb_ref = refs[6 * num_layers + 1]
    o_ref = refs[6 * num_layers + 2]

    def cell(g, c_prev):                        # PyTorch gate order: i, f, g, o
        i = jax.nn.sigmoid(g[:, 0 * hid:1 * hid])
        f = jax.nn.sigmoid(g[:, 1 * hid:2 * hid])
        gg = jnp.tanh(g[:, 2 * hid:3 * hid])
        o = jax.nn.sigmoid(g[:, 3 * hid:4 * hid])
        c = f * c_prev + i * gg
        return o * jnp.tanh(c), c

    # Time-major stacked layer input: rows = t*N + n.
    xs = jnp.concatenate([x_ref[:, t, :] for t in range(T)], axis=0).astype(jnp.bfloat16)
    hf_all = hb_all = None
    for l in range(num_layers):
        wih_f, whh_f, b_f, wih_b, whh_b, b_b = w_refs[6 * l:6 * l + 6]
        # Batched input projections for ALL timesteps (off the recurrence chain).
        if l == 0:
            gin_f = jnp.dot(xs, wih_f[...], preferred_element_type=jnp.float32)
            gin_b = jnp.dot(xs, wih_b[...], preferred_element_type=jnp.float32)
        else:
            gin_f = (jnp.dot(hf_all, wih_f[0:hid, :], preferred_element_type=jnp.float32) +
                     jnp.dot(hb_all, wih_f[hid:2 * hid, :], preferred_element_type=jnp.float32))
            gin_b = (jnp.dot(hf_all, wih_b[0:hid, :], preferred_element_type=jnp.float32) +
                     jnp.dot(hb_all, wih_b[hid:2 * hid, :], preferred_element_type=jnp.float32))
        gin_f = gin_f + b_f[...]
        gin_b = gin_b + b_b[...]
        whhf, whhb = whh_f[...], whh_b[...]
        zero = jnp.zeros((N, hid), jnp.float32)
        h_f, c_f, h_b, c_b = zero, zero, zero, zero
        outs_f = [None] * T
        outs_b = [None] * T
        for t in range(T):                      # unrolled recurrence, fwd & bwd interleaved
            gf = gin_f[t * N:(t + 1) * N, :] + jnp.dot(
                h_f.astype(jnp.bfloat16), whhf, preferred_element_type=jnp.float32)
            gb = gin_b[(T - 1 - t) * N:(T - t) * N, :] + jnp.dot(
                h_b.astype(jnp.bfloat16), whhb, preferred_element_type=jnp.float32)
            h_f, c_f = cell(gf, c_f)
            h_b, c_b = cell(gb, c_b)
            outs_f[t] = h_f
            outs_b[T - 1 - t] = h_b
        hf_all = jnp.concatenate(outs_f, axis=0).astype(jnp.bfloat16)   # (T*N, hid)
        hb_all = jnp.concatenate(outs_b, axis=0).astype(jnp.bfloat16)
        # TODO(synk): nn.LSTM inter-layer dropout(p=0.25) is training-only; eval identity.

    # Head Linear(2*hid, out) + log-softmax, batched over all (T*N) rows.
    logits = (jnp.dot(hf_all, fw_ref[0:hid, :], preferred_element_type=jnp.float32) +
              jnp.dot(hb_all, fw_ref[hid:2 * hid, :], preferred_element_type=jnp.float32) +
              fb_ref[...])
    z = logits - jnp.max(logits, axis=-1, keepdims=True)
    logp = z - jnp.log(jnp.sum(jnp.exp(z), axis=-1, keepdims=True))
    for t in range(T):
        o_ref[:, t, :] = logp[t * N:(t + 1) * N, :]


def blstm_forward(seq, lstm_params, head_w, head_b, *, hid, num_layers, out_size):
    N, T, _ = seq.shape
    args = [seq]
    for l in range(num_layers):
        for d in ("fwd", "bwd"):
            lp = lstm_params[l][d]
            args += [lp["w_ih"], lp["w_hh"], lp["b"]]
    args += [head_w, head_b]
    kernel = functools.partial(blstm_kernel, num_layers=num_layers, hid=hid, T=T, N=N)
    # Single launch, whole batch, whole stack + head.
    # TODO(synk): on v7x the fwd/bwd recurrences could be split across the two
    # TensorCores (core_map + shared VMEM); kept fused since the model is launch-bound.
    return pl.pallas_call(
        kernel,
        out_shape=jax.ShapeDtypeStruct((N, T, out_size), jnp.float32),
    )(*args)


# ---------------------------------------------------------------------------
# Full Overall.forward
# ---------------------------------------------------------------------------
def overall_forward(x_nchw, params, *, hid, num_layers, out_size):
    seq = cnn_forward(x_nchw, params)                     # (N, W/8, 64), batch-first
    return blstm_forward(seq, params["lstm"], params["blstm_fc_w"], params["blstm_fc_b"],
                         hid=hid, num_layers=num_layers, out_size=out_size)


# ---------------------------------------------------------------------------
# Deterministic, kernel-ready parameter init (shapes follow the torch module).
# ---------------------------------------------------------------------------
def init_params(key, *, img_hw=32, in_size=64, hid=32, out_size=16, num_layers=2):
    keys = iter(jax.random.split(key, 64))

    def uni(shape, scale):
        return jax.random.uniform(next(keys), shape, jnp.float32, minval=-scale, maxval=scale)

    p = {}
    cin = 1
    for i, cout in zip((1, 2, 3), (32, 64, 128)):
        k = 1.0 / (cin * 9) ** 0.5
        w = uni((3, 3, cin, cout), k)                      # HWIO; tap index = dh*3 + dw
        b = uni((cout,), k)
        gamma = 1.0 + 0.1 * jax.random.normal(next(keys), (cout,), jnp.float32)
        beta = 0.1 * jax.random.normal(next(keys), (cout,), jnp.float32)
        rmean = 0.1 * jax.random.normal(next(keys), (cout,), jnp.float32)
        rvar = 1.0 + 0.5 * jax.random.uniform(next(keys), (cout,), jnp.float32)
        s = gamma * jax.lax.rsqrt(rvar + 1e-5)
        if i == 1:
            p["conv1_w"] = w.reshape(9 * cin, cout).astype(jnp.bfloat16)     # im2col layout
        else:
            p[f"conv{i}_w"] = w.reshape(9, cin, cout).astype(jnp.bfloat16)   # per-tap layout
        p[f"conv{i}_scale"] = s.reshape(1, cout)                             # folded BN scale
        p[f"conv{i}_shift"] = ((b - rmean) * s + beta).reshape(1, cout)      # conv bias folded
        cin = cout

    # CNN head Linear(512, 64): stored as (H/8, 128, 64).  Row index of the (512,64)
    # transposed torch weight is h*128 + c, matching permute(0,3,2,1)+reshape order.
    h8 = img_hw // 8
    k = 1.0 / (h8 * cin) ** 0.5
    p["cnn_fc_w"] = uni((h8 * cin, in_size), k).reshape(h8, cin, in_size).astype(jnp.bfloat16)
    p["cnn_fc_b"] = uni((in_size,), k).reshape(1, in_size)

    # Bidirectional LSTM: weights stored transposed (in, 4*hid); biases combined.
    p["lstm"] = []
    k = 1.0 / hid ** 0.5
    for layer in range(num_layers):
        d_in = in_size if layer == 0 else 2 * hid
        lp = {}
        for d in ("fwd", "bwd"):
            lp[d] = dict(
                w_ih=uni((4 * hid, d_in), k).T.astype(jnp.bfloat16),
                w_hh=uni((4 * hid, hid), k).T.astype(jnp.bfloat16),
                b=(uni((4 * hid,), k) + uni((4 * hid,), k)).reshape(1, 4 * hid),
            )
        p["lstm"].append(lp)

    # BLSTM head Linear(2*hid, out_size)
    k = 1.0 / (2 * hid) ** 0.5
    p["blstm_fc_w"] = uni((2 * hid, out_size), k).astype(jnp.bfloat16)
    p["blstm_fc_b"] = uni((out_size,), k).reshape(1, out_size)
    return p


if __name__ == "__main__":
    HID, OUT, LAYERS, IN_SIZE = 32, 16, 2, 64
    key = jax.random.PRNGKey(0)
    kp, kx = jax.random.split(key)
    params = init_params(kp, img_hw=32, in_size=IN_SIZE, hid=HID,
                         out_size=OUT, num_layers=LAYERS)

    # torch-style NCHW input; H=32 so that (H/8)*128 = 512 matches CNN.fc(512, 64).
    x = jax.random.normal(kx, (2, 1, 32, 32), jnp.float32)

    fwd = jax.jit(functools.partial(overall_forward, hid=HID,
                                    num_layers=LAYERS, out_size=OUT))
    out = jax.block_until_ready(fwd(x, params))

    assert out.shape == (2, 4, OUT), out.shape
    assert bool(jnp.all(jnp.isfinite(out)))
    # log-softmax rows must exp-sum to 1
    assert bool(jnp.allclose(jnp.exp(out).sum(-1), 1.0, atol=1e-3))
    print("KERNEL_OK")
</pallas_src>

<mosaic_0001>
module attributes {stable_mosaic.version = 11 : i64} {
  func.func @blstm_kernel(%arg0: memref<2x4x64xf32, #tpu.memory_space<vmem>>, %arg1: memref<64x128xbf16, #tpu.memory_space<vmem>>, %arg2: memref<32x128xbf16, #tpu.memory_space<vmem>>, %arg3: memref<1x128xf32, #tpu.memory_space<vmem>>, %arg4: memref<64x128xbf16, #tpu.memory_space<vmem>>, %arg5: memref<32x128xbf16, #tpu.memory_space<vmem>>, %arg6: memref<1x128xf32, #tpu.memory_space<vmem>>, %arg7: memref<64x128xbf16, #tpu.memory_space<vmem>>, %arg8: memref<32x128xbf16, #tpu.memory_space<vmem>>, %arg9: memref<1x128xf32, #tpu.memory_space<vmem>>, %arg10: memref<64x128xbf16, #tpu.memory_space<vmem>>, %arg11: memref<32x128xbf16, #tpu.memory_space<vmem>>, %arg12: memref<1x128xf32, #tpu.memory_space<vmem>>, %arg13: memref<64x16xbf16, #tpu.memory_space<vmem>>, %arg14: memref<1x16xf32, #tpu.memory_space<vmem>>, %arg15: memref<2x4x16xf32, #tpu.memory_space<vmem>>) attributes {dimension_semantics = [], scalar_prefetch = 0 : i64, scratch_operands = 0 : i64, tpu.core_type = #tpu.core_type<tc>} {
    %c0 = arith.constant 0 : index
    %c0_0 = arith.constant 0 : index
    %c0_1 = arith.constant 0 : index
    %0 = vector.load %arg0[%c0, %c0_0, %c0_1] : memref<2x4x64xf32, #tpu.memory_space<vmem>>, vector<2x1x64xf32>
    %1 = vector.shape_cast %0 : vector<2x1x64xf32> to vector<2x64xf32>
    %c0_2 = arith.constant 0 : index
    %c1 = arith.constant 1 : index
    %c0_3 = arith.constant 0 : index
    %2 = vector.load %arg0[%c0_2, %c1, %c0_3] : memref<2x4x64xf32, #tpu.memory_space<vmem>>, vector<2x1x64xf32>
    %3 = vector.shape_cast %2 : vector<2x1x64xf32> to vector<2x64xf32>
    %c0_4 = arith.constant 0 : index
    %c2 = arith.constant 2 : index
    %c0_5 = arith.constant 0 : index
    %4 = vector.load %arg0[%c0_4, %c2, %c0_5] : memref<2x4x64xf32, #tpu.memory_space<vmem>>, vector<2x1x64xf32>
    %5 = vector.shape_cast %4 : vector<2x1x64xf32> to vector<2x64xf32>
    %c0_6 = arith.constant 0 : index
    %c3 = arith.constant 3 : index
    %c0_7 = arith.constant 0 : index
    %6 = vector.load %arg0[%c0_6, %c3, %c0_7] : memref<2x4x64xf32, #tpu.memory_space<vmem>>, vector<2x1x64xf32>
    %7 = vector.shape_cast %6 : vector<2x1x64xf32> to vector<2x64xf32>
    %8 = tpu.concatenate %1, %3, %5, %7 in 0 : vector<2x64xf32>, vector<2x64xf32>, vector<2x64xf32>, vector<2x64xf32> -> vector<8x64xf32>
    %9 = arith.truncf %8 : vector<8x64xf32> to vector<8x64xbf16>
    %c0_8 = arith.constant 0 : index
    %c0_9 = arith.constant 0 : index
    %10 = vector.load %arg1[%c0_8, %c0_9] : memref<64x128xbf16, #tpu.memory_space<vmem>>, vector<64x128xbf16>
    %cst = arith.constant dense<0.000000e+00> : vector<8x128xf32>
    %11 = tpu.matmul %9, %10, %cst {dimension_numbers = #tpu.dot_dimension_numbers<[1], [0], [0], [1], [0, 0, 1, 1], [], []>} : vector<8x64xbf16>, vector<64x128xbf16>, vector<8x128xf32> -> vector<8x128xf32>
    %c0_10 = arith.constant 0 : index
    %c0_11 = arith.constant 0 : index
    %12 = vector.load %arg4[%c0_10, %c0_11] : memref<64x128xbf16, #tpu.memory_space<vmem>>, vector<64x128xbf16>
    %cst_12 = arith.constant dense<0.000000e+00> : vector<8x128xf32>
    %13 = tpu.matmul %9, %12, %cst_12 {dimension_numbers = #tpu.dot_dimension_numbers<[1], [0], [0], [1], [0, 0, 1, 1], [], []>} : vector<8x64xbf16>, vector<64x128xbf16>, vector<8x128xf32> -> vector<8x128xf32>
    %c0_13 = arith.constant 0 : index
    %c0_14 = arith.constant 0 : index
    %14 = vector.load %arg3[%c0_13, %c0_14] : memref<1x128xf32, #tpu.memory_space<vmem>>, vector<1x128xf32>
    %15 = vector.broadcast %14 : vector<1x128xf32> to vector<8x128xf32>
    %16 = arith.addf %11, %15 : vector<8x128xf32>
    %c0_15 = arith.constant 0 : index
    %c0_16 = arith.constant 0 : index
    %17 = vector.load %arg6[%c0_15, %c0_16] : memref<1x128xf32, #tpu.memory_space<vmem>>, vector<1x128xf32>
    %18 = vector.broadcast %17 : vector<1x128xf32> to vector<8x128xf32>
    %19 = arith.addf %13, %18 : vector<8x128xf32>
    %c0_17 = arith.constant 0 : index
    %c0_18 = arith.constant 0 : index
    %20 = vector.load %arg2[%c0_17, %c0_18] : memref<32x128xbf16, #tpu.memory_space<vmem>>, vector<32x128xbf16>
    %c0_19 = arith.constant 0 : index
    %c0_20 = arith.constant 0 : index
    %21 = vector.load %arg5[%c0_19, %c0_20] : memref<32x128xbf16, #tpu.memory_space<vmem>>, vector<32x128xbf16>
    %cst_21 = arith.constant 0.000000e+00 : f32
    %22 = vector.broadcast %cst_21 : f32 to vector<2x32xf32>
    %23 = vector.extract_strided_slice %16 {offsets = [0, 0], sizes = [2, 128], strides = [1, 1]} : vector<8x128xf32> to vector<2x128xf32>
    %24 = arith.truncf %22 : vector<2x32xf32> to vector<2x32xbf16>
    %cst_22 = arith.constant dense<0.000000e+00> : vector<2x128xf32>
    %25 = tpu.matmul %24, %20, %cst_22 {dimension_numbers = #tpu.dot_dimension_numbers<[1], [0], [0], [1], [0, 0, 1, 1], [], []>} : vector<2x32xbf16>, vector<32x128xbf16>, vector<2x128xf32> -> vector<2x128xf32>
    %26 = arith.addf %23, %25 : vector<2x128xf32>
    %27 = vector.extract_strided_slice %19 {offsets = [6, 0], sizes = [2, 128], strides = [1, 1]} : vector<8x128xf32> to vector<2x128xf32>
    %28 = arith.truncf %22 : vector<2x32xf32> to vector<2x32xbf16>
    %cst_23 = arith.constant dense<0.000000e+00> : vector<2x128xf32>
    %29 = tpu.matmul %28, %21, %cst_23 {dimension_numbers = #tpu.dot_dimension_numbers<[1], [0], [0], [1], [0, 0, 1, 1], [], []>} : vector<2x32xbf16>, vector<32x128xbf16>, vector<2x128xf32> -> vector<2x128xf32>
    %30 = arith.addf %27, %29 : vector<2x128xf32>
    %31 = vector.extract_strided_slice %26 {offsets = [0, 0], sizes = [2, 32], strides = [1, 1]} : vector<2x128xf32> to vector<2x32xf32>
    %32 = arith.negf %31 : vector<2x32xf32>
    %33 = math.exp %32 : vector<2x32xf32>
    %cst_24 = arith.constant 1.000000e+00 : f32
    %34 = vector.broadcast %cst_24 : f32 to vector<2x32xf32>
    %35 = arith.addf %34, %33 : vector<2x32xf32>
    %36 = arith.divf %34, %35 : vector<2x32xf32>
    %37 = vector.extract_strided_slice %26 {offsets = [0, 32], sizes = [2, 32], strides = [1, 1]} : vector<2x128xf32> to vector<2x32xf32>
    %38 = arith.negf %37 : vector<2x32xf32>
    %39 = math.exp %38 : vector<2x32xf32>
    %cst_25 = arith.constant 1.000000e+00 : f32
    %40 = vector.broadcast %cst_25 : f32 to vector<2x32xf32>
    %41 = arith.addf %40, %39 : vector<2x32xf32>
    %42 = arith.divf %40, %41 : vector<2x32xf32>
    %43 = vector.extract_strided_slice %26 {offsets = [0, 64], sizes = [2, 32], strides = [1, 1]} : vector<2x128xf32> to vector<2x32xf32>
    %44 = math.tanh %43 : vector<2x32xf32>
    %45 = vector.extract_strided_slice %26 {offsets = [0, 96], sizes = [2, 32], strides = [1, 1]} : vector<2x128xf32> to vector<2x32xf32>
    %46 = arith.negf %45 : vector<2x32xf32>
    %47 = math.exp %46 : vector<2x32xf32>
    %cst_26 = arith.constant 1.000000e+00 : f32
    %48 = vector.broadcast %cst_26 : f32 to vector<2x32xf32>
    %49 = arith.addf %48, %47 : vector<2x32xf32>
    %50 = arith.divf %48, %49 : vector<2x32xf32>
    %51 = arith.mulf %42, %22 : vector<2x32xf32>
    %52 = arith.mulf %36, %44 : vector<2x32xf32>
    %53 = arith.addf %51, %52 : vector<2x32xf32>
    %54 = math.tanh %53 : vector<2x32xf32>
    %55 = arith.mulf %50, %54 : vector<2x32xf32>
    %56 = vector.extract_strided_slice %30 {offsets = [0, 0], sizes = [2, 32], strides = [1, 1]} : vector<2x128xf32> to vector<2x32xf32>
    %57 = arith.negf %56 : vector<2x32xf32>
    %58 = math.exp %57 : vector<2x32xf32>
    %cst_27 = arith.constant 1.000000e+00 : f32
    %59 = vector.broadcast %cst_27 : f32 to vector<2x32xf32>
    %60 = arith.addf %59, %58 : vector<2x32xf32>
    %61 = arith.divf %59, %60 : vector<2x32xf32>
    %62 = vector.extract_strided_slice %30 {offsets = [0, 32], sizes = [2, 32], strides = [1, 1]} : vector<2x128xf32> to vector<2x32xf32>
    %63 = arith.negf %62 : vector<2x32xf32>
    %64 = math.exp %63 : vector<2x32xf32>
    %cst_28 = arith.constant 1.000000e+00 : f32
    %65 = vector.broadcast %cst_28 : f32 to vector<2x32xf32>
    %66 = arith.addf %65, %64 : vector<2x32xf32>
    %67 = arith.divf %65, %66 : vector<2x32xf32>
    %68 = vector.extract_strided_slice %30 {offsets = [0, 64], sizes = [2, 32], strides = [1, 1]} : vector<2x128xf32> to vector<2x32xf32>
    %69 = math.tanh %68 : vector<2x32xf32>
    %70 = vector.extract_strided_slice %30 {offsets = [0, 96], sizes = [2, 32], strides = [1, 1]} : vector<2x128xf32> to vector<2x32xf32>
    %71 = arith.negf %70 : vector<2x32xf32>
    %72 = math.exp %71 : vector<2x32xf32>
    %cst_29 = arith.constant 1.000000e+00 : f32
    %73 = vector.broadcast %cst_29 : f32 to vector<2x32xf32>
    %74 = arith.addf %73, %72 : vector<2x32xf32>
    %75 = arith.divf %73, %74 : vector<2x32xf32>
    %76 = arith.mulf %67, %22 : vector<2x32xf32>
    %77 = arith.mulf %61, %69 : vector<2x32xf32>
    %78 = arith.addf %76, %77 : vector<2x32xf32>
    %79 = math.tanh %78 : vector<2x32xf32>
    %80 = arith.mulf %75, %79 : vector<2x32xf32>
    %81 = vector.extract_strided_slice %16 {offsets = [2, 0], sizes = [2, 128], strides = [1, 1]} : vector<8x128xf32> to vector<2x128xf32>
    %82 = arith.truncf %55 : vector<2x32xf32> to vector<2x32xbf16>
    %cst_30 = arith.constant dense<0.000000e+00> : vector<2x128xf32>
    %83 = tpu.matmul %82, %20, %cst_30 {dimension_numbers = #tpu.dot_dimension_numbers<[1], [0], [0], [1], [0, 0, 1, 1], [], []>} : vector<2x32xbf16>, vector<32x128xbf16>, vector<2x128xf32> -> vector<2x128xf32>
    %84 = arith.addf %81, %83 : vector<2x128xf32>
    %85 = vector.extract_strided_slice %19 {offsets = [4, 0], sizes = [2, 128], strides = [1, 1]} : vector<8x128xf32> to vector<2x128xf32>
    %86 = arith.truncf %80 : vector<2x32xf32> to vector<2x32xbf16>
    %cst_31 = arith.constant dense<0.000000e+00> : vector<2x128xf32>
    %87 = tpu.matmul %86, %21, %cst_31 {dimension_numbers = #tpu.dot_dimension_numbers<[1], [0], [0], [1], [0, 0, 1, 1], [], []>} : vector<2x32xbf16>, vector<32x128xbf16>, vector<2x128xf32> -> vector<2x128xf32>
    %88 = arith.addf %85, %87 : vector<2x128xf32>
    %89 = vector.extract_strided_slice %84 {offsets = [0, 0], sizes = [2, 32], strides = [1, 1]} : vector<2x128xf32> to vector<2x32xf32>
    %90 = arith.negf %89 : vector<2x32xf32>
    %91 = math.exp %90 : vector<2x32xf32>
    %cst_32 = arith.constant 1.000000e+00 : f32
    %92 = vector.broadcast %cst_32 : f32 to vector<2x32xf32>
    %93 = arith.addf %92, %91 : vector<2x32xf32>
    %94 = arith.divf %92, %93 : vector<2x32xf32>
    %95 = vector.extract_strided_slice %84 {offsets = [0, 32], sizes = [2, 32], strides = [1, 1]} : vector<2x128xf32> to vector<2x32xf32>
    %96 = arith.negf %95 : vector<2x32xf32>
    %97 = math.exp %96 : vector<2x32xf32>
    %cst_33 = arith.constant 1.000000e+00 : f32
    %98 = vector.broadcast %cst_33 : f32 to vector<2x32xf32>
    %99 = arith.addf %98, %97 : vector<2x32xf32>
    %100 = arith.divf %98, %99 : vector<2x32xf32>
    %101 = vector.extract_strided_slice %84 {offsets = [0, 64], sizes = [2, 32], strides = [1, 1]} : vector<2x128xf32> to vector<2x32xf32>
    %102 = math.tanh %101 : vector<2x32xf32>
    %103 = vector.extract_strided_slice %84 {offsets = [0, 96], sizes = [2, 32], strides = [1, 1]} : vector<2x128xf32> to vector<2x32xf32>
    %104 = arith.negf %103 : vector<2x32xf32>
    %105 = math.exp %104 : vector<2x32xf32>
    %cst_34 = arith.constant 1.000000e+00 : f32
    %106 = vector.broadcast %cst_34 : f32 to vector<2x32xf32>
    %107 = arith.addf %106, %105 : vector<2x32xf32>
    %108 = arith.divf %106, %107 : vector<2x32xf32>
    %109 = arith.mulf %100, %53 : vector<2x32xf32>
    %110 = arith.mulf %94, %102 : vector<2x32xf32>
    %111 = arith.addf %109, %110 : vector<2x32xf32>
    %112 = math.tanh %111 : vector<2x32xf32>
    %113 = arith.mulf %108, %112 : vector<2x32xf32>
    %114 = vector.extract_strided_slice %88 {offsets = [0, 0], sizes = [2, 32], strides = [1, 1]} : vector<2x128xf32> to vector<2x32xf32>
    %115 = arith.negf %114 : vector<2x32xf32>
    %116 = math.exp %115 : vector<2x32xf32>
    %cst_35 = arith.constant 1.000000e+00 : f32
    %117 = vector.broadcast %cst_35 : f32 to vector<2x32xf32>
    %118 = arith.addf %117, %116 : vector<2x32xf32>
    %119 = arith.divf %117, %118 : vector<2x32xf32>
    %120 = vector.extract_strided_slice %88 {offsets = [0, 32], sizes = [2, 32], strides = [1, 1]} : vector<2x128xf32> to vector<2x32xf32>
    %121 = arith.negf %120 : vector<2x32xf32>
    %122 = math.exp %121 : vector<2x32xf32>
    %cst_36 = arith.constant 1.000000e+00 : f32
    %123 = vector.broadcast %cst_36 : f32 to vector<2x32xf32>
    %124 = arith.addf %123, %122 : vector<2x32xf32>
    %125 = arith.divf %123, %124 : vector<2x32xf32>
    %126 = vector.extract_strided_slice %88 {offsets = [0, 64], sizes = [2, 32], strides = [1, 1]} : vector<2x128xf32> to vector<2x32xf32>
    %127 = math.tanh %126 : vector<2x32xf32>
    %128 = vector.extract_strided_slice %88 {offsets = [0, 96], sizes = [2, 32], strides = [1, 1]} : vector<2x128xf32> to vector<2x32xf32>
    %129 = arith.negf %128 : vector<2x32xf32>
    %130 = math.exp %129 : vector<2x32xf32>
    %cst_37 = arith.constant 1.000000e+00 : f32
    %131 = vector.broadcast %cst_37 : f32 to vector<2x32xf32>
    %132 = arith.addf %131, %130 : vector<2x32xf32>
    %133 = arith.divf %131, %132 : vector<2x32xf32>
    %134 = arith.mulf %125, %78 : vector<2x32xf32>
    %135 = arith.mulf %119, %127 : vector<2x32xf32>
    %136 = arith.addf %134, %135 : vector<2x32xf32>
    %137 = math.tanh %136 : vector<2x32xf32>
    %138 = arith.mulf %133, %137 : vector<2x32xf32>
    %139 = vector.extract_strided_slice %16 {offsets = [4, 0], sizes = [2, 128], strides = [1, 1]} : vector<8x128xf32> to vector<2x128xf32>
    %140 = arith.truncf %113 : vector<2x32xf32> to vector<2x32xbf16>
    %cst_38 = arith.constant dense<0.000000e+00> : vector<2x128xf32>
    %141 = tpu.matmul %140, %20, %cst_38 {dimension_numbers = #tpu.dot_dimension_numbers<[1], [0], [0], [1], [0, 0, 1, 1], [], []>} : vector<2x32xbf16>, vector<32x128xbf16>, vector<2x128xf32> -> vector<2x128xf32>
    %142 = arith.addf %139, %141 : vector<2x128xf32>
    %143 = vector.extract_strided_slice %19 {offsets = [2, 0], sizes = [2, 128], strides = [1, 1]} : vector<8x128xf32> to vector<2x128xf32>
    %144 = arith.truncf %138 : vector<2x32xf32> to vector<2x32xbf16>
    %cst_39 = arith.constant dense<0.000000e+00> : vector<2x128xf32>
    %145 = tpu.matmul %144, %21, %cst_39 {dimension_numbers = #tpu.dot_dimension_numbers<[1], [0], [0], [1], [0, 0, 1, 1], [], []>} : vector<2x32xbf16>, vector<32x128xbf16>, vector<2x128xf32> -> vector<2x128xf32>
    %146 = arith.addf %143, %145 : vector<2x128xf32>
    %147 = vector.extract_strided_slice %142 {offsets = [0, 0], sizes = [2, 32], strides = [1, 1]} : vector<2x128xf32> to vector<2x32xf32>
    %148 = arith.negf %147 : vector<2x32xf32>
    %149 = math.exp %148 : vector<2x32xf32>
    %cst_40 = arith.constant 1.000000e+00 : f32
    %150 = vector.broadcast %cst_40 : f32 to vector<2x32xf32>
    %151 = arith.addf %150, %149 : vector<2x32xf32>
    %152 = arith.divf %150, %151 : vector<2x32xf32>
    %153 = vector.extract_strided_slice %142 {offsets = [0, 32], sizes = [2, 32], strides = [1, 1]} : vector<2x128xf32> to vector<2x32xf32>
    %154 = arith.negf %153 : vector<2x32xf32>
    %155 = math.exp %154 : vector<2x32xf32>
    %cst_41 = arith.constant 1.000000e+00 : f32
    %156 = vector.broadcast %cst_41 : f32 to vector<2x32xf32>
    %157 = arith.addf %156, %155 : vector<2x32xf32>
    %158 = arith.divf %156, %157 : vector<2x32xf32>
    %159 = vector.extract_strided_slice %142 {offsets = [0, 64], sizes = [2, 32], strides = [1, 1]} : vector<2x128xf32> to vector<2x32xf32>
    %160 = math.tanh %159 : vector<2x32xf32>
    %161 = vector.extract_strided_slice %142 {offsets = [0, 96], sizes = [2, 32], strides = [1, 1]} : vector<2x128xf32> to vector<2x32xf32>
    %162 = arith.negf %161 : vector<2x32xf32>
    %163 = math.exp %162 : vector<2x32xf32>
    %cst_42 = arith.constant 1.000000e+00 : f32
    %164 = vector.broadcast %cst_42 : f32 to vector<2x32xf32>
    %165 = arith.addf %164, %163 : vector<2x32xf32>
    %166 = arith.divf %164, %165 : vector<2x32xf32>
    %167 = arith.mulf %158, %111 : vector<2x32xf32>
    %168 = arith.mulf %152, %160 : vector<2x32xf32>
    %169 = arith.addf %167, %168 : vector<2x32xf32>
    %170 = math.tanh %169 : vector<2x32xf32>
    %171 = arith.mulf %166, %170 : vector<2x32xf32>
    %172 = vector.extract_strided_slice %146 {offsets = [0, 0], sizes = [2, 32], strides = [1, 1]} : vector<2x128xf32> to vector<2x32xf32>
    %173 = arith.negf %172 : vector<2x32xf32>
    %174 = math.exp %173 : vector<2x32xf32>
    %cst_43 = arith.constant 1.000000e+00 : f32
    %175 = vector.broadcast %cst_43 : f32 to vector<2x32xf32>
    %176 = arith.addf %175, %174 : vector<2x32xf32>
    %177 = arith.divf %175, %176 : vector<2x32xf32>
    %178 = vector.extract_strided_slice %146 {offsets = [0, 32], sizes = [2, 32], strides = [1, 1]} : vector<2x128xf32> to vector<2x32xf32>
    %179 = arith.negf %178 : vector<2x32xf32>
    %180 = math.exp %179 : vector<2x32xf32>
    %cst_44 = arith.constant 1.000000e+00 : f32
    %181 = vector.broadcast %cst_44 : f32 to vector<2x32xf32>
    %182 = arith.addf %181, %180 : vector<2x32xf32>
    %183 = arith.divf %181, %182 : vector<2x32xf32>
    %184 = vector.extract_strided_slice %146 {offsets = [0, 64], sizes = [2, 32], strides = [1, 1]} : vector<2x128xf32> to vector<2x32xf32>
    %185 = math.tanh %184 : vector<2x32xf32>
    %186 = vector.extract_strided_slice %146 {offsets = [0, 96], sizes = [2, 32], strides = [1, 1]} : vector<2x128xf32> to vector<2x32xf32>
    %187 = arith.negf %186 : vector<2x32xf32>
    %188 = math.exp %187 : vector<2x32xf32>
    %cst_45 = arith.constant 1.000000e+00 : f32
    %189 = vector.broadcast %cst_45 : f32 to vector<2x32xf32>
    %190 = arith.addf %189, %188 : vector<2x32xf32>
    %191 = arith.divf %189, %190 : vector<2x32xf32>
    %192 = arith.mulf %183, %136 : vector<2x32xf32>
    %193 = arith.mulf %177, %185 : vector<2x32xf32>
    %194 = arith.addf %192, %193 : vector<2x32xf32>
    %195 = math.tanh %194 : vector<2x32xf32>
    %196 = arith.mulf %191, %195 : vector<2x32xf32>
    %197 = vector.extract_strided_slice %16 {offsets = [6, 0], sizes = [2, 128], strides = [1, 1]} : vector<8x128xf32> to vector<2x128xf32>
    %198 = arith.truncf %171 : vector<2x32xf32> to vector<2x32xbf16>
    %cst_46 = arith.constant dense<0.000000e+00> : vector<2x128xf32>
    %199 = tpu.matmul %198, %20, %cst_46 {dimension_numbers = #tpu.dot_dimension_numbers<[1], [0], [0], [1], [0, 0, 1, 1], [], []>} : vector<2x32xbf16>, vector<32x128xbf16>, vector<2x128xf32> -> vector<2x128xf32>
    %200 = arith.addf %197, %199 : vector<2x128xf32>
    %201 = vector.extract_strided_slice %19 {offsets = [0, 0], sizes = [2, 128], strides = [1, 1]} : vector<8x128xf32> to vector<2x128xf32>
    %202 = arith.truncf %196 : vector<2x32xf32> to vector<2x32xbf16>
    %cst_47 = arith.constant dense<0.000000e+00> : vector<2x128xf32>
    %203 = tpu.matmul %202, %21, %cst_47 {dimension_numbers = #tpu.dot_dimension_numbers<[1], [0], [0], [1], [0, 0, 1, 1], [], []>} : vector<2x32xbf16>, vector<32x128xbf16>, vector<2x128xf32> -> vector<2x128xf32>
    %204 = arith.addf %201, %203 : vector<2x128xf32>
    %205 = vector.extract_strided_slice %200 {offsets = [0, 0], sizes = [2, 32], strides = [1, 1]} : vector<2x128xf32> to vector<2x32xf32>
    %206 = arith.negf %205 : vector<2x32xf32>
    %207 = math.exp %206 : vector<2x32xf32>
    %cst_48 = arith.constant 1.000000e+00 : f32
    %208 = vector.broadcast %cst_48 : f32 to vector<2x32xf32>
    %209 = arith.addf %208, %207 : vector<2x32xf32>
    %210 = arith.divf %208, %209 : vector<2x32xf32>
    %211 = vector.extract_strided_slice %200 {offsets = [0, 32], sizes = [2, 32], strides = [1, 1]} : vector<2x128xf32> to vector<2x32xf32>
    %212 = arith.negf %211 : vector<2x32xf32>
    %213 = math.exp %212 : vector<2x32xf32>
    %cst_49 = arith.constant 1.000000e+00 : f32
    %214 = vector.broadcast %cst_49 : f32 to vector<2x32xf32>
    %215 = arith.addf %214, %213 : vector<2x32xf32>
    %216 = arith.divf %214, %215 : vector<2x32xf32>
    %217 = vector.extract_strided_slice %200 {offsets = [0, 64], sizes = [2, 32], strides = [1, 1]} : vector<2x128xf32> to vector<2x32xf32>
    %218 = math.tanh %217 : vector<2x32xf32>
    %219 = vector.extract_strided_slice %200 {offsets = [0, 96], sizes = [2, 32], strides = [1, 1]} : vector<2x128xf32> to vector<2x32xf32>
    %220 = arith.negf %219 : vector<2x32xf32>
    %221 = math.exp %220 : vector<2x32xf32>
    %cst_50 = arith.constant 1.000000e+00 : f32
    %222 = vector.broadcast %cst_50 : f32 to vector<2x32xf32>
    %223 = arith.addf %222, %221 : vector<2x32xf32>
    %224 = arith.divf %222, %223 : vector<2x32xf32>
    %225 = arith.mulf %216, %169 : vector<2x32xf32>
    %226 = arith.mulf %210, %218 : vector<2x32xf32>
    %227 = arith.addf %225, %226 : vector<2x32xf32>
    %228 = math.tanh %227 : vector<2x32xf32>
    %229 = arith.mulf %224, %228 : vector<2x32xf32>
    %230 = vector.extract_strided_slice %204 {offsets = [0, 0], sizes = [2, 32], strides = [1, 1]} : vector<2x128xf32> to vector<2x32xf32>
    %231 = arith.negf %230 : vector<2x32xf32>
    %232 = math.exp %231 : vector<2x32xf32>
    %cst_51 = arith.constant 1.000000e+00 : f32
    %233 = vector.broadcast %cst_51 : f32 to vector<2x32xf32>
    %234 = arith.addf %233, %232 : vector<2x32xf32>
    %235 = arith.divf %233, %234 : vector<2x32xf32>
    %236 = vector.extract_strided_slice %204 {offsets = [0, 32], sizes = [2, 32], strides = [1, 1]} : vector<2x128xf32> to vector<2x32xf32>
    %237 = arith.negf %236 : vector<2x32xf32>
    %238 = math.exp %237 : vector<2x32xf32>
    %cst_52 = arith.constant 1.000000e+00 : f32
    %239 = vector.broadcast %cst_52 : f32 to vector<2x32xf32>
    %240 = arith.addf %239, %238 : vector<2x32xf32>
    %241 = arith.divf %239, %240 : vector<2x32xf32>
    %242 = vector.extract_strided_slice %204 {offsets = [0, 64], sizes = [2, 32], strides = [1, 1]} : vector<2x128xf32> to vector<2x32xf32>
    %243 = math.tanh %242 : vector<2x32xf32>
    %244 = vector.extract_strided_slice %204 {offsets = [0, 96], sizes = [2, 32], strides = [1, 1]} : vector<2x128xf32> to vector<2x32xf32>
    %245 = arith.negf %244 : vector<2x32xf32>
    %246 = math.exp %245 : vector<2x32xf32>
    %cst_53 = arith.constant 1.000000e+00 : f32
    %247 = vector.broadcast %cst_53 : f32 to vector<2x32xf32>
    %248 = arith.addf %247, %246 : vector<2x32xf32>
    %249 = arith.divf %247, %248 : vector<2x32xf32>
    %250 = arith.mulf %241, %194 : vector<2x32xf32>
    %251 = arith.mulf %235, %243 : vector<2x32xf32>
    %252 = arith.addf %250, %251 : vector<2x32xf32>
    %253 = math.tanh %252 : vector<2x32xf32>
    %254 = arith.mulf %249, %253 : vector<2x32xf32>
    %255 = tpu.concatenate %55, %113, %171, %229 in 0 : vector<2x32xf32>, vector<2x32xf32>, vector<2x32xf32>, vector<2x32xf32> -> vector<8x32xf32>
    %256 = arith.truncf %255 : vector<8x32xf32> to vector<8x32xbf16>
    %257 = tpu.concatenate %254, %196, %138, %80 in 0 : vector<2x32xf32>, vector<2x32xf32>, vector<2x32xf32>, vector<2x32xf32> -> vector<8x32xf32>
    %258 = arith.truncf %257 : vector<8x32xf32> to vector<8x32xbf16>
    %c0_54 = arith.constant 0 : index
    %c0_55 = arith.constant 0 : index
    %259 = vector.load %arg7[%c0_54, %c0_55] : memref<64x128xbf16, #tpu.memory_space<vmem>>, vector<32x128xbf16>
    %cst_56 = arith.constant dense<0.000000e+00> : vector<8x128xf32>
    %260 = tpu.matmul %256, %259, %cst_56 {dimension_numbers = #tpu.dot_dimension_numbers<[1], [0], [0], [1], [0, 0, 1, 1], [], []>} : vector<8x32xbf16>, vector<32x128xbf16>, vector<8x128xf32> -> vector<8x128xf32>
    %c32 = arith.constant 32 : index
    %c0_57 = arith.constant 0 : index
    %261 = vector.load %arg7[%c32, %c0_57] : memref<64x128xbf16, #tpu.memory_space<vmem>>, vector<32x128xbf16>
    %cst_58 = arith.constant dense<0.000000e+00> : vector<8x128xf32>
    %262 = tpu.matmul %258, %261, %cst_58 {dimension_numbers = #tpu.dot_dimension_numbers<[1], [0], [0], [1], [0, 0, 1, 1], [], []>} : vector<8x32xbf16>, vector<32x128xbf16>, vector<8x128xf32> -> vector<8x128xf32>
    %263 = arith.addf %260, %262 : vector<8x128xf32>
    %c0_59 = arith.constant 0 : index
    %c0_60 = arith.constant 0 : index
    %264 = vector.load %arg10[%c0_59, %c0_60] : memref<64x128xbf16, #tpu.memory_space<vmem>>, vector<32x128xbf16>
    %cst_61 = arith.constant dense<0.000000e+00> : vector<8x128xf32>
    %265 = tpu.matmul %256, %264, %cst_61 {dimension_numbers = #tpu.dot_dimension_numbers<[1], [0], [0], [1], [0, 0, 1, 1], [], []>} : vector<8x32xbf16>, vector<32x128xbf16>, vector<8x128xf32> -> vector<8x128xf32>
    %c32_62 = arith.constant 32 : index
    %c0_63 = arith.constant 0 : index
    %266 = vector.load %arg10[%c32_62, %c0_63] : memref<64x128xbf16, #tpu.memory_space<vmem>>, vector<32x128xbf16>
    %cst_64 = arith.constant dense<0.000000e+00> : vector<8x128xf32>
    %267 = tpu.matmul %258, %266, %cst_64 {dimension_numbers = #tpu.dot_dimension_numbers<[1], [0], [0], [1], [0, 0, 1, 1], [], []>} : vector<8x32xbf16>, vector<32x128xbf16>, vector<8x128xf32> -> vector<8x128xf32>
    %268 = arith.addf %265, %267 : vector<8x128xf32>
    %c0_65 = arith.constant 0 : index
    %c0_66 = arith.constant 0 : index
    %269 = vector.load %arg9[%c0_65, %c0_66] : memref<1x128xf32, #tpu.memory_space<vmem>>, vector<1x128xf32>
    %270 = vector.broadcast %269 : vector<1x128xf32> to vector<8x128xf32>
    %271 = arith.addf %263, %270 : vector<8x128xf32>
    %c0_67 = arith.constant 0 : index
    %c0_68 = arith.constant 0 : index
    %272 = vector.load %arg12[%c0_67, %c0_68] : memref<1x128xf32, #tpu.memory_space<vmem>>, vector<1x128xf32>
    %273 = vector.broadcast %272 : vector<1x128xf32> to vector<8x128xf32>
    %274 = arith.addf %268, %273 : vector<8x128xf32>
    %c0_69 = arith.constant 0 : index
    %c0_70 = arith.constant 0 : index
    %275 = vector.load %arg8[%c0_69, %c0_70] : memref<32x128xbf16, #tpu.memory_space<vmem>>, vector<32x128xbf16>
    %c0_71 = arith.constant 0 : index
    %c0_72 = arith.constant 0 : index
    %276 = vector.load %arg11[%c0_71, %c0_72] : memref<32x128xbf16, #tpu.memory_space<vmem>>, vector<32x128xbf16>
    %cst_73 = arith.constant 0.000000e+00 : f32
    %277 = vector.broadcast %cst_73 : f32 to vector<2x32xf32>
    %278 = vector.extract_strided_slice %271 {offsets = [0, 0], sizes = [2, 128], strides = [1, 1]} : vector<8x128xf32> to vector<2x128xf32>
    %279 = arith.truncf %277 : vector<2x32xf32> to vector<2x32xbf16>
    %cst_74 = arith.constant dense<0.000000e+00> : vector<2x128xf32>
    %280 = tpu.matmul %279, %275, %cst_74 {dimension_numbers = #tpu.dot_dimension_numbers<[1], [0], [0], [1], [0, 0, 1, 1], [], []>} : vector<2x32xbf16>, vector<32x128xbf16>, vector<2x128xf32> -> vector<2x128xf32>
    %281 = arith.addf %278, %280 : vector<2x128xf32>
    %282 = vector.extract_strided_slice %274 {offsets = [6, 0], sizes = [2, 128], strides = [1, 1]} : vector<8x128xf32> to vector<2x128xf32>
    %283 = arith.truncf %277 : vector<2x32xf32> to vector<2x32xbf16>
    %cst_75 = arith.constant dense<0.000000e+00> : vector<2x128xf32>
    %284 = tpu.matmul %283, %276, %cst_75 {dimension_numbers = #tpu.dot_dimension_numbers<[1], [0], [0], [1], [0, 0, 1, 1], [], []>} : vector<2x32xbf16>, vector<32x128xbf16>, vector<2x128xf32> -> vector<2x128xf32>
    %285 = arith.addf %282, %284 : vector<2x128xf32>
    %286 = vector.extract_strided_slice %281 {offsets = [0, 0], sizes = [2, 32], strides = [1, 1]} : vector<2x128xf32> to vector<2x32xf32>
    %287 = arith.negf %286 : vector<2x32xf32>
    %288 = math.exp %287 : vector<2x32xf32>
    %cst_76 = arith.constant 1.000000e+00 : f32
    %289 = vector.broadcast %cst_76 : f32 to vector<2x32xf32>
    %290 = arith.addf %289, %288 : vector<2x32xf32>
    %291 = arith.divf %289, %290 : vector<2x32xf32>
    %292 = vector.extract_strided_slice %281 {offsets = [0, 32], sizes = [2, 32], strides = [1, 1]} : vector<2x128xf32> to vector<2x32xf32>
    %293 = arith.negf %292 : vector<2x32xf32>
    %294 = math.exp %293 : vector<2x32xf32>
    %cst_77 = arith.constant 1.000000e+00 : f32
    %295 = vector.broadcast %cst_77 : f32 to vector<2x32xf32>
    %296 = arith.addf %295, %294 : vector<2x32xf32>
    %297 = arith.divf %295, %296 : vector<2x32xf32>
    %298 = vector.extract_strided_slice %281 {offsets = [0, 64], sizes = [2, 32], strides = [1, 1]} : vector<2x128xf32> to vector<2x32xf32>
    %299 = math.tanh %298 : vector<2x32xf32>
    %300 = vector.extract_strided_slice %281 {offsets = [0, 96], sizes = [2, 32], strides = [1, 1]} : vector<2x128xf32> to vector<2x32xf32>
    %301 = arith.negf %300 : vector<2x32xf32>
    %302 = math.exp %301 : vector<2x32xf32>
    %cst_78 = arith.constant 1.000000e+00 : f32
    %303 = vector.broadcast %cst_78 : f32 to vector<2x32xf32>
    %304 = arith.addf %303, %302 : vector<2x32xf32>
    %305 = arith.divf %303, %304 : vector<2x32xf32>
    %306 = arith.mulf %297, %277 : vector<2x32xf32>
    %307 = arith.mulf %291, %299 : vector<2x32xf32>
    %308 = arith.addf %306, %307 : vector<2x32xf32>
    %309 = math.tanh %308 : vector<2x32xf32>
    %310 = arith.mulf %305, %309 : vector<2x32xf32>
    %311 = vector.extract_strided_slice %285 {offsets = [0, 0], sizes = [2, 32], strides = [1, 1]} : vector<2x128xf32> to vector<2x32xf32>
    %312 = arith.negf %311 : vector<2x32xf32>
    %313 = math.exp %312 : vector<2x32xf32>
    %cst_79 = arith.constant 1.000000e+00 : f32
    %314 = vector.broadcast %cst_79 : f32 to vector<2x32xf32>
    %315 = arith.addf %314, %313 : vector<2x32xf32>
    %316 = arith.divf %314, %315 : vector<2x32xf32>
    %317 = vector.extract_strided_slice %285 {offsets = [0, 32], sizes = [2, 32], strides = [1, 1]} : vector<2x128xf32> to vector<2x32xf32>
    %318 = arith.negf %317 : vector<2x32xf32>
    %319 = math.exp %318 : vector<2x32xf32>
    %cst_80 = arith.constant 1.000000e+00 : f32
    %320 = vector.broadcast %cst_80 : f32 to vector<2x32xf32>
    %321 = arith.addf %320, %319 : vector<2x32xf32>
    %322 = arith.divf %320, %321 : vector<2x32xf32>
    %323 = vector.extract_strided_slice %285 {offsets = [0, 64], sizes = [2, 32], strides = [1, 1]} : vector<2x128xf32> to vector<2x32xf32>
    %324 = math.tanh %323 : vector<2x32xf32>
    %325 = vector.extract_strided_slice %285 {offsets = [0, 96], sizes = [2, 32], strides = [1, 1]} : vector<2x128xf32> to vector<2x32xf32>
    %326 = arith.negf %325 : vector<2x32xf32>
    %327 = math.exp %326 : vector<2x32xf32>
    %cst_81 = arith.constant 1.000000e+00 : f32
    %328 = vector.broadcast %cst_81 : f32 to vector<2x32xf32>
    %329 = arith.addf %328, %327 : vector<2x32xf32>
    %330 = arith.divf %328, %329 : vector<2x32xf32>
    %331 = arith.mulf %322, %277 : vector<2x32xf32>
    %332 = arith.mulf %316, %324 : vector<2x32xf32>
    %333 = arith.addf %331, %332 : vector<2x32xf32>
    %334 = math.tanh %333 : vector<2x32xf32>
    %335 = arith.mulf %330, %334 : vector<2x32xf32>
    %336 = vector.extract_strided_slice %271 {offsets = [2, 0], sizes = [2, 128], strides = [1, 1]} : vector<8x128xf32> to vector<2x128xf32>
    %337 = arith.truncf %310 : vector<2x32xf32> to vector<2x32xbf16>
    %cst_82 = arith.constant dense<0.000000e+00> : vector<2x128xf32>
    %338 = tpu.matmul %337, %275, %cst_82 {dimension_numbers = #tpu.dot_dimension_numbers<[1], [0], [0], [1], [0, 0, 1, 1], [], []>} : vector<2x32xbf16>, vector<32x128xbf16>, vector<2x128xf32> -> vector<2x128xf32>
    %339 = arith.addf %336, %338 : vector<2x128xf32>
    %340 = vector.extract_strided_slice %274 {offsets = [4, 0], sizes = [2, 128], strides = [1, 1]} : vector<8x128xf32> to vector<2x128xf32>
    %341 = arith.truncf %335 : vector<2x32xf32> to vector<2x32xbf16>
    %cst_83 = arith.constant dense<0.000000e+00> : vector<2x128xf32>
    %342 = tpu.matmul %341, %276, %cst_83 {dimension_numbers = #tpu.dot_dimension_numbers<[1], [0], [0], [1], [0, 0, 1, 1], [], []>} : vector<2x32xbf16>, vector<32x128xbf16>, vector<2x128xf32> -> vector<2x128xf32>
    %343 = arith.addf %340, %342 : vector<2x128xf32>
    %344 = vector.extract_strided_slice %339 {offsets = [0, 0], sizes = [2, 32], strides = [1, 1]} : vector<2x128xf32> to vector<2x32xf32>
    %345 = arith.negf %344 : vector<2x32xf32>
    %346 = math.exp %345 : vector<2x32xf32>
    %cst_84 = arith.constant 1.000000e+00 : f32
    %347 = vector.broadcast %cst_84 : f32 to vector<2x32xf32>
    %348 = arith.addf %347, %346 : vector<2x32xf32>
    %349 = arith.divf %347, %348 : vector<2x32xf32>
    %350 = vector.extract_strided_slice %339 {offsets = [0, 32], sizes = [2, 32], strides = [1, 1]} : vector<2x128xf32> to vector<2x32xf32>
    %351 = arith.negf %350 : vector<2x32xf32>
    %352 = math.exp %351 : vector<2x32xf32>
    %cst_85 = arith.constant 1.000000e+00 : f32
    %353 = vector.broadcast %cst_85 : f32 to vector<2x32xf32>
    %354 = arith.addf %353, %352 : vector<2x32xf32>
    %355 = arith.divf %353, %354 : vector<2x32xf32>
    %356 = vector.extract_strided_slice %339 {offsets = [0, 64], sizes = [2, 32], strides = [1, 1]} : vector<2x128xf32> to vector<2x32xf32>
    %357 = math.tanh %356 : vector<2x32xf32>
    %358 = vector.extract_strided_slice %339 {offsets = [0, 96], sizes = [2, 32], strides = [1, 1]} : vector<2x128xf32> to vector<2x32xf32>
    %359 = arith.negf %358 : vector<2x32xf32>
    %360 = math.exp %359 : vector<2x32xf32>
    %cst_86 = arith.constant 1.000000e+00 : f32
    %361 = vector.broadcast %cst_86 : f32 to vector<2x32xf32>
    %362 = arith.addf %361, %360 : vector<2x32xf32>
    %363 = arith.divf %361, %362 : vector<2x32xf32>
    %364 = arith.mulf %355, %308 : vector<2x32xf32>
    %365 = arith.mulf %349, %357 : vector<2x32xf32>
    %366 = arith.addf %364, %365 : vector<2x32xf32>
    %367 = math.tanh %366 : vector<2x32xf32>
    %368 = arith.mulf %363, %367 : vector<2x32xf32>
    %369 = vector.extract_strided_slice %343 {offsets = [0, 0], sizes = [2, 32], strides = [1, 1]} : vector<2x128xf32> to vector<2x32xf32>
    %370 = arith.negf %369 : vector<2x32xf32>
    %371 = math.exp %370 : vector<2x32xf32>
    %cst_87 = arith.constant 1.000000e+00 : f32
    %372 = vector.broadcast %cst_87 : f32 to vector<2x32xf32>
    %373 = arith.addf %372, %371 : vector<2x32xf32>
    %374 = arith.divf %372, %373 : vector<2x32xf32>
    %375 = vector.extract_strided_slice %343 {offsets = [0, 32], sizes = [2, 32], strides = [1, 1]} : vector<2x128xf32> to vector<2x32xf32>
    %376 = arith.negf %375 : vector<2x32xf32>
    %377 = math.exp %376 : vector<2x32xf32>
    %cst_88 = arith.constant 1.000000e+00 : f32
    %378 = vector.broadcast %cst_88 : f32 to vector<2x32xf32>
    %379 = arith.addf %378, %377 : vector<2x32xf32>
    %380 = arith.divf %378, %379 : vector<2x32xf32>
    %381 = vector.extract_strided_slice %343 {offsets = [0, 64], sizes = [2, 32], strides = [1, 1]} : vector<2x128xf32> to vector<2x32xf32>
    %382 = math.tanh %381 : vector<2x32xf32>
    %383 = vector.extract_strided_slice %343 {offsets = [0, 96], sizes = [2, 32], strides = [1, 1]} : vector<2x128xf32> to vector<2x32xf32>
    %384 = arith.negf %383 : vector<2x32xf32>
    %385 = math.exp %384 : vector<2x32xf32>
    %cst_89 = arith.constant 1.000000e+00 : f32
    %386 = vector.broadcast %cst_89 : f32 to vector<2x32xf32>
    %387 = arith.addf %386, %385 : vector<2x32xf32>
    %388 = arith.divf %386, %387 : vector<2x32xf32>
    %389 = arith.mulf %380, %333 : vector<2x32xf32>
    %390 = arith.mulf %374, %382 : vector<2x32xf32>
    %391 = arith.addf %389, %390 : vector<2x32xf32>
    %392 = math.tanh %391 : vector<2x32xf32>
    %393 = arith.mulf %388, %392 : vector<2x32xf32>
    %394 = vector.extract_strided_slice %271 {offsets = [4, 0], sizes = [2, 128], strides = [1, 1]} : vector<8x128xf32> to vector<2x128xf32>
    %395 = arith.truncf %368 : vector<2x32xf32> to vector<2x32xbf16>
    %cst_90 = arith.constant dense<0.000000e+00> : vector<2x128xf32>
    %396 = tpu.matmul %395, %275, %cst_90 {dimension_numbers = #tpu.dot_dimension_numbers<[1], [0], [0], [1], [0, 0, 1, 1], [], []>} : vector<2x32xbf16>, vector<32x128xbf16>, vector<2x128xf32> -> vector<2x128xf32>
    %397 = arith.addf %394, %396 : vector<2x128xf32>
    %398 = vector.extract_strided_slice %274 {offsets = [2, 0], sizes = [2, 128], strides = [1, 1]} : vector<8x128xf32> to vector<2x128xf32>
    %399 = arith.truncf %393 : vector<2x32xf32> to vector<2x32xbf16>
    %cst_91 = arith.constant dense<0.000000e+00> : vector<2x128xf32>
    %400 = tpu.matmul %399, %276, %cst_91 {dimension_numbers = #tpu.dot_dimension_numbers<[1], [0], [0], [1], [0, 0, 1, 1], [], []>} : vector<2x32xbf16>, vector<32x128xbf16>, vector<2x128xf32> -> vector<2x128xf32>
    %401 = arith.addf %398, %400 : vector<2x128xf32>
    %402 = vector.extract_strided_slice %397 {offsets = [0, 0], sizes = [2, 32], strides = [1, 1]} : vector<2x128xf32> to vector<2x32xf32>
    %403 = arith.negf %402 : vector<2x32xf32>
    %404 = math.exp %403 : vector<2x32xf32>
    %cst_92 = arith.constant 1.000000e+00 : f32
    %405 = vector.broadcast %cst_92 : f32 to vector<2x32xf32>
    %406 = arith.addf %405, %404 : vector<2x32xf32>
    %407 = arith.divf %405, %406 : vector<2x32xf32>
    %408 = vector.extract_strided_slice %397 {offsets = [0, 32], sizes = [2, 32], strides = [1, 1]} : vector<2x128xf32> to vector<2x32xf32>
    %409 = arith.negf %408 : vector<2x32xf32>
    %410 = math.exp %409 : vector<2x32xf32>
    %cst_93 = arith.constant 1.000000e+00 : f32
    %411 = vector.broadcast %cst_93 : f32 to vector<2x32xf32>
    %412 = arith.addf %411, %410 : vector<2x32xf32>
    %413 = arith.divf %411, %412 : vector<2x32xf32>
    %414 = vector.extract_strided_slice %397 {offsets = [0, 64], sizes = [2, 32], strides = [1, 1]} : vector<2x128xf32> to vector<2x32xf32>
    %415 = math.tanh %414 : vector<2x32xf32>
    %416 = vector.extract_strided_slice %397 {offsets = [0, 96], sizes = [2, 32], strides = [1, 1]} : vector<2x128xf32> to vector<2x32xf32>
    %417 = arith.negf %416 : vector<2x32xf32>
    %418 = math.exp %417 : vector<2x32xf32>
    %cst_94 = arith.constant 1.000000e+00 : f32
    %419 = vector.broadcast %cst_94 : f32 to vector<2x32xf32>
    %420 = arith.addf %419, %418 : vector<2x32xf32>
    %421 = arith.divf %419, %420 : vector<2x32xf32>
    %422 = arith.mulf %413, %366 : vector<2x32xf32>
    %423 = arith.mulf %407, %415 : vector<2x32xf32>
    %424 = arith.addf %422, %423 : vector<2x32xf32>
    %425 = math.tanh %424 : vector<2x32xf32>
    %426 = arith.mulf %421, %425 : vector<2x32xf32>
    %427 = vector.extract_strided_slice %401 {offsets = [0, 0], sizes = [2, 32], strides = [1, 1]} : vector<2x128xf32> to vector<2x32xf32>
    %428 = arith.negf %427 : vector<2x32xf32>
    %429 = math.exp %428 : vector<2x32xf32>
    %cst_95 = arith.constant 1.000000e+00 : f32
    %430 = vector.broadcast %cst_95 : f32 to vector<2x32xf32>
    %431 = arith.addf %430, %429 : vector<2x32xf32>
    %432 = arith.divf %430, %431 : vector<2x32xf32>
    %433 = vector.extract_strided_slice %401 {offsets = [0, 32], sizes = [2, 32], strides = [1, 1]} : vector<2x128xf32> to vector<2x32xf32>
    %434 = arith.negf %433 : vector<2x32xf32>
    %435 = math.exp %434 : vector<2x32xf32>
    %cst_96 = arith.constant 1.000000e+00 : f32
    %436 = vector.broadcast %cst_96 : f32 to vector<2x32xf32>
    %437 = arith.addf %436, %435 : vector<2x32xf32>
    %438 = arith.divf %436, %437 : vector<2x32xf32>
    %439 = vector.extract_strided_slice %401 {offsets = [0, 64], sizes = [2, 32], strides = [1, 1]} : vector<2x128xf32> to vector<2x32xf32>
    %440 = math.tanh %439 : vector<2x32xf32>
    %441 = vector.extract_strided_slice %401 {offsets = [0, 96], sizes = [2, 32], strides = [1, 1]} : vector<2x128xf32> to vector<2x32xf32>
    %442 = arith.negf %441 : vector<2x32xf32>
    %443 = math.exp %442 : vector<2x32xf32>
    %cst_97 = arith.constant 1.000000e+00 : f32
    %444 = vector.broadcast %cst_97 : f32 to vector<2x32xf32>
    %445 = arith.addf %444, %443 : vector<2x32xf32>
    %446 = arith.divf %444, %445 : vector<2x32xf32>
    %447 = arith.mulf %438, %391 : vector<2x32xf32>
    %448 = arith.mulf %432, %440 : vector<2x32xf32>
    %449 = arith.addf %447, %448 : vector<2x32xf32>
    %450 = math.tanh %449 : vector<2x32xf32>
    %451 = arith.mulf %446, %450 : vector<2x32xf32>
    %452 = vector.extract_strided_slice %271 {offsets = [6, 0], sizes = [2, 128], strides = [1, 1]} : vector<8x128xf32> to vector<2x128xf32>
    %453 = arith.truncf %426 : vector<2x32xf32> to vector<2x32xbf16>
    %cst_98 = arith.constant dense<0.000000e+00> : vector<2x128xf32>
    %454 = tpu.matmul %453, %275, %cst_98 {dimension_numbers = #tpu.dot_dimension_numbers<[1], [0], [0], [1], [0, 0, 1, 1], [], []>} : vector<2x32xbf16>, vector<32x128xbf16>, vector<2x128xf32> -> vector<2x128xf32>
    %455 = arith.addf %452, %454 : vector<2x128xf32>
    %456 = vector.extract_strided_slice %274 {offsets = [0, 0], sizes = [2, 128], strides = [1, 1]} : vector<8x128xf32> to vector<2x128xf32>
    %457 = arith.truncf %451 : vector<2x32xf32> to vector<2x32xbf16>
    %cst_99 = arith.constant dense<0.000000e+00> : vector<2x128xf32>
    %458 = tpu.matmul %457, %276, %cst_99 {dimension_numbers = #tpu.dot_dimension_numbers<[1], [0], [0], [1], [0, 0, 1, 1], [], []>} : vector<2x32xbf16>, vector<32x128xbf16>, vector<2x128xf32> -> vector<2x128xf32>
    %459 = arith.addf %456, %458 : vector<2x128xf32>
    %460 = vector.extract_strided_slice %455 {offsets = [0, 0], sizes = [2, 32], strides = [1, 1]} : vector<2x128xf32> to vector<2x32xf32>
    %461 = arith.negf %460 : vector<2x32xf32>
    %462 = math.exp %461 : vector<2x32xf32>
    %cst_100 = arith.constant 1.000000e+00 : f32
    %463 = vector.broadcast %cst_100 : f32 to vector<2x32xf32>
    %464 = arith.addf %463, %462 : vector<2x32xf32>
    %465 = arith.divf %463, %464 : vector<2x32xf32>
    %466 = vector.extract_strided_slice %455 {offsets = [0, 32], sizes = [2, 32], strides = [1, 1]} : vector<2x128xf32> to vector<2x32xf32>
    %467 = arith.negf %466 : vector<2x32xf32>
    %468 = math.exp %467 : vector<2x32xf32>
    %cst_101 = arith.constant 1.000000e+00 : f32
    %469 = vector.broadcast %cst_101 : f32 to vector<2x32xf32>
    %470 = arith.addf %469, %468 : vector<2x32xf32>
    %471 = arith.divf %469, %470 : vector<2x32xf32>
    %472 = vector.extract_strided_slice %455 {offsets = [0, 64], sizes = [2, 32], strides = [1, 1]} : vector<2x128xf32> to vector<2x32xf32>
    %473 = math.tanh %472 : vector<2x32xf32>
    %474 = vector.extract_strided_slice %455 {offsets = [0, 96], sizes = [2, 32], strides = [1, 1]} : vector<2x128xf32> to vector<2x32xf32>
    %475 = arith.negf %474 : vector<2x32xf32>
    %476 = math.exp %475 : vector<2x32xf32>
    %cst_102 = arith.constant 1.000000e+00 : f32
    %477 = vector.broadcast %cst_102 : f32 to vector<2x32xf32>
    %478 = arith.addf %477, %476 : vector<2x32xf32>
    %479 = arith.divf %477, %478 : vector<2x32xf32>
    %480 = arith.mulf %471, %424 : vector<2x32xf32>
    %481 = arith.mulf %465, %473 : vector<2x32xf32>
    %482 = arith.addf %480, %481 : vector<2x32xf32>
    %483 = math.tanh %482 : vector<2x32xf32>
    %484 = arith.mulf %479, %483 : vector<2x32xf32>
    %485 = vector.extract_strided_slice %459 {offsets = [0, 0], sizes = [2, 32], strides = [1, 1]} : vector<2x128xf32> to vector<2x32xf32>
    %486 = arith.negf %485 : vector<2x32xf32>
    %487 = math.exp %486 : vector<2x32xf32>
    %cst_103 = arith.constant 1.000000e+00 : f32
    %488 = vector.broadcast %cst_103 : f32 to vector<2x32xf32>
    %489 = arith.addf %488, %487 : vector<2x32xf32>
    %490 = arith.divf %488, %489 : vector<2x32xf32>
    %491 = vector.extract_strided_slice %459 {offsets = [0, 32], sizes = [2, 32], strides = [1, 1]} : vector<2x128xf32> to vector<2x32xf32>
    %492 = arith.negf %491 : vector<2x32xf32>
    %493 = math.exp %492 : vector<2x32xf32>
    %cst_104 = arith.constant 1.000000e+00 : f32
    %494 = vector.broadcast %cst_104 : f32 to vector<2x32xf32>
    %495 = arith.addf %494, %493 : vector<2x32xf32>
    %496 = arith.divf %494, %495 : vector<2x32xf32>
    %497 = vector.extract_strided_slice %459 {offsets = [0, 64], sizes = [2, 32], strides = [1, 1]} : vector<2x128xf32> to vector<2x32xf32>
    %498 = math.tanh %497 : vector<2x32xf32>
    %499 = vector.extract_strided_slice %459 {offsets = [0, 96], sizes = [2, 32], strides = [1, 1]} : vector<2x128xf32> to vector<2x32xf32>
    %500 = arith.negf %499 : vector<2x32xf32>
    %501 = math.exp %500 : vector<2x32xf32>
    %cst_105 = arith.constant 1.000000e+00 : f32
    %502 = vector.broadcast %cst_105 : f32 to vector<2x32xf32>
    %503 = arith.addf %502, %501 : vector<2x32xf32>
    %504 = arith.divf %502, %503 : vector<2x32xf32>
    %505 = arith.mulf %496, %449 : vector<2x32xf32>
    %506 = arith.mulf %490, %498 : vector<2x32xf32>
    %507 = arith.addf %505, %506 : vector<2x32xf32>
    %508 = math.tanh %507 : vector<2x32xf32>
    %509 = arith.mulf %504, %508 : vector<2x32xf32>
    %510 = tpu.concatenate %310, %368, %426, %484 in 0 : vector<2x32xf32>, vector<2x32xf32>, vector<2x32xf32>, vector<2x32xf32> -> vector<8x32xf32>
    %511 = arith.truncf %510 : vector<8x32xf32> to vector<8x32xbf16>
    %512 = tpu.concatenate %509, %451, %393, %335 in 0 : vector<2x32xf32>, vector<2x32xf32>, vector<2x32xf32>, vector<2x32xf32> -> vector<8x32xf32>
    %513 = arith.truncf %512 : vector<8x32xf32> to vector<8x32xbf16>
    %c0_106 = arith.constant 0 : index
    %c0_107 = arith.constant 0 : index
    %514 = vector.load %arg13[%c0_106, %c0_107] : memref<64x16xbf16, #tpu.memory_space<vmem>>, vector<32x16xbf16>
    %cst_108 = arith.constant dense<0.000000e+00> : vector<8x16xf32>
    %515 = tpu.matmul %511, %514, %cst_108 {dimension_numbers = #tpu.dot_dimension_numbers<[1], [0], [0], [1], [0, 0, 1, 1], [], []>} : vector<8x32xbf16>, vector<32x16xbf16>, vector<8x16xf32> -> vector<8x16xf32>
    %c32_109 = arith.constant 32 : index
    %c0_110 = arith.constant 0 : index
    %516 = vector.load %arg13[%c32_109, %c0_110] : memref<64x16xbf16, #tpu.memory_space<vmem>>, vector<32x16xbf16>
    %cst_111 = arith.constant dense<0.000000e+00> : vector<8x16xf32>
    %517 = tpu.matmul %513, %516, %cst_111 {dimension_numbers = #tpu.dot_dimension_numbers<[1], [0], [0], [1], [0, 0, 1, 1], [], []>} : vector<8x32xbf16>, vector<32x16xbf16>, vector<8x16xf32> -> vector<8x16xf32>
    %518 = arith.addf %515, %517 : vector<8x16xf32>
    %c0_112 = arith.constant 0 : index
    %c0_113 = arith.constant 0 : index
    %519 = vector.load %arg14[%c0_112, %c0_113] : memref<1x16xf32, #tpu.memory_space<vmem>>, vector<1x16xf32>
    %520 = vector.broadcast %519 : vector<1x16xf32> to vector<8x16xf32>
    %521 = arith.addf %518, %520 : vector<8x16xf32>
    %cst_114 = arith.constant dense<0xFF800000> : vector<8xf32>
    %522 = vector.multi_reduction <maximumf>, %521, %cst_114 [1] : vector<8x16xf32> to vector<8xf32>
    %523 = vector.shape_cast %522 : vector<8xf32> to vector<8x1xf32>
    %524 = vector.broadcast %523 : vector<8x1xf32> to vector<8x16xf32>
    %525 = arith.subf %521, %524 : vector<8x16xf32>
    %526 = math.exp %525 : vector<8x16xf32>
    %cst_115 = arith.constant dense<0.000000e+00> : vector<8xf32>
    %527 = vector.multi_reduction <add>, %526, %cst_115 [1] : vector<8x16xf32> to vector<8xf32>
    %528 = vector.shape_cast %527 : vector<8xf32> to vector<8x1xf32>
    %529 = math.log %528 : vector<8x1xf32>
    %530 = vector.broadcast %529 : vector<8x1xf32> to vector<8x16xf32>
    %531 = arith.subf %525, %530 : vector<8x16xf32>
    %532 = vector.extract_strided_slice %531 {offsets = [0, 0], sizes = [2, 16], strides = [1, 1]} : vector<8x16xf32> to vector<2x16xf32>
    %c0_116 = arith.constant 0 : index
    %c0_117 = arith.constant 0 : index
    %c0_118 = arith.constant 0 : index
    %533 = vector.load %arg15[%c0_116, %c0_117, %c0_118] : memref<2x4x16xf32, #tpu.memory_space<vmem>>, vector<2x1x16xf32>
    %534 = vector.shape_cast %533 : vector<2x1x16xf32> to vector<2x16xf32>
    %535 = vector.shape_cast %532 : vector<2x16xf32> to vector<2x1x16xf32>
    tpu.vector_store %arg15[%c0_116, %c0_117, %c0_118], %535 {strides = array<i32>} : memref<2x4x16xf32, #tpu.memory_space<vmem>>, vector<2x1x16xf32>,
    %536 = vector.extract_strided_slice %531 {offsets = [2, 0], sizes = [2, 16], strides = [1, 1]} : vector<8x16xf32> to vector<2x16xf32>
    %c0_119 = arith.constant 0 : index
    %c1_120 = arith.constant 1 : index
    %c0_121 = arith.constant 0 : index
    %537 = vector.load %arg15[%c0_119, %c1_120, %c0_121] : memref<2x4x16xf32, #tpu.memory_space<vmem>>, vector<2x1x16xf32>
    %538 = vector.shape_cast %537 : vector<2x1x16xf32> to vector<2x16xf32>
    %539 = vector.shape_cast %536 : vector<2x16xf32> to vector<2x1x16xf32>
    tpu.vector_store %arg15[%c0_119, %c1_120, %c0_121], %539 {strides = array<i32>} : memref<2x4x16xf32, #tpu.memory_space<vmem>>, vector<2x1x16xf32>,
    %540 = vector.extract_strided_slice %531 {offsets = [4, 0], sizes = [2, 16], strides = [1, 1]} : vector<8x16xf32> to vector<2x16xf32>
    %c0_122 = arith.constant 0 : index
    %c2_123 = arith.constant 2 : index
    %c0_124 = arith.constant 0 : index
    %541 = vector.load %arg15[%c0_122, %c2_123, %c0_124] : memref<2x4x16xf32, #tpu.memory_space<vmem>>, vector<2x1x16xf32>
    %542 = vector.shape_cast %541 : vector<2x1x16xf32> to vector<2x16xf32>
    %543 = vector.shape_cast %540 : vector<2x16xf32> to vector<2x1x16xf32>
    tpu.vector_store %arg15[%c0_122, %c2_123, %c0_124], %543 {strides = array<i32>} : memref<2x4x16xf32, #tpu.memory_space<vmem>>, vector<2x1x16xf32>,
    %544 = vector.extract_strided_slice %531 {offsets = [6, 0], sizes = [2, 16], strides = [1, 1]} : vector<8x16xf32> to vector<2x16xf32>
    %c0_125 = arith.constant 0 : index
    %c3_126 = arith.constant 3 : index
    %c0_127 = arith.constant 0 : index
    %545 = vector.load %arg15[%c0_125, %c3_126, %c0_127] : memref<2x4x16xf32, #tpu.memory_space<vmem>>, vector<2x1x16xf32>
    %546 = vector.shape_cast %545 : vector<2x1x16xf32> to vector<2x16xf32>
    %547 = vector.shape_cast %544 : vector<2x16xf32> to vector<2x1x16xf32>
    tpu.vector_store %arg15[%c0_125, %c3_126, %c0_127], %547 {strides = array<i32>} : memref<2x4x16xf32, #tpu.memory_space<vmem>>, vector<2x1x16xf32>,
    return
  }
}

module attributes {stable_mosaic.version = 11 : i64} {
  func.func @cnn_kernel(%arg0: i32, %arg1: memref<1x1024x9xbf16, #tpu.memory_space<vmem>>, %arg2: memref<9x32xbf16, #tpu.memory_space<vmem>>, %arg3: memref<1x32xf32, #tpu.memory_space<vmem>>, %arg4: memref<1x32xf32, #tpu.memory_space<vmem>>, %arg5: memref<9x32x64xbf16, #tpu.memory_space<vmem>>, %arg6: memref<1x64xf32, #tpu.memory_space<vmem>>, %arg7: memref<1x64xf32, #tpu.memory_space<vmem>>, %arg8: memref<9x64x128xbf16, #tpu.memory_space<vmem>>, %arg9: memref<1x128xf32, #tpu.memory_space<vmem>>, %arg10: memref<1x128xf32, #tpu.memory_space<vmem>>, %arg11: memref<4x128x64xbf16, #tpu.memory_space<vmem>>, %arg12: memref<1x64xf32, #tpu.memory_space<vmem>>, %arg13: memref<1x4x64xf32, #tpu.memory_space<vmem>>, %arg14: memref<18x18x32xf32, #tpu.memory_space<vmem>>, %arg15: memref<10x10x64xf32, #tpu.memory_space<vmem>>, %arg16: memref<128x32xf32, #tpu.memory_space<vmem>>, %arg17: memref<128x64xf32, #tpu.memory_space<vmem>>, %arg18: memref<32x128xf32, #tpu.memory_space<vmem>>) attributes {dimension_semantics = [#tpu.dimension_semantics<parallel>], iteration_bounds = array<i64: 2>, scalar_prefetch = 0 : i64, scratch_operands = 5 : i64, tpu.core_type = #tpu.core_type<tc>, window_params = [{transform_indices = @transform_0, window_bounds = array<i64: 1, 1024, 9>}, {pipeline_mode = #tpu.pipeline_mode<synchronous>, transform_indices = @transform_1, window_bounds = array<i64: 9, 32>}, {pipeline_mode = #tpu.pipeline_mode<synchronous>, transform_indices = @transform_2, window_bounds = array<i64: 1, 32>}, {pipeline_mode = #tpu.pipeline_mode<synchronous>, transform_indices = @transform_3, window_bounds = array<i64: 1, 32>}, {pipeline_mode = #tpu.pipeline_mode<synchronous>, transform_indices = @transform_4, window_bounds = array<i64: 9, 32, 64>}, {pipeline_mode = #tpu.pipeline_mode<synchronous>, transform_indices = @transform_5, window_bounds = array<i64: 1, 64>}, {pipeline_mode = #tpu.pipeline_mode<synchronous>, transform_indices = @transform_6, window_bounds = array<i64: 1, 64>}, {pipeline_mode = #tpu.pipeline_mode<synchronous>, transform_indices = @transform_7, window_bounds = array<i64: 9, 64, 128>}, {pipeline_mode = #tpu.pipeline_mode<synchronous>, transform_indices = @transform_8, window_bounds = array<i64: 1, 128>}, {pipeline_mode = #tpu.pipeline_mode<synchronous>, transform_indices = @transform_9, window_bounds = array<i64: 1, 128>}, {pipeline_mode = #tpu.pipeline_mode<synchronous>, transform_indices = @transform_10, window_bounds = array<i64: 4, 128, 64>}, {pipeline_mode = #tpu.pipeline_mode<synchronous>, transform_indices = @transform_11, window_bounds = array<i64: 1, 64>}, {transform_indices = @transform_12, window_bounds = array<i64: 1, 4, 64>}]} {
    %cst = arith.constant 0.000000e+00 : f32
    %0 = vector.broadcast %cst : f32 to vector<18x18x32xf32>
    %c0 = arith.constant 0 : index
    %c0_0 = arith.constant 0 : index
    %c0_1 = arith.constant 0 : index
    %1 = vector.load %arg14[%c0, %c0_0, %c0_1] : memref<18x18x32xf32, #tpu.memory_space<vmem>>, vector<18x18x32xf32>
    tpu.vector_store %arg14[%c0, %c0_0, %c0_1], %0 {strides = array<i32>} : memref<18x18x32xf32, #tpu.memory_space<vmem>>, vector<18x18x32xf32>,
    %cst_2 = arith.constant 0.000000e+00 : f32
    %2 = vector.broadcast %cst_2 : f32 to vector<10x10x64xf32>
    %c0_3 = arith.constant 0 : index
    %c0_4 = arith.constant 0 : index
    %c0_5 = arith.constant 0 : index
    %3 = vector.load %arg15[%c0_3, %c0_4, %c0_5] : memref<10x10x64xf32, #tpu.memory_space<vmem>>, vector<10x10x64xf32>
    tpu.vector_store %arg15[%c0_3, %c0_4, %c0_5], %2 {strides = array<i32>} : memref<10x10x64xf32, #tpu.memory_space<vmem>>, vector<10x10x64xf32>,
    %c0_6 = arith.constant 0 : index
    %c0_7 = arith.constant 0 : index
    %4 = vector.load %arg2[%c0_6, %c0_7] : memref<9x32xbf16, #tpu.memory_space<vmem>>, vector<9x32xbf16>
    %c0_8 = arith.constant 0 : index
    %c0_9 = arith.constant 0 : index
    %5 = vector.load %arg3[%c0_8, %c0_9] : memref<1x32xf32, #tpu.memory_space<vmem>>, vector<1x32xf32>
    %c0_10 = arith.constant 0 : index
    %c0_11 = arith.constant 0 : index
    %6 = vector.load %arg4[%c0_10, %c0_11] : memref<1x32xf32, #tpu.memory_space<vmem>>, vector<1x32xf32>
    %c0_12 = arith.constant 0 : index
    %c0_13 = arith.constant 0 : index
    %c0_14 = arith.constant 0 : index
    %7 = vector.load %arg1[%c0_12, %c0_13, %c0_14] : memref<1x1024x9xbf16, #tpu.memory_space<vmem>>, vector<1x256x9xbf16>
    %8 = vector.shape_cast %7 : vector<1x256x9xbf16> to vector<256x9xbf16>
    %cst_15 = arith.constant dense<0.000000e+00> : vector<256x32xf32>
    %9 = tpu.matmul %8, %4, %cst_15 {dimension_numbers = #tpu.dot_dimension_numbers<[1], [0], [0], [1], [0, 0, 1, 1], [], []>} : vector<256x9xbf16>, vector<9x32xbf16>, vector<256x32xf32> -> vector<256x32xf32>
    %10 = vector.broadcast %5 : vector<1x32xf32> to vector<256x32xf32>
    %11 = arith.mulf %9, %10 : vector<256x32xf32>
    %12 = vector.broadcast %6 : vector<1x32xf32> to vector<256x32xf32>
    %13 = arith.addf %11, %12 : vector<256x32xf32>
    %cst_16 = arith.constant 0.000000e+00 : f32
    %14 = vector.broadcast %cst_16 : f32 to vector<256x32xf32>
    %15 = arith.maximumf %13, %14 : vector<256x32xf32>
    %16 = vector.shape_cast %15 : vector<256x32xf32> to vector<4x2x32x32xf32>
    %17 = vector.extract_strided_slice %16 {offsets = [0, 0, 0, 0], sizes = [4, 1, 32, 32], strides = [1, 1, 1, 1]} : vector<4x2x32x32xf32> to vector<4x1x32x32xf32>
    %18 = vector.shape_cast %17 : vector<4x1x32x32xf32> to vector<4x32x32xf32>
    %19 = vector.extract_strided_slice %16 {offsets = [0, 1, 0, 0], sizes = [4, 1, 32, 32], strides = [1, 1, 1, 1]} : vector<4x2x32x32xf32> to vector<4x1x32x32xf32>
    %20 = vector.shape_cast %19 : vector<4x1x32x32xf32> to vector<4x32x32xf32>
    %21 = arith.maximumf %18, %20 : vector<4x32x32xf32>
    %22 = vector.shape_cast %21 : vector<4x32x32xf32> to vector<128x32xf32>
    %c0_17 = arith.constant 0 : index
    %c0_18 = arith.constant 0 : index
    %23 = vector.load %arg16[%c0_17, %c0_18] : memref<128x32xf32, #tpu.memory_space<vmem>>, vector<128x32xf32>
    tpu.vector_store %arg16[%c0_17, %c0_18], %22 {strides = array<i32>} : memref<128x32xf32, #tpu.memory_space<vmem>>, vector<128x32xf32>,
    %c0_19 = arith.constant 0 : index
    %c0_20 = arith.constant 0 : index
    %24 = tpu.strided_load %arg16[%c0_19, %c0_20] {strides = array<i32: 2, 1>} : memref<128x32xf32, #tpu.memory_space<vmem>>, vector<64x32xf32>
    %c1 = arith.constant 1 : index
    %c0_21 = arith.constant 0 : index
    %25 = tpu.strided_load %arg16[%c1, %c0_21] {strides = array<i32: 2, 1>} : memref<128x32xf32, #tpu.memory_space<vmem>>, vector<64x32xf32>
    %26 = arith.maximumf %24, %25 : vector<64x32xf32>
    %27 = vector.shape_cast %26 : vector<64x32xf32> to vector<4x16x32xf32>
    %c1_22 = arith.constant 1 : index
    %c1_23 = arith.constant 1 : index
    %c0_24 = arith.constant 0 : index
    %28 = vector.load %arg14[%c1_22, %c1_23, %c0_24] : memref<18x18x32xf32, #tpu.memory_space<vmem>>, vector<4x16x32xf32>
    tpu.vector_store %arg14[%c1_22, %c1_23, %c0_24], %27 {strides = array<i32>} : memref<18x18x32xf32, #tpu.memory_space<vmem>>, vector<4x16x32xf32>,
    %c0_25 = arith.constant 0 : index
    %c256 = arith.constant 256 : index
    %c0_26 = arith.constant 0 : index
    %29 = vector.load %arg1[%c0_25, %c256, %c0_26] : memref<1x1024x9xbf16, #tpu.memory_space<vmem>>, vector<1x256x9xbf16>
    %30 = vector.shape_cast %29 : vector<1x256x9xbf16> to vector<256x9xbf16>
    %cst_27 = arith.constant dense<0.000000e+00> : vector<256x32xf32>
    %31 = tpu.matmul %30, %4, %cst_27 {dimension_numbers = #tpu.dot_dimension_numbers<[1], [0], [0], [1], [0, 0, 1, 1], [], []>} : vector<256x9xbf16>, vector<9x32xbf16>, vector<256x32xf32> -> vector<256x32xf32>
    %32 = vector.broadcast %5 : vector<1x32xf32> to vector<256x32xf32>
    %33 = arith.mulf %31, %32 : vector<256x32xf32>
    %34 = vector.broadcast %6 : vector<1x32xf32> to vector<256x32xf32>
    %35 = arith.addf %33, %34 : vector<256x32xf32>
    %cst_28 = arith.constant 0.000000e+00 : f32
    %36 = vector.broadcast %cst_28 : f32 to vector<256x32xf32>
    %37 = arith.maximumf %35, %36 : vector<256x32xf32>
    %38 = vector.shape_cast %37 : vector<256x32xf32> to vector<4x2x32x32xf32>
    %39 = vector.extract_strided_slice %38 {offsets = [0, 0, 0, 0], sizes = [4, 1, 32, 32], strides = [1, 1, 1, 1]} : vector<4x2x32x32xf32> to vector<4x1x32x32xf32>
    %40 = vector.shape_cast %39 : vector<4x1x32x32xf32> to vector<4x32x32xf32>
    %41 = vector.extract_strided_slice %38 {offsets = [0, 1, 0, 0], sizes = [4, 1, 32, 32], strides = [1, 1, 1, 1]} : vector<4x2x32x32xf32> to vector<4x1x32x32xf32>
    %42 = vector.shape_cast %41 : vector<4x1x32x32xf32> to vector<4x32x32xf32>
    %43 = arith.maximumf %40, %42 : vector<4x32x32xf32>
    %44 = vector.shape_cast %43 : vector<4x32x32xf32> to vector<128x32xf32>
    %c0_29 = arith.constant 0 : index
    %c0_30 = arith.constant 0 : index
    %45 = vector.load %arg16[%c0_29, %c0_30] : memref<128x32xf32, #tpu.memory_space<vmem>>, vector<128x32xf32>
    tpu.vector_store %arg16[%c0_29, %c0_30], %44 {strides = array<i32>} : memref<128x32xf32, #tpu.memory_space<vmem>>, vector<128x32xf32>,
    %c0_31 = arith.constant 0 : index
    %c0_32 = arith.constant 0 : index
    %46 = tpu.strided_load %arg16[%c0_31, %c0_32] {strides = array<i32: 2, 1>} : memref<128x32xf32, #tpu.memory_space<vmem>>, vector<64x32xf32>
    %c1_33 = arith.constant 1 : index
    %c0_34 = arith.constant 0 : index
    %47 = tpu.strided_load %arg16[%c1_33, %c0_34] {strides = array<i32: 2, 1>} : memref<128x32xf32, #tpu.memory_space<vmem>>, vector<64x32xf32>
    %48 = arith.maximumf %46, %47 : vector<64x32xf32>
    %49 = vector.shape_cast %48 : vector<64x32xf32> to vector<4x16x32xf32>
    %c5 = arith.constant 5 : index
    %c1_35 = arith.constant 1 : index
    %c0_36 = arith.constant 0 : index
    %50 = vector.load %arg14[%c5, %c1_35, %c0_36] : memref<18x18x32xf32, #tpu.memory_space<vmem>>, vector<4x16x32xf32>
    tpu.vector_store %arg14[%c5, %c1_35, %c0_36], %49 {strides = array<i32>} : memref<18x18x32xf32, #tpu.memory_space<vmem>>, vector<4x16x32xf32>,
    %c0_37 = arith.constant 0 : index
    %c512 = arith.constant 512 : index
    %c0_38 = arith.constant 0 : index
    %51 = vector.load %arg1[%c0_37, %c512, %c0_38] : memref<1x1024x9xbf16, #tpu.memory_space<vmem>>, vector<1x256x9xbf16>
    %52 = vector.shape_cast %51 : vector<1x256x9xbf16> to vector<256x9xbf16>
    %cst_39 = arith.constant dense<0.000000e+00> : vector<256x32xf32>
    %53 = tpu.matmul %52, %4, %cst_39 {dimension_numbers = #tpu.dot_dimension_numbers<[1], [0], [0], [1], [0, 0, 1, 1], [], []>} : vector<256x9xbf16>, vector<9x32xbf16>, vector<256x32xf32> -> vector<256x32xf32>
    %54 = vector.broadcast %5 : vector<1x32xf32> to vector<256x32xf32>
    %55 = arith.mulf %53, %54 : vector<256x32xf32>
    %56 = vector.broadcast %6 : vector<1x32xf32> to vector<256x32xf32>
    %57 = arith.addf %55, %56 : vector<256x32xf32>
    %cst_40 = arith.constant 0.000000e+00 : f32
    %58 = vector.broadcast %cst_40 : f32 to vector<256x32xf32>
    %59 = arith.maximumf %57, %58 : vector<256x32xf32>
    %60 = vector.shape_cast %59 : vector<256x32xf32> to vector<4x2x32x32xf32>
    %61 = vector.extract_strided_slice %60 {offsets = [0, 0, 0, 0], sizes = [4, 1, 32, 32], strides = [1, 1, 1, 1]} : vector<4x2x32x32xf32> to vector<4x1x32x32xf32>
    %62 = vector.shape_cast %61 : vector<4x1x32x32xf32> to vector<4x32x32xf32>
    %63 = vector.extract_strided_slice %60 {offsets = [0, 1, 0, 0], sizes = [4, 1, 32, 32], strides = [1, 1, 1, 1]} : vector<4x2x32x32xf32> to vector<4x1x32x32xf32>
    %64 = vector.shape_cast %63 : vector<4x1x32x32xf32> to vector<4x32x32xf32>
    %65 = arith.maximumf %62, %64 : vector<4x32x32xf32>
    %66 = vector.shape_cast %65 : vector<4x32x32xf32> to vector<128x32xf32>
    %c0_41 = arith.constant 0 : index
    %c0_42 = arith.constant 0 : index
    %67 = vector.load %arg16[%c0_41, %c0_42] : memref<128x32xf32, #tpu.memory_space<vmem>>, vector<128x32xf32>
    tpu.vector_store %arg16[%c0_41, %c0_42], %66 {strides = array<i32>} : memref<128x32xf32, #tpu.memory_space<vmem>>, vector<128x32xf32>,
    %c0_43 = arith.constant 0 : index
    %c0_44 = arith.constant 0 : index
    %68 = tpu.strided_load %arg16[%c0_43, %c0_44] {strides = array<i32: 2, 1>} : memref<128x32xf32, #tpu.memory_space<vmem>>, vector<64x32xf32>
    %c1_45 = arith.constant 1 : index
    %c0_46 = arith.constant 0 : index
    %69 = tpu.strided_load %arg16[%c1_45, %c0_46] {strides = array<i32: 2, 1>} : memref<128x32xf32, #tpu.memory_space<vmem>>, vector<64x32xf32>
    %70 = arith.maximumf %68, %69 : vector<64x32xf32>
    %71 = vector.shape_cast %70 : vector<64x32xf32> to vector<4x16x32xf32>
    %c9 = arith.constant 9 : index
    %c1_47 = arith.constant 1 : index
    %c0_48 = arith.constant 0 : index
    %72 = vector.load %arg14[%c9, %c1_47, %c0_48] : memref<18x18x32xf32, #tpu.memory_space<vmem>>, vector<4x16x32xf32>
    tpu.vector_store %arg14[%c9, %c1_47, %c0_48], %71 {strides = array<i32>} : memref<18x18x32xf32, #tpu.memory_space<vmem>>, vector<4x16x32xf32>,
    %c0_49 = arith.constant 0 : index
    %c768 = arith.constant 768 : index
    %c0_50 = arith.constant 0 : index
    %73 = vector.load %arg1[%c0_49, %c768, %c0_50] : memref<1x1024x9xbf16, #tpu.memory_space<vmem>>, vector<1x256x9xbf16>
    %74 = vector.shape_cast %73 : vector<1x256x9xbf16> to vector<256x9xbf16>
    %cst_51 = arith.constant dense<0.000000e+00> : vector<256x32xf32>
    %75 = tpu.matmul %74, %4, %cst_51 {dimension_numbers = #tpu.dot_dimension_numbers<[1], [0], [0], [1], [0, 0, 1, 1], [], []>} : vector<256x9xbf16>, vector<9x32xbf16>, vector<256x32xf32> -> vector<256x32xf32>
    %76 = vector.broadcast %5 : vector<1x32xf32> to vector<256x32xf32>
    %77 = arith.mulf %75, %76 : vector<256x32xf32>
    %78 = vector.broadcast %6 : vector<1x32xf32> to vector<256x32xf32>
    %79 = arith.addf %77, %78 : vector<256x32xf32>
    %cst_52 = arith.constant 0.000000e+00 : f32
    %80 = vector.broadcast %cst_52 : f32 to vector<256x32xf32>
    %81 = arith.maximumf %79, %80 : vector<256x32xf32>
    %82 = vector.shape_cast %81 : vector<256x32xf32> to vector<4x2x32x32xf32>
    %83 = vector.extract_strided_slice %82 {offsets = [0, 0, 0, 0], sizes = [4, 1, 32, 32], strides = [1, 1, 1, 1]} : vector<4x2x32x32xf32> to vector<4x1x32x32xf32>
    %84 = vector.shape_cast %83 : vector<4x1x32x32xf32> to vector<4x32x32xf32>
    %85 = vector.extract_strided_slice %82 {offsets = [0, 1, 0, 0], sizes = [4, 1, 32, 32], strides = [1, 1, 1, 1]} : vector<4x2x32x32xf32> to vector<4x1x32x32xf32>
    %86 = vector.shape_cast %85 : vector<4x1x32x32xf32> to vector<4x32x32xf32>
    %87 = arith.maximumf %84, %86 : vector<4x32x32xf32>
    %88 = vector.shape_cast %87 : vector<4x32x32xf32> to vector<128x32xf32>
    %c0_53 = arith.constant 0 : index
    %c0_54 = arith.constant 0 : index
    %89 = vector.load %arg16[%c0_53, %c0_54] : memref<128x32xf32, #tpu.memory_space<vmem>>, vector<128x32xf32>
    tpu.vector_store %arg16[%c0_53, %c0_54], %88 {strides = array<i32>} : memref<128x32xf32, #tpu.memory_space<vmem>>, vector<128x32xf32>,
    %c0_55 = arith.constant 0 : index
    %c0_56 = arith.constant 0 : index
    %90 = tpu.strided_load %arg16[%c0_55, %c0_56] {strides = array<i32: 2, 1>} : memref<128x32xf32, #tpu.memory_space<vmem>>, vector<64x32xf32>
    %c1_57 = arith.constant 1 : index
    %c0_58 = arith.constant 0 : index
    %91 = tpu.strided_load %arg16[%c1_57, %c0_58] {strides = array<i32: 2, 1>} : memref<128x32xf32, #tpu.memory_space<vmem>>, vector<64x32xf32>
    %92 = arith.maximumf %90, %91 : vector<64x32xf32>
    %93 = vector.shape_cast %92 : vector<64x32xf32> to vector<4x16x32xf32>
    %c13 = arith.constant 13 : index
    %c1_59 = arith.constant 1 : index
    %c0_60 = arith.constant 0 : index
    %94 = vector.load %arg14[%c13, %c1_59, %c0_60] : memref<18x18x32xf32, #tpu.memory_space<vmem>>, vector<4x16x32xf32>
    tpu.vector_store %arg14[%c13, %c1_59, %c0_60], %93 {strides = array<i32>} : memref<18x18x32xf32, #tpu.memory_space<vmem>>, vector<4x16x32xf32>,
    %c0_61 = arith.constant 0 : index
    %c0_62 = arith.constant 0 : index
    %95 = vector.load %arg6[%c0_61, %c0_62] : memref<1x64xf32, #tpu.memory_space<vmem>>, vector<1x64xf32>
    %c0_63 = arith.constant 0 : index
    %c0_64 = arith.constant 0 : index
    %96 = vector.load %arg7[%c0_63, %c0_64] : memref<1x64xf32, #tpu.memory_space<vmem>>, vector<1x64xf32>
    %cst_65 = arith.constant 0.000000e+00 : f32
    %97 = vector.broadcast %cst_65 : f32 to vector<256x64xf32>
    %c0_66 = arith.constant 0 : index
    %c0_67 = arith.constant 0 : index
    %c0_68 = arith.constant 0 : index
    %98 = vector.load %arg14[%c0_66, %c0_67, %c0_68] : memref<18x18x32xf32, #tpu.memory_space<vmem>>, vector<16x16x32xf32>
    %99 = arith.truncf %98 : vector<16x16x32xf32> to vector<16x16x32xbf16>
    %100 = vector.shape_cast %99 : vector<16x16x32xbf16> to vector<256x32xbf16>
    %c0_69 = arith.constant 0 : index
    %c0_70 = arith.constant 0 : index
    %c0_71 = arith.constant 0 : index
    %101 = vector.load %arg5[%c0_69, %c0_70, %c0_71] : memref<9x32x64xbf16, #tpu.memory_space<vmem>>, vector<1x32x64xbf16>
    %102 = vector.shape_cast %101 : vector<1x32x64xbf16> to vector<32x64xbf16>
    %cst_72 = arith.constant dense<0.000000e+00> : vector<256x64xf32>
    %103 = tpu.matmul %100, %102, %cst_72 {dimension_numbers = #tpu.dot_dimension_numbers<[1], [0], [0], [1], [0, 0, 1, 1], [], []>} : vector<256x32xbf16>, vector<32x64xbf16>, vector<256x64xf32> -> vector<256x64xf32>
    %104 = arith.addf %97, %103 : vector<256x64xf32>
    %c0_73 = arith.constant 0 : index
    %c1_74 = arith.constant 1 : index
    %c0_75 = arith.constant 0 : index
    %105 = vector.load %arg14[%c0_73, %c1_74, %c0_75] : memref<18x18x32xf32, #tpu.memory_space<vmem>>, vector<16x16x32xf32>
    %106 = arith.truncf %105 : vector<16x16x32xf32> to vector<16x16x32xbf16>
    %107 = vector.shape_cast %106 : vector<16x16x32xbf16> to vector<256x32xbf16>
    %c1_76 = arith.constant 1 : index
    %c0_77 = arith.constant 0 : index
    %c0_78 = arith.constant 0 : index
    %108 = vector.load %arg5[%c1_76, %c0_77, %c0_78] : memref<9x32x64xbf16, #tpu.memory_space<vmem>>, vector<1x32x64xbf16>
    %109 = vector.shape_cast %108 : vector<1x32x64xbf16> to vector<32x64xbf16>
    %cst_79 = arith.constant dense<0.000000e+00> : vector<256x64xf32>
    %110 = tpu.matmul %107, %109, %cst_79 {dimension_numbers = #tpu.dot_dimension_numbers<[1], [0], [0], [1], [0, 0, 1, 1], [], []>} : vector<256x32xbf16>, vector<32x64xbf16>, vector<256x64xf32> -> vector<256x64xf32>
    %111 = arith.addf %104, %110 : vector<256x64xf32>
    %c0_80 = arith.constant 0 : index
    %c2 = arith.constant 2 : index
    %c0_81 = arith.constant 0 : index
    %112 = vector.load %arg14[%c0_80, %c2, %c0_81] : memref<18x18x32xf32, #tpu.memory_space<vmem>>, vector<16x16x32xf32>
    %113 = arith.truncf %112 : vector<16x16x32xf32> to vector<16x16x32xbf16>
    %114 = vector.shape_cast %113 : vector<16x16x32xbf16> to vector<256x32xbf16>
    %c2_82 = arith.constant 2 : index
    %c0_83 = arith.constant 0 : index
    %c0_84 = arith.constant 0 : index
    %115 = vector.load %arg5[%c2_82, %c0_83, %c0_84] : memref<9x32x64xbf16, #tpu.memory_space<vmem>>, vector<1x32x64xbf16>
    %116 = vector.shape_cast %115 : vector<1x32x64xbf16> to vector<32x64xbf16>
    %cst_85 = arith.constant dense<0.000000e+00> : vector<256x64xf32>
    %117 = tpu.matmul %114, %116, %cst_85 {dimension_numbers = #tpu.dot_dimension_numbers<[1], [0], [0], [1], [0, 0, 1, 1], [], []>} : vector<256x32xbf16>, vector<32x64xbf16>, vector<256x64xf32> -> vector<256x64xf32>
    %118 = arith.addf %111, %117 : vector<256x64xf32>
    %c1_86 = arith.constant 1 : index
    %c0_87 = arith.constant 0 : index
    %c0_88 = arith.constant 0 : index
    %119 = vector.load %arg14[%c1_86, %c0_87, %c0_88] : memref<18x18x32xf32, #tpu.memory_space<vmem>>, vector<16x16x32xf32>
    %120 = arith.truncf %119 : vector<16x16x32xf32> to vector<16x16x32xbf16>
    %121 = vector.shape_cast %120 : vector<16x16x32xbf16> to vector<256x32xbf16>
    %c3 = arith.constant 3 : index
    %c0_89 = arith.constant 0 : index
    %c0_90 = arith.constant 0 : index
    %122 = vector.load %arg5[%c3, %c0_89, %c0_90] : memref<9x32x64xbf16, #tpu.memory_space<vmem>>, vector<1x32x64xbf16>
    %123 = vector.shape_cast %122 : vector<1x32x64xbf16> to vector<32x64xbf16>
    %cst_91 = arith.constant dense<0.000000e+00> : vector<256x64xf32>
    %124 = tpu.matmul %121, %123, %cst_91 {dimension_numbers = #tpu.dot_dimension_numbers<[1], [0], [0], [1], [0, 0, 1, 1], [], []>} : vector<256x32xbf16>, vector<32x64xbf16>, vector<256x64xf32> -> vector<256x64xf32>
    %125 = arith.addf %118, %124 : vector<256x64xf32>
    %c1_92 = arith.constant 1 : index
    %c1_93 = arith.constant 1 : index
    %c0_94 = arith.constant 0 : index
    %126 = vector.load %arg14[%c1_92, %c1_93, %c0_94] : memref<18x18x32xf32, #tpu.memory_space<vmem>>, vector<16x16x32xf32>
    %127 = arith.truncf %126 : vector<16x16x32xf32> to vector<16x16x32xbf16>
    %128 = vector.shape_cast %127 : vector<16x16x32xbf16> to vector<256x32xbf16>
    %c4 = arith.constant 4 : index
    %c0_95 = arith.constant 0 : index
    %c0_96 = arith.constant 0 : index
    %129 = vector.load %arg5[%c4, %c0_95, %c0_96] : memref<9x32x64xbf16, #tpu.memory_space<vmem>>, vector<1x32x64xbf16>
    %130 = vector.shape_cast %129 : vector<1x32x64xbf16> to vector<32x64xbf16>
    %cst_97 = arith.constant dense<0.000000e+00> : vector<256x64xf32>
    %131 = tpu.matmul %128, %130, %cst_97 {dimension_numbers = #tpu.dot_dimension_numbers<[1], [0], [0], [1], [0, 0, 1, 1], [], []>} : vector<256x32xbf16>, vector<32x64xbf16>, vector<256x64xf32> -> vector<256x64xf32>
    %132 = arith.addf %125, %131 : vector<256x64xf32>
    %c1_98 = arith.constant 1 : index
    %c2_99 = arith.constant 2 : index
    %c0_100 = arith.constant 0 : index
    %133 = vector.load %arg14[%c1_98, %c2_99, %c0_100] : memref<18x18x32xf32, #tpu.memory_space<vmem>>, vector<16x16x32xf32>
    %134 = arith.truncf %133 : vector<16x16x32xf32> to vector<16x16x32xbf16>
    %135 = vector.shape_cast %134 : vector<16x16x32xbf16> to vector<256x32xbf16>
    %c5_101 = arith.constant 5 : index
    %c0_102 = arith.constant 0 : index
    %c0_103 = arith.constant 0 : index
    %136 = vector.load %arg5[%c5_101, %c0_102, %c0_103] : memref<9x32x64xbf16, #tpu.memory_space<vmem>>, vector<1x32x64xbf16>
    %137 = vector.shape_cast %136 : vector<1x32x64xbf16> to vector<32x64xbf16>
    %cst_104 = arith.constant dense<0.000000e+00> : vector<256x64xf32>
    %138 = tpu.matmul %135, %137, %cst_104 {dimension_numbers = #tpu.dot_dimension_numbers<[1], [0], [0], [1], [0, 0, 1, 1], [], []>} : vector<256x32xbf16>, vector<32x64xbf16>, vector<256x64xf32> -> vector<256x64xf32>
    %139 = arith.addf %132, %138 : vector<256x64xf32>
    %c2_105 = arith.constant 2 : index
    %c0_106 = arith.constant 0 : index
    %c0_107 = arith.constant 0 : index
    %140 = vector.load %arg14[%c2_105, %c0_106, %c0_107] : memref<18x18x32xf32, #tpu.memory_space<vmem>>, vector<16x16x32xf32>
    %141 = arith.truncf %140 : vector<16x16x32xf32> to vector<16x16x32xbf16>
    %142 = vector.shape_cast %141 : vector<16x16x32xbf16> to vector<256x32xbf16>
    %c6 = arith.constant 6 : index
    %c0_108 = arith.constant 0 : index
    %c0_109 = arith.constant 0 : index
    %143 = vector.load %arg5[%c6, %c0_108, %c0_109] : memref<9x32x64xbf16, #tpu.memory_space<vmem>>, vector<1x32x64xbf16>
    %144 = vector.shape_cast %143 : vector<1x32x64xbf16> to vector<32x64xbf16>
    %cst_110 = arith.constant dense<0.000000e+00> : vector<256x64xf32>
    %145 = tpu.matmul %142, %144, %cst_110 {dimension_numbers = #tpu.dot_dimension_numbers<[1], [0], [0], [1], [0, 0, 1, 1], [], []>} : vector<256x32xbf16>, vector<32x64xbf16>, vector<256x64xf32> -> vector<256x64xf32>
    %146 = arith.addf %139, %145 : vector<256x64xf32>
    %c2_111 = arith.constant 2 : index
    %c1_112 = arith.constant 1 : index
    %c0_113 = arith.constant 0 : index
    %147 = vector.load %arg14[%c2_111, %c1_112, %c0_113] : memref<18x18x32xf32, #tpu.memory_space<vmem>>, vector<16x16x32xf32>
    %148 = arith.truncf %147 : vector<16x16x32xf32> to vector<16x16x32xbf16>
    %149 = vector.shape_cast %148 : vector<16x16x32xbf16> to vector<256x32xbf16>
    %c7 = arith.constant 7 : index
    %c0_114 = arith.constant 0 : index
    %c0_115 = arith.constant 0 : index
    %150 = vector.load %arg5[%c7, %c0_114, %c0_115] : memref<9x32x64xbf16, #tpu.memory_space<vmem>>, vector<1x32x64xbf16>
    %151 = vector.shape_cast %150 : vector<1x32x64xbf16> to vector<32x64xbf16>
    %cst_116 = arith.constant dense<0.000000e+00> : vector<256x64xf32>
    %152 = tpu.matmul %149, %151, %cst_116 {dimension_numbers = #tpu.dot_dimension_numbers<[1], [0], [0], [1], [0, 0, 1, 1], [], []>} : vector<256x32xbf16>, vector<32x64xbf16>, vector<256x64xf32> -> vector<256x64xf32>
    %153 = arith.addf %146, %152 : vector<256x64xf32>
    %c2_117 = arith.constant 2 : index
    %c2_118 = arith.constant 2 : index
    %c0_119 = arith.constant 0 : index
    %154 = vector.load %arg14[%c2_117, %c2_118, %c0_119] : memref<18x18x32xf32, #tpu.memory_space<vmem>>, vector<16x16x32xf32>
    %155 = arith.truncf %154 : vector<16x16x32xf32> to vector<16x16x32xbf16>
    %156 = vector.shape_cast %155 : vector<16x16x32xbf16> to vector<256x32xbf16>
    %c8 = arith.constant 8 : index
    %c0_120 = arith.constant 0 : index
    %c0_121 = arith.constant 0 : index
    %157 = vector.load %arg5[%c8, %c0_120, %c0_121] : memref<9x32x64xbf16, #tpu.memory_space<vmem>>, vector<1x32x64xbf16>
    %158 = vector.shape_cast %157 : vector<1x32x64xbf16> to vector<32x64xbf16>
    %cst_122 = arith.constant dense<0.000000e+00> : vector<256x64xf32>
    %159 = tpu.matmul %156, %158, %cst_122 {dimension_numbers = #tpu.dot_dimension_numbers<[1], [0], [0], [1], [0, 0, 1, 1], [], []>} : vector<256x32xbf16>, vector<32x64xbf16>, vector<256x64xf32> -> vector<256x64xf32>
    %160 = arith.addf %153, %159 : vector<256x64xf32>
    %161 = vector.broadcast %95 : vector<1x64xf32> to vector<256x64xf32>
    %162 = arith.mulf %160, %161 : vector<256x64xf32>
    %163 = vector.broadcast %96 : vector<1x64xf32> to vector<256x64xf32>
    %164 = arith.addf %162, %163 : vector<256x64xf32>
    %cst_123 = arith.constant 0.000000e+00 : f32
    %165 = vector.broadcast %cst_123 : f32 to vector<256x64xf32>
    %166 = arith.maximumf %164, %165 : vector<256x64xf32>
    %167 = vector.shape_cast %166 : vector<256x64xf32> to vector<8x2x16x64xf32>
    %168 = vector.extract_strided_slice %167 {offsets = [0, 0, 0, 0], sizes = [8, 1, 16, 64], strides = [1, 1, 1, 1]} : vector<8x2x16x64xf32> to vector<8x1x16x64xf32>
    %169 = vector.shape_cast %168 : vector<8x1x16x64xf32> to vector<8x16x64xf32>
    %170 = vector.extract_strided_slice %167 {offsets = [0, 1, 0, 0], sizes = [8, 1, 16, 64], strides = [1, 1, 1, 1]} : vector<8x2x16x64xf32> to vector<8x1x16x64xf32>
    %171 = vector.shape_cast %170 : vector<8x1x16x64xf32> to vector<8x16x64xf32>
    %172 = arith.maximumf %169, %171 : vector<8x16x64xf32>
    %173 = vector.shape_cast %172 : vector<8x16x64xf32> to vector<128x64xf32>
    %c0_124 = arith.constant 0 : index
    %c0_125 = arith.constant 0 : index
    %174 = vector.load %arg17[%c0_124, %c0_125] : memref<128x64xf32, #tpu.memory_space<vmem>>, vector<128x64xf32>
    tpu.vector_store %arg17[%c0_124, %c0_125], %173 {strides = array<i32>} : memref<128x64xf32, #tpu.memory_space<vmem>>, vector<128x64xf32>,
    %c0_126 = arith.constant 0 : index
    %c0_127 = arith.constant 0 : index
    %175 = tpu.strided_load %arg17[%c0_126, %c0_127] {strides = array<i32: 2, 1>} : memref<128x64xf32, #tpu.memory_space<vmem>>, vector<64x64xf32>
    %c1_128 = arith.constant 1 : index
    %c0_129 = arith.constant 0 : index
    %176 = tpu.strided_load %arg17[%c1_128, %c0_129] {strides = array<i32: 2, 1>} : memref<128x64xf32, #tpu.memory_space<vmem>>, vector<64x64xf32>
    %177 = arith.maximumf %175, %176 : vector<64x64xf32>
    %178 = vector.shape_cast %177 : vector<64x64xf32> to vector<8x8x64xf32>
    %c1_130 = arith.constant 1 : index
    %c1_131 = arith.constant 1 : index
    %c0_132 = arith.constant 0 : index
    %179 = vector.load %arg15[%c1_130, %c1_131, %c0_132] : memref<10x10x64xf32, #tpu.memory_space<vmem>>, vector<8x8x64xf32>
    tpu.vector_store %arg15[%c1_130, %c1_131, %c0_132], %178 {strides = array<i32>} : memref<10x10x64xf32, #tpu.memory_space<vmem>>, vector<8x8x64xf32>,
    %c0_133 = arith.constant 0 : index
    %c0_134 = arith.constant 0 : index
    %180 = vector.load %arg9[%c0_133, %c0_134] : memref<1x128xf32, #tpu.memory_space<vmem>>, vector<1x128xf32>
    %c0_135 = arith.constant 0 : index
    %c0_136 = arith.constant 0 : index
    %181 = vector.load %arg10[%c0_135, %c0_136] : memref<1x128xf32, #tpu.memory_space<vmem>>, vector<1x128xf32>
    %cst_137 = arith.constant 0.000000e+00 : f32
    %182 = vector.broadcast %cst_137 : f32 to vector<64x128xf32>
    %c0_138 = arith.constant 0 : index
    %c0_139 = arith.constant 0 : index
    %c0_140 = arith.constant 0 : index
    %183 = vector.load %arg15[%c0_138, %c0_139, %c0_140] : memref<10x10x64xf32, #tpu.memory_space<vmem>>, vector<8x8x64xf32>
    %184 = arith.truncf %183 : vector<8x8x64xf32> to vector<8x8x64xbf16>
    %185 = vector.shape_cast %184 : vector<8x8x64xbf16> to vector<64x64xbf16>
    %c0_141 = arith.constant 0 : index
    %c0_142 = arith.constant 0 : index
    %c0_143 = arith.constant 0 : index
    %186 = vector.load %arg8[%c0_141, %c0_142, %c0_143] : memref<9x64x128xbf16, #tpu.memory_space<vmem>>, vector<1x64x128xbf16>
    %187 = vector.shape_cast %186 : vector<1x64x128xbf16> to vector<64x128xbf16>
    %cst_144 = arith.constant dense<0.000000e+00> : vector<64x128xf32>
    %188 = tpu.matmul %185, %187, %cst_144 {dimension_numbers = #tpu.dot_dimension_numbers<[1], [0], [0], [1], [0, 0, 1, 1], [], []>} : vector<64x64xbf16>, vector<64x128xbf16>, vector<64x128xf32> -> vector<64x128xf32>
    %189 = arith.addf %182, %188 : vector<64x128xf32>
    %c0_145 = arith.constant 0 : index
    %c1_146 = arith.constant 1 : index
    %c0_147 = arith.constant 0 : index
    %190 = vector.load %arg15[%c0_145, %c1_146, %c0_147] : memref<10x10x64xf32, #tpu.memory_space<vmem>>, vector<8x8x64xf32>
    %191 = arith.truncf %190 : vector<8x8x64xf32> to vector<8x8x64xbf16>
    %192 = vector.shape_cast %191 : vector<8x8x64xbf16> to vector<64x64xbf16>
    %c1_148 = arith.constant 1 : index
    %c0_149 = arith.constant 0 : index
    %c0_150 = arith.constant 0 : index
    %193 = vector.load %arg8[%c1_148, %c0_149, %c0_150] : memref<9x64x128xbf16, #tpu.memory_space<vmem>>, vector<1x64x128xbf16>
    %194 = vector.shape_cast %193 : vector<1x64x128xbf16> to vector<64x128xbf16>
    %cst_151 = arith.constant dense<0.000000e+00> : vector<64x128xf32>
    %195 = tpu.matmul %192, %194, %cst_151 {dimension_numbers = #tpu.dot_dimension_numbers<[1], [0], [0], [1], [0, 0, 1, 1], [], []>} : vector<64x64xbf16>, vector<64x128xbf16>, vector<64x128xf32> -> vector<64x128xf32>
    %196 = arith.addf %189, %195 : vector<64x128xf32>
    %c0_152 = arith.constant 0 : index
    %c2_153 = arith.constant 2 : index
    %c0_154 = arith.constant 0 : index
    %197 = vector.load %arg15[%c0_152, %c2_153, %c0_154] : memref<10x10x64xf32, #tpu.memory_space<vmem>>, vector<8x8x64xf32>
    %198 = arith.truncf %197 : vector<8x8x64xf32> to vector<8x8x64xbf16>
    %199 = vector.shape_cast %198 : vector<8x8x64xbf16> to vector<64x64xbf16>
    %c2_155 = arith.constant 2 : index
    %c0_156 = arith.constant 0 : index
    %c0_157 = arith.constant 0 : index
    %200 = vector.load %arg8[%c2_155, %c0_156, %c0_157] : memref<9x64x128xbf16, #tpu.memory_space<vmem>>, vector<1x64x128xbf16>
    %201 = vector.shape_cast %200 : vector<1x64x128xbf16> to vector<64x128xbf16>
    %cst_158 = arith.constant dense<0.000000e+00> : vector<64x128xf32>
    %202 = tpu.matmul %199, %201, %cst_158 {dimension_numbers = #tpu.dot_dimension_numbers<[1], [0], [0], [1], [0, 0, 1, 1], [], []>} : vector<64x64xbf16>, vector<64x128xbf16>, vector<64x128xf32> -> vector<64x128xf32>
    %203 = arith.addf %196, %202 : vector<64x128xf32>
    %c1_159 = arith.constant 1 : index
    %c0_160 = arith.constant 0 : index
    %c0_161 = arith.constant 0 : index
    %204 = vector.load %arg15[%c1_159, %c0_160, %c0_161] : memref<10x10x64xf32, #tpu.memory_space<vmem>>, vector<8x8x64xf32>
    %205 = arith.truncf %204 : vector<8x8x64xf32> to vector<8x8x64xbf16>
    %206 = vector.shape_cast %205 : vector<8x8x64xbf16> to vector<64x64xbf16>
    %c3_162 = arith.constant 3 : index
    %c0_163 = arith.constant 0 : index
    %c0_164 = arith.constant 0 : index
    %207 = vector.load %arg8[%c3_162, %c0_163, %c0_164] : memref<9x64x128xbf16, #tpu.memory_space<vmem>>, vector<1x64x128xbf16>
    %208 = vector.shape_cast %207 : vector<1x64x128xbf16> to vector<64x128xbf16>
    %cst_165 = arith.constant dense<0.000000e+00> : vector<64x128xf32>
    %209 = tpu.matmul %206, %208, %cst_165 {dimension_numbers = #tpu.dot_dimension_numbers<[1], [0], [0], [1], [0, 0, 1, 1], [], []>} : vector<64x64xbf16>, vector<64x128xbf16>, vector<64x128xf32> -> vector<64x128xf32>
    %210 = arith.addf %203, %209 : vector<64x128xf32>
    %c1_166 = arith.constant 1 : index
    %c1_167 = arith.constant 1 : index
    %c0_168 = arith.constant 0 : index
    %211 = vector.load %arg15[%c1_166, %c1_167, %c0_168] : memref<10x10x64xf32, #tpu.memory_space<vmem>>, vector<8x8x64xf32>
    %212 = arith.truncf %211 : vector<8x8x64xf32> to vector<8x8x64xbf16>
    %213 = vector.shape_cast %212 : vector<8x8x64xbf16> to vector<64x64xbf16>
    %c4_169 = arith.constant 4 : index
    %c0_170 = arith.constant 0 : index
    %c0_171 = arith.constant 0 : index
    %214 = vector.load %arg8[%c4_169, %c0_170, %c0_171] : memref<9x64x128xbf16, #tpu.memory_space<vmem>>, vector<1x64x128xbf16>
    %215 = vector.shape_cast %214 : vector<1x64x128xbf16> to vector<64x128xbf16>
    %cst_172 = arith.constant dense<0.000000e+00> : vector<64x128xf32>
    %216 = tpu.matmul %213, %215, %cst_172 {dimension_numbers = #tpu.dot_dimension_numbers<[1], [0], [0], [1], [0, 0, 1, 1], [], []>} : vector<64x64xbf16>, vector<64x128xbf16>, vector<64x128xf32> -> vector<64x128xf32>
    %217 = arith.addf %210, %216 : vector<64x128xf32>
    %c1_173 = arith.constant 1 : index
    %c2_174 = arith.constant 2 : index
    %c0_175 = arith.constant 0 : index
    %218 = vector.load %arg15[%c1_173, %c2_174, %c0_175] : memref<10x10x64xf32, #tpu.memory_space<vmem>>, vector<8x8x64xf32>
    %219 = arith.truncf %218 : vector<8x8x64xf32> to vector<8x8x64xbf16>
    %220 = vector.shape_cast %219 : vector<8x8x64xbf16> to vector<64x64xbf16>
    %c5_176 = arith.constant 5 : index
    %c0_177 = arith.constant 0 : index
    %c0_178 = arith.constant 0 : index
    %221 = vector.load %arg8[%c5_176, %c0_177, %c0_178] : memref<9x64x128xbf16, #tpu.memory_space<vmem>>, vector<1x64x128xbf16>
    %222 = vector.shape_cast %221 : vector<1x64x128xbf16> to vector<64x128xbf16>
    %cst_179 = arith.constant dense<0.000000e+00> : vector<64x128xf32>
    %223 = tpu.matmul %220, %222, %cst_179 {dimension_numbers = #tpu.dot_dimension_numbers<[1], [0], [0], [1], [0, 0, 1, 1], [], []>} : vector<64x64xbf16>, vector<64x128xbf16>, vector<64x128xf32> -> vector<64x128xf32>
    %224 = arith.addf %217, %223 : vector<64x128xf32>
    %c2_180 = arith.constant 2 : index
    %c0_181 = arith.constant 0 : index
    %c0_182 = arith.constant 0 : index
    %225 = vector.load %arg15[%c2_180, %c0_181, %c0_182] : memref<10x10x64xf32, #tpu.memory_space<vmem>>, vector<8x8x64xf32>
    %226 = arith.truncf %225 : vector<8x8x64xf32> to vector<8x8x64xbf16>
    %227 = vector.shape_cast %226 : vector<8x8x64xbf16> to vector<64x64xbf16>
    %c6_183 = arith.constant 6 : index
    %c0_184 = arith.constant 0 : index
    %c0_185 = arith.constant 0 : index
    %228 = vector.load %arg8[%c6_183, %c0_184, %c0_185] : memref<9x64x128xbf16, #tpu.memory_space<vmem>>, vector<1x64x128xbf16>
    %229 = vector.shape_cast %228 : vector<1x64x128xbf16> to vector<64x128xbf16>
    %cst_186 = arith.constant dense<0.000000e+00> : vector<64x128xf32>
    %230 = tpu.matmul %227, %229, %cst_186 {dimension_numbers = #tpu.dot_dimension_numbers<[1], [0], [0], [1], [0, 0, 1, 1], [], []>} : vector<64x64xbf16>, vector<64x128xbf16>, vector<64x128xf32> -> vector<64x128xf32>
    %231 = arith.addf %224, %230 : vector<64x128xf32>
    %c2_187 = arith.constant 2 : index
    %c1_188 = arith.constant 1 : index
    %c0_189 = arith.constant 0 : index
    %232 = vector.load %arg15[%c2_187, %c1_188, %c0_189] : memref<10x10x64xf32, #tpu.memory_space<vmem>>, vector<8x8x64xf32>
    %233 = arith.truncf %232 : vector<8x8x64xf32> to vector<8x8x64xbf16>
    %234 = vector.shape_cast %233 : vector<8x8x64xbf16> to vector<64x64xbf16>
    %c7_190 = arith.constant 7 : index
    %c0_191 = arith.constant 0 : index
    %c0_192 = arith.constant 0 : index
    %235 = vector.load %arg8[%c7_190, %c0_191, %c0_192] : memref<9x64x128xbf16, #tpu.memory_space<vmem>>, vector<1x64x128xbf16>
    %236 = vector.shape_cast %235 : vector<1x64x128xbf16> to vector<64x128xbf16>
    %cst_193 = arith.constant dense<0.000000e+00> : vector<64x128xf32>
    %237 = tpu.matmul %234, %236, %cst_193 {dimension_numbers = #tpu.dot_dimension_numbers<[1], [0], [0], [1], [0, 0, 1, 1], [], []>} : vector<64x64xbf16>, vector<64x128xbf16>, vector<64x128xf32> -> vector<64x128xf32>
    %238 = arith.addf %231, %237 : vector<64x128xf32>
    %c2_194 = arith.constant 2 : index
    %c2_195 = arith.constant 2 : index
    %c0_196 = arith.constant 0 : index
    %239 = vector.load %arg15[%c2_194, %c2_195, %c0_196] : memref<10x10x64xf32, #tpu.memory_space<vmem>>, vector<8x8x64xf32>
    %240 = arith.truncf %239 : vector<8x8x64xf32> to vector<8x8x64xbf16>
    %241 = vector.shape_cast %240 : vector<8x8x64xbf16> to vector<64x64xbf16>
    %c8_197 = arith.constant 8 : index
    %c0_198 = arith.constant 0 : index
    %c0_199 = arith.constant 0 : index
    %242 = vector.load %arg8[%c8_197, %c0_198, %c0_199] : memref<9x64x128xbf16, #tpu.memory_space<vmem>>, vector<1x64x128xbf16>
    %243 = vector.shape_cast %242 : vector<1x64x128xbf16> to vector<64x128xbf16>
    %cst_200 = arith.constant dense<0.000000e+00> : vector<64x128xf32>
    %244 = tpu.matmul %241, %243, %cst_200 {dimension_numbers = #tpu.dot_dimension_numbers<[1], [0], [0], [1], [0, 0, 1, 1], [], []>} : vector<64x64xbf16>, vector<64x128xbf16>, vector<64x128xf32> -> vector<64x128xf32>
    %245 = arith.addf %238, %244 : vector<64x128xf32>
    %246 = vector.broadcast %180 : vector<1x128xf32> to vector<64x128xf32>
    %247 = arith.mulf %245, %246 : vector<64x128xf32>
    %248 = vector.broadcast %181 : vector<1x128xf32> to vector<64x128xf32>
    %249 = arith.addf %247, %248 : vector<64x128xf32>
    %cst_201 = arith.constant 0.000000e+00 : f32
    %250 = vector.broadcast %cst_201 : f32 to vector<64x128xf32>
    %251 = arith.maximumf %249, %250 : vector<64x128xf32>
    %252 = vector.shape_cast %251 : vector<64x128xf32> to vector<4x2x8x128xf32>
    %253 = vector.extract_strided_slice %252 {offsets = [0, 0, 0, 0], sizes = [4, 1, 8, 128], strides = [1, 1, 1, 1]} : vector<4x2x8x128xf32> to vector<4x1x8x128xf32>
    %254 = vector.shape_cast %253 : vector<4x1x8x128xf32> to vector<4x8x128xf32>
    %255 = vector.extract_strided_slice %252 {offsets = [0, 1, 0, 0], sizes = [4, 1, 8, 128], strides = [1, 1, 1, 1]} : vector<4x2x8x128xf32> to vector<4x1x8x128xf32>
    %256 = vector.shape_cast %255 : vector<4x1x8x128xf32> to vector<4x8x128xf32>
    %257 = arith.maximumf %254, %256 : vector<4x8x128xf32>
    %258 = vector.shape_cast %257 : vector<4x8x128xf32> to vector<32x128xf32>
    %c0_202 = arith.constant 0 : index
    %c0_203 = arith.constant 0 : index
    %259 = vector.load %arg18[%c0_202, %c0_203] : memref<32x128xf32, #tpu.memory_space<vmem>>, vector<32x128xf32>
    tpu.vector_store %arg18[%c0_202, %c0_203], %258 {strides = array<i32>} : memref<32x128xf32, #tpu.memory_space<vmem>>, vector<32x128xf32>,
    %c0_204 = arith.constant 0 : index
    %c0_205 = arith.constant 0 : index
    %260 = tpu.strided_load %arg18[%c0_204, %c0_205] {strides = array<i32: 2, 1>} : memref<32x128xf32, #tpu.memory_space<vmem>>, vector<16x128xf32>
    %c1_206 = arith.constant 1 : index
    %c0_207 = arith.constant 0 : index
    %261 = tpu.strided_load %arg18[%c1_206, %c0_207] {strides = array<i32: 2, 1>} : memref<32x128xf32, #tpu.memory_space<vmem>>, vector<16x128xf32>
    %262 = arith.maximumf %260, %261 : vector<16x128xf32>
    %263 = vector.shape_cast %262 : vector<16x128xf32> to vector<4x4x128xf32>
    %cst_208 = arith.constant 0.000000e+00 : f32
    %264 = vector.broadcast %cst_208 : f32 to vector<4x64xf32>
    %265 = vector.extract_strided_slice %263 {offsets = [0, 0, 0], sizes = [1, 4, 128], strides = [1, 1, 1]} : vector<4x4x128xf32> to vector<1x4x128xf32>
    %266 = vector.shape_cast %265 : vector<1x4x128xf32> to vector<4x128xf32>
    %267 = arith.truncf %266 : vector<4x128xf32> to vector<4x128xbf16>
    %c0_209 = arith.constant 0 : index
    %c0_210 = arith.constant 0 : index
    %c0_211 = arith.constant 0 : index
    %268 = vector.load %arg11[%c0_209, %c0_210, %c0_211] : memref<4x128x64xbf16, #tpu.memory_space<vmem>>, vector<1x128x64xbf16>
    %269 = vector.shape_cast %268 : vector<1x128x64xbf16> to vector<128x64xbf16>
    %cst_212 = arith.constant dense<0.000000e+00> : vector<4x64xf32>
    %270 = tpu.matmul %267, %269, %cst_212 {dimension_numbers = #tpu.dot_dimension_numbers<[1], [0], [0], [1], [0, 0, 1, 1], [], []>} : vector<4x128xbf16>, vector<128x64xbf16>, vector<4x64xf32> -> vector<4x64xf32>
    %271 = arith.addf %264, %270 : vector<4x64xf32>
    %272 = vector.extract_strided_slice %263 {offsets = [1, 0, 0], sizes = [1, 4, 128], strides = [1, 1, 1]} : vector<4x4x128xf32> to vector<1x4x128xf32>
    %273 = vector.shape_cast %272 : vector<1x4x128xf32> to vector<4x128xf32>
    %274 = arith.truncf %273 : vector<4x128xf32> to vector<4x128xbf16>
    %c1_213 = arith.constant 1 : index
    %c0_214 = arith.constant 0 : index
    %c0_215 = arith.constant 0 : index
    %275 = vector.load %arg11[%c1_213, %c0_214, %c0_215] : memref<4x128x64xbf16, #tpu.memory_space<vmem>>, vector<1x128x64xbf16>
    %276 = vector.shape_cast %275 : vector<1x128x64xbf16> to vector<128x64xbf16>
    %cst_216 = arith.constant dense<0.000000e+00> : vector<4x64xf32>
    %277 = tpu.matmul %274, %276, %cst_216 {dimension_numbers = #tpu.dot_dimension_numbers<[1], [0], [0], [1], [0, 0, 1, 1], [], []>} : vector<4x128xbf16>, vector<128x64xbf16>, vector<4x64xf32> -> vector<4x64xf32>
    %278 = arith.addf %271, %277 : vector<4x64xf32>
    %279 = vector.extract_strided_slice %263 {offsets = [2, 0, 0], sizes = [1, 4, 128], strides = [1, 1, 1]} : vector<4x4x128xf32> to vector<1x4x128xf32>
    %280 = vector.shape_cast %279 : vector<1x4x128xf32> to vector<4x128xf32>
    %281 = arith.truncf %280 : vector<4x128xf32> to vector<4x128xbf16>
    %c2_217 = arith.constant 2 : index
    %c0_218 = arith.constant 0 : index
    %c0_219 = arith.constant 0 : index
    %282 = vector.load %arg11[%c2_217, %c0_218, %c0_219] : memref<4x128x64xbf16, #tpu.memory_space<vmem>>, vector<1x128x64xbf16>
    %283 = vector.shape_cast %282 : vector<1x128x64xbf16> to vector<128x64xbf16>
    %cst_220 = arith.constant dense<0.000000e+00> : vector<4x64xf32>
    %284 = tpu.matmul %281, %283, %cst_220 {dimension_numbers = #tpu.dot_dimension_numbers<[1], [0], [0], [1], [0, 0, 1, 1], [], []>} : vector<4x128xbf16>, vector<128x64xbf16>, vector<4x64xf32> -> vector<4x64xf32>
    %285 = arith.addf %278, %284 : vector<4x64xf32>
    %286 = vector.extract_strided_slice %263 {offsets = [3, 0, 0], sizes = [1, 4, 128], strides = [1, 1, 1]} : vector<4x4x128xf32> to vector<1x4x128xf32>
    %287 = vector.shape_cast %286 : vector<1x4x128xf32> to vector<4x128xf32>
    %288 = arith.truncf %287 : vector<4x128xf32> to vector<4x128xbf16>
    %c3_221 = arith.constant 3 : index
    %c0_222 = arith.constant 0 : index
    %c0_223 = arith.constant 0 : index
    %289 = vector.load %arg11[%c3_221, %c0_222, %c0_223] : memref<4x128x64xbf16, #tpu.memory_space<vmem>>, vector<1x128x64xbf16>
    %290 = vector.shape_cast %289 : vector<1x128x64xbf16> to vector<128x64xbf16>
    %cst_224 = arith.constant dense<0.000000e+00> : vector<4x64xf32>
    %291 = tpu.matmul %288, %290, %cst_224 {dimension_numbers = #tpu.dot_dimension_numbers<[1], [0], [0], [1], [0, 0, 1, 1], [], []>} : vector<4x128xbf16>, vector<128x64xbf16>, vector<4x64xf32> -> vector<4x64xf32>
    %292 = arith.addf %285, %291 : vector<4x64xf32>
    %c0_225 = arith.constant 0 : index
    %c0_226 = arith.constant 0 : index
    %293 = vector.load %arg12[%c0_225, %c0_226] : memref<1x64xf32, #tpu.memory_space<vmem>>, vector<1x64xf32>
    %294 = vector.broadcast %293 : vector<1x64xf32> to vector<4x64xf32>
    %295 = arith.addf %292, %294 : vector<4x64xf32>
    %cst_227 = arith.constant 0.000000e+00 : f32
    %296 = vector.broadcast %cst_227 : f32 to vector<4x64xf32>
    %297 = arith.maximumf %295, %296 : vector<4x64xf32>
    %c0_228 = arith.constant 0 : index
    %c0_229 = arith.constant 0 : index
    %c0_230 = arith.constant 0 : index
    %298 = vector.load %arg13[%c0_228, %c0_229, %c0_230] : memref<1x4x64xf32, #tpu.memory_space<vmem>>, vector<1x4x64xf32>
    %299 = vector.shape_cast %298 : vector<1x4x64xf32> to vector<4x64xf32>
    %300 = vector.shape_cast %297 : vector<4x64xf32> to vector<1x4x64xf32>
    tpu.vector_store %arg13[%c0_228, %c0_229, %c0_230], %300 {strides = array<i32>} : memref<1x4x64xf32, #tpu.memory_space<vmem>>, vector<1x4x64xf32>,
    return
  }
  func.func @transform_0(%arg0: i32) -> (i32, i32, i32) {
    %c0_i32 = arith.constant 0 : i32
    %c0_i32_0 = arith.constant 0 : i32
    %c0_i32_1 = arith.constant 0 : i32
    return %arg0, %c0_i32, %c0_i32_0 : i32, i32, i32
  }
  func.func @transform_1(%arg0: i32) -> (i32, i32) {
    %c0_i32 = arith.constant 0 : i32
    %c0_i32_0 = arith.constant 0 : i32
    %c0_i32_1 = arith.constant 0 : i32
    return %c0_i32, %c0_i32_0 : i32, i32
  }
  func.func @transform_2(%arg0: i32) -> (i32, i32) {
    %c0_i32 = arith.constant 0 : i32
    %c0_i32_0 = arith.constant 0 : i32
    %c0_i32_1 = arith.constant 0 : i32
    return %c0_i32, %c0_i32_0 : i32, i32
  }
  func.func @transform_3(%arg0: i32) -> (i32, i32) {
    %c0_i32 = arith.constant 0 : i32
    %c0_i32_0 = arith.constant 0 : i32
    %c0_i32_1 = arith.constant 0 : i32
    return %c0_i32, %c0_i32_0 : i32, i32
  }
  func.func @transform_4(%arg0: i32) -> (i32, i32, i32) {
    %c0_i32 = arith.constant 0 : i32
    %c0_i32_0 = arith.constant 0 : i32
    %c0_i32_1 = arith.constant 0 : i32
    %c0_i32_2 = arith.constant 0 : i32
    return %c0_i32, %c0_i32_0, %c0_i32_1 : i32, i32, i32
  }
  func.func @transform_5(%arg0: i32) -> (i32, i32) {
    %c0_i32 = arith.constant 0 : i32
    %c0_i32_0 = arith.constant 0 : i32
    %c0_i32_1 = arith.constant 0 : i32
    return %c0_i32, %c0_i32_0 : i32, i32
  }
  func.func @transform_6(%arg0: i32) -> (i32, i32) {
    %c0_i32 = arith.constant 0 : i32
    %c0_i32_0 = arith.constant 0 : i32
    %c0_i32_1 = arith.constant 0 : i32
    return %c0_i32, %c0_i32_0 : i32, i32
  }
  func.func @transform_7(%arg0: i32) -> (i32, i32, i32) {
    %c0_i32 = arith.constant 0 : i32
    %c0_i32_0 = arith.constant 0 : i32
    %c0_i32_1 = arith.constant 0 : i32
    %c0_i32_2 = arith.constant 0 : i32
    return %c0_i32, %c0_i32_0, %c0_i32_1 : i32, i32, i32
  }
  func.func @transform_8(%arg0: i32) -> (i32, i32) {
    %c0_i32 = arith.constant 0 : i32
    %c0_i32_0 = arith.constant 0 : i32
    %c0_i32_1 = arith.constant 0 : i32
    return %c0_i32, %c0_i32_0 : i32, i32
  }
  func.func @transform_9(%arg0: i32) -> (i32, i32) {
    %c0_i32 = arith.constant 0 : i32
    %c0_i32_0 = arith.constant 0 : i32
    %c0_i32_1 = arith.constant 0 : i32
    return %c0_i32, %c0_i32_0 : i32, i32
  }
  func.func @transform_10(%arg0: i32) -> (i32, i32, i32) {
    %c0_i32 = arith.constant 0 : i32
    %c0_i32_0 = arith.constant 0 : i32
    %c0_i32_1 = arith.constant 0 : i32
    %c0_i32_2 = arith.constant 0 : i32
    return %c0_i32, %c0_i32_0, %c0_i32_1 : i32, i32, i32
  }
  func.func @transform_11(%arg0: i32) -> (i32, i32) {
    %c0_i32 = arith.constant 0 : i32
    %c0_i32_0 = arith.constant 0 : i32
    %c0_i32_1 = arith.constant 0 : i32
    return %c0_i32, %c0_i32_0 : i32, i32
  }
  func.func @transform_12(%arg0: i32) -> (i32, i32, i32) {
    %c0_i32 = arith.constant 0 : i32
    %c0_i32_0 = arith.constant 0 : i32
    %c0_i32_1 = arith.constant 0 : i32
    return %arg0, %c0_i32, %c0_i32_0 : i32, i32, i32
  }
}

</mosaic_0001>

<llo_original>
// kernel: overall_forward.3
$region0: #{overall_forward.3}
  #allocation0 [shape = 'u32[]', space=smem, size = 0x4, offset = 0x4, fixed_abs, tag = 'smem constant byte address 0x4 - core index']
  #allocation1 [shape = 'u32[144,128]{1,0:T(1,128)}', space=vmem, size = 0x12000, scoped, tag = 'internal scratch']
  %s0 = inlined_call_operand.vmem [shape: f32[2,4,64], index: 0, kind: input, shape index: {}]
  %s1 = inlined_call_operand.vmem [shape: bf16[64,128], index: 1, kind: input, shape index: {}]
  %s2 = inlined_call_operand.vmem [shape: bf16[32,128], index: 2, kind: input, shape index: {}]
  %s3 = inlined_call_operand.vmem [shape: f32[1,128], index: 3, kind: input, shape index: {}]
  %s4 = inlined_call_operand.vmem [shape: bf16[64,128], index: 4, kind: input, shape index: {}]
  %s5 = inlined_call_operand.vmem [shape: bf16[32,128], index: 5, kind: input, shape index: {}]
  %s6 = inlined_call_operand.vmem [shape: f32[1,128], index: 6, kind: input, shape index: {}]
  %s7 = inlined_call_operand.vmem [shape: bf16[64,128], index: 7, kind: input, shape index: {}]
  %s8 = inlined_call_operand.vmem [shape: bf16[32,128], index: 8, kind: input, shape index: {}]
  %s9 = inlined_call_operand.vmem [shape: f32[1,128], index: 9, kind: input, shape index: {}]
  %s10 = inlined_call_operand.vmem [shape: bf16[64,128], index: 10, kind: input, shape index: {}]
  %s11 = inlined_call_operand.vmem [shape: bf16[32,128], index: 11, kind: input, shape index: {}]
  %s12 = inlined_call_operand.vmem [shape: f32[1,128], index: 12, kind: input, shape index: {}]
  %s13 = inlined_call_operand.vmem [shape: bf16[64,16], index: 13, kind: input, shape index: {}]
  %s14 = inlined_call_operand.vmem [shape: f32[1,16], index: 14, kind: input, shape index: {}]
  %s15 = inlined_call_operand.hbm [shape: f32[2,4,16], index: 15, kind: output, shape index: {}]
  %s16 = sld [smem:[#allocation0]]
  $region70: #{overall_forward.3} parent=0
    _
  %s18 = ssub.s32 1, %s16
  %s19 = scalar_select 0, %s18, %s16
  $region1: #{overall_forward.3} parent=0
    #allocation2 [shape = 'u8[4096]{0}', space=vmem, size = 0x1000, scoped, tag = 'output window, operand 0, single buffered']
    #allocation3 [shape = 's32[1]{0}', space=sflag, size = 0x4, scoped, tag = 'scoped memory for overall_forward.3']
    %20 = vsyncpa [#allocation3], 0
    // Predicated region
    $region2: #{overall_forward.3} parent=1 // pred_check
      _
    $region3: #{overall_forward.3} parent=1 // pred_check_branch
      %22 = sbr.rel (0) target = $region5
    $region4: #{overall_forward.3} parent=1 // pred_region
      _
    $region5: #{overall_forward.3} parent=1 // pred_fallthru
      _
    // Predicated region
    $region6: #{overall_forward.3} parent=1 // pred_check
      _
    $region7: #{overall_forward.3} parent=1 // pred_check_branch
      %24 = sbr.rel (0) target = $region9
    $region8: #{overall_forward.3} parent=1 // pred_region
      _
    $region9: #{overall_forward.3} parent=1 // pred_fallthru
      _
    // Predicated region
    $region10: #{overall_forward.3} parent=1 // pred_check
      _
    $region11: #{overall_forward.3} parent=1 // pred_check_branch
      %26 = sbr.rel (0) target = $region13
    $region12: #{overall_forward.3} parent=1 // pred_region
      _
    $region13: #{overall_forward.3} parent=1 // pred_fallthru
      _
    // Predicated region
    $region14: #{overall_forward.3} parent=1 // pred_check
      _
    $region15: #{overall_forward.3} parent=1 // pred_check_branch
      %28 = sbr.rel (0) target = $region17
    $region16: #{overall_forward.3} parent=1 // pred_region
      _
    $region17: #{overall_forward.3} parent=1 // pred_fallthru
      _
    // Predicated region
    $region18: #{overall_forward.3} parent=1 // pred_check
      _
    $region19: #{overall_forward.3} parent=1 // pred_check_branch
      %30 = sbr.rel (0) target = $region21
    $region20: #{overall_forward.3} parent=1 // pred_region
      _
    $region21: #{overall_forward.3} parent=1 // pred_fallthru
      _
    // Predicated region
    $region22: #{overall_forward.3} parent=1 // pred_check
      _
    $region23: #{overall_forward.3} parent=1 // pred_check_branch
      %32 = sbr.rel (0) target = $region25
    $region24: #{overall_forward.3} parent=1 // pred_region
      _
    $region25: #{overall_forward.3} parent=1 // pred_fallthru
      _
    // Predicated region
    $region26: #{overall_forward.3} parent=1 // pred_check
      _
    $region27: #{overall_forward.3} parent=1 // pred_check_branch
      %34 = sbr.rel (0) target = $region29
    $region28: #{overall_forward.3} parent=1 // pred_region
      _
    $region29: #{overall_forward.3} parent=1 // pred_fallthru
      _
    // Predicated region
    $region30: #{overall_forward.3} parent=1 // pred_check
      _
    $region31: #{overall_forward.3} parent=1 // pred_check_branch
      %36 = sbr.rel (0) target = $region33
    $region32: #{overall_forward.3} parent=1 // pred_region
      _
    $region33: #{overall_forward.3} parent=1 // pred_fallthru
      _
    // Predicated region
    $region34: #{overall_forward.3} parent=1 // pred_check
      _
    $region35: #{overall_forward.3} parent=1 // pred_check_branch
      %38 = sbr.rel (0) target = $region37
    $region36: #{overall_forward.3} parent=1 // pred_region
      _
    $region37: #{overall_forward.3} parent=1 // pred_fallthru
      _
    // Predicated region
    $region38: #{overall_forward.3} parent=1 // pred_check
      _
    $region39: #{overall_forward.3} parent=1 // pred_check_branch
      %40 = sbr.rel (0) target = $region41
    $region40: #{overall_forward.3} parent=1 // pred_region
      _
    $region41: #{overall_forward.3} parent=1 // pred_fallthru
      _
    // Predicated region
    $region42: #{overall_forward.3} parent=1 // pred_check
      _
    $region43: #{overall_forward.3} parent=1 // pred_check_branch
      %42 = sbr.rel (0) target = $region45
    $region44: #{overall_forward.3} parent=1 // pred_region
      _
    $region45: #{overall_forward.3} parent=1 // pred_fallthru
      _
    // Predicated region
    $region46: #{overall_forward.3} parent=1 // pred_check
      _
    $region47: #{overall_forward.3} parent=1 // pred_check_branch
      %44 = sbr.rel (0) target = $region49
    $region48: #{overall_forward.3} parent=1 // pred_region
      _
    $region49: #{overall_forward.3} parent=1 // pred_fallthru
      _
    // Predicated region
    $region50: #{overall_forward.3} parent=1 // pred_check
      _
    $region51: #{overall_forward.3} parent=1 // pred_check_branch
      %46 = sbr.rel (0) target = $region53
    $region52: #{overall_forward.3} parent=1 // pred_region
      _
    $region53: #{overall_forward.3} parent=1 // pred_fallthru
      _
    // Predicated region
    $region54: #{overall_forward.3} parent=1 // pred_check
      _
    $region55: #{overall_forward.3} parent=1 // pred_check_branch
      %48 = sbr.rel (0) target = $region57
    $region56: #{overall_forward.3} parent=1 // pred_region
      _
    $region57: #{overall_forward.3} parent=1 // pred_fallthru
      _
    // Predicated region
    $region58: #{overall_forward.3} parent=1 // pred_check
      _
    $region59: #{overall_forward.3} parent=1 // pred_check_branch
      %50 = sbr.rel (0) target = $region61
    $region60: #{overall_forward.3} parent=1 // pred_region
      _
    $region61: #{overall_forward.3} parent=1 // pred_fallthru
      _
    %v52 = vld [vmem:[%s0] sm:$0x1]
    %v53 = vld [vmem:[%s0 + $0x4] sm:$0x1]
    %v54 = vld [vmem:[%s0 + $0x1] sm:$0x1]
    %v55 = vld [vmem:[%s0 + $0x5] sm:$0x1]
    %v56 = vld [vmem:[%s0 + $0x2] sm:$0x1]
    %v57 = vld [vmem:[%s0 + $0x6] sm:$0x1]
    %v58 = vld [vmem:[%s0 + $0x3] sm:$0x1]
    %v59 = vld [vmem:[%s0 + $0x7] sm:$0x1]
    %v62 = vrot.slane %v53, 7
    %vm63 = vcmask 1041409
    %v64 = vsel %vm63, %v62, %v52
    %v68 = vrot.slane %v54, 6
    %v69 = vrot.slane %v55, 5
    %vm70 = vcmask 1043459
    %v71 = vsel %vm70, %v69, %v68
    %v75 = vrot.slane %v56, 4
    %v76 = vrot.slane %v57, 3
    %vm77 = vcmask 1045509
    %v78 = vsel %vm77, %v76, %v75
    %v82 = vrot.slane %v58, 2
    %v83 = vrot.slane %v59, 1
    %vm84 = vcmask 1047559
    %v85 = vsel %vm84, %v83, %v82
    %vm87 = vcmask 1041408
    %v88 = vsel %vm87, %v64, %v71
    %vm89 = vcmask 1043456
    %v90 = vsel %vm89, %v88, %v78
    %vm91 = vcmask 1045504
    %v92 = vsel %vm91, %v90, %v85
    %v93 = vpack.c.bf16 %v92, %v92
    %v94 = vld [vmem:[%s1] sm:$0xf]
    %v95 = vld [vmem:[%s1 + $0x4] sm:$0xf]
    %v96 = vld [vmem:[%s1 + $0x8] sm:$0xf]
    %v97 = vld [vmem:[%s1 + $0xc] sm:$0xf]
    %v98 = vld [vmem:[%s1 + $0x10] sm:$0xf]
    %v99 = vld [vmem:[%s1 + $0x14] sm:$0xf]
    %v100 = vld [vmem:[%s1 + $0x18] sm:$0xf]
    %v101 = vld [vmem:[%s1 + $0x1c] sm:$0xf]
    %v102 = vld [vmem:[%s4] sm:$0xf]
    %v103 = vld [vmem:[%s4 + $0x4] sm:$0xf]
    %v104 = vld [vmem:[%s4 + $0x8] sm:$0xf]
    %v105 = vld [vmem:[%s4 + $0xc] sm:$0xf]
    %v106 = vld [vmem:[%s4 + $0x10] sm:$0xf]
    %v107 = vld [vmem:[%s4 + $0x14] sm:$0xf]
    %v108 = vld [vmem:[%s4 + $0x18] sm:$0xf]
    %v109 = vld [vmem:[%s4 + $0x1c] sm:$0xf]
    %v110 = vld [vmem:[%s3] sm:$0x1]
    %v112 = vlaneseq
    %v113 = vshrl.u32 %v112, 7
    %v114 = vsub.s32 0, %v113
    %v115 = vrot.slane %v110, %v114
    %v125 = vunpack.c.l.b16 %v94
    %v126 = vunpack.c.l.b16 %v95
    %v127 = vunpack.c.l.b16 %v96
    %v128 = vunpack.c.l.b16 %v97
    %v129 = vunpack.c.l.b16 %v98
    %v130 = vunpack.c.l.b16 %v99
    %v131 = vunpack.c.l.b16 %v100
    %v132 = vunpack.c.l.b16 %v101
    %v133 = vpack.c.b16 %v126, %v125
    %v134 = vpack.c.b16 %v128, %v127
    %v135 = vpack.c.b16 %v130, %v129
    %v136 = vpack.c.b16 %v132, %v131
    %vm141 = vcmask 523264
    %v143 = vsel %vm141, %v93, 0
    %145 = vmatprep.subr.bf16.mxu0 0
    %146 = vmatpush1.bf16.msra.mxu0 %v133
    %147 = vmatprep.subr.bf16.mxu0 0
    %148 = vmatpush1.bf16.msra.mxu0 %v134
    %149 = vmatprep.subr.bf16.mxu0 0
    %150 = vmatpush1.bf16.msra.mxu0 %v135
    %151 = vmatprep.subr.bf16.mxu0 0
    %152 = vmatpush1.bf16.msra.mxu0 %v136
    %153 = vmatprep.subr.bf16.mxu0 0
    %154 = vmatpush1.bf16.msra.mxu0 0
    %155 = vmatprep.subr.bf16.mxu0 0
    %156 = vmatpush1.bf16.msra.mxu0 0
    %157 = vmatprep.subr.bf16.mxu0 0
    %158 = vmatpush1.bf16.msra.mxu0 0
    %159 = vmatprep.subr.bf16.mxu0 0
    %160 = vmatpush1.bf16.msra.mxu0 0
    %161 = vmatprep.subr.bf16.mxu0 0
    %162 = vmatpush1.bf16.msra.mxu0 0
    %163 = vmatprep.subr.bf16.mxu0 0
    %164 = vmatpush1.bf16.msra.mxu0 0
    %165 = vmatprep.subr.bf16.mxu0 0
    %166 = vmatpush1.bf16.msra.mxu0 0
    %167 = vmatprep.subr.bf16.mxu0 0
    %168 = vmatpush1.bf16.msra.mxu0 0
    %169 = vmatprep.subr.bf16.mxu0 0
    %170 = vmatpush1.bf16.msra.mxu0 0
    %171 = vmatprep.subr.bf16.mxu0 0
    %172 = vmatpush1.bf16.msra.mxu0 0
    %173 = vmatprep.subr.bf16.mxu0 0
    %174 = vmatpush1.bf16.msra.mxu0 0
    %175 = vmatprep.subr.bf16.mxu0 0
    %176 = vmatpush1.bf16.msra.mxu0 0
    %177 = vmatprep.mubr.bf16.mxu0 0
    %178 = vmatmul.mubr.bf16.gmra.mrb[0].mxu0 %v143
    %v179 = vpop.f32.mrb[0].mxu0
    %v180 = vadd.f32 %v115, %v179
    %v181 = vpop.f32.mrb[0].mxu0
    %v182 = vpop.f32.mrb[0].mxu0
    %v183 = vpop.f32.mrb[0].mxu0
    %184 = vdwg.mxu0
    %v185 = vld [vmem:[%s6] sm:$0x1]
    %v187 = vlaneseq
    %v188 = vshrl.u32 %v187, 7
    %v189 = vsub.s32 0, %v188
    %v190 = vrot.slane %v185, %v189
    %v200 = vunpack.c.l.b16 %v102
    %v201 = vunpack.c.l.b16 %v103
    %v202 = vunpack.c.l.b16 %v104
    %v203 = vunpack.c.l.b16 %v105
    %v204 = vunpack.c.l.b16 %v106
    %v205 = vunpack.c.l.b16 %v107
    %v206 = vunpack.c.l.b16 %v108
    %v207 = vunpack.c.l.b16 %v109
    %v208 = vpack.c.b16 %v201, %v200
    %v209 = vpack.c.b16 %v203, %v202
    %v210 = vpack.c.b16 %v205, %v204
    %v211 = vpack.c.b16 %v207, %v206
    %216 = vmatprep.subr.bf16.mxu0 0
    %217 = vmatpush1.bf16.msra.mxu0 %v208
    %218 = vmatprep.subr.bf16.mxu0 0
    %219 = vmatpush1.bf16.msra.mxu0 %v209
    %220 = vmatprep.subr.bf16.mxu0 0
    %221 = vmatpush1.bf16.msra.mxu0 %v210
    %222 = vmatprep.subr.bf16.mxu0 0
    %223 = vmatpush1.bf16.msra.mxu0 %v211
    %224 = vmatprep.subr.bf16.mxu0 0
    %225 = vmatpush1.bf16.msra.mxu0 0
    %226 = vmatprep.subr.bf16.mxu0 0
    %227 = vmatpush1.bf16.msra.mxu0 0
    %228 = vmatprep.subr.bf16.mxu0 0
    %229 = vmatpush1.bf16.msra.mxu0 0
    %230 = vmatprep.subr.bf16.mxu0 0
    %231 = vmatpush1.bf16.msra.mxu0 0
    %232 = vmatprep.subr.bf16.mxu0 0
    %233 = vmatpush1.bf16.msra.mxu0 0
    %234 = vmatprep.subr.bf16.mxu0 0
    %235 = vmatpush1.bf16.msra.mxu0 0
    %236 = vmatprep.subr.bf16.mxu0 0
    %237 = vmatpush1.bf16.msra.mxu0 0
    %238 = vmatprep.subr.bf16.mxu0 0
    %239 = vmatpush1.bf16.msra.mxu0 0
    %240 = vmatprep.subr.bf16.mxu0 0
    %241 = vmatpush1.bf16.msra.mxu0 0
    %242 = vmatprep.subr.bf16.mxu0 0
    %243 = vmatpush1.bf16.msra.mxu0 0
    %244 = vmatprep.subr.bf16.mxu0 0
    %245 = vmatpush1.bf16.msra.mxu0 0
    %246 = vmatprep.subr.bf16.mxu0 0
    %247 = vmatpush1.bf16.msra.mxu0 0
    %248 = vmatprep.mubr.bf16.mxu0 0
    %249 = vmatmul.mubr.bf16.gmra.mrb[0].mxu0 %v143
    %v250 = vpop.f32.mrb[0].mxu0
    %v251 = vadd.f32 %v190, %v250
    %v252 = vpop.f32.mrb[0].mxu0
    %v253 = vpop.f32.mrb[0].mxu0
    %v254 = vpop.f32.mrb[0].mxu0
    %255 = vdwg.mxu0
    %v256 = vld [vmem:[%s2] sm:$0xf]
    %v257 = vld [vmem:[%s2 + $0x4] sm:$0xf]
    %v258 = vld [vmem:[%s2 + $0x8] sm:$0xf]
    %v259 = vld [vmem:[%s2 + $0xc] sm:$0xf]
    %v260 = vld [vmem:[%s5] sm:$0xf]
    %v261 = vld [vmem:[%s5 + $0x4] sm:$0xf]
    %v262 = vld [vmem:[%s5 + $0x8] sm:$0xf]
    %v263 = vld [vmem:[%s5 + $0xc] sm:$0xf]
    %v268 = vunpack.c.l.b16 %v256
    %v269 = vunpack.c.l.b16 %v257
    %v270 = vunpack.c.l.b16 %v258
    %v271 = vunpack.c.l.b16 %v259
    %v272 = vpack.c.b16 %v269, %v268
    %v273 = vpack.c.b16 %v271, %v270
    %vm276 = vcmask 261120
    %v278 = vsel %vm276, 0, 0
    %280 = vmatprep.subr.bf16.mxu0 0
    %281 = vmatpush1.bf16.msra.mxu0 %v272
    %282 = vmatprep.subr.bf16.mxu0 0
    %283 = vmatpush1.bf16.msra.mxu0 %v273
    %284 = vmatprep.subr.bf16.mxu0 0
    %285 = vmatpush1.bf16.msra.mxu0 0
    %286 = vmatprep.subr.bf16.mxu0 0
    %287 = vmatpush1.bf16.msra.mxu0 0
    %288 = vmatprep.subr.bf16.mxu0 0
    %289 = vmatpush1.bf16.msra.mxu0 0
    %290 = vmatprep.subr.bf16.mxu0 0
    %291 = vmatpush1.bf16.msra.mxu0 0
    %292 = vmatprep.subr.bf16.mxu0 0
    %293 = vmatpush1.bf16.msra.mxu0 0
    %294 = vmatprep.subr.bf16.mxu0 0
    %295 = vmatpush1.bf16.msra.mxu0 0
    %296 = vmatprep.subr.bf16.mxu0 0
    %297 = vmatpush1.bf16.msra.mxu0 0
    %298 = vmatprep.subr.bf16.mxu0 0
    %299 = vmatpush1.bf16.msra.mxu0 0
    %300 = vmatprep.subr.bf16.mxu0 0
    %301 = vmatpush1.bf16.msra.mxu0 0
    %302 = vmatprep.subr.bf16.mxu0 0
    %303 = vmatpush1.bf16.msra.mxu0 0
    %304 = vmatprep.subr.bf16.mxu0 0
    %305 = vmatpush1.bf16.msra.mxu0 0
    %306 = vmatprep.subr.bf16.mxu0 0
    %307 = vmatpush1.bf16.msra.mxu0 0
    %308 = vmatprep.subr.bf16.mxu0 0
    %309 = vmatpush1.bf16.msra.mxu0 0
    %310 = vmatprep.subr.bf16.mxu0 0
    %311 = vmatpush1.bf16.msra.mxu0 0
    %312 = vmatprep.mubr.bf16.mxu0 0
    %313 = vmatmul.mubr.bf16.gmra.mrb[0].mxu0 %v278
    %v314 = vpop.f32.mrb[0].mxu0
    %v315 = vadd.f32 0.0, %v314
    %v316 = vpop.f32.mrb[0].mxu0
    %v317 = vpop.f32.mrb[0].mxu0
    %v318 = vpop.f32.mrb[0].mxu0
    %319 = vdwg.mxu0
    %v320 = vadd.f32 %v180, %v315
    %v325 = vunpack.c.l.b16 %v260
    %v326 = vunpack.c.l.b16 %v261
    %v327 = vunpack.c.l.b16 %v262
    %v328 = vunpack.c.l.b16 %v263
    %v329 = vpack.c.b16 %v326, %v325
    %v330 = vpack.c.b16 %v328, %v327
    %333 = vmatprep.subr.bf16.mxu0 0
    %334 = vmatpush1.bf16.msra.mxu0 %v329
    %335 = vmatprep.subr.bf16.mxu0 0
    %336 = vmatpush1.bf16.msra.mxu0 %v330
    %337 = vmatprep.subr.bf16.mxu0 0
    %338 = vmatpush1.bf16.msra.mxu0 0
    %339 = vmatprep.subr.bf16.mxu0 0
    %340 = vmatpush1.bf16.msra.mxu0 0
    %341 = vmatprep.subr.bf16.mxu0 0
    %342 = vmatpush1.bf16.msra.mxu0 0
    %343 = vmatprep.subr.bf16.mxu0 0
    %344 = vmatpush1.bf16.msra.mxu0 0
    %345 = vmatprep.subr.bf16.mxu0 0
    %346 = vmatpush1.bf16.msra.mxu0 0
    %347 = vmatprep.subr.bf16.mxu0 0
    %348 = vmatpush1.bf16.msra.mxu0 0
    %349 = vmatprep.subr.bf16.mxu0 0
    %350 = vmatpush1.bf16.msra.mxu0 0
    %351 = vmatprep.subr.bf16.mxu0 0
    %352 = vmatpush1.bf16.msra.mxu0 0
    %353 = vmatprep.subr.bf16.mxu0 0
    %354 = vmatpush1.bf16.msra.mxu0 0
    %355 = vmatprep.subr.bf16.mxu0 0
    %356 = vmatpush1.bf16.msra.mxu0 0
    %357 = vmatprep.subr.bf16.mxu0 0
    %358 = vmatpush1.bf16.msra.mxu0 0
    %359 = vmatprep.subr.bf16.mxu0 0
    %360 = vmatpush1.bf16.msra.mxu0 0
    %361 = vmatprep.subr.bf16.mxu0 0
    %362 = vmatpush1.bf16.msra.mxu0 0
    %363 = vmatprep.subr.bf16.mxu0 0
    %364 = vmatpush1.bf16.msra.mxu0 0
    %365 = vmatprep.mubr.bf16.mxu0 0
    %366 = vmatmul.mubr.bf16.gmra.mrb[0].mxu0 %v278
    %v367 = vpop.f32.mrb[0].mxu0
    %v368 = vadd.f32 0.0, %v367
    %v369 = vpop.f32.mrb[0].mxu0
    %v370 = vpop.f32.mrb[0].mxu0
    %v371 = vpop.f32.mrb[0].mxu0
    %372 = vdwg.mxu0
    %v374 = vrot.slane %v368, 2
    %v376 = vadd.f32 %v251, %v374
    %v377 = vxor.u32 %v320, 2147483648
    %v378 = vmul.f32 %v377, 1.442695
    %v379 = vpow.pop %v378
    %v380 = vadd.f32 %v379, 1.0
    %v381 = vrcp.pop %v380
    %v382 = vmul.f32 1.0, %v381
    %v383 = vtanh.pop %v320
    %v384 = vmul.f32 %v382, 0.0
    %386 = vrot.lane.b32.xlu0 %v383, 64
    %v387 = vpop.permute.xlu0 %386
    %v389 = vmul.f32 %v382, %v387
    %391 = vrot.lane.b32.xlu0 %v389, 32
    %v392 = vpop.permute.xlu0 %391
    %v394 = vadd.f32 %v384, %v392
    %v395 = vtanh.pop %v394
    %397 = vrot.lane.b32.xlu0 %v395, 64
    %v398 = vpop.permute.xlu0 %397
    %v400 = vmul.f32 %v382, %v398
    %v401 = vxor.u32 %v376, 2147483648
    %v402 = vmul.f32 %v401, 1.442695
    %v403 = vpow.pop %v402
    %v404 = vadd.f32 %v403, 1.0
    %v405 = vrcp.pop %v404
    %v406 = vmul.f32 1.0, %v405
    %v407 = vtanh.pop %v376
    %v408 = vmul.f32 %v406, 0.0
    %410 = vrot.lane.b32.xlu0 %v407, 64
    %v411 = vpop.permute.xlu0 %410
    %v413 = vmul.f32 %v406, %v411
    %415 = vrot.lane.b32.xlu0 %v413, 32
    %v416 = vpop.permute.xlu0 %415
    %v418 = vadd.f32 %v408, %v416
    %v419 = vtanh.pop %v418
    %421 = vrot.lane.b32.xlu0 %v419, 64
    %v422 = vpop.permute.xlu0 %421
    %v424 = vmul.f32 %v406, %v422
    %v425 = vpack.c.bf16 %v400, %v400
    %427 = vrot.lane.b32.xlu0 %v425, 32
    %v428 = vpop.permute.xlu0 %427
    %v430 = vsel %vm276, %v428, 0
    %432 = vmatprep.subr.bf16.mxu0 0
    %433 = vmatpush1.bf16.msra.mxu0 %v272
    %434 = vmatprep.subr.bf16.mxu0 0
    %435 = vmatpush1.bf16.msra.mxu0 %v273
    %436 = vmatprep.subr.bf16.mxu0 0
    %437 = vmatpush1.bf16.msra.mxu0 0
    %438 = vmatprep.subr.bf16.mxu0 0
    %439 = vmatpush1.bf16.msra.mxu0 0
    %440 = vmatprep.subr.bf16.mxu0 0
    %441 = vmatpush1.bf16.msra.mxu0 0
    %442 = vmatprep.subr.bf16.mxu0 0
    %443 = vmatpush1.bf16.msra.mxu0 0
    %444 = vmatprep.subr.bf16.mxu0 0
    %445 = vmatpush1.bf16.msra.mxu0 0
    %446 = vmatprep.subr.bf16.mxu0 0
    %447 = vmatpush1.bf16.msra.mxu0 0
    %448 = vmatprep.subr.bf16.mxu0 0
    %449 = vmatpush1.bf16.msra.mxu0 0
    %450 = vmatprep.subr.bf16.mxu0 0
    %451 = vmatpush1.bf16.msra.mxu0 0
    %452 = vmatprep.subr.bf16.mxu0 0
    %453 = vmatpush1.bf16.msra.mxu0 0
    %454 = vmatprep.subr.bf16.mxu0 0
    %455 = vmatpush1.bf16.msra.mxu0 0
    %456 = vmatprep.subr.bf16.mxu0 0
    %457 = vmatpush1.bf16.msra.mxu0 0
    %458 = vmatprep.subr.bf16.mxu0 0
    %459 = vmatpush1.bf16.msra.mxu0 0
    %460 = vmatprep.subr.bf16.mxu0 0
    %461 = vmatpush1.bf16.msra.mxu0 0
    %462 = vmatprep.subr.bf16.mxu0 0
    %463 = vmatpush1.bf16.msra.mxu0 0
    %464 = vmatprep.mubr.bf16.mxu0 0
    %465 = vmatmul.mubr.bf16.gmra.mrb[0].mxu0 %v430
    %v466 = vpop.f32.mrb[0].mxu0
    %v467 = vadd.f32 0.0, %v466
    %v468 = vpop.f32.mrb[0].mxu0
    %v469 = vpop.f32.mrb[0].mxu0
    %v470 = vpop.f32.mrb[0].mxu0
    %471 = vdwg.mxu0
    %v473 = vrot.slane %v467, 6
    %v475 = vadd.f32 %v180, %v473
    %v476 = vpack.c.bf16 %v424, %v424
    %v478 = vrot.slane %v476, 3
    %479 = vrot.lane.b32.xlu0 %v478, 32
    %v480 = vpop.permute.xlu0 %479
    %v482 = vsel %vm276, %v480, 0
    %484 = vmatprep.subr.bf16.mxu0 0
    %485 = vmatpush1.bf16.msra.mxu0 %v329
    %486 = vmatprep.subr.bf16.mxu0 0
    %487 = vmatpush1.bf16.msra.mxu0 %v330
    %488 = vmatprep.subr.bf16.mxu0 0
    %489 = vmatpush1.bf16.msra.mxu0 0
    %490 = vmatprep.subr.bf16.mxu0 0
    %491 = vmatpush1.bf16.msra.mxu0 0
    %492 = vmatprep.subr.bf16.mxu0 0
    %493 = vmatpush1.bf16.msra.mxu0 0
    %494 = vmatprep.subr.bf16.mxu0 0
    %495 = vmatpush1.bf16.msra.mxu0 0
    %496 = vmatprep.subr.bf16.mxu0 0
    %497 = vmatpush1.bf16.msra.mxu0 0
    %498 = vmatprep.subr.bf16.mxu0 0
    %499 = vmatpush1.bf16.msra.mxu0 0
    %500 = vmatprep.subr.bf16.mxu0 0
    %501 = vmatpush1.bf16.msra.mxu0 0
    %502 = vmatprep.subr.bf16.mxu0 0
    %503 = vmatpush1.bf16.msra.mxu0 0
    %504 = vmatprep.subr.bf16.mxu0 0
    %505 = vmatpush1.bf16.msra.mxu0 0
    %506 = vmatprep.subr.bf16.mxu0 0
    %507 = vmatpush1.bf16.msra.mxu0 0
    %508 = vmatprep.subr.bf16.mxu0 0
    %509 = vmatpush1.bf16.msra.mxu0 0
    %510 = vmatprep.subr.bf16.mxu0 0
    %511 = vmatpush1.bf16.msra.mxu0 0
    %512 = vmatprep.subr.bf16.mxu0 0
    %513 = vmatpush1.bf16.msra.mxu0 0
    %514 = vmatprep.subr.bf16.mxu0 0
    %515 = vmatpush1.bf16.msra.mxu0 0
    %516 = vmatprep.mubr.bf16.mxu0 0
    %517 = vmatmul.mubr.bf16.gmra.mrb[0].mxu0 %v482
    %v518 = vpop.f32.mrb[0].mxu0
    %v519 = vadd.f32 0.0, %v518
    %v520 = vpop.f32.mrb[0].mxu0
    %v521 = vpop.f32.mrb[0].mxu0
    %v522 = vpop.f32.mrb[0].mxu0
    %523 = vdwg.mxu0
    %v525 = vrot.slane %v519, 4
    %v527 = vadd.f32 %v251, %v525
    %v528 = vxor.u32 %v475, 2147483648
    %v529 = vmul.f32 %v528, 1.442695
    %v530 = vpow.pop %v529
    %v531 = vadd.f32 %v530, 1.0
    %v532 = vrcp.pop %v531
    %v533 = vmul.f32 1.0, %v532
    %v534 = vtanh.pop %v475
    %v536 = vrot.slane %v394, 6
    %v538 = vmul.f32 %v533, %v536
    %540 = vrot.lane.b32.xlu0 %v534, 64
    %v541 = vpop.permute.xlu0 %540
    %v543 = vmul.f32 %v533, %v541
    %545 = vrot.lane.b32.xlu0 %v543, 32
    %v546 = vpop.permute.xlu0 %545
    %v548 = vadd.f32 %v538, %v546
    %v549 = vtanh.pop %v548
    %551 = vrot.lane.b32.xlu0 %v549, 64
    %v552 = vpop.permute.xlu0 %551
    %v554 = vmul.f32 %v533, %v552
    %v555 = vxor.u32 %v527, 2147483648
    %v556 = vmul.f32 %v555, 1.442695
    %v557 = vpow.pop %v556
    %v558 = vadd.f32 %v557, 1.0
    %v559 = vrcp.pop %v558
    %v560 = vmul.f32 1.0, %v559
    %v561 = vtanh.pop %v527
    %v563 = vrot.slane %v418, 2
    %v565 = vmul.f32 %v560, %v563
    %567 = vrot.lane.b32.xlu0 %v561, 64
    %v568 = vpop.permute.xlu0 %567
    %v570 = vmul.f32 %v560, %v568
    %572 = vrot.lane.b32.xlu0 %v570, 32
    %v573 = vpop.permute.xlu0 %572
    %v575 = vadd.f32 %v565, %v573
    %v576 = vtanh.pop %v575
    %578 = vrot.lane.b32.xlu0 %v576, 64
    %v579 = vpop.permute.xlu0 %578
    %v581 = vmul.f32 %v560, %v579
    %v582 = vpack.c.bf16 %v554, %v554
    %v584 = vrot.slane %v582, 1
    %585 = vrot.lane.b32.xlu0 %v584, 32
    %v586 = vpop.permute.xlu0 %585
    %v588 = vsel %vm276, %v586, 0
    %590 = vmatprep.subr.bf16.mxu0 0
    %591 = vmatpush1.bf16.msra.mxu0 %v272
    %592 = vmatprep.subr.bf16.mxu0 0
    %593 = vmatpush1.bf16.msra.mxu0 %v273
    %594 = vmatprep.subr.bf16.mxu0 0
    %595 = vmatpush1.bf16.msra.mxu0 0
    %596 = vmatprep.subr.bf16.mxu0 0
    %597 = vmatpush1.bf16.msra.mxu0 0
    %598 = vmatprep.subr.bf16.mxu0 0
    %599 = vmatpush1.bf16.msra.mxu0 0
    %600 = vmatprep.subr.bf16.mxu0 0
    %601 = vmatpush1.bf16.msra.mxu0 0
    %602 = vmatprep.subr.bf16.mxu0 0
    %603 = vmatpush1.bf16.msra.mxu0 0
    %604 = vmatprep.subr.bf16.mxu0 0
    %605 = vmatpush1.bf16.msra.mxu0 0
    %606 = vmatprep.subr.bf16.mxu0 0
    %607 = vmatpush1.bf16.msra.mxu0 0
    %608 = vmatprep.subr.bf16.mxu0 0
    %609 = vmatpush1.bf16.msra.mxu0 0
    %610 = vmatprep.subr.bf16.mxu0 0
    %611 = vmatpush1.bf16.msra.mxu0 0
    %612 = vmatprep.subr.bf16.mxu0 0
    %613 = vmatpush1.bf16.msra.mxu0 0
    %614 = vmatprep.subr.bf16.mxu0 0
    %615 = vmatpush1.bf16.msra.mxu0 0
    %616 = vmatprep.subr.bf16.mxu0 0
    %617 = vmatpush1.bf16.msra.mxu0 0
    %618 = vmatprep.subr.bf16.mxu0 0
    %619 = vmatpush1.bf16.msra.mxu0 0
    %620 = vmatprep.subr.bf16.mxu0 0
    %621 = vmatpush1.bf16.msra.mxu0 0
    %622 = vmatprep.mubr.bf16.mxu0 0
    %623 = vmatmul.mubr.bf16.gmra.mrb[0].mxu0 %v588
    %v624 = vpop.f32.mrb[0].mxu0
    %v625 = vadd.f32 0.0, %v624
    %v626 = vpop.f32.mrb[0].mxu0
    %v627 = vpop.f32.mrb[0].mxu0
    %v628 = vpop.f32.mrb[0].mxu0
    %629 = vdwg.mxu0
    %v631 = vrot.slane %v625, 4
    %v633 = vadd.f32 %v180, %v631
    %v634 = vpack.c.bf16 %v581, %v581
    %v636 = vrot.slane %v634, 2
    %637 = vrot.lane.b32.xlu0 %v636, 32
    %v638 = vpop.permute.xlu0 %637
    %v640 = vsel %vm276, %v638, 0
    %642 = vmatprep.subr.bf16.mxu0 0
    %643 = vmatpush1.bf16.msra.mxu0 %v329
    %644 = vmatprep.subr.bf16.mxu0 0
    %645 = vmatpush1.bf16.msra.mxu0 %v330
    %646 = vmatprep.subr.bf16.mxu0 0
    %647 = vmatpush1.bf16.msra.mxu0 0
    %648 = vmatprep.subr.bf16.mxu0 0
    %649 = vmatpush1.bf16.msra.mxu0 0
    %650 = vmatprep.subr.bf16.mxu0 0
    %651 = vmatpush1.bf16.msra.mxu0 0
    %652 = vmatprep.subr.bf16.mxu0 0
    %653 = vmatpush1.bf16.msra.mxu0 0
    %654 = vmatprep.subr.bf16.mxu0 0
    %655 = vmatpush1.bf16.msra.mxu0 0
    %656 = vmatprep.subr.bf16.mxu0 0
    %657 = vmatpush1.bf16.msra.mxu0 0
    %658 = vmatprep.subr.bf16.mxu0 0
    %659 = vmatpush1.bf16.msra.mxu0 0
    %660 = vmatprep.subr.bf16.mxu0 0
    %661 = vmatpush1.bf16.msra.mxu0 0
    %662 = vmatprep.subr.bf16.mxu0 0
    %663 = vmatpush1.bf16.msra.mxu0 0
    %664 = vmatprep.subr.bf16.mxu0 0
    %665 = vmatpush1.bf16.msra.mxu0 0
    %666 = vmatprep.subr.bf16.mxu0 0
    %667 = vmatpush1.bf16.msra.mxu0 0
    %668 = vmatprep.subr.bf16.mxu0 0
    %669 = vmatpush1.bf16.msra.mxu0 0
    %670 = vmatprep.subr.bf16.mxu0 0
    %671 = vmatpush1.bf16.msra.mxu0 0
    %672 = vmatprep.subr.bf16.mxu0 0
    %673 = vmatpush1.bf16.msra.mxu0 0
    %674 = vmatprep.mubr.bf16.mxu0 0
    %675 = vmatmul.mubr.bf16.gmra.mrb[0].mxu0 %v640
    %v676 = vpop.f32.mrb[0].mxu0
    %v677 = vadd.f32 0.0, %v676
    %v678 = vpop.f32.mrb[0].mxu0
    %v679 = vpop.f32.mrb[0].mxu0
    %v680 = vpop.f32.mrb[0].mxu0
    %681 = vdwg.mxu0
    %v683 = vrot.slane %v677, 6
    %v685 = vadd.f32 %v251, %v683
    %v686 = vxor.u32 %v633, 2147483648
    %v687 = vmul.f32 %v686, 1.442695
    %v688 = vpow.pop %v687
    %v689 = vadd.f32 %v688, 1.0
    %v690 = vrcp.pop %v689
    %v691 = vmul.f32 1.0, %v690
    %v692 = vtanh.pop %v633
    %v694 = vrot.slane %v548, 6
    %v696 = vmul.f32 %v691, %v694
    %698 = vrot.lane.b32.xlu0 %v692, 64
    %v699 = vpop.permute.xlu0 %698
    %v701 = vmul.f32 %v691, %v699
    %703 = vrot.lane.b32.xlu0 %v701, 32
    %v704 = vpop.permute.xlu0 %703
    %v706 = vadd.f32 %v696, %v704
    %v707 = vtanh.pop %v706
    %709 = vrot.lane.b32.xlu0 %v707, 64
    %v710 = vpop.permute.xlu0 %709
    %v712 = vmul.f32 %v691, %v710
    %v713 = vxor.u32 %v685, 2147483648
    %v714 = vmul.f32 %v713, 1.442695
    %v715 = vpow.pop %v714
    %v716 = vadd.f32 %v715, 1.0
    %v717 = vrcp.pop %v716
    %v718 = vmul.f32 1.0, %v717
    %v719 = vtanh.pop %v685
    %v721 = vrot.slane %v575, 2
    %v723 = vmul.f32 %v718, %v721
    %725 = vrot.lane.b32.xlu0 %v719, 64
    %v726 = vpop.permute.xlu0 %725
    %v728 = vmul.f32 %v718, %v726
    %730 = vrot.lane.b32.xlu0 %v728, 32
    %v731 = vpop.permute.xlu0 %730
    %v733 = vadd.f32 %v723, %v731
    %v734 = vtanh.pop %v733
    %736 = vrot.lane.b32.xlu0 %v734, 64
    %v737 = vpop.permute.xlu0 %736
    %v739 = vmul.f32 %v718, %v737
    %v740 = vpack.c.bf16 %v712, %v712
    %v742 = vrot.slane %v740, 2
    %743 = vrot.lane.b32.xlu0 %v742, 32
    %v744 = vpop.permute.xlu0 %743
    %v746 = vsel %vm276, %v744, 0
    %748 = vmatprep.subr.bf16.mxu0 0
    %749 = vmatpush1.bf16.msra.mxu0 %v272
    %750 = vmatprep.subr.bf16.mxu0 0
    %751 = vmatpush1.bf16.msra.mxu0 %v273
    %752 = vmatprep.subr.bf16.mxu0 0
    %753 = vmatpush1.bf16.msra.mxu0 0
    %754 = vmatprep.subr.bf16.mxu0 0
    %755 = vmatpush1.bf16.msra.mxu0 0
    %756 = vmatprep.subr.bf16.mxu0 0
    %757 = vmatpush1.bf16.msra.mxu0 0
    %758 = vmatprep.subr.bf16.mxu0 0
    %759 = vmatpush1.bf16.msra.mxu0 0
    %760 = vmatprep.subr.bf16.mxu0 0
    %761 = vmatpush1.bf16.msra.mxu0 0
    %762 = vmatprep.subr.bf16.mxu0 0
    %763 = vmatpush1.bf16.msra.mxu0 0
    %764 = vmatprep.subr.bf16.mxu0 0
    %765 = vmatpush1.bf16.msra.mxu0 0
    %766 = vmatprep.subr.bf16.mxu0 0
    %767 = vmatpush1.bf16.msra.mxu0 0
    %768 = vmatprep.subr.bf16.mxu0 0
    %769 = vmatpush1.bf16.msra.mxu0 0
    %770 = vmatprep.subr.bf16.mxu0 0
    %771 = vmatpush1.bf16.msra.mxu0 0
    %772 = vmatprep.subr.bf16.mxu0 0
    %773 = vmatpush1.bf16.msra.mxu0 0
    %774 = vmatprep.subr.bf16.mxu0 0
    %775 = vmatpush1.bf16.msra.mxu0 0
    %776 = vmatprep.subr.bf16.mxu0 0
    %777 = vmatpush1.bf16.msra.mxu0 0
    %778 = vmatprep.subr.bf16.mxu0 0
    %779 = vmatpush1.bf16.msra.mxu0 0
    %780 = vmatprep.mubr.bf16.mxu0 0
    %781 = vmatmul.mubr.bf16.gmra.mrb[0].mxu0 %v746
    %v782 = vpop.f32.mrb[0].mxu0
    %v783 = vadd.f32 0.0, %v782
    %v784 = vpop.f32.mrb[0].mxu0
    %v785 = vpop.f32.mrb[0].mxu0
    %v786 = vpop.f32.mrb[0].mxu0
    %787 = vdwg.mxu0
    %v789 = vrot.slane %v783, 2
    %v791 = vadd.f32 %v180, %v789
    %v792 = vpack.c.bf16 %v739, %v739
    %v794 = vrot.slane %v792, 1
    %795 = vrot.lane.b32.xlu0 %v794, 32
    %v796 = vpop.permute.xlu0 %795
    %v798 = vsel %vm276, %v796, 0
    %800 = vmatprep.subr.bf16.mxu0 0
    %801 = vmatpush1.bf16.msra.mxu0 %v329
    %802 = vmatprep.subr.bf16.mxu0 0
    %803 = vmatpush1.bf16.msra.mxu0 %v330
    %804 = vmatprep.subr.bf16.mxu0 0
    %805 = vmatpush1.bf16.msra.mxu0 0
    %806 = vmatprep.subr.bf16.mxu0 0
    %807 = vmatpush1.bf16.msra.mxu0 0
    %808 = vmatprep.subr.bf16.mxu0 0
    %809 = vmatpush1.bf16.msra.mxu0 0
    %810 = vmatprep.subr.bf16.mxu0 0
    %811 = vmatpush1.bf16.msra.mxu0 0
    %812 = vmatprep.subr.bf16.mxu0 0
    %813 = vmatpush1.bf16.msra.mxu0 0
    %814 = vmatprep.subr.bf16.mxu0 0
    %815 = vmatpush1.bf16.msra.mxu0 0
    %816 = vmatprep.subr.bf16.mxu0 0
    %817 = vmatpush1.bf16.msra.mxu0 0
    %818 = vmatprep.subr.bf16.mxu0 0
    %819 = vmatpush1.bf16.msra.mxu0 0
    %820 = vmatprep.subr.bf16.mxu0 0
    %821 = vmatpush1.bf16.msra.mxu0 0
    %822 = vmatprep.subr.bf16.mxu0 0
    %823 = vmatpush1.bf16.msra.mxu0 0
    %824 = vmatprep.subr.bf16.mxu0 0
    %825 = vmatpush1.bf16.msra.mxu0 0
    %826 = vmatprep.subr.bf16.mxu0 0
    %827 = vmatpush1.bf16.msra.mxu0 0
    %828 = vmatprep.subr.bf16.mxu0 0
    %829 = vmatpush1.bf16.msra.mxu0 0
    %830 = vmatprep.subr.bf16.mxu0 0
    %831 = vmatpush1.bf16.msra.mxu0 0
    %832 = vmatprep.mubr.bf16.mxu0 0
    %833 = vmatmul.mubr.bf16.gmra.mrb[0].mxu0 %v798
    %v834 = vpop.f32.mrb[0].mxu0
    %v835 = vadd.f32 0.0, %v834
    %v836 = vpop.f32.mrb[0].mxu0
    %v837 = vpop.f32.mrb[0].mxu0
    %v838 = vpop.f32.mrb[0].mxu0
    %839 = vdwg.mxu0
    %v840 = vadd.f32 %v251, %v835
    %v841 = vxor.u32 %v791, 2147483648
    %v842 = vmul.f32 %v841, 1.442695
    %v843 = vpow.pop %v842
    %v844 = vadd.f32 %v843, 1.0
    %v845 = vrcp.pop %v844
    %v846 = vmul.f32 1.0, %v845
    %v847 = vtanh.pop %v791
    %v849 = vrot.slane %v706, 6
    %v851 = vmul.f32 %v846, %v849
    %853 = vrot.lane.b32.xlu0 %v847, 64
    %v854 = vpop.permute.xlu0 %853
    %v856 = vmul.f32 %v846, %v854
    %858 = vrot.lane.b32.xlu0 %v856, 32
    %v859 = vpop.permute.xlu0 %858
    %v861 = vadd.f32 %v851, %v859
    %v862 = vtanh.pop %v861
    %864 = vrot.lane.b32.xlu0 %v862, 64
    %v865 = vpop.permute.xlu0 %864
    %v867 = vmul.f32 %v846, %v865
    %v868 = vxor.u32 %v840, 2147483648
    %v869 = vmul.f32 %v868, 1.442695
    %v870 = vpow.pop %v869
    %v871 = vadd.f32 %v870, 1.0
    %v872 = vrcp.pop %v871
    %v873 = vmul.f32 1.0, %v872
    %v874 = vtanh.pop %v840
    %v876 = vrot.slane %v733, 2
    %v878 = vmul.f32 %v873, %v876
    %880 = vrot.lane.b32.xlu0 %v874, 64
    %v881 = vpop.permute.xlu0 %880
    %v883 = vmul.f32 %v873, %v881
    %885 = vrot.lane.b32.xlu0 %v883, 32
    %v886 = vpop.permute.xlu0 %885
    %v888 = vadd.f32 %v878, %v886
    %v889 = vtanh.pop %v888
    %891 = vrot.lane.b32.xlu0 %v889, 64
    %v892 = vpop.permute.xlu0 %891
    %v894 = vmul.f32 %v873, %v892
    %v895 = vsel %vm87, %v400, %v554
    %v896 = vsel %vm89, %v895, %v712
    %v897 = vsel %vm91, %v896, %v867
    %v898 = vpack.c.bf16 %v897, %v897
    %v899 = vsel %vm87, %v894, %v739
    %v900 = vsel %vm89, %v899, %v581
    %v901 = vsel %vm91, %v900, %v424
    %v902 = vpack.c.bf16 %v901, %v901
    %v903 = vld [vmem:[%s7] sm:$0xf]
    %v904 = vld [vmem:[%s7 + $0x4] sm:$0xf]
    %v905 = vld [vmem:[%s7 + $0x8] sm:$0xf]
    %v906 = vld [vmem:[%s7 + $0xc] sm:$0xf]
    %v907 = vld [vmem:[%s7 + $0x10] sm:$0xf]
    %v908 = vld [vmem:[%s7 + $0x14] sm:$0xf]
    %v909 = vld [vmem:[%s7 + $0x18] sm:$0xf]
    %v910 = vld [vmem:[%s7 + $0x1c] sm:$0xf]
    %912 = vrot.lane.b32.xlu0 %v902, 32
    %v913 = vpop.permute.xlu0 %912
    %v918 = vunpack.c.l.b16 %v907
    %v919 = vunpack.c.l.b16 %v908
    %v920 = vunpack.c.l.b16 %v909
    %v921 = vunpack.c.l.b16 %v910
    %v922 = vpack.c.b16 %v919, %v918
    %v923 = vpack.c.b16 %v921, %v920
    %v927 = vsel %vm276, %v913, 0
    %929 = vmatprep.subr.bf16.mxu0 0
    %930 = vmatpush1.bf16.msra.mxu0 %v922
    %931 = vmatprep.subr.bf16.mxu0 0
    %932 = vmatpush1.bf16.msra.mxu0 %v923
    %933 = vmatprep.subr.bf16.mxu0 0
    %934 = vmatpush1.bf16.msra.mxu0 0
    %935 = vmatprep.subr.bf16.mxu0 0
    %936 = vmatpush1.bf16.msra.mxu0 0
    %937 = vmatprep.subr.bf16.mxu0 0
    %938 = vmatpush1.bf16.msra.mxu0 0
    %939 = vmatprep.subr.bf16.mxu0 0
    %940 = vmatpush1.bf16.msra.mxu0 0
    %941 = vmatprep.subr.bf16.mxu0 0
    %942 = vmatpush1.bf16.msra.mxu0 0
    %943 = vmatprep.subr.bf16.mxu0 0
    %944 = vmatpush1.bf16.msra.mxu0 0
    %945 = vmatprep.subr.bf16.mxu0 0
    %946 = vmatpush1.bf16.msra.mxu0 0
    %947 = vmatprep.subr.bf16.mxu0 0
    %948 = vmatpush1.bf16.msra.mxu0 0
    %949 = vmatprep.subr.bf16.mxu0 0
    %950 = vmatpush1.bf16.msra.mxu0 0
    %951 = vmatprep.subr.bf16.mxu0 0
    %952 = vmatpush1.bf16.msra.mxu0 0
    %953 = vmatprep.subr.bf16.mxu0 0
    %954 = vmatpush1.bf16.msra.mxu0 0
    %955 = vmatprep.subr.bf16.mxu0 0
    %956 = vmatpush1.bf16.msra.mxu0 0
    %957 = vmatprep.subr.bf16.mxu0 0
    %958 = vmatpush1.bf16.msra.mxu0 0
    %959 = vmatprep.subr.bf16.mxu0 0
    %960 = vmatpush1.bf16.msra.mxu0 0
    %961 = vmatprep.mubr.bf16.mxu0 0
    %962 = vmatmul.mubr.bf16.gmra.mrb[0].mxu0 %v927
    %v963 = vpop.f32.mrb[0].mxu0
    %v964 = vadd.f32 0.0, %v963
    %v965 = vpop.f32.mrb[0].mxu0
    %v966 = vpop.f32.mrb[0].mxu0
    %v967 = vpop.f32.mrb[0].mxu0
    %968 = vdwg.mxu0
    %970 = vrot.lane.b32.xlu0 %v898, 32
    %v971 = vpop.permute.xlu0 %970
    %v976 = vunpack.c.l.b16 %v903
    %v977 = vunpack.c.l.b16 %v904
    %v978 = vunpack.c.l.b16 %v905
    %v979 = vunpack.c.l.b16 %v906
    %v980 = vpack.c.b16 %v977, %v976
    %v981 = vpack.c.b16 %v979, %v978
    %v985 = vsel %vm276, %v971, 0
    %987 = vmatprep.subr.bf16.mxu0 0
    %988 = vmatpush1.bf16.msra.mxu0 %v980
    %989 = vmatprep.subr.bf16.mxu0 0
    %990 = vmatpush1.bf16.msra.mxu0 %v981
    %991 = vmatprep.subr.bf16.mxu0 0
    %992 = vmatpush1.bf16.msra.mxu0 0
    %993 = vmatprep.subr.bf16.mxu0 0
    %994 = vmatpush1.bf16.msra.mxu0 0
    %995 = vmatprep.subr.bf16.mxu0 0
    %996 = vmatpush1.bf16.msra.mxu0 0
    %997 = vmatprep.subr.bf16.mxu0 0
    %998 = vmatpush1.bf16.msra.mxu0 0
    %999 = vmatprep.subr.bf16.mxu0 0
    %1000 = vmatpush1.bf16.msra.mxu0 0
    %1001 = vmatprep.subr.bf16.mxu0 0
    %1002 = vmatpush1.bf16.msra.mxu0 0
    %1003 = vmatprep.subr.bf16.mxu0 0
    %1004 = vmatpush1.bf16.msra.mxu0 0
    %1005 = vmatprep.subr.bf16.mxu0 0
    %1006 = vmatpush1.bf16.msra.mxu0 0
    %1007 = vmatprep.subr.bf16.mxu0 0
    %1008 = vmatpush1.bf16.msra.mxu0 0
    %1009 = vmatprep.subr.bf16.mxu0 0
    %1010 = vmatpush1.bf16.msra.mxu0 0
    %1011 = vmatprep.subr.bf16.mxu0 0
    %1012 = vmatpush1.bf16.msra.mxu0 0
    %1013 = vmatprep.subr.bf16.mxu0 0
    %1014 = vmatpush1.bf16.msra.mxu0 0
    %1015 = vmatprep.subr.bf16.mxu0 0
    %1016 = vmatpush1.bf16.msra.mxu0 0
    %1017 = vmatprep.subr.bf16.mxu0 0
    %1018 = vmatpush1.bf16.msra.mxu0 0
    %1019 = vmatprep.mubr.bf16.mxu0 0
    %1020 = vmatmul.mubr.bf16.gmra.mrb[0].mxu0 %v985
    %v1021 = vpop.f32.mrb[0].mxu0
    %v1022 = vadd.f32 %v964, %v1021
    %v1023 = vpop.f32.mrb[0].mxu0
    %v1024 = vpop.f32.mrb[0].mxu0
    %v1025 = vpop.f32.mrb[0].mxu0
    %1026 = vdwg.mxu0
    %v1027 = vld [vmem:[%s10] sm:$0xf]
    %v1028 = vld [vmem:[%s10 + $0x4] sm:$0xf]
    %v1029 = vld [vmem:[%s10 + $0x8] sm:$0xf]
    %v1030 = vld [vmem:[%s10 + $0xc] sm:$0xf]
    %v1031 = vld [vmem:[%s10 + $0x10] sm:$0xf]
    %v1032 = vld [vmem:[%s10 + $0x14] sm:$0xf]
    %v1033 = vld [vmem:[%s10 + $0x18] sm:$0xf]
    %v1034 = vld [vmem:[%s10 + $0x1c] sm:$0xf]
    %v1039 = vunpack.c.l.b16 %v1031
    %v1040 = vunpack.c.l.b16 %v1032
    %v1041 = vunpack.c.l.b16 %v1033
    %v1042 = vunpack.c.l.b16 %v1034
    %v1043 = vpack.c.b16 %v1040, %v1039
    %v1044 = vpack.c.b16 %v1042, %v1041
    %1047 = vmatprep.subr.bf16.mxu0 0
    %1048 = vmatpush1.bf16.msra.mxu0 %v1043
    %1049 = vmatprep.subr.bf16.mxu0 0
    %1050 = vmatpush1.bf16.msra.mxu0 %v1044
    %1051 = vmatprep.subr.bf16.mxu0 0
    %1052 = vmatpush1.bf16.msra.mxu0 0
    %1053 = vmatprep.subr.bf16.mxu0 0
    %1054 = vmatpush1.bf16.msra.mxu0 0
    %1055 = vmatprep.subr.bf16.mxu0 0
    %1056 = vmatpush1.bf16.msra.mxu0 0
    %1057 = vmatprep.subr.bf16.mxu0 0
    %1058 = vmatpush1.bf16.msra.mxu0 0
    %1059 = vmatprep.subr.bf16.mxu0 0
    %1060 = vmatpush1.bf16.msra.mxu0 0
    %1061 = vmatprep.subr.bf16.mxu0 0
    %1062 = vmatpush1.bf16.msra.mxu0 0
    %1063 = vmatprep.subr.bf16.mxu0 0
    %1064 = vmatpush1.bf16.msra.mxu0 0
    %1065 = vmatprep.subr.bf16.mxu0 0
    %1066 = vmatpush1.bf16.msra.mxu0 0
    %1067 = vmatprep.subr.bf16.mxu0 0
    %1068 = vmatpush1.bf16.msra.mxu0 0
    %1069 = vmatprep.subr.bf16.mxu0 0
    %1070 = vmatpush1.bf16.msra.mxu0 0
    %1071 = vmatprep.subr.bf16.mxu0 0
    %1072 = vmatpush1.bf16.msra.mxu0 0
    %1073 = vmatprep.subr.bf16.mxu0 0
    %1074 = vmatpush1.bf16.msra.mxu0 0
    %1075 = vmatprep.subr.bf16.mxu0 0
    %1076 = vmatpush1.bf16.msra.mxu0 0
    %1077 = vmatprep.subr.bf16.mxu0 0
    %1078 = vmatpush1.bf16.msra.mxu0 0
    %1079 = vmatprep.mubr.bf16.mxu0 0
    %1080 = vmatmul.mubr.bf16.gmra.mrb[0].mxu0 %v927
    %v1081 = vpop.f32.mrb[0].mxu0
    %v1082 = vadd.f32 0.0, %v1081
    %v1083 = vpop.f32.mrb[0].mxu0
    %v1084 = vpop.f32.mrb[0].mxu0
    %v1085 = vpop.f32.mrb[0].mxu0
    %1086 = vdwg.mxu0
    %v1091 = vunpack.c.l.b16 %v1027
    %v1092 = vunpack.c.l.b16 %v1028
    %v1093 = vunpack.c.l.b16 %v1029
    %v1094 = vunpack.c.l.b16 %v1030
    %v1095 = vpack.c.b16 %v1092, %v1091
    %v1096 = vpack.c.b16 %v1094, %v1093
    %1099 = vmatprep.subr.bf16.mxu0 0
    %1100 = vmatpush1.bf16.msra.mxu0 %v1095
    %1101 = vmatprep.subr.bf16.mxu0 0
    %1102 = vmatpush1.bf16.msra.mxu0 %v1096
    %1103 = vmatprep.subr.bf16.mxu0 0
    %1104 = vmatpush1.bf16.msra.mxu0 0
    %1105 = vmatprep.subr.bf16.mxu0 0
    %1106 = vmatpush1.bf16.msra.mxu0 0
    %1107 = vmatprep.subr.bf16.mxu0 0
    %1108 = vmatpush1.bf16.msra.mxu0 0
    %1109 = vmatprep.subr.bf16.mxu0 0
    %1110 = vmatpush1.bf16.msra.mxu0 0
    %1111 = vmatprep.subr.bf16.mxu0 0
    %1112 = vmatpush1.bf16.msra.mxu0 0
    %1113 = vmatprep.subr.bf16.mxu0 0
    %1114 = vmatpush1.bf16.msra.mxu0 0
    %1115 = vmatprep.subr.bf16.mxu0 0
    %1116 = vmatpush1.bf16.msra.mxu0 0
    %1117 = vmatprep.subr.bf16.mxu0 0
    %1118 = vmatpush1.bf16.msra.mxu0 0
    %1119 = vmatprep.subr.bf16.mxu0 0
    %1120 = vmatpush1.bf16.msra.mxu0 0
    %1121 = vmatprep.subr.bf16.mxu0 0
    %1122 = vmatpush1.bf16.msra.mxu0 0
    %1123 = vmatprep.subr.bf16.mxu0 0
    %1124 = vmatpush1.bf16.msra.mxu0 0
    %1125 = vmatprep.subr.bf16.mxu0 0
    %1126 = vmatpush1.bf16.msra.mxu0 0
    %1127 = vmatprep.subr.bf16.mxu0 0
    %1128 = vmatpush1.bf16.msra.mxu0 0
    %1129 = vmatprep.subr.bf16.mxu0 0
    %1130 = vmatpush1.bf16.msra.mxu0 0
    %1131 = vmatprep.mubr.bf16.mxu0 0
    %1132 = vmatmul.mubr.bf16.gmra.mrb[0].mxu0 %v985
    %v1133 = vpop.f32.mrb[0].mxu0
    %v1134 = vadd.f32 %v1082, %v1133
    %v1135 = vpop.f32.mrb[0].mxu0
    %v1136 = vpop.f32.mrb[0].mxu0
    %v1137 = vpop.f32.mrb[0].mxu0
    %1138 = vdwg.mxu0
    %v1139 = vld [vmem:[%s9] sm:$0x1]
    %v1141 = vlaneseq
    %v1142 = vshrl.u32 %v1141, 7
    %v1143 = vsub.s32 0, %v1142
    %v1144 = vrot.slane %v1139, %v1143
    %v1146 = vadd.f32 %v1022, %v1144
    %v1147 = vld [vmem:[%s12] sm:$0x1]
    %v1149 = vlaneseq
    %v1150 = vshrl.u32 %v1149, 7
    %v1151 = vsub.s32 0, %v1150
    %v1152 = vrot.slane %v1147, %v1151
    %v1154 = vadd.f32 %v1134, %v1152
    %v1155 = vld [vmem:[%s8] sm:$0xf]
    %v1156 = vld [vmem:[%s8 + $0x4] sm:$0xf]
    %v1157 = vld [vmem:[%s8 + $0x8] sm:$0xf]
    %v1158 = vld [vmem:[%s8 + $0xc] sm:$0xf]
    %v1159 = vld [vmem:[%s11] sm:$0xf]
    %v1160 = vld [vmem:[%s11 + $0x4] sm:$0xf]
    %v1161 = vld [vmem:[%s11 + $0x8] sm:$0xf]
    %v1162 = vld [vmem:[%s11 + $0xc] sm:$0xf]
    %v1167 = vunpack.c.l.b16 %v1155
    %v1168 = vunpack.c.l.b16 %v1156
    %v1169 = vunpack.c.l.b16 %v1157
    %v1170 = vunpack.c.l.b16 %v1158
    %v1171 = vpack.c.b16 %v1168, %v1167
    %v1172 = vpack.c.b16 %v1170, %v1169
    %1175 = vmatprep.subr.bf16.mxu0 0
    %1176 = vmatpush1.bf16.msra.mxu0 %v1171
    %1177 = vmatprep.subr.bf16.mxu0 0
    %1178 = vmatpush1.bf16.msra.mxu0 %v1172
    %1179 = vmatprep.subr.bf16.mxu0 0
    %1180 = vmatpush1.bf16.msra.mxu0 0
    %1181 = vmatprep.subr.bf16.mxu0 0
    %1182 = vmatpush1.bf16.msra.mxu0 0
    %1183 = vmatprep.subr.bf16.mxu0 0
    %1184 = vmatpush1.bf16.msra.mxu0 0
    %1185 = vmatprep.subr.bf16.mxu0 0
    %1186 = vmatpush1.bf16.msra.mxu0 0
    %1187 = vmatprep.subr.bf16.mxu0 0
    %1188 = vmatpush1.bf16.msra.mxu0 0
    %1189 = vmatprep.subr.bf16.mxu0 0
    %1190 = vmatpush1.bf16.msra.mxu0 0
    %1191 = vmatprep.subr.bf16.mxu0 0
    %1192 = vmatpush1.bf16.msra.mxu0 0
    %1193 = vmatprep.subr.bf16.mxu0 0
    %1194 = vmatpush1.bf16.msra.mxu0 0
    %1195 = vmatprep.subr.bf16.mxu0 0
    %1196 = vmatpush1.bf16.msra.mxu0 0
    %1197 = vmatprep.subr.bf16.mxu0 0
    %1198 = vmatpush1.bf16.msra.mxu0 0
    %1199 = vmatprep.subr.bf16.mxu0 0
    %1200 = vmatpush1.bf16.msra.mxu0 0
    %1201 = vmatprep.subr.bf16.mxu0 0
    %1202 = vmatpush1.bf16.msra.mxu0 0
    %1203 = vmatprep.subr.bf16.mxu0 0
    %1204 = vmatpush1.bf16.msra.mxu0 0
    %1205 = vmatprep.subr.bf16.mxu0 0
    %1206 = vmatpush1.bf16.msra.mxu0 0
    %1207 = vmatprep.mubr.bf16.mxu0 0
    %1208 = vmatmul.mubr.bf16.gmra.mrb[0].mxu0 %v278
    %v1209 = vpop.f32.mrb[0].mxu0
    %v1210 = vadd.f32 0.0, %v1209
    %v1211 = vpop.f32.mrb[0].mxu0
    %v1212 = vpop.f32.mrb[0].mxu0
    %v1213 = vpop.f32.mrb[0].mxu0
    %1214 = vdwg.mxu0
    %v1215 = vadd.f32 %v1146, %v1210
    %v1220 = vunpack.c.l.b16 %v1159
    %v1221 = vunpack.c.l.b16 %v1160
    %v1222 = vunpack.c.l.b16 %v1161
    %v1223 = vunpack.c.l.b16 %v1162
    %v1224 = vpack.c.b16 %v1221, %v1220
    %v1225 = vpack.c.b16 %v1223, %v1222
    %1228 = vmatprep.subr.bf16.mxu0 0
    %1229 = vmatpush1.bf16.msra.mxu0 %v1224
    %1230 = vmatprep.subr.bf16.mxu0 0
    %1231 = vmatpush1.bf16.msra.mxu0 %v1225
    %1232 = vmatprep.subr.bf16.mxu0 0
    %1233 = vmatpush1.bf16.msra.mxu0 0
    %1234 = vmatprep.subr.bf16.mxu0 0
    %1235 = vmatpush1.bf16.msra.mxu0 0
    %1236 = vmatprep.subr.bf16.mxu0 0
    %1237 = vmatpush1.bf16.msra.mxu0 0
    %1238 = vmatprep.subr.bf16.mxu0 0
    %1239 = vmatpush1.bf16.msra.mxu0 0
    %1240 = vmatprep.subr.bf16.mxu0 0
    %1241 = vmatpush1.bf16.msra.mxu0 0
    %1242 = vmatprep.subr.bf16.mxu0 0
    %1243 = vmatpush1.bf16.msra.mxu0 0
    %1244 = vmatprep.subr.bf16.mxu0 0
    %1245 = vmatpush1.bf16.msra.mxu0 0
    %1246 = vmatprep.subr.bf16.mxu0 0
    %1247 = vmatpush1.bf16.msra.mxu0 0
    %1248 = vmatprep.subr.bf16.mxu0 0
    %1249 = vmatpush1.bf16.msra.mxu0 0
    %1250 = vmatprep.subr.bf16.mxu0 0
    %1251 = vmatpush1.bf16.msra.mxu0 0
    %1252 = vmatprep.subr.bf16.mxu0 0
    %1253 = vmatpush1.bf16.msra.mxu0 0
    %1254 = vmatprep.subr.bf16.mxu0 0
    %1255 = vmatpush1.bf16.msra.mxu0 0
    %1256 = vmatprep.subr.bf16.mxu0 0
    %1257 = vmatpush1.bf16.msra.mxu0 0
    %1258 = vmatprep.subr.bf16.mxu0 0
    %1259 = vmatpush1.bf16.msra.mxu0 0
    %1260 = vmatprep.mubr.bf16.mxu0 0
    %1261 = vmatmul.mubr.bf16.gmra.mrb[0].mxu0 %v278
    %v1262 = vpop.f32.mrb[0].mxu0
    %v1263 = vadd.f32 0.0, %v1262
    %v1264 = vpop.f32.mrb[0].mxu0
    %v1265 = vpop.f32.mrb[0].mxu0
    %v1266 = vpop.f32.mrb[0].mxu0
    %1267 = vdwg.mxu0
    %v1269 = vrot.slane %v1263, 2
    %v1271 = vadd.f32 %v1154, %v1269
    %v1272 = vxor.u32 %v1215, 2147483648
    %v1273 = vmul.f32 %v1272, 1.442695
    %v1274 = vpow.pop %v1273
    %v1275 = vadd.f32 %v1274, 1.0
    %v1276 = vrcp.pop %v1275
    %v1277 = vmul.f32 1.0, %v1276
    %v1278 = vtanh.pop %v1215
    %v1279 = vmul.f32 %v1277, 0.0
    %1281 = vrot.lane.b32.xlu0 %v1278, 64
    %v1282 = vpop.permute.xlu0 %1281
    %v1284 = vmul.f32 %v1277, %v1282
    %1286 = vrot.lane.b32.xlu0 %v1284, 32
    %v1287 = vpop.permute.xlu0 %1286
    %v1289 = vadd.f32 %v1279, %v1287
    %v1290 = vtanh.pop %v1289
    %1292 = vrot.lane.b32.xlu0 %v1290, 64
    %v1293 = vpop.permute.xlu0 %1292
    %v1295 = vmul.f32 %v1277, %v1293
    %v1296 = vxor.u32 %v1271, 2147483648
    %v1297 = vmul.f32 %v1296, 1.442695
    %v1298 = vpow.pop %v1297
    %v1299 = vadd.f32 %v1298, 1.0
    %v1300 = vrcp.pop %v1299
    %v1301 = vmul.f32 1.0, %v1300
    %v1302 = vtanh.pop %v1271
    %v1303 = vmul.f32 %v1301, 0.0
    %1305 = vrot.lane.b32.xlu0 %v1302, 64
    %v1306 = vpop.permute.xlu0 %1305
    %v1308 = vmul.f32 %v1301, %v1306
    %1310 = vrot.lane.b32.xlu0 %v1308, 32
    %v1311 = vpop.permute.xlu0 %1310
    %v1313 = vadd.f32 %v1303, %v1311
    %v1314 = vtanh.pop %v1313
    %1316 = vrot.lane.b32.xlu0 %v1314, 64
    %v1317 = vpop.permute.xlu0 %1316
    %v1319 = vmul.f32 %v1301, %v1317
    %v1320 = vpack.c.bf16 %v1295, %v1295
    %1322 = vrot.lane.b32.xlu0 %v1320, 32
    %v1323 = vpop.permute.xlu0 %1322
    %v1325 = vsel %vm276, %v1323, 0
    %1327 = vmatprep.subr.bf16.mxu0 0
    %1328 = vmatpush1.bf16.msra.mxu0 %v1171
    %1329 = vmatprep.subr.bf16.mxu0 0
    %1330 = vmatpush1.bf16.msra.mxu0 %v1172
    %1331 = vmatprep.subr.bf16.mxu0 0
    %1332 = vmatpush1.bf16.msra.mxu0 0
    %1333 = vmatprep.subr.bf16.mxu0 0
    %1334 = vmatpush1.bf16.msra.mxu0 0
    %1335 = vmatprep.subr.bf16.mxu0 0
    %1336 = vmatpush1.bf16.msra.mxu0 0
    %1337 = vmatprep.subr.bf16.mxu0 0
    %1338 = vmatpush1.bf16.msra.mxu0 0
    %1339 = vmatprep.subr.bf16.mxu0 0
    %1340 = vmatpush1.bf16.msra.mxu0 0
    %1341 = vmatprep.subr.bf16.mxu0 0
    %1342 = vmatpush1.bf16.msra.mxu0 0
    %1343 = vmatprep.subr.bf16.mxu0 0
    %1344 = vmatpush1.bf16.msra.mxu0 0
    %1345 = vmatprep.subr.bf16.mxu0 0
    %1346 = vmatpush1.bf16.msra.mxu0 0
    %1347 = vmatprep.subr.bf16.mxu0 0
    %1348 = vmatpush1.bf16.msra.mxu0 0
    %1349 = vmatprep.subr.bf16.mxu0 0
    %1350 = vmatpush1.bf16.msra.mxu0 0
    %1351 = vmatprep.subr.bf16.mxu0 0
    %1352 = vmatpush1.bf16.msra.mxu0 0
    %1353 = vmatprep.subr.bf16.mxu0 0
    %1354 = vmatpush1.bf16.msra.mxu0 0
    %1355 = vmatprep.subr.bf16.mxu0 0
    %1356 = vmatpush1.bf16.msra.mxu0 0
    %1357 = vmatprep.subr.bf16.mxu0 0
    %1358 = vmatpush1.bf16.msra.mxu0 0
    %1359 = vmatprep.mubr.bf16.mxu0 0
    %1360 = vmatmul.mubr.bf16.gmra.mrb[0].mxu0 %v1325
    %v1361 = vpop.f32.mrb[0].mxu0
    %v1362 = vadd.f32 0.0, %v1361
    %v1363 = vpop.f32.mrb[0].mxu0
    %v1364 = vpop.f32.mrb[0].mxu0
    %v1365 = vpop.f32.mrb[0].mxu0
    %1366 = vdwg.mxu0
    %v1368 = vrot.slane %v1362, 6
    %v1370 = vadd.f32 %v1146, %v1368
    %v1371 = vpack.c.bf16 %v1319, %v1319
    %v1373 = vrot.slane %v1371, 3
    %1374 = vrot.lane.b32.xlu0 %v1373, 32
    %v1375 = vpop.permute.xlu0 %1374
    %v1377 = vsel %vm276, %v1375, 0
    %1379 = vmatprep.subr.bf16.mxu0 0
    %1380 = vmatpush1.bf16.msra.mxu0 %v1224
    %1381 = vmatprep.subr.bf16.mxu0 0
    %1382 = vmatpush1.bf16.msra.mxu0 %v1225
    %1383 = vmatprep.subr.bf16.mxu0 0
    %1384 = vmatpush1.bf16.msra.mxu0 0
    %1385 = vmatprep.subr.bf16.mxu0 0
    %1386 = vmatpush1.bf16.msra.mxu0 0
    %1387 = vmatprep.subr.bf16.mxu0 0
    %1388 = vmatpush1.bf16.msra.mxu0 0
    %1389 = vmatprep.subr.bf16.mxu0 0
    %1390 = vmatpush1.bf16.msra.mxu0 0
    %1391 = vmatprep.subr.bf16.mxu0 0
    %1392 = vmatpush1.bf16.msra.mxu0 0
    %1393 = vmatprep.subr.bf16.mxu0 0
    %1394 = vmatpush1.bf16.msra.mxu0 0
    %1395 = vmatprep.subr.bf16.mxu0 0
    %1396 = vmatpush1.bf16.msra.mxu0 0
    %1397 = vmatprep.subr.bf16.mxu0 0
    %1398 = vmatpush1.bf16.msra.mxu0 0
    %1399 = vmatprep.subr.bf16.mxu0 0
    %1400 = vmatpush1.bf16.msra.mxu0 0
    %1401 = vmatprep.subr.bf16.mxu0 0
    %1402 = vmatpush1.bf16.msra.mxu0 0
    %1403 = vmatprep.subr.bf16.mxu0 0
    %1404 = vmatpush1.bf16.msra.mxu0 0
    %1405 = vmatprep.subr.bf16.mxu0 0
    %1406 = vmatpush1.bf16.msra.mxu0 0
    %1407 = vmatprep.subr.bf16.mxu0 0
    %1408 = vmatpush1.bf16.msra.mxu0 0
    %1409 = vmatprep.subr.bf16.mxu0 0
    %1410 = vmatpush1.bf16.msra.mxu0 0
    %1411 = vmatprep.mubr.bf16.mxu0 0
    %1412 = vmatmul.mubr.bf16.gmra.mrb[0].mxu0 %v1377
    %v1413 = vpop.f32.mrb[0].mxu0
    %v1414 = vadd.f32 0.0, %v1413
    %v1415 = vpop.f32.mrb[0].mxu0
    %v1416 = vpop.f32.mrb[0].mxu0
    %v1417 = vpop.f32.mrb[0].mxu0
    %1418 = vdwg.mxu0
    %v1420 = vrot.slane %v1414, 4
    %v1422 = vadd.f32 %v1154, %v1420
    %v1423 = vxor.u32 %v1370, 2147483648
    %v1424 = vmul.f32 %v1423, 1.442695
    %v1425 = vpow.pop %v1424
    %v1426 = vadd.f32 %v1425, 1.0
    %v1427 = vrcp.pop %v1426
    %v1428 = vmul.f32 1.0, %v1427
    %v1429 = vtanh.pop %v1370
    %v1431 = vrot.slane %v1289, 6
    %v1433 = vmul.f32 %v1428, %v1431
    %1435 = vrot.lane.b32.xlu0 %v1429, 64
    %v1436 = vpop.permute.xlu0 %1435
    %v1438 = vmul.f32 %v1428, %v1436
    %1440 = vrot.lane.b32.xlu0 %v1438, 32
    %v1441 = vpop.permute.xlu0 %1440
    %v1443 = vadd.f32 %v1433, %v1441
    %v1444 = vtanh.pop %v1443
    %1446 = vrot.lane.b32.xlu0 %v1444, 64
    %v1447 = vpop.permute.xlu0 %1446
    %v1449 = vmul.f32 %v1428, %v1447
    %v1450 = vxor.u32 %v1422, 2147483648
    %v1451 = vmul.f32 %v1450, 1.442695
    %v1452 = vpow.pop %v1451
    %v1453 = vadd.f32 %v1452, 1.0
    %v1454 = vrcp.pop %v1453
    %v1455 = vmul.f32 1.0, %v1454
    %v1456 = vtanh.pop %v1422
    %v1458 = vrot.slane %v1313, 2
    %v1460 = vmul.f32 %v1455, %v1458
    %1462 = vrot.lane.b32.xlu0 %v1456, 64
    %v1463 = vpop.permute.xlu0 %1462
    %v1465 = vmul.f32 %v1455, %v1463
    %1467 = vrot.lane.b32.xlu0 %v1465, 32
    %v1468 = vpop.permute.xlu0 %1467
    %v1470 = vadd.f32 %v1460, %v1468
    %v1471 = vtanh.pop %v1470
    %1473 = vrot.lane.b32.xlu0 %v1471, 64
    %v1474 = vpop.permute.xlu0 %1473
    %v1476 = vmul.f32 %v1455, %v1474
    %v1477 = vpack.c.bf16 %v1449, %v1449
    %v1479 = vrot.slane %v1477, 1
    %1480 = vrot.lane.b32.xlu0 %v1479, 32
    %v1481 = vpop.permute.xlu0 %1480
    %v1483 = vsel %vm276, %v1481, 0
    %1485 = vmatprep.subr.bf16.mxu0 0
    %1486 = vmatpush1.bf16.msra.mxu0 %v1171
    %1487 = vmatprep.subr.bf16.mxu0 0
    %1488 = vmatpush1.bf16.msra.mxu0 %v1172
    %1489 = vmatprep.subr.bf16.mxu0 0
    %1490 = vmatpush1.bf16.msra.mxu0 0
    %1491 = vmatprep.subr.bf16.mxu0 0
    %1492 = vmatpush1.bf16.msra.mxu0 0
    %1493 = vmatprep.subr.bf16.mxu0 0
    %1494 = vmatpush1.bf16.msra.mxu0 0
    %1495 = vmatprep.subr.bf16.mxu0 0
    %1496 = vmatpush1.bf16.msra.mxu0 0
    %1497 = vmatprep.subr.bf16.mxu0 0
    %1498 = vmatpush1.bf16.msra.mxu0 0
    %1499 = vmatprep.subr.bf16.mxu0 0
    %1500 = vmatpush1.bf16.msra.mxu0 0
    %1501 = vmatprep.subr.bf16.mxu0 0
    %1502 = vmatpush1.bf16.msra.mxu0 0
    %1503 = vmatprep.subr.bf16.mxu0 0
    %1504 = vmatpush1.bf16.msra.mxu0 0
    %1505 = vmatprep.subr.bf16.mxu0 0
    %1506 = vmatpush1.bf16.msra.mxu0 0
    %1507 = vmatprep.subr.bf16.mxu0 0
    %1508 = vmatpush1.bf16.msra.mxu0 0
    %1509 = vmatprep.subr.bf16.mxu0 0
    %1510 = vmatpush1.bf16.msra.mxu0 0
    %1511 = vmatprep.subr.bf16.mxu0 0
    %1512 = vmatpush1.bf16.msra.mxu0 0
    %1513 = vmatprep.subr.bf16.mxu0 0
    %1514 = vmatpush1.bf16.msra.mxu0 0
    %1515 = vmatprep.subr.bf16.mxu0 0
    %1516 = vmatpush1.bf16.msra.mxu0 0
    %1517 = vmatprep.mubr.bf16.mxu0 0
    %1518 = vmatmul.mubr.bf16.gmra.mrb[0].mxu0 %v1483
    %v1519 = vpop.f32.mrb[0].mxu0
    %v1520 = vadd.f32 0.0, %v1519
    %v1521 = vpop.f32.mrb[0].mxu0
    %v1522 = vpop.f32.mrb[0].mxu0
    %v1523 = vpop.f32.mrb[0].mxu0
    %1524 = vdwg.mxu0
    %v1526 = vrot.slane %v1520, 4
    %v1528 = vadd.f32 %v1146, %v1526
    %v1529 = vpack.c.bf16 %v1476, %v1476
    %v1531 = vrot.slane %v1529, 2
    %1532 = vrot.lane.b32.xlu0 %v1531, 32
    %v1533 = vpop.permute.xlu0 %1532
    %v1535 = vsel %vm276, %v1533, 0
    %1537 = vmatprep.subr.bf16.mxu0 0
    %1538 = vmatpush1.bf16.msra.mxu0 %v1224
    %1539 = vmatprep.subr.bf16.mxu0 0
    %1540 = vmatpush1.bf16.msra.mxu0 %v1225
    %1541 = vmatprep.subr.bf16.mxu0 0
    %1542 = vmatpush1.bf16.msra.mxu0 0
    %1543 = vmatprep.subr.bf16.mxu0 0
    %1544 = vmatpush1.bf16.msra.mxu0 0
    %1545 = vmatprep.subr.bf16.mxu0 0
    %1546 = vmatpush1.bf16.msra.mxu0 0
    %1547 = vmatprep.subr.bf16.mxu0 0
    %1548 = vmatpush1.bf16.msra.mxu0 0
    %1549 = vmatprep.subr.bf16.mxu0 0
    %1550 = vmatpush1.bf16.msra.mxu0 0
    %1551 = vmatprep.subr.bf16.mxu0 0
    %1552 = vmatpush1.bf16.msra.mxu0 0
    %1553 = vmatprep.subr.bf16.mxu0 0
    %1554 = vmatpush1.bf16.msra.mxu0 0
    %1555 = vmatprep.subr.bf16.mxu0 0
    %1556 = vmatpush1.bf16.msra.mxu0 0
    %1557 = vmatprep.subr.bf16.mxu0 0
    %1558 = vmatpush1.bf16.msra.mxu0 0
    %1559 = vmatprep.subr.bf16.mxu0 0
    %1560 = vmatpush1.bf16.msra.mxu0 0
    %1561 = vmatprep.subr.bf16.mxu0 0
    %1562 = vmatpush1.bf16.msra.mxu0 0
    %1563 = vmatprep.subr.bf16.mxu0 0
    %1564 = vmatpush1.bf16.msra.mxu0 0
    %1565 = vmatprep.subr.bf16.mxu0 0
    %1566 = vmatpush1.bf16.msra.mxu0 0
    %1567 = vmatprep.subr.bf16.mxu0 0
    %1568 = vmatpush1.bf16.msra.mxu0 0
    %1569 = vmatprep.mubr.bf16.mxu0 0
    %1570 = vmatmul.mubr.bf16.gmra.mrb[0].mxu0 %v1535
    %v1571 = vpop.f32.mrb[0].mxu0
    %v1572 = vadd.f32 0.0, %v1571
    %v1573 = vpop.f32.mrb[0].mxu0
    %v1574 = vpop.f32.mrb[0].mxu0
    %v1575 = vpop.f32.mrb[0].mxu0
    %1576 = vdwg.mxu0
    %v1578 = vrot.slane %v1572, 6
    %v1580 = vadd.f32 %v1154, %v1578
    %v1581 = vxor.u32 %v1528, 2147483648
    %v1582 = vmul.f32 %v1581, 1.442695
    %v1583 = vpow.pop %v1582
    %v1584 = vadd.f32 %v1583, 1.0
    %v1585 = vrcp.pop %v1584
    %v1586 = vmul.f32 1.0, %v1585
    %v1587 = vtanh.pop %v1528
    %v1589 = vrot.slane %v1443, 6
    %v1591 = vmul.f32 %v1586, %v1589
    %1593 = vrot.lane.b32.xlu0 %v1587, 64
    %v1594 = vpop.permute.xlu0 %1593
    %v1596 = vmul.f32 %v1586, %v1594
    %1598 = vrot.lane.b32.xlu0 %v1596, 32
    %v1599 = vpop.permute.xlu0 %1598
    %v1601 = vadd.f32 %v1591, %v1599
    %v1602 = vtanh.pop %v1601
    %1604 = vrot.lane.b32.xlu0 %v1602, 64
    %v1605 = vpop.permute.xlu0 %1604
    %v1607 = vmul.f32 %v1586, %v1605
    %v1608 = vxor.u32 %v1580, 2147483648
    %v1609 = vmul.f32 %v1608, 1.442695
    %v1610 = vpow.pop %v1609
    %v1611 = vadd.f32 %v1610, 1.0
    %v1612 = vrcp.pop %v1611
    %v1613 = vmul.f32 1.0, %v1612
    %v1614 = vtanh.pop %v1580
    %v1616 = vrot.slane %v1470, 2
    %v1618 = vmul.f32 %v1613, %v1616
    %1620 = vrot.lane.b32.xlu0 %v1614, 64
    %v1621 = vpop.permute.xlu0 %1620
    %v1623 = vmul.f32 %v1613, %v1621
    %1625 = vrot.lane.b32.xlu0 %v1623, 32
    %v1626 = vpop.permute.xlu0 %1625
    %v1628 = vadd.f32 %v1618, %v1626
    %v1629 = vtanh.pop %v1628
    %1631 = vrot.lane.b32.xlu0 %v1629, 64
    %v1632 = vpop.permute.xlu0 %1631
    %v1634 = vmul.f32 %v1613, %v1632
    %v1635 = vpack.c.bf16 %v1607, %v1607
    %v1637 = vrot.slane %v1635, 2
    %1638 = vrot.lane.b32.xlu0 %v1637, 32
    %v1639 = vpop.permute.xlu0 %1638
    %v1641 = vsel %vm276, %v1639, 0
    %1643 = vmatprep.subr.bf16.mxu0 0
    %1644 = vmatpush1.bf16.msra.mxu0 %v1171
    %1645 = vmatprep.subr.bf16.mxu0 0
    %1646 = vmatpush1.bf16.msra.mxu0 %v1172
    %1647 = vmatprep.subr.bf16.mxu0 0
    %1648 = vmatpush1.bf16.msra.mxu0 0
    %1649 = vmatprep.subr.bf16.mxu0 0
    %1650 = vmatpush1.bf16.msra.mxu0 0
    %1651 = vmatprep.subr.bf16.mxu0 0
    %1652 = vmatpush1.bf16.msra.mxu0 0
    %1653 = vmatprep.subr.bf16.mxu0 0
    %1654 = vmatpush1.bf16.msra.mxu0 0
    %1655 = vmatprep.subr.bf16.mxu0 0
    %1656 = vmatpush1.bf16.msra.mxu0 0
    %1657 = vmatprep.subr.bf16.mxu0 0
    %1658 = vmatpush1.bf16.msra.mxu0 0
    %1659 = vmatprep.subr.bf16.mxu0 0
    %1660 = vmatpush1.bf16.msra.mxu0 0
    %1661 = vmatprep.subr.bf16.mxu0 0
    %1662 = vmatpush1.bf16.msra.mxu0 0
    %1663 = vmatprep.subr.bf16.mxu0 0
    %1664 = vmatpush1.bf16.msra.mxu0 0
    %1665 = vmatprep.subr.bf16.mxu0 0
    %1666 = vmatpush1.bf16.msra.mxu0 0
    %1667 = vmatprep.subr.bf16.mxu0 0
    %1668 = vmatpush1.bf16.msra.mxu0 0
    %1669 = vmatprep.subr.bf16.mxu0 0
    %1670 = vmatpush1.bf16.msra.mxu0 0
    %1671 = vmatprep.subr.bf16.mxu0 0
    %1672 = vmatpush1.bf16.msra.mxu0 0
    %1673 = vmatprep.subr.bf16.mxu0 0
    %1674 = vmatpush1.bf16.msra.mxu0 0
    %1675 = vmatprep.mubr.bf16.mxu0 0
    %1676 = vmatmul.mubr.bf16.gmra.mrb[0].mxu0 %v1641
    %v1677 = vpop.f32.mrb[0].mxu0
    %v1678 = vadd.f32 0.0, %v1677
    %v1679 = vpop.f32.mrb[0].mxu0
    %v1680 = vpop.f32.mrb[0].mxu0
    %v1681 = vpop.f32.mrb[0].mxu0
    %1682 = vdwg.mxu0
    %v1684 = vrot.slane %v1678, 2
    %v1686 = vadd.f32 %v1146, %v1684
    %v1687 = vpack.c.bf16 %v1634, %v1634
    %v1689 = vrot.slane %v1687, 1
    %1690 = vrot.lane.b32.xlu0 %v1689, 32
    %v1691 = vpop.permute.xlu0 %1690
    %v1693 = vsel %vm276, %v1691, 0
    %1695 = vmatprep.subr.bf16.mxu0 0
    %1696 = vmatpush1.bf16.msra.mxu0 %v1224
    %1697 = vmatprep.subr.bf16.mxu0 0
    %1698 = vmatpush1.bf16.msra.mxu0 %v1225
    %1699 = vmatprep.subr.bf16.mxu0 0
    %1700 = vmatpush1.bf16.msra.mxu0 0
    %1701 = vmatprep.subr.bf16.mxu0 0
    %1702 = vmatpush1.bf16.msra.mxu0 0
    %1703 = vmatprep.subr.bf16.mxu0 0
    %1704 = vmatpush1.bf16.msra.mxu0 0
    %1705 = vmatprep.subr.bf16.mxu0 0
    %1706 = vmatpush1.bf16.msra.mxu0 0
    %1707 = vmatprep.subr.bf16.mxu0 0
    %1708 = vmatpush1.bf16.msra.mxu0 0
    %1709 = vmatprep.subr.bf16.mxu0 0
    %1710 = vmatpush1.bf16.msra.mxu0 0
    %1711 = vmatprep.subr.bf16.mxu0 0
    %1712 = vmatpush1.bf16.msra.mxu0 0
    %1713 = vmatprep.subr.bf16.mxu0 0
    %1714 = vmatpush1.bf16.msra.mxu0 0
    %1715 = vmatprep.subr.bf16.mxu0 0
    %1716 = vmatpush1.bf16.msra.mxu0 0
    %1717 = vmatprep.subr.bf16.mxu0 0
    %1718 = vmatpush1.bf16.msra.mxu0 0
    %1719 = vmatprep.subr.bf16.mxu0 0
    %1720 = vmatpush1.bf16.msra.mxu0 0
    %1721 = vmatprep.subr.bf16.mxu0 0
    %1722 = vmatpush1.bf16.msra.mxu0 0
    %1723 = vmatprep.subr.bf16.mxu0 0
    %1724 = vmatpush1.bf16.msra.mxu0 0
    %1725 = vmatprep.subr.bf16.mxu0 0
    %1726 = vmatpush1.bf16.msra.mxu0 0
    %1727 = vmatprep.mubr.bf16.mxu0 0
    %1728 = vmatmul.mubr.bf16.gmra.mrb[0].mxu0 %v1693
    %v1729 = vpop.f32.mrb[0].mxu0
    %v1730 = vadd.f32 0.0, %v1729
    %v1731 = vpop.f32.mrb[0].mxu0
    %v1732 = vpop.f32.mrb[0].mxu0
    %v1733 = vpop.f32.mrb[0].mxu0
    %1734 = vdwg.mxu0
    %v1735 = vadd.f32 %v1154, %v1730
    %v1736 = vxor.u32 %v1686, 2147483648
    %v1737 = vmul.f32 %v1736, 1.442695
    %v1738 = vpow.pop %v1737
    %v1739 = vadd.f32 %v1738, 1.0
    %v1740 = vrcp.pop %v1739
    %v1741 = vmul.f32 1.0, %v1740
    %v1742 = vtanh.pop %v1686
    %v1744 = vrot.slane %v1601, 6
    %v1746 = vmul.f32 %v1741, %v1744
    %1748 = vrot.lane.b32.xlu0 %v1742, 64
    %v1749 = vpop.permute.xlu0 %1748
    %v1751 = vmul.f32 %v1741, %v1749
    %1753 = vrot.lane.b32.xlu0 %v1751, 32
    %v1754 = vpop.permute.xlu0 %1753
    %v1756 = vadd.f32 %v1746, %v1754
    %v1757 = vtanh.pop %v1756
    %1759 = vrot.lane.b32.xlu0 %v1757, 64
    %v1760 = vpop.permute.xlu0 %1759
    %v1762 = vmul.f32 %v1741, %v1760
    %v1763 = vxor.u32 %v1735, 2147483648
    %v1764 = vmul.f32 %v1763, 1.442695
    %v1765 = vpow.pop %v1764
    %v1766 = vadd.f32 %v1765, 1.0
    %v1767 = vrcp.pop %v1766
    %v1768 = vmul.f32 1.0, %v1767
    %v1769 = vtanh.pop %v1735
    %v1771 = vrot.slane %v1628, 2
    %v1773 = vmul.f32 %v1768, %v1771
    %1775 = vrot.lane.b32.xlu0 %v1769, 64
    %v1776 = vpop.permute.xlu0 %1775
    %v1778 = vmul.f32 %v1768, %v1776
    %1780 = vrot.lane.b32.xlu0 %v1778, 32
    %v1781 = vpop.permute.xlu0 %1780
    %v1783 = vadd.f32 %v1773, %v1781
    %v1784 = vtanh.pop %v1783
    %1786 = vrot.lane.b32.xlu0 %v1784, 64
    %v1787 = vpop.permute.xlu0 %1786
    %v1789 = vmul.f32 %v1768, %v1787
    %v1790 = vsel %vm87, %v1295, %v1449
    %v1791 = vsel %vm89, %v1790, %v1607
    %v1792 = vsel %vm91, %v1791, %v1762
    %v1793 = vpack.c.bf16 %v1792, %v1792
    %v1794 = vsel %vm87, %v1789, %v1634
    %v1795 = vsel %vm89, %v1794, %v1476
    %v1796 = vsel %vm91, %v1795, %v1319
    %v1797 = vpack.c.bf16 %v1796, %v1796
    %v1798 = vld [vmem:[%s13] sm:$0xf]
    %v1799 = vld [vmem:[%s13 + $0x4] sm:$0xf]
    %v1800 = vld [vmem:[%s13 + $0x8] sm:$0xf]
    %v1801 = vld [vmem:[%s13 + $0xc] sm:$0xf]
    %v1802 = vld [vmem:[%s13 + $0x10] sm:$0xf]
    %v1803 = vld [vmem:[%s13 + $0x14] sm:$0xf]
    %v1804 = vld [vmem:[%s13 + $0x18] sm:$0xf]
    %v1805 = vld [vmem:[%s13 + $0x1c] sm:$0xf]
    %1807 = vrot.lane.b32.xlu0 %v1797, 32
    %v1808 = vpop.permute.xlu0 %1807
    %v1813 = vunpack.c.l.b16 %v1802
    %v1814 = vunpack.c.l.b16 %v1803
    %v1815 = vunpack.c.l.b16 %v1804
    %v1816 = vunpack.c.l.b16 %v1805
    %v1817 = vpack.c.b16 %v1814, %v1813
    %v1818 = vpack.c.b16 %v1816, %v1815
    %v1822 = vsel %vm276, %v1808, 0
    %1824 = vmatprep.subr.bf16.mxu0 0
    %1825 = vmatpush1.bf16.msra.mxu0 %v1817
    %1826 = vmatprep.subr.bf16.mxu0 0
    %1827 = vmatpush1.bf16.msra.mxu0 %v1818
    %1828 = vmatprep.subr.bf16.mxu0 0
    %1829 = vmatpush1.bf16.msra.mxu0 0
    %1830 = vmatprep.subr.bf16.mxu0 0
    %1831 = vmatpush1.bf16.msra.mxu0 0
    %1832 = vmatprep.subr.bf16.mxu0 0
    %1833 = vmatpush1.bf16.msra.mxu0 0
    %1834 = vmatprep.subr.bf16.mxu0 0
    %1835 = vmatpush1.bf16.msra.mxu0 0
    %1836 = vmatprep.subr.bf16.mxu0 0
    %1837 = vmatpush1.bf16.msra.mxu0 0
    %1838 = vmatprep.subr.bf16.mxu0 0
    %1839 = vmatpush1.bf16.msra.mxu0 0
    %1840 = vmatprep.subr.bf16.mxu0 0
    %1841 = vmatpush1.bf16.msra.mxu0 0
    %1842 = vmatprep.subr.bf16.mxu0 0
    %1843 = vmatpush1.bf16.msra.mxu0 0
    %1844 = vmatprep.subr.bf16.mxu0 0
    %1845 = vmatpush1.bf16.msra.mxu0 0
    %1846 = vmatprep.subr.bf16.mxu0 0
    %1847 = vmatpush1.bf16.msra.mxu0 0
    %1848 = vmatprep.subr.bf16.mxu0 0
    %1849 = vmatpush1.bf16.msra.mxu0 0
    %1850 = vmatprep.subr.bf16.mxu0 0
    %1851 = vmatpush1.bf16.msra.mxu0 0
    %1852 = vmatprep.subr.bf16.mxu0 0
    %1853 = vmatpush1.bf16.msra.mxu0 0
    %1854 = vmatprep.subr.bf16.mxu0 0
    %1855 = vmatpush1.bf16.msra.mxu0 0
    %1856 = vmatprep.mubr.bf16.mxu0 0
    %1857 = vmatmul.mubr.bf16.gmra.mrb[0].mxu0 %v1822
    %v1858 = vpop.f32.mrb[0].mxu0
    %v1859 = vadd.f32 0.0, %v1858
    %v1860 = vpop.f32.mrb[0].mxu0
    %v1861 = vpop.f32.mrb[0].mxu0
    %v1862 = vpop.f32.mrb[0].mxu0
    %1863 = vdwg.mxu0
    %1865 = vrot.lane.b32.xlu0 %v1793, 32
    %v1866 = vpop.permute.xlu0 %1865
    %v1871 = vunpack.c.l.b16 %v1798
    %v1872 = vunpack.c.l.b16 %v1799
    %v1873 = vunpack.c.l.b16 %v1800
    %v1874 = vunpack.c.l.b16 %v1801
    %v1875 = vpack.c.b16 %v1872, %v1871
    %v1876 = vpack.c.b16 %v1874, %v1873
    %v1880 = vsel %vm276, %v1866, 0
    %1882 = vmatprep.subr.bf16.mxu0 0
    %1883 = vmatpush1.bf16.msra.mxu0 %v1875
    %1884 = vmatprep.subr.bf16.mxu0 0
    %1885 = vmatpush1.bf16.msra.mxu0 %v1876
    %1886 = vmatprep.subr.bf16.mxu0 0
    %1887 = vmatpush1.bf16.msra.mxu0 0
    %1888 = vmatprep.subr.bf16.mxu0 0
    %1889 = vmatpush1.bf16.msra.mxu0 0
    %1890 = vmatprep.subr.bf16.mxu0 0
    %1891 = vmatpush1.bf16.msra.mxu0 0
    %1892 = vmatprep.subr.bf16.mxu0 0
    %1893 = vmatpush1.bf16.msra.mxu0 0
    %1894 = vmatprep.subr.bf16.mxu0 0
    %1895 = vmatpush1.bf16.msra.mxu0 0
    %1896 = vmatprep.subr.bf16.mxu0 0
    %1897 = vmatpush1.bf16.msra.mxu0 0
    %1898 = vmatprep.subr.bf16.mxu0 0
    %1899 = vmatpush1.bf16.msra.mxu0 0
    %1900 = vmatprep.subr.bf16.mxu0 0
    %1901 = vmatpush1.bf16.msra.mxu0 0
    %1902 = vmatprep.subr.bf16.mxu0 0
    %1903 = vmatpush1.bf16.msra.mxu0 0
    %1904 = vmatprep.subr.bf16.mxu0 0
    %1905 = vmatpush1.bf16.msra.mxu0 0
    %1906 = vmatprep.subr.bf16.mxu0 0
    %1907 = vmatpush1.bf16.msra.mxu0 0
    %1908 = vmatprep.subr.bf16.mxu0 0
    %1909 = vmatpush1.bf16.msra.mxu0 0
    %1910 = vmatprep.subr.bf16.mxu0 0
    %1911 = vmatpush1.bf16.msra.mxu0 0
    %1912 = vmatprep.subr.bf16.mxu0 0
    %1913 = vmatpush1.bf16.msra.mxu0 0
    %1914 = vmatprep.mubr.bf16.mxu0 0
    %1915 = vmatmul.mubr.bf16.gmra.mrb[0].mxu0 %v1880
    %v1916 = vpop.f32.mrb[0].mxu0
    %v1917 = vadd.f32 %v1859, %v1916
    %v1918 = vpop.f32.mrb[0].mxu0
    %v1919 = vpop.f32.mrb[0].mxu0
    %v1920 = vpop.f32.mrb[0].mxu0
    %1921 = vdwg.mxu0
    %v1922 = vld [vmem:[%s14] sm:$0x1]
    %v1924 = vlaneseq
    %v1925 = vshrl.u32 %v1924, 7
    %v1926 = vsub.s32 0, %v1925
    %v1927 = vrot.slane %v1922, %v1926
    %v1929 = vadd.f32 %v1917, %v1927
    %vm1930 = vcmask 130048
    %v1931 = vsel %vm1930, %v1929, -inf
    %1932 = vmax.xlane.f32.xlu0 %v1931
    %v1933 = vpop.xlane.xlu0 %1932
    %v1934 = vsub.f32 %v1929, %v1933
    %v1935 = vmul.f32 %v1934, 1.442695
    %v1936 = vpow.pop %v1935
    %v1937 = vsel %vm1930, %v1936, 0.0
    %1938 = vadd.xlane.f32.xlu0 %v1937
    %v1939 = vpop.xlane.xlu0 %1938
    %v1940 = vlog2.pop %v1939
    %v1941 = vmul.f32 %v1940, 0.6931472
    %v1942 = vsub.f32 %v1934, %v1941
    %v1945 = vunpack.c.l.s4 1966171168
    %v1946 = vunpack.c.0.s8 %v1945
    %v1947 = vlaneseq
    %v1948 = vshrl.u32 %v1947, 7
    %v1949 = vsub.s32 %v1946, %v1948
    %v1950 = vrot.slane %v1942, %v1949
    %v1951 = vcombine.high %v1950, %v1950
    %v1953 = vunpack.c.l.s4 1966171168
    %v1954 = vunpack.c.0.s8 %v1953
    %v1955 = vlaneseq
    %v1956 = vshrl.u32 %v1955, 7
    %v1957 = vsub.s32 %v1954, %v1956
    %v1958 = vrot.slane %v1950, %v1957
    %v1960 = vunpack.c.l.s4 1966171168
    %v1961 = vunpack.c.0.s8 %v1960
    %v1962 = vlaneseq
    %v1963 = vshrl.u32 %v1962, 7
    %v1964 = vsub.s32 %v1961, %v1963
    %v1965 = vrot.slane %v1951, %v1964
    %vm1968 = vcmask 122880
    %1969 = vst.msk [vmem:[#allocation2] sm:$0x1] %vm1968, %v1958
    %1970 = vst.msk [vmem:[#allocation2 + $0x4] sm:$0x1] %vm1968, %v1965
    %v1971 = vcombine.high %v1958, %v1958
    %v1972 = vcombine.high %v1965, %v1965
    %1975 = vst.msk [vmem:[#allocation2 + $0x1] sm:$0x1] %vm1968, %v1971
    %1976 = vst.msk [vmem:[#allocation2 + $0x5] sm:$0x1] %vm1968, %v1972
    %v1977 = vcombine.high %v1942, %v1942
    %v1979 = vunpack.c.l.s4 1966171168
    %v1980 = vunpack.c.0.s8 %v1979
    %v1981 = vlaneseq
    %v1982 = vshrl.u32 %v1981, 7
    %v1983 = vsub.s32 %v1980, %v1982
    %v1984 = vrot.slane %v1977, %v1983
    %v1985 = vcombine.high %v1984, %v1984
    %v1987 = vunpack.c.l.s4 1966171168
    %v1988 = vunpack.c.0.s8 %v1987
    %v1989 = vlaneseq
    %v1990 = vshrl.u32 %v1989, 7
    %v1991 = vsub.s32 %v1988, %v1990
    %v1992 = vrot.slane %v1984, %v1991
    %v1994 = vunpack.c.l.s4 1966171168
    %v1995 = vunpack.c.0.s8 %v1994
    %v1996 = vlaneseq
    %v1997 = vshrl.u32 %v1996, 7
    %v1998 = vsub.s32 %v1995, %v1997
    %v1999 = vrot.slane %v1985, %v1998
    %2002 = vst.msk [vmem:[#allocation2 + $0x2] sm:$0x1] %vm1968, %v1992
    %2003 = vst.msk [vmem:[#allocation2 + $0x6] sm:$0x1] %vm1968, %v1999
    %v2004 = vcombine.high %v1992, %v1992
    %v2005 = vcombine.high %v1999, %v1999
    %2008 = vst.msk [vmem:[#allocation2 + $0x3] sm:$0x1] %vm1968, %v2004
    %2009 = vst.msk [vmem:[#allocation2 + $0x7] sm:$0x1] %vm1968, %v2005
    // Predicated region
    $region62: #{overall_forward.3} parent=1 // pred_check
      _
    $region63: #{overall_forward.3} parent=1 // pred_check_branch
      %2011 = sbr.rel (0) target = $region65
    $region64: #{overall_forward.3} parent=1 // pred_region
      %s2013 = ssub.s32 128, 128
      %2014 = vsyncadd [#allocation3], %s2013
      %s2015 = sshll.u32 [#allocation2], 4
      %s2016 = int_to_ptr.vmem [resolvable:$true] %s2015
      %2021 = dma.vmem_to_hbm [thread:$0]  %s2016, 128, %s15, [#allocation3], 64, 64, 4
    $region65: #{overall_forward.3} parent=1 // pred_fallthru
      _
    // Predicated region
    $region66: #{overall_forward.3} parent=1 // pred_check
      _
    $region67: #{overall_forward.3} parent=1 // pred_check_branch
      %2023 = sbr.rel (0) target = $region69
    $region68: #{overall_forward.3} parent=1 // pred_region
      %2024 = dma.done [#allocation3], 128
    $region69: #{overall_forward.3} parent=1 // pred_fallthru
      _
    %2025 = vsyncpa [#allocation3], 1

// kernel: overall_forward.2
$region0: #{overall_forward.2}
  #allocation0 [shape = 'u32[]', space=smem, size = 0x4, offset = 0x4, fixed_abs, tag = 'smem constant byte address 0x4 - core index']
  #allocation1 [shape = 'u32[144,128]{1,0:T(1,128)}', space=vmem, size = 0x12000, scoped, tag = 'internal scratch']
  #allocation2 [shape = 'f32[18,18,32]{2,1,0:T(8,128)}', space=vmem, size = 0x36000, scoped, tag = 'scratch operand']
  #allocation3 [shape = 'f32[10,10,64]{2,1,0:T(8,128)}', space=vmem, size = 0x14000, scoped, tag = 'scratch operand']
  #allocation4 [shape = 'f32[128,32]{1,0:T(8,128)}', space=vmem, size = 0x10000, scoped, tag = 'scratch operand']
  #allocation5 [shape = 'f32[128,64]{1,0:T(8,128)}', space=vmem, size = 0x10000, scoped, tag = 'scratch operand']
  #allocation6 [shape = 'f32[32,128]{1,0:T(8,128)}', space=vmem, size = 0x4000, scoped, tag = 'scratch operand']
  %s0 = inlined_call_operand.vmem [shape: bf16[2,1024,9], index: 0, kind: input, shape index: {}]
  %s1 = inlined_call_operand.vmem [shape: bf16[9,32], index: 1, kind: input, shape index: {}]
  %s2 = inlined_call_operand.vmem [shape: f32[1,32], index: 2, kind: input, shape index: {}]
  %s3 = inlined_call_operand.vmem [shape: f32[1,32], index: 3, kind: input, shape index: {}]
  %s4 = inlined_call_operand.vmem [shape: bf16[9,32,64], index: 4, kind: input, shape index: {}]
  %s5 = inlined_call_operand.vmem [shape: f32[1,64], index: 5, kind: input, shape index: {}]
  %s6 = inlined_call_operand.vmem [shape: f32[1,64], index: 6, kind: input, shape index: {}]
  %s7 = inlined_call_operand.vmem [shape: bf16[9,64,128], index: 7, kind: input, shape index: {}]
  %s8 = inlined_call_operand.vmem [shape: f32[1,128], index: 8, kind: input, shape index: {}]
  %s9 = inlined_call_operand.vmem [shape: f32[1,128], index: 9, kind: input, shape index: {}]
  %s10 = inlined_call_operand.vmem [shape: bf16[4,128,64], index: 10, kind: input, shape index: {}]
  %s11 = inlined_call_operand.vmem [shape: f32[1,64], index: 11, kind: input, shape index: {}]
  %s12 = inlined_call_operand.vmem [shape: f32[2,4,64], index: 12, kind: output, shape index: {}]
  %s13 = sld [smem:[#allocation0]]
  $region81: #{overall_forward.2} parent=0
    _
  %s15 = ssub.s32 1, %s13
  %s16 = scalar_select 0, %s15, %s13
  loop: start=0, step=1, limit=4
  $region2: #{overall_forward.2} parent=0 // loop_pre_header
    _
  $region3: #{overall_forward.2} parent=0 // loop_header
    %s18 = sphi 0, %s22
    %p19 = scmp.ge.s32.totalorder %s18, 4
    %s28 = sphi 0, %s30
    %s31 = sphi 0, %s28
    %s32 = sphi 0, %s31
    %s48 = sphi 0, %s32
    %s52 = sphi 0, %s52
    %s54 = sphi 0, %s52
    %s55 = sphi 0, %s54
    %s69 = sphi 0, %s55
    %s73 = sphi 0, %s73
    %s75 = sphi 0, %s73
    %s76 = sphi 0, %s75
    %s90 = sphi 0, %s76
    %s94 = sphi 0, %s94
    %s96 = sphi 0, %s94
    %s97 = sphi 0, %s96
    %s111 = sphi 0, %s97
    %s115 = sphi 0, %s115
    %s117 = sphi 0, %s115
    %s118 = sphi 0, %s117
    %s132 = sphi 0, %s118
    %s136 = sphi 0, %s136
    %s138 = sphi 0, %s136
    %s139 = sphi 0, %s138
    %s153 = sphi 0, %s139
    %s157 = sphi 0, %s157
    %s159 = sphi 0, %s157
    %s160 = sphi 0, %s159
    %s174 = sphi 0, %s160
    %s178 = sphi 0, %s178
    %s180 = sphi 0, %s178
    %s181 = sphi 0, %s180
    %s195 = sphi 0, %s181
    %s199 = sphi 0, %s199
    %s201 = sphi 0, %s199
    %s202 = sphi 0, %s201
    %s216 = sphi 0, %s202
    %s220 = sphi 0, %s220
    %s222 = sphi 0, %s220
    %s223 = sphi 0, %s222
    %s237 = sphi 0, %s223
    %s241 = sphi 0, %s241
    %s243 = sphi 0, %s241
    %s244 = sphi 0, %s243
    %s258 = sphi 0, %s244
    %s262 = sphi 0, %s262
    %s264 = sphi 0, %s262
    %s265 = sphi 0, %s264
    %s279 = sphi 0, %s265
    %s285 = sphi 0, %s287
    %s288 = sphi 0, %s285
    %s289 = sphi 0, %s288
    %s305 = sphi 0, %s289
  $region4: #{overall_forward.2} parent=0 // loop_header_branch
    %21 = sbr.rel (%p19) target = $region8
  $region5: #{overall_forward.2} parent=0 // loop_body
    %s23 = ssub.s32 %s18, 1
    %s24 = ssub.s32 %s18, 2
    %s25 = sadd.s32 %s18, 1
    %s26 = ssub.s32 %s18, %s25
    %p27 = scmp.eq.s32.totalorder %s26, 0
    %s29 = sadd.s32 %s28, 1
    %s30 = scalar_select %p27, %s28, %s29
    %p33 = pneg %p27
    %p34 = scmp.eq.s32.totalorder %s18, 1
    %p35 = por %p33, %p34
    %p36 = scmp.ne.s32.totalorder %s28, %s31
    %p37 = scmp.eq.s32.totalorder %s18, 0
    %p38 = por %p36, %p37
    %p39 = scmp.ne.s32.totalorder %s28, %s31
    %p40 = scmp.eq.s32.totalorder %s23, 1
    %p41 = por %p39, %p40
    %p42 = scmp.ne.s32.totalorder %s31, %s32
    %p43 = scmp.eq.s32.totalorder %s23, 0
    %p44 = por %p42, %p43
    %p45 = scmp.ne.s32.totalorder %s31, %s32
    %p46 = scmp.eq.s32.totalorder %s24, 1
    %p47 = por %p45, %p46
    %p49 = scmp.ne.s32.totalorder %s32, %s48
    %p50 = scmp.eq.s32.totalorder %s24, 0
    %p51 = por %p49, %p50
    %s53 = sadd.s32 %s52, 1
    %p56 = scmp.eq.s32.totalorder %s18, 1
    %p57 = scmp.ne.s32.totalorder %s52, %s54
    %p58 = scmp.eq.s32.totalorder %s18, 0
    %p59 = por %p57, %p58
    %p60 = scmp.ne.s32.totalorder %s52, %s54
    %p61 = scmp.eq.s32.totalorder %s23, 1
    %p62 = por %p60, %p61
    %p63 = scmp.ne.s32.totalorder %s54, %s55
    %p64 = scmp.eq.s32.totalorder %s23, 0
    %p65 = por %p63, %p64
    %p66 = scmp.ne.s32.totalorder %s54, %s55
    %p67 = scmp.eq.s32.totalorder %s24, 1
    %p68 = por %p66, %p67
    %p70 = scmp.ne.s32.totalorder %s55, %s69
    %p71 = scmp.eq.s32.totalorder %s24, 0
    %p72 = por %p70, %p71
    %s74 = sadd.s32 %s73, 1
    %p77 = scmp.eq.s32.totalorder %s18, 1
    %p78 = scmp.ne.s32.totalorder %s73, %s75
    %p79 = scmp.eq.s32.totalorder %s18, 0
    %p80 = por %p78, %p79
    %p81 = scmp.ne.s32.totalorder %s73, %s75
    %p82 = scmp.eq.s32.totalorder %s23, 1
    %p83 = por %p81, %p82
    %p84 = scmp.ne.s32.totalorder %s75, %s76
    %p85 = scmp.eq.s32.totalorder %s23, 0
    %p86 = por %p84, %p85
    %p87 = scmp.ne.s32.totalorder %s75, %s76
    %p88 = scmp.eq.s32.totalorder %s24, 1
    %p89 = por %p87, %p88
    %p91 = scmp.ne.s32.totalorder %s76, %s90
    %p92 = scmp.eq.s32.totalorder %s24, 0
    %p93 = por %p91, %p92
    %s95 = sadd.s32 %s94, 1
    %p98 = scmp.eq.s32.totalorder %s18, 1
    %p99 = scmp.ne.s32.totalorder %s94, %s96
    %p100 = scmp.eq.s32.totalorder %s18, 0
    %p101 = por %p99, %p100
    %p102 = scmp.ne.s32.totalorder %s94, %s96
    %p103 = scmp.eq.s32.totalorder %s23, 1
    %p104 = por %p102, %p103
    %p105 = scmp.ne.s32.totalorder %s96, %s97
    %p106 = scmp.eq.s32.totalorder %s23, 0
    %p107 = por %p105, %p106
    %p108 = scmp.ne.s32.totalorder %s96, %s97
    %p109 = scmp.eq.s32.totalorder %s24, 1
    %p110 = por %p108, %p109
    %p112 = scmp.ne.s32.totalorder %s97, %s111
    %p113 = scmp.eq.s32.totalorder %s24, 0
    %p114 = por %p112, %p113
    %s116 = sadd.s32 %s115, 1
    %p119 = scmp.eq.s32.totalorder %s18, 1
    %p120 = scmp.ne.s32.totalorder %s115, %s117
    %p121 = scmp.eq.s32.totalorder %s18, 0
    %p122 = por %p120, %p121
    %p123 = scmp.ne.s32.totalorder %s115, %s117
    %p124 = scmp.eq.s32.totalorder %s23, 1
    %p125 = por %p123, %p124
    %p126 = scmp.ne.s32.totalorder %s117, %s118
    %p127 = scmp.eq.s32.totalorder %s23, 0
    %p128 = por %p126, %p127
    %p129 = scmp.ne.s32.totalorder %s117, %s118
    %p130 = scmp.eq.s32.totalorder %s24, 1
    %p131 = por %p129, %p130
    %p133 = scmp.ne.s32.totalorder %s118, %s132
    %p134 = scmp.eq.s32.totalorder %s24, 0
    %p135 = por %p133, %p134
    %s137 = sadd.s32 %s136, 1
    %p140 = scmp.eq.s32.totalorder %s18, 1
    %p141 = scmp.ne.s32.totalorder %s136, %s138
    %p142 = scmp.eq.s32.totalorder %s18, 0
    %p143 = por %p141, %p142
    %p144 = scmp.ne.s32.totalorder %s136, %s138
    %p145 = scmp.eq.s32.totalorder %s23, 1
    %p146 = por %p144, %p145
    %p147 = scmp.ne.s32.totalorder %s138, %s139
    %p148 = scmp.eq.s32.totalorder %s23, 0
    %p149 = por %p147, %p148
    %p150 = scmp.ne.s32.totalorder %s138, %s139
    %p151 = scmp.eq.s32.totalorder %s24, 1
    %p152 = por %p150, %p151
    %p154 = scmp.ne.s32.totalorder %s139, %s153
    %p155 = scmp.eq.s32.totalorder %s24, 0
    %p156 = por %p154, %p155
    %s158 = sadd.s32 %s157, 1
    %p161 = scmp.eq.s32.totalorder %s18, 1
    %p162 = scmp.ne.s32.totalorder %s157, %s159
    %p163 = scmp.eq.s32.totalorder %s18, 0
    %p164 = por %p162, %p163
    %p165 = scmp.ne.s32.totalorder %s157, %s159
    %p166 = scmp.eq.s32.totalorder %s23, 1
    %p167 = por %p165, %p166
    %p168 = scmp.ne.s32.totalorder %s159, %s160
    %p169 = scmp.eq.s32.totalorder %s23, 0
    %p170 = por %p168, %p169
    %p171 = scmp.ne.s32.totalorder %s159, %s160
    %p172 = scmp.eq.s32.totalorder %s24, 1
    %p173 = por %p171, %p172
    %p175 = scmp.ne.s32.totalorder %s160, %s174
    %p176 = scmp.eq.s32.totalorder %s24, 0
    %p177 = por %p175, %p176
    %s179 = sadd.s32 %s178, 1
    %p182 = scmp.eq.s32.totalorder %s18, 1
    %p183 = scmp.ne.s32.totalorder %s178, %s180
    %p184 = scmp.eq.s32.totalorder %s18, 0
    %p185 = por %p183, %p184
    %p186 = scmp.ne.s32.totalorder %s178, %s180
    %p187 = scmp.eq.s32.totalorder %s23, 1
    %p188 = por %p186, %p187
    %p189 = scmp.ne.s32.totalorder %s180, %s181
    %p190 = scmp.eq.s32.totalorder %s23, 0
    %p191 = por %p189, %p190
    %p192 = scmp.ne.s32.totalorder %s180, %s181
    %p193 = scmp.eq.s32.totalorder %s24, 1
    %p194 = por %p192, %p193
    %p196 = scmp.ne.s32.totalorder %s181, %s195
    %p197 = scmp.eq.s32.totalorder %s24, 0
    %p198 = por %p196, %p197
    %s200 = sadd.s32 %s199, 1
    %p203 = scmp.eq.s32.totalorder %s18, 1
    %p204 = scmp.ne.s32.totalorder %s199, %s201
    %p205 = scmp.eq.s32.totalorder %s18, 0
    %p206 = por %p204, %p205
    %p207 = scmp.ne.s32.totalorder %s199, %s201
    %p208 = scmp.eq.s32.totalorder %s23, 1
    %p209 = por %p207, %p208
    %p210 = scmp.ne.s32.totalorder %s201, %s202
    %p211 = scmp.eq.s32.totalorder %s23, 0
    %p212 = por %p210, %p211
    %p213 = scmp.ne.s32.totalorder %s201, %s202
    %p214 = scmp.eq.s32.totalorder %s24, 1
    %p215 = por %p213, %p214
    %p217 = scmp.ne.s32.totalorder %s202, %s216
    %p218 = scmp.eq.s32.totalorder %s24, 0
    %p219 = por %p217, %p218
    %s221 = sadd.s32 %s220, 1
    %p224 = scmp.eq.s32.totalorder %s18, 1
    %p225 = scmp.ne.s32.totalorder %s220, %s222
    %p226 = scmp.eq.s32.totalorder %s18, 0
    %p227 = por %p225, %p226
    %p228 = scmp.ne.s32.totalorder %s220, %s222
    %p229 = scmp.eq.s32.totalorder %s23, 1
    %p230 = por %p228, %p229
    %p231 = scmp.ne.s32.totalorder %s222, %s223
    %p232 = scmp.eq.s32.totalorder %s23, 0
    %p233 = por %p231, %p232
    %p234 = scmp.ne.s32.totalorder %s222, %s223
    %p235 = scmp.eq.s32.totalorder %s24, 1
    %p236 = por %p234, %p235
    %p238 = scmp.ne.s32.totalorder %s223, %s237
    %p239 = scmp.eq.s32.totalorder %s24, 0
    %p240 = por %p238, %p239
    %s242 = sadd.s32 %s241, 1
    %p245 = scmp.eq.s32.totalorder %s18, 1
    %p246 = scmp.ne.s32.totalorder %s241, %s243
    %p247 = scmp.eq.s32.totalorder %s18, 0
    %p248 = por %p246, %p247
    %p249 = scmp.ne.s32.totalorder %s241, %s243
    %p250 = scmp.eq.s32.totalorder %s23, 1
    %p251 = por %p249, %p250
    %p252 = scmp.ne.s32.totalorder %s243, %s244
    %p253 = scmp.eq.s32.totalorder %s23, 0
    %p254 = por %p252, %p253
    %p255 = scmp.ne.s32.totalorder %s243, %s244
    %p256 = scmp.eq.s32.totalorder %s24, 1
    %p257 = por %p255, %p256
    %p259 = scmp.ne.s32.totalorder %s244, %s258
    %p260 = scmp.eq.s32.totalorder %s24, 0
    %p261 = por %p259, %p260
    %s263 = sadd.s32 %s262, 1
    %p266 = scmp.eq.s32.totalorder %s18, 1
    %p267 = scmp.ne.s32.totalorder %s262, %s264
    %p268 = scmp.eq.s32.totalorder %s18, 0
    %p269 = por %p267, %p268
    %p270 = scmp.ne.s32.totalorder %s262, %s264
    %p271 = scmp.eq.s32.totalorder %s23, 1
    %p272 = por %p270, %p271
    %p273 = scmp.ne.s32.totalorder %s264, %s265
    %p274 = scmp.eq.s32.totalorder %s23, 0
    %p275 = por %p273, %p274
    %p276 = scmp.ne.s32.totalorder %s264, %s265
    %p277 = scmp.eq.s32.totalorder %s24, 1
    %p278 = por %p276, %p277
    %p280 = scmp.ne.s32.totalorder %s265, %s279
    %p281 = scmp.eq.s32.totalorder %s24, 0
    %p282 = por %p280, %p281
    %s283 = ssub.s32 %s18, %s25
    %p284 = scmp.eq.s32.totalorder %s283, 0
    %s286 = sadd.s32 %s285, 1
    %s287 = scalar_select %p284, %s285, %s286
    %p290 = pneg %p284
    %p291 = scmp.eq.s32.totalorder %s18, 1
    %p292 = por %p290, %p291
    %p293 = scmp.ne.s32.totalorder %s285, %s288
    %p294 = scmp.eq.s32.totalorder %s18, 0
    %p295 = por %p293, %p294
    %p296 = scmp.ne.s32.totalorder %s285, %s288
    %p297 = scmp.eq.s32.totalorder %s23, 1
    %p298 = por %p296, %p297
    %p299 = scmp.ne.s32.totalorder %s288, %s289
    %p300 = scmp.eq.s32.totalorder %s23, 0
    %p301 = por %p299, %p300
    %p302 = scmp.ne.s32.totalorder %s288, %s289
    %p303 = scmp.eq.s32.totalorder %s24, 1
    %p304 = por %p302, %p303
    %p306 = scmp.ne.s32.totalorder %s289, %s305
    %p307 = scmp.eq.s32.totalorder %s24, 0
    %p308 = por %p306, %p307
    %p309 = scmp.le.s32.totalorder 1, %s18
    %p310 = scmp.lt.s32.totalorder %s18, 3
    %p311 = pnand %p309, %p310
    %p312 = pneg %p311
    // Predicated region
    $region9: #{overall_forward.2} parent=5 // pred_check
      _
    $region10: #{overall_forward.2} parent=5 // pred_check_branch
      %314 = sbr.rel (%p311) target = $region12
    $region11: #{overall_forward.2} parent=5 // pred_region
      %s315 = ssub.s32 %s18, 1
      // Predicated region
      $region13: #{overall_forward.2} parent=11 // pred_check
        %p316 = pneg %p65
      $region14: #{overall_forward.2} parent=11 // pred_check_branch
        %318 = sbr.rel (%p316) target = $region16
      $region15: #{overall_forward.2} parent=11 // pred_region
        _
      $region16: #{overall_forward.2} parent=11 // pred_fallthru
        _
      // Predicated region
      $region17: #{overall_forward.2} parent=11 // pred_check
        %p319 = pneg %p86
      $region18: #{overall_forward.2} parent=11 // pred_check_branch
        %321 = sbr.rel (%p319) target = $region20
      $region19: #{overall_forward.2} parent=11 // pred_region
        _
      $region20: #{overall_forward.2} parent=11 // pred_fallthru
        _
      // Predicated region
      $region21: #{overall_forward.2} parent=11 // pred_check
        %p322 = pneg %p107
      $region22: #{overall_forward.2} parent=11 // pred_check_branch
        %324 = sbr.rel (%p322) target = $region24
      $region23: #{overall_forward.2} parent=11 // pred_region
        _
      $region24: #{overall_forward.2} parent=11 // pred_fallthru
        _
      // Predicated region
      $region25: #{overall_forward.2} parent=11 // pred_check
        %p325 = pneg %p128
      $region26: #{overall_forward.2} parent=11 // pred_check_branch
        %327 = sbr.rel (%p325) target = $region28
      $region27: #{overall_forward.2} parent=11 // pred_region
        _
      $region28: #{overall_forward.2} parent=11 // pred_fallthru
        _
      // Predicated region
      $region29: #{overall_forward.2} parent=11 // pred_check
        %p328 = pneg %p149
      $region30: #{overall_forward.2} parent=11 // pred_check_branch
        %330 = sbr.rel (%p328) target = $region32
      $region31: #{overall_forward.2} parent=11 // pred_region
        _
      $region32: #{overall_forward.2} parent=11 // pred_fallthru
        _
      // Predicated region
      $region33: #{overall_forward.2} parent=11 // pred_check
        %p331 = pneg %p170
      $region34: #{overall_forward.2} parent=11 // pred_check_branch
        %333 = sbr.rel (%p331) target = $region36
      $region35: #{overall_forward.2} parent=11 // pred_region
        _
      $region36: #{overall_forward.2} parent=11 // pred_fallthru
        _
      // Predicated region
      $region37: #{overall_forward.2} parent=11 // pred_check
        %p334 = pneg %p191
      $region38: #{overall_forward.2} parent=11 // pred_check_branch
        %336 = sbr.rel (%p334) target = $region40
      $region39: #{overall_forward.2} parent=11 // pred_region
        _
      $region40: #{overall_forward.2} parent=11 // pred_fallthru
        _
      // Predicated region
      $region41: #{overall_forward.2} parent=11 // pred_check
        %p337 = pneg %p212
      $region42: #{overall_forward.2} parent=11 // pred_check_branch
        %339 = sbr.rel (%p337) target = $region44
      $region43: #{overall_forward.2} parent=11 // pred_region
        _
      $region44: #{overall_forward.2} parent=11 // pred_fallthru
        _
      // Predicated region
      $region45: #{overall_forward.2} parent=11 // pred_check
        %p340 = pneg %p233
      $region46: #{overall_forward.2} parent=11 // pred_check_branch
        %342 = sbr.rel (%p340) target = $region48
      $region47: #{overall_forward.2} parent=11 // pred_region
        _
      $region48: #{overall_forward.2} parent=11 // pred_fallthru
        _
      // Predicated region
      $region49: #{overall_forward.2} parent=11 // pred_check
        %p343 = pneg %p254
      $region50: #{overall_forward.2} parent=11 // pred_check_branch
        %345 = sbr.rel (%p343) target = $region52
      $region51: #{overall_forward.2} parent=11 // pred_region
        _
      $region52: #{overall_forward.2} parent=11 // pred_fallthru
        _
      // Predicated region
      $region53: #{overall_forward.2} parent=11 // pred_check
        %p346 = pneg %p275
      $region54: #{overall_forward.2} parent=11 // pred_check_branch
        %348 = sbr.rel (%p346) target = $region56
      $region55: #{overall_forward.2} parent=11 // pred_region
        _
      $region56: #{overall_forward.2} parent=11 // pred_fallthru
        _
    $region12: #{overall_forward.2} parent=5 // pred_fallthru
      _
    %p349 = scmp.lt.s32.totalorder %s18, 2
    // Predicated region
    $region57: #{overall_forward.2} parent=5 // pred_check
      %p350 = pneg %p349
    $region58: #{overall_forward.2} parent=5 // pred_check_branch
      %352 = sbr.rel (%p350) target = $region60
    $region59: #{overall_forward.2} parent=5 // pred_region
      // Predicated region
      $region61: #{overall_forward.2} parent=59 // pred_check
        %p353 = pneg %p38
      $region62: #{overall_forward.2} parent=59 // pred_check_branch
        %355 = sbr.rel (%p353) target = $region64
      $region63: #{overall_forward.2} parent=59 // pred_region
        %p356 = scmp.lt.s32.totalorder %s18, 1
        %s357 = scalar_select %p356, %s18, 1
        %s358 = smul.addr %s357, 128
        %s359 = smul.addr %s358, 4
        %s360 = scalar_lea.vmem %s0, %s359
      $region64: #{overall_forward.2} parent=59 // pred_fallthru
        _
    $region60: #{overall_forward.2} parent=5 // pred_fallthru
      _
    %p361 = scmp.le.s32.totalorder 1, %s18
    %p362 = scmp.lt.s32.totalorder %s18, 3
    %p363 = pnand %p361, %p362
    %p364 = pneg %p363
    // Predicated region
    $region65: #{overall_forward.2} parent=5 // pred_check
      _
    $region66: #{overall_forward.2} parent=5 // pred_check_branch
      %366 = sbr.rel (%p363) target = $region68
    $region67: #{overall_forward.2} parent=5 // pred_region
      %s367 = ssub.s32 %s18, 1
      %p368 = scmp.lt.s32.totalorder %s23, 1
      %s369 = scalar_select %p368, %s23, 1
      %s370 = smul.addr %s369, 128
      %s371 = smul.addr %s370, 4
      %s372 = scalar_lea.vmem %s0, %s371
      %p373 = pneg %p44
      %p374 = pneg %p41
      %p375 = pneg %p65
      %p376 = pneg %p62
      %p377 = pneg %p86
      %p378 = pneg %p83
      %p379 = pneg %p107
      %p380 = pneg %p104
      %p381 = pneg %p128
      %p382 = pneg %p125
      %p383 = pneg %p149
      %p384 = pneg %p146
      %p385 = pneg %p170
      %p386 = pneg %p167
      %p387 = pneg %p191
      %p388 = pneg %p188
      %p389 = pneg %p212
      %p390 = pneg %p209
      %p391 = pneg %p233
      %p392 = pneg %p230
      %p393 = pneg %p254
      %p394 = pneg %p251
      %p395 = pneg %p275
      %p396 = pneg %p272
      %p397 = pneg %p301
      %p398 = pneg %p298
      %p399 = scmp.lt.s32.totalorder %s23, 1
      %s400 = scalar_select %p399, %s23, 1
      %s401 = smul.addr %s400, 4
      %s402 = scalar_lea.vmem %s12, %s401
      %p403 = scmp.lt.s32.totalorder %s23, 1
      %s404 = scalar_select %p403, %s23, 1
      %s405 = smul.addr %s404, 128
      %s406 = smul.addr %s405, 4
      %s407 = scalar_lea.vmem %s0, %s406
      %p408 = scmp.lt.s32.totalorder %s23, 1
      %s409 = scalar_select %p408, %s23, 1
      %s410 = smul.addr %s409, 4
      %s411 = scalar_lea.vmem %s12, %s410
      %vm413 = vcmask 261120
      %414 = vst.msk [vmem:[#allocation2] sm:$0xff] %vm413, 0.0
      %415 = vst.msk [vmem:[#allocation2 + $0x8] sm:$0xff] %vm413, 0.0
      %vm416 = vcmask 254976
      %417 = vst.msk [vmem:[#allocation2 + $0x10] sm:$0x3] %vm416, 0.0
      %418 = vst.msk [vmem:[#allocation2 + $0x18] sm:$0xff] %vm413, 0.0
      %419 = vst.msk [vmem:[#allocation2 + $0x20] sm:$0xff] %vm413, 0.0
      %420 = vst.msk [vmem:[#allocation2 + $0x28] sm:$0x3] %vm416, 0.0
      %421 = vst.msk [vmem:[#allocation2 + $0x30] sm:$0xff] %vm413, 0.0
      %422 = vst.msk [vmem:[#allocation2 + $0x38] sm:$0xff] %vm413, 0.0
      %423 = vst.msk [vmem:[#allocation2 + $0x40] sm:$0x3] %vm416, 0.0
      %424 = vst.msk [vmem:[#allocation2 + $0x48] sm:$0xff] %vm413, 0.0
      %425 = vst.msk [vmem:[#allocation2 + $0x50] sm:$0xff] %vm413, 0.0
      %426 = vst.msk [vmem:[#allocation2 + $0x58] sm:$0x3] %vm416, 0.0
      %427 = vst.msk [vmem:[#allocation2 + $0x60] sm:$0xff] %vm413, 0.0
      %428 = vst.msk [vmem:[#allocation2 + $0x68] sm:$0xff] %vm413, 0.0
      %429 = vst.msk [vmem:[#allocation2 + $0x70] sm:$0x3] %vm416, 0.0
      %430 = vst.msk [vmem:[#allocation2 + $0x78] sm:$0xff] %vm413, 0.0
      %431 = vst.msk [vmem:[#allocation2 + $0x80] sm:$0xff] %vm413, 0.0
      %432 = vst.msk [vmem:[#allocation2 + $0x88] sm:$0x3] %vm416, 0.0
      %433 = vst.msk [vmem:[#allocation2 + $0x90] sm:$0xff] %vm413, 0.0
      %434 = vst.msk [vmem:[#allocation2 + $0x98] sm:$0xff] %vm413, 0.0
      %435 = vst.msk [vmem:[#allocation2 + $0xa0] sm:$0x3] %vm416, 0.0
      %436 = vst.msk [vmem:[#allocation2 + $0xa8] sm:$0xff] %vm413, 0.0
      %437 = vst.msk [vmem:[#allocation2 + $0xb0] sm:$0xff] %vm413, 0.0
      %438 = vst.msk [vmem:[#allocation2 + $0xb8] sm:$0x3] %vm416, 0.0
      %439 = vst.msk [vmem:[#allocation2 + $0xc0] sm:$0xff] %vm413, 0.0
      %440 = vst.msk [vmem:[#allocation2 + $0xc8] sm:$0xff] %vm413, 0.0
      %441 = vst.msk [vmem:[#allocation2 + $0xd0] sm:$0x3] %vm416, 0.0
      %442 = vst.msk [vmem:[#allocation2 + $0xd8] sm:$0xff] %vm413, 0.0
      %443 = vst.msk [vmem:[#allocation2 + $0xe0] sm:$0xff] %vm413, 0.0
      %444 = vst.msk [vmem:[#allocation2 + $0xe8] sm:$0x3] %vm416, 0.0
      %445 = vst.msk [vmem:[#allocation2 + $0xf0] sm:$0xff] %vm413, 0.0
      %446 = vst.msk [vmem:[#allocation2 + $0xf8] sm:$0xff] %vm413, 0.0
      %447 = vst.msk [vmem:[#allocation2 + $0x100] sm:$0x3] %vm416, 0.0
      %448 = vst.msk [vmem:[#allocation2 + $0x108] sm:$0xff] %vm413, 0.0
      %449 = vst.msk [vmem:[#allocation2 + $0x110] sm:$0xff] %vm413, 0.0
      %450 = vst.msk [vmem:[#allocation2 + $0x118] sm:$0x3] %vm416, 0.0
      %451 = vst.msk [vmem:[#allocation2 + $0x120] sm:$0xff] %vm413, 0.0
      %452 = vst.msk [vmem:[#allocation2 + $0x128] sm:$0xff] %vm413, 0.0
      %453 = vst.msk [vmem:[#allocation2 + $0x130] sm:$0x3] %vm416, 0.0
      %454 = vst.msk [vmem:[#allocation2 + $0x138] sm:$0xff] %vm413, 0.0
      %455 = vst.msk [vmem:[#allocation2 + $0x140] sm:$0xff] %vm413, 0.0
      %456 = vst.msk [vmem:[#allocation2 + $0x148] sm:$0x3] %vm416, 0.0
      %457 = vst.msk [vmem:[#allocation2 + $0x150] sm:$0xff] %vm413, 0.0
      %458 = vst.msk [vmem:[#allocation2 + $0x158] sm:$0xff] %vm413, 0.0
      %459 = vst.msk [vmem:[#allocation2 + $0x160] sm:$0x3] %vm416, 0.0
      %460 = vst.msk [vmem:[#allocation2 + $0x168] sm:$0xff] %vm413, 0.0
      %461 = vst.msk [vmem:[#allocation2 + $0x170] sm:$0xff] %vm413, 0.0
      %462 = vst.msk [vmem:[#allocation2 + $0x178] sm:$0x3] %vm416, 0.0
      %463 = vst.msk [vmem:[#allocation2 + $0x180] sm:$0xff] %vm413, 0.0
      %464 = vst.msk [vmem:[#allocation2 + $0x188] sm:$0xff] %vm413, 0.0
      %465 = vst.msk [vmem:[#allocation2 + $0x190] sm:$0x3] %vm416, 0.0
      %466 = vst.msk [vmem:[#allocation2 + $0x198] sm:$0xff] %vm413, 0.0
      %467 = vst.msk [vmem:[#allocation2 + $0x1a0] sm:$0xff] %vm413, 0.0
      %468 = vst.msk [vmem:[#allocation2 + $0x1a8] sm:$0x3] %vm416, 0.0
      %vm469 = vcmask 523264
      %470 = vst.msk [vmem:[#allocation3] sm:$0xff] %vm469, 0.0
      %vm471 = vcmask 517120
      %472 = vst.msk [vmem:[#allocation3 + $0x8] sm:$0x3] %vm471, 0.0
      %473 = vst.msk [vmem:[#allocation3 + $0x10] sm:$0xff] %vm469, 0.0
      %474 = vst.msk [vmem:[#allocation3 + $0x18] sm:$0x3] %vm471, 0.0
      %475 = vst.msk [vmem:[#allocation3 + $0x20] sm:$0xff] %vm469, 0.0
      %476 = vst.msk [vmem:[#allocation3 + $0x28] sm:$0x3] %vm471, 0.0
      %477 = vst.msk [vmem:[#allocation3 + $0x30] sm:$0xff] %vm469, 0.0
      %478 = vst.msk [vmem:[#allocation3 + $0x38] sm:$0x3] %vm471, 0.0
      %479 = vst.msk [vmem:[#allocation3 + $0x40] sm:$0xff] %vm469, 0.0
      %480 = vst.msk [vmem:[#allocation3 + $0x48] sm:$0x3] %vm471, 0.0
      %481 = vst.msk [vmem:[#allocation3 + $0x50] sm:$0xff] %vm469, 0.0
      %482 = vst.msk [vmem:[#allocation3 + $0x58] sm:$0x3] %vm471, 0.0
      %483 = vst.msk [vmem:[#allocation3 + $0x60] sm:$0xff] %vm469, 0.0
      %484 = vst.msk [vmem:[#allocation3 + $0x68] sm:$0x3] %vm471, 0.0
      %485 = vst.msk [vmem:[#allocation3 + $0x70] sm:$0xff] %vm469, 0.0
      %486 = vst.msk [vmem:[#allocation3 + $0x78] sm:$0x3] %vm471, 0.0
      %487 = vst.msk [vmem:[#allocation3 + $0x80] sm:$0xff] %vm469, 0.0
      %488 = vst.msk [vmem:[#allocation3 + $0x88] sm:$0x3] %vm471, 0.0
      %489 = vst.msk [vmem:[#allocation3 + $0x90] sm:$0xff] %vm469, 0.0
      %490 = vst.msk [vmem:[#allocation3 + $0x98] sm:$0x3] %vm471, 0.0
      %v491 = vld [vmem:[%s1] sm:$0xf]
      %v492 = vld [vmem:[%s1 + $0x4] sm:$0x1]
      %v493 = vld [vmem:[%s2] sm:$0x1]
      %v494 = vld [vmem:[%s3] sm:$0x1]
      %v495 = vld [vmem:[%s407] sm:$0xf]
      %v496 = vld [vmem:[%s407 + $0x4] sm:$0xf]
      %v497 = vld [vmem:[%s407 + $0x8] sm:$0xf]
      %v498 = vld [vmem:[%s407 + $0xc] sm:$0xf]
      %v499 = vld [vmem:[%s407 + $0x10] sm:$0xf]
      %v500 = vld [vmem:[%s407 + $0x14] sm:$0xf]
      %v501 = vld [vmem:[%s407 + $0x18] sm:$0xf]
      %v502 = vld [vmem:[%s407 + $0x1c] sm:$0xf]
      %v503 = vld [vmem:[%s407 + $0x20] sm:$0xf]
      %v504 = vld [vmem:[%s407 + $0x24] sm:$0xf]
      %v505 = vld [vmem:[%s407 + $0x28] sm:$0xf]
      %v506 = vld [vmem:[%s407 + $0x2c] sm:$0xf]
      %v507 = vld [vmem:[%s407 + $0x30] sm:$0xf]
      %v508 = vld [vmem:[%s407 + $0x34] sm:$0xf]
      %v509 = vld [vmem:[%s407 + $0x38] sm:$0xf]
      %v510 = vld [vmem:[%s407 + $0x3c] sm:$0xf]
      %v511 = vld [vmem:[%s407 + $0x40] sm:$0xf]
      %v512 = vld [vmem:[%s407 + $0x44] sm:$0xf]
      %v513 = vld [vmem:[%s407 + $0x48] sm:$0xf]
      %v514 = vld [vmem:[%s407 + $0x4c] sm:$0xf]
      %v515 = vld [vmem:[%s407 + $0x50] sm:$0xf]
      %v516 = vld [vmem:[%s407 + $0x54] sm:$0xf]
      %v517 = vld [vmem:[%s407 + $0x58] sm:$0xf]
      %v518 = vld [vmem:[%s407 + $0x5c] sm:$0xf]
      %v519 = vld [vmem:[%s407 + $0x60] sm:$0xf]
      %v520 = vld [vmem:[%s407 + $0x64] sm:$0xf]
      %v521 = vld [vmem:[%s407 + $0x68] sm:$0xf]
      %v522 = vld [vmem:[%s407 + $0x6c] sm:$0xf]
      %v523 = vld [vmem:[%s407 + $0x70] sm:$0xf]
      %v524 = vld [vmem:[%s407 + $0x74] sm:$0xf]
      %v525 = vld [vmem:[%s407 + $0x78] sm:$0xf]
      %v526 = vld [vmem:[%s407 + $0x7c] sm:$0xf]
      %v559 = vunpack.c.l.b16 %v495
      %v560 = vunpack.c.l.b16 %v496
      %v561 = vunpack.c.l.b16 %v497
      %v562 = vunpack.c.l.b16 %v498
      %v563 = vunpack.c.l.b16 %v499
      %v564 = vunpack.c.l.b16 %v500
      %v565 = vunpack.c.l.b16 %v501
      %v566 = vunpack.c.l.b16 %v502
      %v567 = vunpack.c.l.b16 %v503
      %v568 = vunpack.c.l.b16 %v504
      %v569 = vunpack.c.l.b16 %v505
      %v570 = vunpack.c.l.b16 %v506
      %v571 = vunpack.c.l.b16 %v507
      %v572 = vunpack.c.l.b16 %v508
      %v573 = vunpack.c.l.b16 %v509
      %v574 = vunpack.c.l.b16 %v510
      %v575 = vunpack.c.l.b16 %v511
      %v576 = vunpack.c.l.b16 %v512
      %v577 = vunpack.c.l.b16 %v513
      %v578 = vunpack.c.l.b16 %v514
      %v579 = vunpack.c.l.b16 %v515
      %v580 = vunpack.c.l.b16 %v516
      %v581 = vunpack.c.l.b16 %v517
      %v582 = vunpack.c.l.b16 %v518
      %v583 = vunpack.c.l.b16 %v519
      %v584 = vunpack.c.l.b16 %v520
      %v585 = vunpack.c.l.b16 %v521
      %v586 = vunpack.c.l.b16 %v522
      %v587 = vunpack.c.l.b16 %v523
      %v588 = vunpack.c.l.b16 %v524
      %v589 = vunpack.c.l.b16 %v525
      %v590 = vunpack.c.l.b16 %v526
      %v591 = vpack.c.b16 %v560, %v559
      %v592 = vpack.c.b16 %v562, %v561
      %v593 = vpack.c.b16 %v564, %v563
      %v594 = vpack.c.b16 %v566, %v565
      %v595 = vpack.c.b16 %v568, %v567
      %v596 = vpack.c.b16 %v570, %v569
      %v597 = vpack.c.b16 %v572, %v571
      %v598 = vpack.c.b16 %v574, %v573
      %v599 = vpack.c.b16 %v576, %v575
      %v600 = vpack.c.b16 %v578, %v577
      %v601 = vpack.c.b16 %v580, %v579
      %v602 = vpack.c.b16 %v582, %v581
      %v603 = vpack.c.b16 %v584, %v583
      %v604 = vpack.c.b16 %v586, %v585
      %v605 = vpack.c.b16 %v588, %v587
      %v606 = vpack.c.b16 %v590, %v589
      %v609 = vunpack.c.l.b16 %v491
      %v610 = vunpack.c.l.b16 %v492
      %v611 = vpack.c.b16 %v610, %v609
      %vm612 = vcmask 72704
      %v614 = vsel %vm612, %v591, 0
      %v617 = vsel %vm612, %v592, 0
      %v620 = vsel %vm612, %v593, 0
      %v623 = vsel %vm612, %v594, 0
      %v626 = vsel %vm612, %v595, 0
      %v629 = vsel %vm612, %v596, 0
      %v632 = vsel %vm612, %v597, 0
      %v635 = vsel %vm612, %v598, 0
      %v638 = vsel %vm612, %v599, 0
      %v641 = vsel %vm612, %v600, 0
      %v644 = vsel %vm612, %v601, 0
      %v647 = vsel %vm612, %v602, 0
      %v650 = vsel %vm612, %v603, 0
      %v653 = vsel %vm612, %v604, 0
      %v656 = vsel %vm612, %v605, 0
      %v659 = vsel %vm612, %v606, 0
      %vm661 = vcmask 1043456
      %vm662 = vcmask 1044480
      %v663 = vsel %vm661, 4294967295, 65535
      %v664 = vsel %vm662, %v663, 0
      %v666 = vand.u32 %v611, %v664
      %668 = vmatprep.subr.bf16.mxu0 0
      %669 = vmatpush1.bf16.msra.mxu0 %v666
      %670 = vmatprep.subr.bf16.mxu0 0
      %671 = vmatpush1.bf16.msra.mxu0 0
      %672 = vmatprep.subr.bf16.mxu0 0
      %673 = vmatpush1.bf16.msra.mxu0 0
      %674 = vmatprep.subr.bf16.mxu0 0
      %675 = vmatpush1.bf16.msra.mxu0 0
      %676 = vmatprep.subr.bf16.mxu0 0
      %677 = vmatpush1.bf16.msra.mxu0 0
      %678 = vmatprep.subr.bf16.mxu0 0
      %679 = vmatpush1.bf16.msra.mxu0 0
      %680 = vmatprep.subr.bf16.mxu0 0
      %681 = vmatpush1.bf16.msra.mxu0 0
      %682 = vmatprep.subr.bf16.mxu0 0
      %683 = vmatpush1.bf16.msra.mxu0 0
      %684 = vmatprep.subr.bf16.mxu0 0
      %685 = vmatpush1.bf16.msra.mxu0 0
      %686 = vmatprep.subr.bf16.mxu0 0
      %687 = vmatpush1.bf16.msra.mxu0 0
      %688 = vmatprep.subr.bf16.mxu0 0
      %689 = vmatpush1.bf16.msra.mxu0 0
      %690 = vmatprep.subr.bf16.mxu0 0
      %691 = vmatpush1.bf16.msra.mxu0 0
      %692 = vmatprep.subr.bf16.mxu0 0
      %693 = vmatpush1.bf16.msra.mxu0 0
      %694 = vmatprep.subr.bf16.mxu0 0
      %695 = vmatpush1.bf16.msra.mxu0 0
      %696 = vmatprep.subr.bf16.mxu0 0
      %697 = vmatpush1.bf16.msra.mxu0 0
      %698 = vmatprep.subr.bf16.mxu0 0
      %699 = vmatpush1.bf16.msra.mxu0 0
      %700 = vmatprep.mubr.bf16.mxu0 0
      %701 = vmatmul.mubr.bf16.gmra.mrb[0].mxu0 %v614
      %v702 = vpop.f32.mrb[0].mxu0
      %v703 = vadd.f32 0.0, %v702
      %v704 = vpop.f32.mrb[0].mxu0
      %v705 = vpop.f32.mrb[0].mxu0
      %v706 = vadd.f32 0.0, %v705
      %v707 = vpop.f32.mrb[0].mxu0
      %708 = vmatprep.mubr.bf16.mxu0 0
      %709 = vmatmul.mubr.bf16.gmra.mrb[0].mxu0 %v617
      %v710 = vpop.f32.mrb[0].mxu0
      %v711 = vadd.f32 0.0, %v710
      %v712 = vpop.f32.mrb[0].mxu0
      %v713 = vpop.f32.mrb[0].mxu0
      %v714 = vadd.f32 0.0, %v713
      %v715 = vpop.f32.mrb[0].mxu0
      %716 = vmatprep.mubr.bf16.mxu0 0
      %717 = vmatmul.mubr.bf16.gmra.mrb[0].mxu0 %v620
      %v718 = vpop.f32.mrb[0].mxu0
      %v719 = vadd.f32 0.0, %v718
      %v720 = vpop.f32.mrb[0].mxu0
      %v721 = vpop.f32.mrb[0].mxu0
      %v722 = vadd.f32 0.0, %v721
      %v723 = vpop.f32.mrb[0].mxu0
      %724 = vmatprep.mubr.bf16.mxu0 0
      %725 = vmatmul.mubr.bf16.gmra.mrb[0].mxu0 %v623
      %v726 = vpop.f32.mrb[0].mxu0
      %v727 = vadd.f32 0.0, %v726
      %v728 = vpop.f32.mrb[0].mxu0
      %v729 = vpop.f32.mrb[0].mxu0
      %v730 = vadd.f32 0.0, %v729
      %v731 = vpop.f32.mrb[0].mxu0
      %732 = vmatprep.mubr.bf16.mxu0 0
      %733 = vmatmul.mubr.bf16.gmra.mrb[0].mxu0 %v626
      %v734 = vpop.f32.mrb[0].mxu0
      %v735 = vadd.f32 0.0, %v734
      %v736 = vpop.f32.mrb[0].mxu0
      %v737 = vpop.f32.mrb[0].mxu0
      %v738 = vadd.f32 0.0, %v737
      %v739 = vpop.f32.mrb[0].mxu0
      %740 = vmatprep.mubr.bf16.mxu0 0
      %741 = vmatmul.mubr.bf16.gmra.mrb[0].mxu0 %v629
      %v742 = vpop.f32.mrb[0].mxu0
      %v743 = vadd.f32 0.0, %v742
      %v744 = vpop.f32.mrb[0].mxu0
      %v745 = vpop.f32.mrb[0].mxu0
      %v746 = vadd.f32 0.0, %v745
      %v747 = vpop.f32.mrb[0].mxu0
      %748 = vmatprep.mubr.bf16.mxu0 0
      %749 = vmatmul.mubr.bf16.gmra.mrb[0].mxu0 %v632
      %v750 = vpop.f32.mrb[0].mxu0
      %v751 = vadd.f32 0.0, %v750
      %v752 = vpop.f32.mrb[0].mxu0
      %v753 = vpop.f32.mrb[0].mxu0
      %v754 = vadd.f32 0.0, %v753
      %v755 = vpop.f32.mrb[0].mxu0
      %756 = vmatprep.mubr.bf16.mxu0 0
      %757 = vmatmul.mubr.bf16.gmra.mrb[0].mxu0 %v635
      %v758 = vpop.f32.mrb[0].mxu0
      %v759 = vadd.f32 0.0, %v758
      %v760 = vpop.f32.mrb[0].mxu0
      %v761 = vpop.f32.mrb[0].mxu0
      %v762 = vadd.f32 0.0, %v761
      %v763 = vpop.f32.mrb[0].mxu0
      %764 = vmatprep.mubr.bf16.mxu0 0
      %765 = vmatmul.mubr.bf16.gmra.mrb[0].mxu0 %v638
      %v766 = vpop.f32.mrb[0].mxu0
      %v767 = vadd.f32 0.0, %v766
      %v768 = vpop.f32.mrb[0].mxu0
      %v769 = vpop.f32.mrb[0].mxu0
      %v770 = vadd.f32 0.0, %v769
      %v771 = vpop.f32.mrb[0].mxu0
      %772 = vmatprep.mubr.bf16.mxu0 0
      %773 = vmatmul.mubr.bf16.gmra.mrb[0].mxu0 %v641
      %v774 = vpop.f32.mrb[0].mxu0
      %v775 = vadd.f32 0.0, %v774
      %v776 = vpop.f32.mrb[0].mxu0
      %v777 = vpop.f32.mrb[0].mxu0
      %v778 = vadd.f32 0.0, %v777
      %v779 = vpop.f32.mrb[0].mxu0
      %780 = vmatprep.mubr.bf16.mxu0 0
      %781 = vmatmul.mubr.bf16.gmra.mrb[0].mxu0 %v644
      %v782 = vpop.f32.mrb[0].mxu0
      %v783 = vadd.f32 0.0, %v782
      %v784 = vpop.f32.mrb[0].mxu0
      %v785 = vpop.f32.mrb[0].mxu0
      %v786 = vadd.f32 0.0, %v785
      %v787 = vpop.f32.mrb[0].mxu0
      %788 = vmatprep.mubr.bf16.mxu0 0
      %789 = vmatmul.mubr.bf16.gmra.mrb[0].mxu0 %v647
      %v790 = vpop.f32.mrb[0].mxu0
      %v791 = vadd.f32 0.0, %v790
      %v792 = vpop.f32.mrb[0].mxu0
      %v793 = vpop.f32.mrb[0].mxu0
      %v794 = vadd.f32 0.0, %v793
      %v795 = vpop.f32.mrb[0].mxu0
      %796 = vmatprep.mubr.bf16.mxu0 0
      %797 = vmatmul.mubr.bf16.gmra.mrb[0].mxu0 %v650
      %v798 = vpop.f32.mrb[0].mxu0
      %v799 = vadd.f32 0.0, %v798
      %v800 = vpop.f32.mrb[0].mxu0
      %v801 = vpop.f32.mrb[0].mxu0
      %v802 = vadd.f32 0.0, %v801
      %v803 = vpop.f32.mrb[0].mxu0
      %804 = vmatprep.mubr.bf16.mxu0 0
      %805 = vmatmul.mubr.bf16.gmra.mrb[0].mxu0 %v653
      %v806 = vpop.f32.mrb[0].mxu0
      %v807 = vadd.f32 0.0, %v806
      %v808 = vpop.f32.mrb[0].mxu0
      %v809 = vpop.f32.mrb[0].mxu0
      %v810 = vadd.f32 0.0, %v809
      %v811 = vpop.f32.mrb[0].mxu0
      %812 = vmatprep.mubr.bf16.mxu0 0
      %813 = vmatmul.mubr.bf16.gmra.mrb[0].mxu0 %v656
      %v814 = vpop.f32.mrb[0].mxu0
      %v815 = vadd.f32 0.0, %v814
      %v816 = vpop.f32.mrb[0].mxu0
      %v817 = vpop.f32.mrb[0].mxu0
      %v818 = vadd.f32 0.0, %v817
      %v819 = vpop.f32.mrb[0].mxu0
      %820 = vmatprep.mubr.bf16.mxu0 0
      %821 = vmatmul.mubr.bf16.gmra.mrb[0].mxu0 %v659
      %v822 = vpop.f32.mrb[0].mxu0
      %v823 = vadd.f32 0.0, %v822
      %v824 = vpop.f32.mrb[0].mxu0
      %v825 = vpop.f32.mrb[0].mxu0
      %v826 = vadd.f32 0.0, %v825
      %v827 = vpop.f32.mrb[0].mxu0
      %828 = vdwg.mxu0
      %v830 = vlaneseq
      %v831 = vshrl.u32 %v830, 7
      %v832 = vsub.s32 0, %v831
      %v833 = vrot.slane %v493, %v832
      %v835 = vmul.f32 %v703, %v833
      %v836 = vmul.f32 %v706, %v833
      %v837 = vmul.f32 %v711, %v833
      %v838 = vmul.f32 %v714, %v833
      %v839 = vmul.f32 %v719, %v833
      %v840 = vmul.f32 %v722, %v833
      %v841 = vmul.f32 %v727, %v833
      %v842 = vmul.f32 %v730, %v833
      %v843 = vmul.f32 %v735, %v833
      %v844 = vmul.f32 %v738, %v833
      %v845 = vmul.f32 %v743, %v833
      %v846 = vmul.f32 %v746, %v833
      %v847 = vmul.f32 %v751, %v833
      %v848 = vmul.f32 %v754, %v833
      %v849 = vmul.f32 %v759, %v833
      %v850 = vmul.f32 %v762, %v833
      %v851 = vmul.f32 %v767, %v833
      %v852 = vmul.f32 %v770, %v833
      %v853 = vmul.f32 %v775, %v833
      %v854 = vmul.f32 %v778, %v833
      %v855 = vmul.f32 %v783, %v833
      %v856 = vmul.f32 %v786, %v833
      %v857 = vmul.f32 %v791, %v833
      %v858 = vmul.f32 %v794, %v833
      %v859 = vmul.f32 %v799, %v833
      %v860 = vmul.f32 %v802, %v833
      %v861 = vmul.f32 %v807, %v833
      %v862 = vmul.f32 %v810, %v833
      %v863 = vmul.f32 %v815, %v833
      %v864 = vmul.f32 %v818, %v833
      %v865 = vmul.f32 %v823, %v833
      %v866 = vmul.f32 %v826, %v833
      %v868 = vlaneseq
      %v869 = vshrl.u32 %v868, 7
      %v870 = vsub.s32 0, %v869
      %v871 = vrot.slane %v494, %v870
      %v873 = vadd.f32 %v835, %v871
      %v874 = vadd.f32 %v836, %v871
      %v875 = vadd.f32 %v837, %v871
      %v876 = vadd.f32 %v838, %v871
      %v877 = vadd.f32 %v839, %v871
      %v878 = vadd.f32 %v840, %v871
      %v879 = vadd.f32 %v841, %v871
      %v880 = vadd.f32 %v842, %v871
      %v881 = vadd.f32 %v843, %v871
      %v882 = vadd.f32 %v844, %v871
      %v883 = vadd.f32 %v845, %v871
      %v884 = vadd.f32 %v846, %v871
      %v885 = vadd.f32 %v847, %v871
      %v886 = vadd.f32 %v848, %v871
      %v887 = vadd.f32 %v849, %v871
      %v888 = vadd.f32 %v850, %v871
      %v889 = vadd.f32 %v851, %v871
      %v890 = vadd.f32 %v852, %v871
      %v891 = vadd.f32 %v853, %v871
      %v892 = vadd.f32 %v854, %v871
      %v893 = vadd.f32 %v855, %v871
      %v894 = vadd.f32 %v856, %v871
      %v895 = vadd.f32 %v857, %v871
      %v896 = vadd.f32 %v858, %v871
      %v897 = vadd.f32 %v859, %v871
      %v898 = vadd.f32 %v860, %v871
      %v899 = vadd.f32 %v861, %v871
      %v900 = vadd.f32 %v862, %v871
      %v901 = vadd.f32 %v863, %v871
      %v902 = vadd.f32 %v864, %v871
      %v903 = vadd.f32 %v865, %v871
      %v904 = vadd.f32 %v866, %v871
      %v905 = vmax.f32 %v873, 0.0
      %v906 = vmax.f32 %v874, 0.0
      %v907 = vmax.f32 %v875, 0.0
      %v908 = vmax.f32 %v876, 0.0
      %v909 = vmax.f32 %v877, 0.0
      %v910 = vmax.f32 %v878, 0.0
      %v911 = vmax.f32 %v879, 0.0
      %v912 = vmax.f32 %v880, 0.0
      %v913 = vmax.f32 %v881, 0.0
      %v914 = vmax.f32 %v882, 0.0
      %v915 = vmax.f32 %v883, 0.0
      %v916 = vmax.f32 %v884, 0.0
      %v917 = vmax.f32 %v885, 0.0
      %v918 = vmax.f32 %v886, 0.0
      %v919 = vmax.f32 %v887, 0.0
      %v920 = vmax.f32 %v888, 0.0
      %v921 = vmax.f32 %v889, 0.0
      %v922 = vmax.f32 %v890, 0.0
      %v923 = vmax.f32 %v891, 0.0
      %v924 = vmax.f32 %v892, 0.0
      %v925 = vmax.f32 %v893, 0.0
      %v926 = vmax.f32 %v894, 0.0
      %v927 = vmax.f32 %v895, 0.0
      %v928 = vmax.f32 %v896, 0.0
      %v929 = vmax.f32 %v897, 0.0
      %v930 = vmax.f32 %v898, 0.0
      %v931 = vmax.f32 %v899, 0.0
      %v932 = vmax.f32 %v900, 0.0
      %v933 = vmax.f32 %v901, 0.0
      %v934 = vmax.f32 %v902, 0.0
      %v935 = vmax.f32 %v903, 0.0
      %v936 = vmax.f32 %v904, 0.0
      %v937 = vmax.f32 %v905, %v909
      %v938 = vmax.f32 %v906, %v910
      %v939 = vmax.f32 %v907, %v911
      %v940 = vmax.f32 %v908, %v912
      %v941 = vmax.f32 %v913, %v917
      %v942 = vmax.f32 %v914, %v918
      %v943 = vmax.f32 %v915, %v919
      %v944 = vmax.f32 %v916, %v920
      %v945 = vmax.f32 %v921, %v925
      %v946 = vmax.f32 %v922, %v926
      %v947 = vmax.f32 %v923, %v927
      %v948 = vmax.f32 %v924, %v928
      %v949 = vmax.f32 %v929, %v933
      %v950 = vmax.f32 %v930, %v934
      %v951 = vmax.f32 %v931, %v935
      %v952 = vmax.f32 %v932, %v936
      %953 = vst.msk [vmem:[#allocation4] sm:$0xff] %vm413, %v937
      %954 = vst.msk [vmem:[#allocation4 + $0x8] sm:$0xff] %vm413, %v938
      %955 = vst.msk [vmem:[#allocation4 + $0x10] sm:$0xff] %vm413, %v939
      %956 = vst.msk [vmem:[#allocation4 + $0x18] sm:$0xff] %vm413, %v940
      %957 = vst.msk [vmem:[#allocation4 + $0x20] sm:$0xff] %vm413, %v941
      %958 = vst.msk [vmem:[#allocation4 + $0x28] sm:$0xff] %vm413, %v942
      %959 = vst.msk [vmem:[#allocation4 + $0x30] sm:$0xff] %vm413, %v943
      %960 = vst.msk [vmem:[#allocation4 + $0x38] sm:$0xff] %vm413, %v944
      %961 = vst.msk [vmem:[#allocation4 + $0x40] sm:$0xff] %vm413, %v945
      %962 = vst.msk [vmem:[#allocation4 + $0x48] sm:$0xff] %vm413, %v946
      %963 = vst.msk [vmem:[#allocation4 + $0x50] sm:$0xff] %vm413, %v947
      %964 = vst.msk [vmem:[#allocation4 + $0x58] sm:$0xff] %vm413, %v948
      %965 = vst.msk [vmem:[#allocation4 + $0x60] sm:$0xff] %vm413, %v949
      %966 = vst.msk [vmem:[#allocation4 + $0x68] sm:$0xff] %vm413, %v950
      %967 = vst.msk [vmem:[#allocation4 + $0x70] sm:$0xff] %vm413, %v951
      %968 = vst.msk [vmem:[#allocation4 + $0x78] sm:$0xff] %vm413, %v952
      %v969 = vld [vmem:[#allocation4] ss:$2 sm:$0xff]
      %s970 = scalar_lea.vmem [#allocation4], 16
      %v971 = vld [vmem:[%s970] ss:$2 sm:$0xff]
      %s972 = scalar_lea.vmem [#allocation4], 32
      %v973 = vld [vmem:[%s972] ss:$2 sm:$0xff]
      %s974 = scalar_lea.vmem [#allocation4], 48
      %v975 = vld [vmem:[%s974] ss:$2 sm:$0xff]
      %s976 = scalar_lea.vmem [#allocation4], 64
      %v977 = vld [vmem:[%s976] ss:$2 sm:$0xff]
      %s978 = scalar_lea.vmem [#allocation4], 80
      %v979 = vld [vmem:[%s978] ss:$2 sm:$0xff]
      %s980 = scalar_lea.vmem [#allocation4], 96
      %v981 = vld [vmem:[%s980] ss:$2 sm:$0xff]
      %s982 = scalar_lea.vmem [#allocation4], 112
      %v983 = vld [vmem:[%s982] ss:$2 sm:$0xff]
      %s984 = scalar_lea.vmem [#allocation4], 1
      %v985 = vld [vmem:[%s984] ss:$2 sm:$0xff]
      %s986 = scalar_lea.vmem [#allocation4], 17
      %v987 = vld [vmem:[%s986] ss:$2 sm:$0xff]
      %s988 = scalar_lea.vmem [#allocation4], 33
      %v989 = vld [vmem:[%s988] ss:$2 sm:$0xff]
      %s990 = scalar_lea.vmem [#allocation4], 49
      %v991 = vld [vmem:[%s990] ss:$2 sm:$0xff]
      %s992 = scalar_lea.vmem [#allocation4], 65
      %v993 = vld [vmem:[%s992] ss:$2 sm:$0xff]
      %s994 = scalar_lea.vmem [#allocation4], 81
      %v995 = vld [vmem:[%s994] ss:$2 sm:$0xff]
      %s996 = scalar_lea.vmem [#allocation4], 97
      %v997 = vld [vmem:[%s996] ss:$2 sm:$0xff]
      %s998 = scalar_lea.vmem [#allocation4], 113
      %v999 = vld [vmem:[%s998] ss:$2 sm:$0xff]
      %v1000 = vmax.f32 %v969, %v985
      %v1001 = vmax.f32 %v971, %v987
      %v1002 = vmax.f32 %v973, %v989
      %v1003 = vmax.f32 %v975, %v991
      %v1004 = vmax.f32 %v977, %v993
      %v1005 = vmax.f32 %v979, %v995
      %v1006 = vmax.f32 %v981, %v997
      %v1007 = vmax.f32 %v983, %v999
      %s1008 = scalar_lea.vmem [#allocation2], 24
      %1009 = vst.msk [vmem:[%s1008 + $0x1] sm:$0xff] %vm413, %v1000
      %1010 = vst.msk [vmem:[%s1008 + $0x9] sm:$0xff] %vm413, %v1001
      %1011 = vst.msk [vmem:[%s1008 + $0x19] sm:$0xff] %vm413, %v1002
      %1012 = vst.msk [vmem:[%s1008 + $0x21] sm:$0xff] %vm413, %v1003
      %1013 = vst.msk [vmem:[%s1008 + $0x31] sm:$0xff] %vm413, %v1004
      %1014 = vst.msk [vmem:[%s1008 + $0x39] sm:$0xff] %vm413, %v1005
      %1015 = vst.msk [vmem:[%s1008 + $0x49] sm:$0xff] %vm413, %v1006
      %1016 = vst.msk [vmem:[%s1008 + $0x51] sm:$0xff] %vm413, %v1007
      %v1017 = vld [vmem:[%s407 + $0x80] sm:$0xf]
      %v1018 = vld [vmem:[%s407 + $0x84] sm:$0xf]
      %v1019 = vld [vmem:[%s407 + $0x88] sm:$0xf]
      %v1020 = vld [vmem:[%s407 + $0x8c] sm:$0xf]
      %v1021 = vld [vmem:[%s407 + $0x90] sm:$0xf]
      %v1022 = vld [vmem:[%s407 + $0x94] sm:$0xf]
      %v1023 = vld [vmem:[%s407 + $0x98] sm:$0xf]
      %v1024 = vld [vmem:[%s407 + $0x9c] sm:$0xf]
      %v1025 = vld [vmem:[%s407 + $0xa0] sm:$0xf]
      %v1026 = vld [vmem:[%s407 + $0xa4] sm:$0xf]
      %v1027 = vld [vmem:[%s407 + $0xa8] sm:$0xf]
      %v1028 = vld [vmem:[%s407 + $0xac] sm:$0xf]
      %v1029 = vld [vmem:[%s407 + $0xb0] sm:$0xf]
      %v1030 = vld [vmem:[%s407 + $0xb4] sm:$0xf]
      %v1031 = vld [vmem:[%s407 + $0xb8] sm:$0xf]
      %v1032 = vld [vmem:[%s407 + $0xbc] sm:$0xf]
      %v1033 = vld [vmem:[%s407 + $0xc0] sm:$0xf]
      %v1034 = vld [vmem:[%s407 + $0xc4] sm:$0xf]
      %v1035 = vld [vmem:[%s407 + $0xc8] sm:$0xf]
      %v1036 = vld [vmem:[%s407 + $0xcc] sm:$0xf]
      %v1037 = vld [vmem:[%s407 + $0xd0] sm:$0xf]
      %v1038 = vld [vmem:[%s407 + $0xd4] sm:$0xf]
      %v1039 = vld [vmem:[%s407 + $0xd8] sm:$0xf]
      %v1040 = vld [vmem:[%s407 + $0xdc] sm:$0xf]
      %v1041 = vld [vmem:[%s407 + $0xe0] sm:$0xf]
      %v1042 = vld [vmem:[%s407 + $0xe4] sm:$0xf]
      %v1043 = vld [vmem:[%s407 + $0xe8] sm:$0xf]
      %v1044 = vld [vmem:[%s407 + $0xec] sm:$0xf]
      %v1045 = vld [vmem:[%s407 + $0xf0] sm:$0xf]
      %v1046 = vld [vmem:[%s407 + $0xf4] sm:$0xf]
      %v1047 = vld [vmem:[%s407 + $0xf8] sm:$0xf]
      %v1048 = vld [vmem:[%s407 + $0xfc] sm:$0xf]
      %v1081 = vunpack.c.l.b16 %v1017
      %v1082 = vunpack.c.l.b16 %v1018
      %v1083 = vunpack.c.l.b16 %v1019
      %v1084 = vunpack.c.l.b16 %v1020
      %v1085 = vunpack.c.l.b16 %v1021
      %v1086 = vunpack.c.l.b16 %v1022
      %v1087 = vunpack.c.l.b16 %v1023
      %v1088 = vunpack.c.l.b16 %v1024
      %v1089 = vunpack.c.l.b16 %v1025
      %v1090 = vunpack.c.l.b16 %v1026
      %v1091 = vunpack.c.l.b16 %v1027
      %v1092 = vunpack.c.l.b16 %v1028
      %v1093 = vunpack.c.l.b16 %v1029
      %v1094 = vunpack.c.l.b16 %v1030
      %v1095 = vunpack.c.l.b16 %v1031
      %v1096 = vunpack.c.l.b16 %v1032
      %v1097 = vunpack.c.l.b16 %v1033
      %v1098 = vunpack.c.l.b16 %v1034
      %v1099 = vunpack.c.l.b16 %v1035
      %v1100 = vunpack.c.l.b16 %v1036
      %v1101 = vunpack.c.l.b16 %v1037
      %v1102 = vunpack.c.l.b16 %v1038
      %v1103 = vunpack.c.l.b16 %v1039
      %v1104 = vunpack.c.l.b16 %v1040
      %v1105 = vunpack.c.l.b16 %v1041
      %v1106 = vunpack.c.l.b16 %v1042
      %v1107 = vunpack.c.l.b16 %v1043
      %v1108 = vunpack.c.l.b16 %v1044
      %v1109 = vunpack.c.l.b16 %v1045
      %v1110 = vunpack.c.l.b16 %v1046
      %v1111 = vunpack.c.l.b16 %v1047
      %v1112 = vunpack.c.l.b16 %v1048
      %v1113 = vpack.c.b16 %v1082, %v1081
      %v1114 = vpack.c.b16 %v1084, %v1083
      %v1115 = vpack.c.b16 %v1086, %v1085
      %v1116 = vpack.c.b16 %v1088, %v1087
      %v1117 = vpack.c.b16 %v1090, %v1089
      %v1118 = vpack.c.b16 %v1092, %v1091
      %v1119 = vpack.c.b16 %v1094, %v1093
      %v1120 = vpack.c.b16 %v1096, %v1095
      %v1121 = vpack.c.b16 %v1098, %v1097
      %v1122 = vpack.c.b16 %v1100, %v1099
      %v1123 = vpack.c.b16 %v1102, %v1101
      %v1124 = vpack.c.b16 %v1104, %v1103
      %v1125 = vpack.c.b16 %v1106, %v1105
      %v1126 = vpack.c.b16 %v1108, %v1107
      %v1127 = vpack.c.b16 %v1110, %v1109
      %v1128 = vpack.c.b16 %v1112, %v1111
      %v1130 = vsel %vm612, %v1113, 0
      %v1133 = vsel %vm612, %v1114, 0
      %v1136 = vsel %vm612, %v1115, 0
      %v1139 = vsel %vm612, %v1116, 0
      %v1142 = vsel %vm612, %v1117, 0
      %v1145 = vsel %vm612, %v1118, 0
      %v1148 = vsel %vm612, %v1119, 0
      %v1151 = vsel %vm612, %v1120, 0
      %v1154 = vsel %vm612, %v1121, 0
      %v1157 = vsel %vm612, %v1122, 0
      %v1160 = vsel %vm612, %v1123, 0
      %v1163 = vsel %vm612, %v1124, 0
      %v1166 = vsel %vm612, %v1125, 0
      %v1169 = vsel %vm612, %v1126, 0
      %v1172 = vsel %vm612, %v1127, 0
      %v1175 = vsel %vm612, %v1128, 0
      %1177 = vmatprep.subr.bf16.mxu0 0
      %1178 = vmatpush1.bf16.msra.mxu0 %v666
      %1179 = vmatprep.subr.bf16.mxu0 0
      %1180 = vmatpush1.bf16.msra.mxu0 0
      %1181 = vmatprep.subr.bf16.mxu0 0
      %1182 = vmatpush1.bf16.msra.mxu0 0
      %1183 = vmatprep.subr.bf16.mxu0 0
      %1184 = vmatpush1.bf16.msra.mxu0 0
      %1185 = vmatprep.subr.bf16.mxu0 0
      %1186 = vmatpush1.bf16.msra.mxu0 0
      %1187 = vmatprep.subr.bf16.mxu0 0
      %1188 = vmatpush1.bf16.msra.mxu0 0
      %1189 = vmatprep.subr.bf16.mxu0 0
      %1190 = vmatpush1.bf16.msra.mxu0 0
      %1191 = vmatprep.subr.bf16.mxu0 0
      %1192 = vmatpush1.bf16.msra.mxu0 0
      %1193 = vmatprep.subr.bf16.mxu0 0
      %1194 = vmatpush1.bf16.msra.mxu0 0
      %1195 = vmatprep.subr.bf16.mxu0 0
      %1196 = vmatpush1.bf16.msra.mxu0 0
      %1197 = vmatprep.subr.bf16.mxu0 0
      %1198 = vmatpush1.bf16.msra.mxu0 0
      %1199 = vmatprep.subr.bf16.mxu0 0
      %1200 = vmatpush1.bf16.msra.mxu0 0
      %1201 = vmatprep.subr.bf16.mxu0 0
      %1202 = vmatpush1.bf16.msra.mxu0 0
      %1203 = vmatprep.subr.bf16.mxu0 0
      %1204 = vmatpush1.bf16.msra.mxu0 0
      %1205 = vmatprep.subr.bf16.mxu0 0
      %1206 = vmatpush1.bf16.msra.mxu0 0
      %1207 = vmatprep.subr.bf16.mxu0 0
      %1208 = vmatpush1.bf16.msra.mxu0 0
      %1209 = vmatprep.mubr.bf16.mxu0 0
      %1210 = vmatmul.mubr.bf16.gmra.mrb[0].mxu0 %v1130
      %v1211 = vpop.f32.mrb[0].mxu0
      %v1212 = vadd.f32 0.0, %v1211
      %v1213 = vpop.f32.mrb[0].mxu0
      %v1214 = vpop.f32.mrb[0].mxu0
      %v1215 = vadd.f32 0.0, %v1214
      %v1216 = vpop.f32.mrb[0].mxu0
      %1217 = vmatprep.mubr.bf16.mxu0 0
      %1218 = vmatmul.mubr.bf16.gmra.mrb[0].mxu0 %v1133
      %v1219 = vpop.f32.mrb[0].mxu0
      %v1220 = vadd.f32 0.0, %v1219
      %v1221 = vpop.f32.mrb[0].mxu0
      %v1222 = vpop.f32.mrb[0].mxu0
      %v1223 = vadd.f32 0.0, %v1222
      %v1224 = vpop.f32.mrb[0].mxu0
      %1225 = vmatprep.mubr.bf16.mxu0 0
      %1226 = vmatmul.mubr.bf16.gmra.mrb[0].mxu0 %v1136
      %v1227 = vpop.f32.mrb[0].mxu0
      %v1228 = vadd.f32 0.0, %v1227
      %v1229 = vpop.f32.mrb[0].mxu0
      %v1230 = vpop.f32.mrb[0].mxu0
      %v1231 = vadd.f32 0.0, %v1230
      %v1232 = vpop.f32.mrb[0].mxu0
      %1233 = vmatprep.mubr.bf16.mxu0 0
      %1234 = vmatmul.mubr.bf16.gmra.mrb[0].mxu0 %v1139
      %v1235 = vpop.f32.mrb[0].mxu0
      %v1236 = vadd.f32 0.0, %v1235
      %v1237 = vpop.f32.mrb[0].mxu0
      %v1238 = vpop.f32.mrb[0].mxu0
      %v1239 = vadd.f32 0.0, %v1238
      %v1240 = vpop.f32.mrb[0].mxu0
      %1241 = vmatprep.mubr.bf16.mxu0 0
      %1242 = vmatmul.mubr.bf16.gmra.mrb[0].mxu0 %v1142
      %v1243 = vpop.f32.mrb[0].mxu0
      %v1244 = vadd.f32 0.0, %v1243
      %v1245 = vpop.f32.mrb[0].mxu0
      %v1246 = vpop.f32.mrb[0].mxu0
      %v1247 = vadd.f32 0.0, %v1246
      %v1248 = vpop.f32.mrb[0].mxu0
      %1249 = vmatprep.mubr.bf16.mxu0 0
      %1250 = vmatmul.mubr.bf16.gmra.mrb[0].mxu0 %v1145
      %v1251 = vpop.f32.mrb[0].mxu0
      %v1252 = vadd.f32 0.0, %v1251
      %v1253 = vpop.f32.mrb[0].mxu0
      %v1254 = vpop.f32.mrb[0].mxu0
      %v1255 = vadd.f32 0.0, %v1254
      %v1256 = vpop.f32.mrb[0].mxu0
      %1257 = vmatprep.mubr.bf16.mxu0 0
      %1258 = vmatmul.mubr.bf16.gmra.mrb[0].mxu0 %v1148
      %v1259 = vpop.f32.mrb[0].mxu0
      %v1260 = vadd.f32 0.0, %v1259
      %v1261 = vpop.f32.mrb[0].mxu0
      %v1262 = vpop.f32.mrb[0].mxu0
      %v1263 = vadd.f32 0.0, %v1262
      %v1264 = vpop.f32.mrb[0].mxu0
      %1265 = vmatprep.mubr.bf16.mxu0 0
      %1266 = vmatmul.mubr.bf16.gmra.mrb[0].mxu0 %v1151
      %v1267 = vpop.f32.mrb[0].mxu0
      %v1268 = vadd.f32 0.0, %v1267
      %v1269 = vpop.f32.mrb[0].mxu0
      %v1270 = vpop.f32.mrb[0].mxu0
      %v1271 = vadd.f32 0.0, %v1270
      %v1272 = vpop.f32.mrb[0].mxu0
      %1273 = vmatprep.mubr.bf16.mxu0 0
      %1274 = vmatmul.mubr.bf16.gmra.mrb[0].mxu0 %v1154
      %v1275 = vpop.f32.mrb[0].mxu0
      %v1276 = vadd.f32 0.0, %v1275
      %v1277 = vpop.f32.mrb[0].mxu0
      %v1278 = vpop.f32.mrb[0].mxu0
      %v1279 = vadd.f32 0.0, %v1278
      %v1280 = vpop.f32.mrb[0].mxu0
      %1281 = vmatprep.mubr.bf16.mxu0 0
      %1282 = vmatmul.mubr.bf16.gmra.mrb[0].mxu0 %v1157
      %v1283 = vpop.f32.mrb[0].mxu0
      %v1284 = vadd.f32 0.0, %v1283
      %v1285 = vpop.f32.mrb[0].mxu0
      %v1286 = vpop.f32.mrb[0].mxu0
      %v1287 = vadd.f32 0.0, %v1286
      %v1288 = vpop.f32.mrb[0].mxu0
      %1289 = vmatprep.mubr.bf16.mxu0 0
      %1290 = vmatmul.mubr.bf16.gmra.mrb[0].mxu0 %v1160
      %v1291 = vpop.f32.mrb[0].mxu0
      %v1292 = vadd.f32 0.0, %v1291
      %v1293 = vpop.f32.mrb[0].mxu0
      %v1294 = vpop.f32.mrb[0].mxu0
      %v1295 = vadd.f32 0.0, %v1294
      %v1296 = vpop.f32.mrb[0].mxu0
      %1297 = vmatprep.mubr.bf16.mxu0 0
      %1298 = vmatmul.mubr.bf16.gmra.mrb[0].mxu0 %v1163
      %v1299 = vpop.f32.mrb[0].mxu0
      %v1300 = vadd.f32 0.0, %v1299
      %v1301 = vpop.f32.mrb[0].mxu0
      %v1302 = vpop.f32.mrb[0].mxu0
      %v1303 = vadd.f32 0.0, %v1302
      %v1304 = vpop.f32.mrb[0].mxu0
      %1305 = vmatprep.mubr.bf16.mxu0 0
      %1306 = vmatmul.mubr.bf16.gmra.mrb[0].mxu0 %v1166
      %v1307 = vpop.f32.mrb[0].mxu0
      %v1308 = vadd.f32 0.0, %v1307
      %v1309 = vpop.f32.mrb[0].mxu0
      %v1310 = vpop.f32.mrb[0].mxu0
      %v1311 = vadd.f32 0.0, %v1310
      %v1312 = vpop.f32.mrb[0].mxu0
      %1313 = vmatprep.mubr.bf16.mxu0 0
      %1314 = vmatmul.mubr.bf16.gmra.mrb[0].mxu0 %v1169
      %v1315 = vpop.f32.mrb[0].mxu0
      %v1316 = vadd.f32 0.0, %v1315
      %v1317 = vpop.f32.mrb[0].mxu0
      %v1318 = vpop.f32.mrb[0].mxu0
      %v1319 = vadd.f32 0.0, %v1318
      %v1320 = vpop.f32.mrb[0].mxu0
      %1321 = vmatprep.mubr.bf16.mxu0 0
      %1322 = vmatmul.mubr.bf16.gmra.mrb[0].mxu0 %v1172
      %v1323 = vpop.f32.mrb[0].mxu0
      %v1324 = vadd.f32 0.0, %v1323
      %v1325 = vpop.f32.mrb[0].mxu0
      %v1326 = vpop.f32.mrb[0].mxu0
      %v1327 = vadd.f32 0.0, %v1326
      %v1328 = vpop.f32.mrb[0].mxu0
      %1329 = vmatprep.mubr.bf16.mxu0 0
      %1330 = vmatmul.mubr.bf16.gmra.mrb[0].mxu0 %v1175
      %v1331 = vpop.f32.mrb[0].mxu0
      %v1332 = vadd.f32 0.0, %v1331
      %v1333 = vpop.f32.mrb[0].mxu0
      %v1334 = vpop.f32.mrb[0].mxu0
      %v1335 = vadd.f32 0.0, %v1334
      %v1336 = vpop.f32.mrb[0].mxu0
      %1337 = vdwg.mxu0
      %v1338 = vmul.f32 %v1212, %v833
      %v1339 = vmul.f32 %v1215, %v833
      %v1340 = vmul.f32 %v1220, %v833
      %v1341 = vmul.f32 %v1223, %v833
      %v1342 = vmul.f32 %v1228, %v833
      %v1343 = vmul.f32 %v1231, %v833
      %v1344 = vmul.f32 %v1236, %v833
      %v1345 = vmul.f32 %v1239, %v833
      %v1346 = vmul.f32 %v1244, %v833
      %v1347 = vmul.f32 %v1247, %v833
      %v1348 = vmul.f32 %v1252, %v833
      %v1349 = vmul.f32 %v1255, %v833
      %v1350 = vmul.f32 %v1260, %v833
      %v1351 = vmul.f32 %v1263, %v833
      %v1352 = vmul.f32 %v1268, %v833
      %v1353 = vmul.f32 %v1271, %v833
      %v1354 = vmul.f32 %v1276, %v833
      %v1355 = vmul.f32 %v1279, %v833
      %v1356 = vmul.f32 %v1284, %v833
      %v1357 = vmul.f32 %v1287, %v833
      %v1358 = vmul.f32 %v1292, %v833
      %v1359 = vmul.f32 %v1295, %v833
      %v1360 = vmul.f32 %v1300, %v833
      %v1361 = vmul.f32 %v1303, %v833
      %v1362 = vmul.f32 %v1308, %v833
      %v1363 = vmul.f32 %v1311, %v833
      %v1364 = vmul.f32 %v1316, %v833
      %v1365 = vmul.f32 %v1319, %v833
      %v1366 = vmul.f32 %v1324, %v833
      %v1367 = vmul.f32 %v1327, %v833
      %v1368 = vmul.f32 %v1332, %v833
      %v1369 = vmul.f32 %v1335, %v833
      %v1370 = vadd.f32 %v1338, %v871
      %v1371 = vadd.f32 %v1339, %v871
      %v1372 = vadd.f32 %v1340, %v871
      %v1373 = vadd.f32 %v1341, %v871
      %v1374 = vadd.f32 %v1342, %v871
      %v1375 = vadd.f32 %v1343, %v871
      %v1376 = vadd.f32 %v1344, %v871
      %v1377 = vadd.f32 %v1345, %v871
      %v1378 = vadd.f32 %v1346, %v871
      %v1379 = vadd.f32 %v1347, %v871
      %v1380 = vadd.f32 %v1348, %v871
      %v1381 = vadd.f32 %v1349, %v871
      %v1382 = vadd.f32 %v1350, %v871
      %v1383 = vadd.f32 %v1351, %v871
      %v1384 = vadd.f32 %v1352, %v871
      %v1385 = vadd.f32 %v1353, %v871
      %v1386 = vadd.f32 %v1354, %v871
      %v1387 = vadd.f32 %v1355, %v871
      %v1388 = vadd.f32 %v1356, %v871
      %v1389 = vadd.f32 %v1357, %v871
      %v1390 = vadd.f32 %v1358, %v871
      %v1391 = vadd.f32 %v1359, %v871
      %v1392 = vadd.f32 %v1360, %v871
      %v1393 = vadd.f32 %v1361, %v871
      %v1394 = vadd.f32 %v1362, %v871
      %v1395 = vadd.f32 %v1363, %v871
      %v1396 = vadd.f32 %v1364, %v871
      %v1397 = vadd.f32 %v1365, %v871
      %v1398 = vadd.f32 %v1366, %v871
      %v1399 = vadd.f32 %v1367, %v871
      %v1400 = vadd.f32 %v1368, %v871
      %v1401 = vadd.f32 %v1369, %v871
      %v1402 = vmax.f32 %v1370, 0.0
      %v1403 = vmax.f32 %v1371, 0.0
      %v1404 = vmax.f32 %v1372, 0.0
      %v1405 = vmax.f32 %v1373, 0.0
      %v1406 = vmax.f32 %v1374, 0.0
      %v1407 = vmax.f32 %v1375, 0.0
      %v1408 = vmax.f32 %v1376, 0.0
      %v1409 = vmax.f32 %v1377, 0.0
      %v1410 = vmax.f32 %v1378, 0.0
      %v1411 = vmax.f32 %v1379, 0.0
      %v1412 = vmax.f32 %v1380, 0.0
      %v1413 = vmax.f32 %v1381, 0.0
      %v1414 = vmax.f32 %v1382, 0.0
      %v1415 = vmax.f32 %v1383, 0.0
      %v1416 = vmax.f32 %v1384, 0.0
      %v1417 = vmax.f32 %v1385, 0.0
      %v1418 = vmax.f32 %v1386, 0.0
      %v1419 = vmax.f32 %v1387, 0.0
      %v1420 = vmax.f32 %v1388, 0.0
      %v1421 = vmax.f32 %v1389, 0.0
      %v1422 = vmax.f32 %v1390, 0.0
      %v1423 = vmax.f32 %v1391, 0.0
      %v1424 = vmax.f32 %v1392, 0.0
      %v1425 = vmax.f32 %v1393, 0.0
      %v1426 = vmax.f32 %v1394, 0.0
      %v1427 = vmax.f32 %v1395, 0.0
      %v1428 = vmax.f32 %v1396, 0.0
      %v1429 = vmax.f32 %v1397, 0.0
      %v1430 = vmax.f32 %v1398, 0.0
      %v1431 = vmax.f32 %v1399, 0.0
      %v1432 = vmax.f32 %v1400, 0.0
      %v1433 = vmax.f32 %v1401, 0.0
      %v1434 = vmax.f32 %v1402, %v1406
      %v1435 = vmax.f32 %v1403, %v1407
      %v1436 = vmax.f32 %v1404, %v1408
      %v1437 = vmax.f32 %v1405, %v1409
      %v1438 = vmax.f32 %v1410, %v1414
      %v1439 = vmax.f32 %v1411, %v1415
      %v1440 = vmax.f32 %v1412, %v1416
      %v1441 = vmax.f32 %v1413, %v1417
      %v1442 = vmax.f32 %v1418, %v1422
      %v1443 = vmax.f32 %v1419, %v1423
      %v1444 = vmax.f32 %v1420, %v1424
      %v1445 = vmax.f32 %v1421, %v1425
      %v1446 = vmax.f32 %v1426, %v1430
      %v1447 = vmax.f32 %v1427, %v1431
      %v1448 = vmax.f32 %v1428, %v1432
      %v1449 = vmax.f32 %v1429, %v1433
      %1450 = vst.msk [vmem:[#allocation4] sm:$0xff] %vm413, %v1434
      %1451 = vst.msk [vmem:[#allocation4 + $0x8] sm:$0xff] %vm413, %v1435
      %1452 = vst.msk [vmem:[#allocation4 + $0x10] sm:$0xff] %vm413, %v1436
      %1453 = vst.msk [vmem:[#allocation4 + $0x18] sm:$0xff] %vm413, %v1437
      %1454 = vst.msk [vmem:[#allocation4 + $0x20] sm:$0xff] %vm413, %v1438
      %1455 = vst.msk [vmem:[#allocation4 + $0x28] sm:$0xff] %vm413, %v1439
      %1456 = vst.msk [vmem:[#allocation4 + $0x30] sm:$0xff] %vm413, %v1440
      %1457 = vst.msk [vmem:[#allocation4 + $0x38] sm:$0xff] %vm413, %v1441
      %1458 = vst.msk [vmem:[#allocation4 + $0x40] sm:$0xff] %vm413, %v1442
      %1459 = vst.msk [vmem:[#allocation4 + $0x48] sm:$0xff] %vm413, %v1443
      %1460 = vst.msk [vmem:[#allocation4 + $0x50] sm:$0xff] %vm413, %v1444
      %1461 = vst.msk [vmem:[#allocation4 + $0x58] sm:$0xff] %vm413, %v1445
      %1462 = vst.msk [vmem:[#allocation4 + $0x60] sm:$0xff] %vm413, %v1446
      %1463 = vst.msk [vmem:[#allocation4 + $0x68] sm:$0xff] %vm413, %v1447
      %1464 = vst.msk [vmem:[#allocation4 + $0x70] sm:$0xff] %vm413, %v1448
      %1465 = vst.msk [vmem:[#allocation4 + $0x78] sm:$0xff] %vm413, %v1449
      %v1466 = vld [vmem:[#allocation4] ss:$2 sm:$0xff]
      %v1467 = vld [vmem:[%s970] ss:$2 sm:$0xff]
      %v1468 = vld [vmem:[%s972] ss:$2 sm:$0xff]
      %v1469 = vld [vmem:[%s974] ss:$2 sm:$0xff]
      %v1470 = vld [vmem:[%s976] ss:$2 sm:$0xff]
      %v1471 = vld [vmem:[%s978] ss:$2 sm:$0xff]
      %v1472 = vld [vmem:[%s980] ss:$2 sm:$0xff]
      %v1473 = vld [vmem:[%s982] ss:$2 sm:$0xff]
      %v1474 = vld [vmem:[%s984] ss:$2 sm:$0xff]
      %v1475 = vld [vmem:[%s986] ss:$2 sm:$0xff]
      %v1476 = vld [vmem:[%s988] ss:$2 sm:$0xff]
      %v1477 = vld [vmem:[%s990] ss:$2 sm:$0xff]
      %v1478 = vld [vmem:[%s992] ss:$2 sm:$0xff]
      %v1479 = vld [vmem:[%s994] ss:$2 sm:$0xff]
      %v1480 = vld [vmem:[%s996] ss:$2 sm:$0xff]
      %v1481 = vld [vmem:[%s998] ss:$2 sm:$0xff]
      %v1482 = vmax.f32 %v1466, %v1474
      %v1483 = vmax.f32 %v1467, %v1475
      %v1484 = vmax.f32 %v1468, %v1476
      %v1485 = vmax.f32 %v1469, %v1477
      %v1486 = vmax.f32 %v1470, %v1478
      %v1487 = vmax.f32 %v1471, %v1479
      %v1488 = vmax.f32 %v1472, %v1480
      %v1489 = vmax.f32 %v1473, %v1481
      %s1490 = scalar_lea.vmem [#allocation2], 120
      %1491 = vst.msk [vmem:[%s1490 + $0x1] sm:$0xff] %vm413, %v1482
      %1492 = vst.msk [vmem:[%s1490 + $0x9] sm:$0xff] %vm413, %v1483
      %1493 = vst.msk [vmem:[%s1490 + $0x19] sm:$0xff] %vm413, %v1484
      %1494 = vst.msk [vmem:[%s1490 + $0x21] sm:$0xff] %vm413, %v1485
      %1495 = vst.msk [vmem:[%s1490 + $0x31] sm:$0xff] %vm413, %v1486
      %1496 = vst.msk [vmem:[%s1490 + $0x39] sm:$0xff] %vm413, %v1487
      %1497 = vst.msk [vmem:[%s1490 + $0x49] sm:$0xff] %vm413, %v1488
      %1498 = vst.msk [vmem:[%s1490 + $0x51] sm:$0xff] %vm413, %v1489
      %v1499 = vld [vmem:[%s407 + $0x100] sm:$0xf]
      %v1500 = vld [vmem:[%s407 + $0x104] sm:$0xf]
      %v1501 = vld [vmem:[%s407 + $0x108] sm:$0xf]
      %v1502 = vld [vmem:[%s407 + $0x10c] sm:$0xf]
      %v1503 = vld [vmem:[%s407 + $0x110] sm:$0xf]
      %v1504 = vld [vmem:[%s407 + $0x114] sm:$0xf]
      %v1505 = vld [vmem:[%s407 + $0x118] sm:$0xf]
      %v1506 = vld [vmem:[%s407 + $0x11c] sm:$0xf]
      %v1507 = vld [vmem:[%s407 + $0x120] sm:$0xf]
      %v1508 = vld [vmem:[%s407 + $0x124] sm:$0xf]
      %v1509 = vld [vmem:[%s407 + $0x128] sm:$0xf]
      %v1510 = vld [vmem:[%s407 + $0x12c] sm:$0xf]
      %v1511 = vld [vmem:[%s407 + $0x130] sm:$0xf]
      %v1512 = vld [vmem:[%s407 + $0x134] sm:$0xf]
      %v1513 = vld [vmem:[%s407 + $0x138] sm:$0xf]
      %v1514 = vld [vmem:[%s407 + $0x13c] sm:$0xf]
      %v1515 = vld [vmem:[%s407 + $0x140] sm:$0xf]
      %v1516 = vld [vmem:[%s407 + $0x144] sm:$0xf]
      %v1517 = vld [vmem:[%s407 + $0x148] sm:$0xf]
      %v1518 = vld [vmem:[%s407 + $0x14c] sm:$0xf]
      %v1519 = vld [vmem:[%s407 + $0x150] sm:$0xf]
      %v1520 = vld [vmem:[%s407 + $0x154] sm:$0xf]
      %v1521 = vld [vmem:[%s407 + $0x158] sm:$0xf]
      %v1522 = vld [vmem:[%s407 + $0x15c] sm:$0xf]
      %v1523 = vld [vmem:[%s407 + $0x160] sm:$0xf]
      %v1524 = vld [vmem:[%s407 + $0x164] sm:$0xf]
      %v1525 = vld [vmem:[%s407 + $0x168] sm:$0xf]
      %v1526 = vld [vmem:[%s407 + $0x16c] sm:$0xf]
      %v1527 = vld [vmem:[%s407 + $0x170] sm:$0xf]
      %v1528 = vld [vmem:[%s407 + $0x174] sm:$0xf]
      %v1529 = vld [vmem:[%s407 + $0x178] sm:$0xf]
      %v1530 = vld [vmem:[%s407 + $0x17c] sm:$0xf]
      %v1563 = vunpack.c.l.b16 %v1499
      %v1564 = vunpack.c.l.b16 %v1500
      %v1565 = vunpack.c.l.b16 %v1501
      %v1566 = vunpack.c.l.b16 %v1502
      %v1567 = vunpack.c.l.b16 %v1503
      %v1568 = vunpack.c.l.b16 %v1504
      %v1569 = vunpack.c.l.b16 %v1505
      %v1570 = vunpack.c.l.b16 %v1506
      %v1571 = vunpack.c.l.b16 %v1507
      %v1572 = vunpack.c.l.b16 %v1508
      %v1573 = vunpack.c.l.b16 %v1509
      %v1574 = vunpack.c.l.b16 %v1510
      %v1575 = vunpack.c.l.b16 %v1511
      %v1576 = vunpack.c.l.b16 %v1512
      %v1577 = vunpack.c.l.b16 %v1513
      %v1578 = vunpack.c.l.b16 %v1514
      %v1579 = vunpack.c.l.b16 %v1515
      %v1580 = vunpack.c.l.b16 %v1516
      %v1581 = vunpack.c.l.b16 %v1517
      %v1582 = vunpack.c.l.b16 %v1518
      %v1583 = vunpack.c.l.b16 %v1519
      %v1584 = vunpack.c.l.b16 %v1520
      %v1585 = vunpack.c.l.b16 %v1521
      %v1586 = vunpack.c.l.b16 %v1522
      %v1587 = vunpack.c.l.b16 %v1523
      %v1588 = vunpack.c.l.b16 %v1524
      %v1589 = vunpack.c.l.b16 %v1525
      %v1590 = vunpack.c.l.b16 %v1526
      %v1591 = vunpack.c.l.b16 %v1527
      %v1592 = vunpack.c.l.b16 %v1528
      %v1593 = vunpack.c.l.b16 %v1529
      %v1594 = vunpack.c.l.b16 %v1530
      %v1595 = vpack.c.b16 %v1564, %v1563
      %v1596 = vpack.c.b16 %v1566, %v1565
      %v1597 = vpack.c.b16 %v1568, %v1567
      %v1598 = vpack.c.b16 %v1570, %v1569
      %v1599 = vpack.c.b16 %v1572, %v1571
      %v1600 = vpack.c.b16 %v1574, %v1573
      %v1601 = vpack.c.b16 %v1576, %v1575
      %v1602 = vpack.c.b16 %v1578, %v1577
      %v1603 = vpack.c.b16 %v1580, %v1579
      %v1604 = vpack.c.b16 %v1582, %v1581
      %v1605 = vpack.c.b16 %v1584, %v1583
      %v1606 = vpack.c.b16 %v1586, %v1585
      %v1607 = vpack.c.b16 %v1588, %v1587
      %v1608 = vpack.c.b16 %v1590, %v1589
      %v1609 = vpack.c.b16 %v1592, %v1591
      %v1610 = vpack.c.b16 %v1594, %v1593
      %v1612 = vsel %vm612, %v1595, 0
      %v1615 = vsel %vm612, %v1596, 0
      %v1618 = vsel %vm612, %v1597, 0
      %v1621 = vsel %vm612, %v1598, 0
      %v1624 = vsel %vm612, %v1599, 0
      %v1627 = vsel %vm612, %v1600, 0
      %v1630 = vsel %vm612, %v1601, 0
      %v1633 = vsel %vm612, %v1602, 0
      %v1636 = vsel %vm612, %v1603, 0
      %v1639 = vsel %vm612, %v1604, 0
      %v1642 = vsel %vm612, %v1605, 0
      %v1645 = vsel %vm612, %v1606, 0
      %v1648 = vsel %vm612, %v1607, 0
      %v1651 = vsel %vm612, %v1608, 0
      %v1654 = vsel %vm612, %v1609, 0
      %v1657 = vsel %vm612, %v1610, 0
      %1659 = vmatprep.subr.bf16.mxu0 0
      %1660 = vmatpush1.bf16.msra.mxu0 %v666
      %1661 = vmatprep.subr.bf16.mxu0 0
      %1662 = vmatpush1.bf16.msra.mxu0 0
      %1663 = vmatprep.subr.bf16.mxu0 0
      %1664 = vmatpush1.bf16.msra.mxu0 0
      %1665 = vmatprep.subr.bf16.mxu0 0
      %1666 = vmatpush1.bf16.msra.mxu0 0
      %1667 = vmatprep.subr.bf16.mxu0 0
      %1668 = vmatpush1.bf16.msra.mxu0 0
      %1669 = vmatprep.subr.bf16.mxu0 0
      %1670 = vmatpush1.bf16.msra.mxu0 0
      %1671 = vmatprep.subr.bf16.mxu0 0
      %1672 = vmatpush1.bf16.msra.mxu0 0
      %1673 = vmatprep.subr.bf16.mxu0 0
      %1674 = vmatpush1.bf16.msra.mxu0 0
      %1675 = vmatprep.subr.bf16.mxu0 0
      %1676 = vmatpush1.bf16.msra.mxu0 0
      %1677 = vmatprep.subr.bf16.mxu0 0
      %1678 = vmatpush1.bf16.msra.mxu0 0
      %1679 = vmatprep.subr.bf16.mxu0 0
      %1680 = vmatpush1.bf16.msra.mxu0 0
      %1681 = vmatprep.subr.bf16.mxu0 0
      %1682 = vmatpush1.bf16.msra.mxu0 0
      %1683 = vmatprep.subr.bf16.mxu0 0
      %1684 = vmatpush1.bf16.msra.mxu0 0
      %1685 = vmatprep.subr.bf16.mxu0 0
      %1686 = vmatpush1.bf16.msra.mxu0 0
      %1687 = vmatprep.subr.bf16.mxu0 0
      %1688 = vmatpush1.bf16.msra.mxu0 0
      %1689 = vmatprep.subr.bf16.mxu0 0
      %1690 = vmatpush1.bf16.msra.mxu0 0
      %1691 = vmatprep.mubr.bf16.mxu0 0
      %1692 = vmatmul.mubr.bf16.gmra.mrb[0].mxu0 %v1612
      %v1693 = vpop.f32.mrb[0].mxu0
      %v1694 = vadd.f32 0.0, %v1693
      %v1695 = vpop.f32.mrb[0].mxu0
      %v1696 = vpop.f32.mrb[0].mxu0
      %v1697 = vadd.f32 0.0, %v1696
      %v1698 = vpop.f32.mrb[0].mxu0
      %1699 = vmatprep.mubr.bf16.mxu0 0
      %1700 = vmatmul.mubr.bf16.gmra.mrb[0].mxu0 %v1615
      %v1701 = vpop.f32.mrb[0].mxu0
      %v1702 = vadd.f32 0.0, %v1701
      %v1703 = vpop.f32.mrb[0].mxu0
      %v1704 = vpop.f32.mrb[0].mxu0
      %v1705 = vadd.f32 0.0, %v1704
      %v1706 = vpop.f32.mrb[0].mxu0
      %1707 = vmatprep.mubr.bf16.mxu0 0
      %1708 = vmatmul.mubr.bf16.gmra.mrb[0].mxu0 %v1618
      %v1709 = vpop.f32.mrb[0].mxu0
      %v1710 = vadd.f32 0.0, %v1709
      %v1711 = vpop.f32.mrb[0].mxu0
      %v1712 = vpop.f32.mrb[0].mxu0
      %v1713 = vadd.f32 0.0, %v1712
      %v1714 = vpop.f32.mrb[0].mxu0
      %1715 = vmatprep.mubr.bf16.mxu0 0
      %1716 = vmatmul.mubr.bf16.gmra.mrb[0].mxu0 %v1621
      %v1717 = vpop.f32.mrb[0].mxu0
      %v1718 = vadd.f32 0.0, %v1717
      %v1719 = vpop.f32.mrb[0].mxu0
      %v1720 = vpop.f32.mrb[0].mxu0
      %v1721 = vadd.f32 0.0, %v1720
      %v1722 = vpop.f32.mrb[0].mxu0
      %1723 = vmatprep.mubr.bf16.mxu0 0
      %1724 = vmatmul.mubr.bf16.gmra.mrb[0].mxu0 %v1624
      %v1725 = vpop.f32.mrb[0].mxu0
      %v1726 = vadd.f32 0.0, %v1725
      %v1727 = vpop.f32.mrb[0].mxu0
      %v1728 = vpop.f32.mrb[0].mxu0
      %v1729 = vadd.f32 0.0, %v1728
      %v1730 = vpop.f32.mrb[0].mxu0
      %1731 = vmatprep.mubr.bf16.mxu0 0
      %1732 = vmatmul.mubr.bf16.gmra.mrb[0].mxu0 %v1627
      %v1733 = vpop.f32.mrb[0].mxu0
      %v1734 = vadd.f32 0.0, %v1733
      %v1735 = vpop.f32.mrb[0].mxu0
      %v1736 = vpop.f32.mrb[0].mxu0
      %v1737 = vadd.f32 0.0, %v1736
      %v1738 = vpop.f32.mrb[0].mxu0
      %1739 = vmatprep.mubr.bf16.mxu0 0
      %1740 = vmatmul.mubr.bf16.gmra.mrb[0].mxu0 %v1630
      %v1741 = vpop.f32.mrb[0].mxu0
      %v1742 = vadd.f32 0.0, %v1741
      %v1743 = vpop.f32.mrb[0].mxu0
      %v1744 = vpop.f32.mrb[0].mxu0
      %v1745 = vadd.f32 0.0, %v1744
      %v1746 = vpop.f32.mrb[0].mxu0
      %1747 = vmatprep.mubr.bf16.mxu0 0
      %1748 = vmatmul.mubr.bf16.gmra.mrb[0].mxu0 %v1633
      %v1749 = vpop.f32.mrb[0].mxu0
      %v1750 = vadd.f32 0.0, %v1749
      %v1751 = vpop.f32.mrb[0].mxu0
      %v1752 = vpop.f32.mrb[0].mxu0
      %v1753 = vadd.f32 0.0, %v1752
      %v1754 = vpop.f32.mrb[0].mxu0
      %1755 = vmatprep.mubr.bf16.mxu0 0
      %1756 = vmatmul.mubr.bf16.gmra.mrb[0].mxu0 %v1636
      %v1757 = vpop.f32.mrb[0].mxu0
      %v1758 = vadd.f32 0.0, %v1757
      %v1759 = vpop.f32.mrb[0].mxu0
      %v1760 = vpop.f32.mrb[0].mxu0
      %v1761 = vadd.f32 0.0, %v1760
      %v1762 = vpop.f32.mrb[0].mxu0
      %1763 = vmatprep.mubr.bf16.mxu0 0
      %1764 = vmatmul.mubr.bf16.gmra.mrb[0].mxu0 %v1639
      %v1765 = vpop.f32.mrb[0].mxu0
      %v1766 = vadd.f32 0.0, %v1765
      %v1767 = vpop.f32.mrb[0].mxu0
      %v1768 = vpop.f32.mrb[0].mxu0
      %v1769 = vadd.f32 0.0, %v1768
      %v1770 = vpop.f32.mrb[0].mxu0
      %1771 = vmatprep.mubr.bf16.mxu0 0
      %1772 = vmatmul.mubr.bf16.gmra.mrb[0].mxu0 %v1642
      %v1773 = vpop.f32.mrb[0].mxu0
      %v1774 = vadd.f32 0.0, %v1773
      %v1775 = vpop.f32.mrb[0].mxu0
      %v1776 = vpop.f32.mrb[0].mxu0
      %v1777 = vadd.f32 0.0, %v1776
      %v1778 = vpop.f32.mrb[0].mxu0
      %1779 = vmatprep.mubr.bf16.mxu0 0
      %1780 = vmatmul.mubr.bf16.gmra.mrb[0].mxu0 %v1645
      %v1781 = vpop.f32.mrb[0].mxu0
      %v1782 = vadd.f32 0.0, %v1781
      %v1783 = vpop.f32.mrb[0].mxu0
      %v1784 = vpop.f32.mrb[0].mxu0
      %v1785 = vadd.f32 0.0, %v1784
      %v1786 = vpop.f32.mrb[0].mxu0
      %1787 = vmatprep.mubr.bf16.mxu0 0
      %1788 = vmatmul.mubr.bf16.gmra.mrb[0].mxu0 %v1648
      %v1789 = vpop.f32.mrb[0].mxu0
      %v1790 = vadd.f32 0.0, %v1789
      %v1791 = vpop.f32.mrb[0].mxu0
      %v1792 = vpop.f32.mrb[0].mxu0
      %v1793 = vadd.f32 0.0, %v1792
      %v1794 = vpop.f32.mrb[0].mxu0
      %1795 = vmatprep.mubr.bf16.mxu0 0
      %1796 = vmatmul.mubr.bf16.gmra.mrb[0].mxu0 %v1651
      %v1797 = vpop.f32.mrb[0].mxu0
      %v1798 = vadd.f32 0.0, %v1797
      %v1799 = vpop.f32.mrb[0].mxu0
      %v1800 = vpop.f32.mrb[0].mxu0
      %v1801 = vadd.f32 0.0, %v1800
      %v1802 = vpop.f32.mrb[0].mxu0
      %1803 = vmatprep.mubr.bf16.mxu0 0
      %1804 = vmatmul.mubr.bf16.gmra.mrb[0].mxu0 %v1654
      %v1805 = vpop.f32.mrb[0].mxu0
      %v1806 = vadd.f32 0.0, %v1805
      %v1807 = vpop.f32.mrb[0].mxu0
      %v1808 = vpop.f32.mrb[0].mxu0
      %v1809 = vadd.f32 0.0, %v1808
      %v1810 = vpop.f32.mrb[0].mxu0
      %1811 = vmatprep.mubr.bf16.mxu0 0
      %1812 = vmatmul.mubr.bf16.gmra.mrb[0].mxu0 %v1657
      %v1813 = vpop.f32.mrb[0].mxu0
      %v1814 = vadd.f32 0.0, %v1813
      %v1815 = vpop.f32.mrb[0].mxu0
      %v1816 = vpop.f32.mrb[0].mxu0
      %v1817 = vadd.f32 0.0, %v1816
      %v1818 = vpop.f32.mrb[0].mxu0
      %1819 = vdwg.mxu0
      %v1820 = vmul.f32 %v1694, %v833
      %v1821 = vmul.f32 %v1697, %v833
      %v1822 = vmul.f32 %v1702, %v833
      %v1823 = vmul.f32 %v1705, %v833
      %v1824 = vmul.f32 %v1710, %v833
      %v1825 = vmul.f32 %v1713, %v833
      %v1826 = vmul.f32 %v1718, %v833
      %v1827 = vmul.f32 %v1721, %v833
      %v1828 = vmul.f32 %v1726, %v833
      %v1829 = vmul.f32 %v1729, %v833
      %v1830 = vmul.f32 %v1734, %v833
      %v1831 = vmul.f32 %v1737, %v833
      %v1832 = vmul.f32 %v1742, %v833
      %v1833 = vmul.f32 %v1745, %v833
      %v1834 = vmul.f32 %v1750, %v833
      %v1835 = vmul.f32 %v1753, %v833
      %v1836 = vmul.f32 %v1758, %v833
      %v1837 = vmul.f32 %v1761, %v833
      %v1838 = vmul.f32 %v1766, %v833
      %v1839 = vmul.f32 %v1769, %v833
      %v1840 = vmul.f32 %v1774, %v833
      %v1841 = vmul.f32 %v1777, %v833
      %v1842 = vmul.f32 %v1782, %v833
      %v1843 = vmul.f32 %v1785, %v833
      %v1844 = vmul.f32 %v1790, %v833
      %v1845 = vmul.f32 %v1793, %v833
      %v1846 = vmul.f32 %v1798, %v833
      %v1847 = vmul.f32 %v1801, %v833
      %v1848 = vmul.f32 %v1806, %v833
      %v1849 = vmul.f32 %v1809, %v833
      %v1850 = vmul.f32 %v1814, %v833
      %v1851 = vmul.f32 %v1817, %v833
      %v1852 = vadd.f32 %v1820, %v871
      %v1853 = vadd.f32 %v1821, %v871
      %v1854 = vadd.f32 %v1822, %v871
      %v1855 = vadd.f32 %v1823, %v871
      %v1856 = vadd.f32 %v1824, %v871
      %v1857 = vadd.f32 %v1825, %v871
      %v1858 = vadd.f32 %v1826, %v871
      %v1859 = vadd.f32 %v1827, %v871
      %v1860 = vadd.f32 %v1828, %v871
      %v1861 = vadd.f32 %v1829, %v871
      %v1862 = vadd.f32 %v1830, %v871
      %v1863 = vadd.f32 %v1831, %v871
      %v1864 = vadd.f32 %v1832, %v871
      %v1865 = vadd.f32 %v1833, %v871
      %v1866 = vadd.f32 %v1834, %v871
      %v1867 = vadd.f32 %v1835, %v871
      %v1868 = vadd.f32 %v1836, %v871
      %v1869 = vadd.f32 %v1837, %v871
      %v1870 = vadd.f32 %v1838, %v871
      %v1871 = vadd.f32 %v1839, %v871
      %v1872 = vadd.f32 %v1840, %v871
      %v1873 = vadd.f32 %v1841, %v871
      %v1874 = vadd.f32 %v1842, %v871
      %v1875 = vadd.f32 %v1843, %v871
      %v1876 = vadd.f32 %v1844, %v871
      %v1877 = vadd.f32 %v1845, %v871
      %v1878 = vadd.f32 %v1846, %v871
      %v1879 = vadd.f32 %v1847, %v871
      %v1880 = vadd.f32 %v1848, %v871
      %v1881 = vadd.f32 %v1849, %v871
      %v1882 = vadd.f32 %v1850, %v871
      %v1883 = vadd.f32 %v1851, %v871
      %v1884 = vmax.f32 %v1852, 0.0
      %v1885 = vmax.f32 %v1853, 0.0
      %v1886 = vmax.f32 %v1854, 0.0
      %v1887 = vmax.f32 %v1855, 0.0
      %v1888 = vmax.f32 %v1856, 0.0
      %v1889 = vmax.f32 %v1857, 0.0
      %v1890 = vmax.f32 %v1858, 0.0
      %v1891 = vmax.f32 %v1859, 0.0
      %v1892 = vmax.f32 %v1860, 0.0
      %v1893 = vmax.f32 %v1861, 0.0
      %v1894 = vmax.f32 %v1862, 0.0
      %v1895 = vmax.f32 %v1863, 0.0
      %v1896 = vmax.f32 %v1864, 0.0
      %v1897 = vmax.f32 %v1865, 0.0
      %v1898 = vmax.f32 %v1866, 0.0
      %v1899 = vmax.f32 %v1867, 0.0
      %v1900 = vmax.f32 %v1868, 0.0
      %v1901 = vmax.f32 %v1869, 0.0
      %v1902 = vmax.f32 %v1870, 0.0
      %v1903 = vmax.f32 %v1871, 0.0
      %v1904 = vmax.f32 %v1872, 0.0
      %v1905 = vmax.f32 %v1873, 0.0
      %v1906 = vmax.f32 %v1874, 0.0
      %v1907 = vmax.f32 %v1875, 0.0
      %v1908 = vmax.f32 %v1876, 0.0
      %v1909 = vmax.f32 %v1877, 0.0
      %v1910 = vmax.f32 %v1878, 0.0
      %v1911 = vmax.f32 %v1879, 0.0
      %v1912 = vmax.f32 %v1880, 0.0
      %v1913 = vmax.f32 %v1881, 0.0
      %v1914 = vmax.f32 %v1882, 0.0
      %v1915 = vmax.f32 %v1883, 0.0
      %v1916 = vmax.f32 %v1884, %v1888
      %v1917 = vmax.f32 %v1885, %v1889
      %v1918 = vmax.f32 %v1886, %v1890
      %v1919 = vmax.f32 %v1887, %v1891
      %v1920 = vmax.f32 %v1892, %v1896
      %v1921 = vmax.f32 %v1893, %v1897
      %v1922 = vmax.f32 %v1894, %v1898
      %v1923 = vmax.f32 %v1895, %v1899
      %v1924 = vmax.f32 %v1900, %v1904
      %v1925 = vmax.f32 %v1901, %v1905
      %v1926 = vmax.f32 %v1902, %v1906
      %v1927 = vmax.f32 %v1903, %v1907
      %v1928 = vmax.f32 %v1908, %v1912
      %v1929 = vmax.f32 %v1909, %v1913
      %v1930 = vmax.f32 %v1910, %v1914
      %v1931 = vmax.f32 %v1911, %v1915
      %1932 = vst.msk [vmem:[#allocation4] sm:$0xff] %vm413, %v1916
      %1933 = vst.msk [vmem:[#allocation4 + $0x8] sm:$0xff] %vm413, %v1917
      %1934 = vst.msk [vmem:[#allocation4 + $0x10] sm:$0xff] %vm413, %v1918
      %1935 = vst.msk [vmem:[#allocation4 + $0x18] sm:$0xff] %vm413, %v1919
      %1936 = vst.msk [vmem:[#allocation4 + $0x20] sm:$0xff] %vm413, %v1920
      %1937 = vst.msk [vmem:[#allocation4 + $0x28] sm:$0xff] %vm413, %v1921
      %1938 = vst.msk [vmem:[#allocation4 + $0x30] sm:$0xff] %vm413, %v1922
      %1939 = vst.msk [vmem:[#allocation4 + $0x38] sm:$0xff] %vm413, %v1923
      %1940 = vst.msk [vmem:[#allocation4 + $0x40] sm:$0xff] %vm413, %v1924
      %1941 = vst.msk [vmem:[#allocation4 + $0x48] sm:$0xff] %vm413, %v1925
      %1942 = vst.msk [vmem:[#allocation4 + $0x50] sm:$0xff] %vm413, %v1926
      %1943 = vst.msk [vmem:[#allocation4 + $0x58] sm:$0xff] %vm413, %v1927
      %1944 = vst.msk [vmem:[#allocation4 + $0x60] sm:$0xff] %vm413, %v1928
      %1945 = vst.msk [vmem:[#allocation4 + $0x68] sm:$0xff] %vm413, %v1929
      %1946 = vst.msk [vmem:[#allocation4 + $0x70] sm:$0xff] %vm413, %v1930
      %1947 = vst.msk [vmem:[#allocation4 + $0x78] sm:$0xff] %vm413, %v1931
      %v1948 = vld [vmem:[#allocation4] ss:$2 sm:$0xff]
      %v1949 = vld [vmem:[%s970] ss:$2 sm:$0xff]
      %v1950 = vld [vmem:[%s972] ss:$2 sm:$0xff]
      %v1951 = vld [vmem:[%s974] ss:$2 sm:$0xff]
      %v1952 = vld [vmem:[%s976] ss:$2 sm:$0xff]
      %v1953 = vld [vmem:[%s978] ss:$2 sm:$0xff]
      %v1954 = vld [vmem:[%s980] ss:$2 sm:$0xff]
      %v1955 = vld [vmem:[%s982] ss:$2 sm:$0xff]
      %v1956 = vld [vmem:[%s984] ss:$2 sm:$0xff]
      %v1957 = vld [vmem:[%s986] ss:$2 sm:$0xff]
      %v1958 = vld [vmem:[%s988] ss:$2 sm:$0xff]
      %v1959 = vld [vmem:[%s990] ss:$2 sm:$0xff]
      %v1960 = vld [vmem:[%s992] ss:$2 sm:$0xff]
      %v1961 = vld [vmem:[%s994] ss:$2 sm:$0xff]
      %v1962 = vld [vmem:[%s996] ss:$2 sm:$0xff]
      %v1963 = vld [vmem:[%s998] ss:$2 sm:$0xff]
      %v1964 = vmax.f32 %v1948, %v1956
      %v1965 = vmax.f32 %v1949, %v1957
      %v1966 = vmax.f32 %v1950, %v1958
      %v1967 = vmax.f32 %v1951, %v1959
      %v1968 = vmax.f32 %v1952, %v1960
      %v1969 = vmax.f32 %v1953, %v1961
      %v1970 = vmax.f32 %v1954, %v1962
      %v1971 = vmax.f32 %v1955, %v1963
      %s1972 = scalar_lea.vmem [#allocation2], 216
      %1973 = vst.msk [vmem:[%s1972 + $0x1] sm:$0xff] %vm413, %v1964
      %1974 = vst.msk [vmem:[%s1972 + $0x9] sm:$0xff] %vm413, %v1965
      %1975 = vst.msk [vmem:[%s1972 + $0x19] sm:$0xff] %vm413, %v1966
      %1976 = vst.msk [vmem:[%s1972 + $0x21] sm:$0xff] %vm413, %v1967
      %1977 = vst.msk [vmem:[%s1972 + $0x31] sm:$0xff] %vm413, %v1968
      %1978 = vst.msk [vmem:[%s1972 + $0x39] sm:$0xff] %vm413, %v1969
      %1979 = vst.msk [vmem:[%s1972 + $0x49] sm:$0xff] %vm413, %v1970
      %1980 = vst.msk [vmem:[%s1972 + $0x51] sm:$0xff] %vm413, %v1971
      %v1981 = vld [vmem:[%s407 + $0x180] sm:$0xf]
      %v1982 = vld [vmem:[%s407 + $0x184] sm:$0xf]
      %v1983 = vld [vmem:[%s407 + $0x188] sm:$0xf]
      %v1984 = vld [vmem:[%s407 + $0x18c] sm:$0xf]
      %v1985 = vld [vmem:[%s407 + $0x190] sm:$0xf]
      %v1986 = vld [vmem:[%s407 + $0x194] sm:$0xf]
      %v1987 = vld [vmem:[%s407 + $0x198] sm:$0xf]
      %v1988 = vld [vmem:[%s407 + $0x19c] sm:$0xf]
      %v1989 = vld [vmem:[%s407 + $0x1a0] sm:$0xf]
      %v1990 = vld [vmem:[%s407 + $0x1a4] sm:$0xf]
      %v1991 = vld [vmem:[%s407 + $0x1a8] sm:$0xf]
      %v1992 = vld [vmem:[%s407 + $0x1ac] sm:$0xf]
      %v1993 = vld [vmem:[%s407 + $0x1b0] sm:$0xf]
      %v1994 = vld [vmem:[%s407 + $0x1b4] sm:$0xf]
      %v1995 = vld [vmem:[%s407 + $0x1b8] sm:$0xf]
      %v1996 = vld [vmem:[%s407 + $0x1bc] sm:$0xf]
      %v1997 = vld [vmem:[%s407 + $0x1c0] sm:$0xf]
      %v1998 = vld [vmem:[%s407 + $0x1c4] sm:$0xf]
      %v1999 = vld [vmem:[%s407 + $0x1c8] sm:$0xf]
      %v2000 = vld [vmem:[%s407 + $0x1cc] sm:$0xf]
      %v2001 = vld [vmem:[%s407 + $0x1d0] sm:$0xf]
      %v2002 = vld [vmem:[%s407 + $0x1d4] sm:$0xf]
      %v2003 = vld [vmem:[%s407 + $0x1d8] sm:$0xf]
      %v2004 = vld [vmem:[%s407 + $0x1dc] sm:$0xf]
      %v2005 = vld [vmem:[%s407 + $0x1e0] sm:$0xf]
      %v2006 = vld [vmem:[%s407 + $0x1e4] sm:$0xf]
      %v2007 = vld [vmem:[%s407 + $0x1e8] sm:$0xf]
      %v2008 = vld [vmem:[%s407 + $0x1ec] sm:$0xf]
      %v2009 = vld [vmem:[%s407 + $0x1f0] sm:$0xf]
      %v2010 = vld [vmem:[%s407 + $0x1f4] sm:$0xf]
      %v2011 = vld [vmem:[%s407 + $0x1f8] sm:$0xf]
      %v2012 = vld [vmem:[%s407 + $0x1fc] sm:$0xf]
      %v2045 = vunpack.c.l.b16 %v1981
      %v2046 = vunpack.c.l.b16 %v1982
      %v2047 = vunpack.c.l.b16 %v1983
      %v2048 = vunpack.c.l.b16 %v1984
      %v2049 = vunpack.c.l.b16 %v1985
      %v2050 = vunpack.c.l.b16 %v1986
      %v2051 = vunpack.c.l.b16 %v1987
      %v2052 = vunpack.c.l.b16 %v1988
      %v2053 = vunpack.c.l.b16 %v1989
      %v2054 = vunpack.c.l.b16 %v1990
      %v2055 = vunpack.c.l.b16 %v1991
      %v2056 = vunpack.c.l.b16 %v1992
      %v2057 = vunpack.c.l.b16 %v1993
      %v2058 = vunpack.c.l.b16 %v1994
      %v2059 = vunpack.c.l.b16 %v1995
      %v2060 = vunpack.c.l.b16 %v1996
      %v2061 = vunpack.c.l.b16 %v1997
      %v2062 = vunpack.c.l.b16 %v1998
      %v2063 = vunpack.c.l.b16 %v1999
      %v2064 = vunpack.c.l.b16 %v2000
      %v2065 = vunpack.c.l.b16 %v2001
      %v2066 = vunpack.c.l.b16 %v2002
      %v2067 = vunpack.c.l.b16 %v2003
      %v2068 = vunpack.c.l.b16 %v2004
      %v2069 = vunpack.c.l.b16 %v2005
      %v2070 = vunpack.c.l.b16 %v2006
      %v2071 = vunpack.c.l.b16 %v2007
      %v2072 = vunpack.c.l.b16 %v2008
      %v2073 = vunpack.c.l.b16 %v2009
      %v2074 = vunpack.c.l.b16 %v2010
      %v2075 = vunpack.c.l.b16 %v2011
      %v2076 = vunpack.c.l.b16 %v2012
      %v2077 = vpack.c.b16 %v2046, %v2045
      %v2078 = vpack.c.b16 %v2048, %v2047
      %v2079 = vpack.c.b16 %v2050, %v2049
      %v2080 = vpack.c.b16 %v2052, %v2051
      %v2081 = vpack.c.b16 %v2054, %v2053
      %v2082 = vpack.c.b16 %v2056, %v2055
      %v2083 = vpack.c.b16 %v2058, %v2057
      %v2084 = vpack.c.b16 %v2060, %v2059
      %v2085 = vpack.c.b16 %v2062, %v2061
      %v2086 = vpack.c.b16 %v2064, %v2063
      %v2087 = vpack.c.b16 %v2066, %v2065
      %v2088 = vpack.c.b16 %v2068, %v2067
      %v2089 = vpack.c.b16 %v2070, %v2069
      %v2090 = vpack.c.b16 %v2072, %v2071
      %v2091 = vpack.c.b16 %v2074, %v2073
      %v2092 = vpack.c.b16 %v2076, %v2075
      %v2094 = vsel %vm612, %v2077, 0
      %v2097 = vsel %vm612, %v2078, 0
      %v2100 = vsel %vm612, %v2079, 0
      %v2103 = vsel %vm612, %v2080, 0
      %v2106 = vsel %vm612, %v2081, 0
      %v2109 = vsel %vm612, %v2082, 0
      %v2112 = vsel %vm612, %v2083, 0
      %v2115 = vsel %vm612, %v2084, 0
      %v2118 = vsel %vm612, %v2085, 0
      %v2121 = vsel %vm612, %v2086, 0
      %v2124 = vsel %vm612, %v2087, 0
      %v2127 = vsel %vm612, %v2088, 0
      %v2130 = vsel %vm612, %v2089, 0
      %v2133 = vsel %vm612, %v2090, 0
      %v2136 = vsel %vm612, %v2091, 0
      %v2139 = vsel %vm612, %v2092, 0
      %2141 = vmatprep.subr.bf16.mxu0 0
      %2142 = vmatpush1.bf16.msra.mxu0 %v666
      %2143 = vmatprep.subr.bf16.mxu0 0
      %2144 = vmatpush1.bf16.msra.mxu0 0
      %2145 = vmatprep.subr.bf16.mxu0 0
      %2146 = vmatpush1.bf16.msra.mxu0 0
      %2147 = vmatprep.subr.bf16.mxu0 0
      %2148 = vmatpush1.bf16.msra.mxu0 0
      %2149 = vmatprep.subr.bf16.mxu0 0
      %2150 = vmatpush1.bf16.msra.mxu0 0
      %2151 = vmatprep.subr.bf16.mxu0 0
      %2152 = vmatpush1.bf16.msra.mxu0 0
      %2153 = vmatprep.subr.bf16.mxu0 0
      %2154 = vmatpush1.bf16.msra.mxu0 0
      %2155 = vmatprep.subr.bf16.mxu0 0
      %2156 = vmatpush1.bf16.msra.mxu0 0
      %2157 = vmatprep.subr.bf16.mxu0 0
      %2158 = vmatpush1.bf16.msra.mxu0 0
      %2159 = vmatprep.subr.bf16.mxu0 0
      %2160 = vmatpush1.bf16.msra.mxu0 0
      %2161 = vmatprep.subr.bf16.mxu0 0
      %2162 = vmatpush1.bf16.msra.mxu0 0
      %2163 = vmatprep.subr.bf16.mxu0 0
      %2164 = vmatpush1.bf16.msra.mxu0 0
      %2165 = vmatprep.subr.bf16.mxu0 0
      %2166 = vmatpush1.bf16.msra.mxu0 0
      %2167 = vmatprep.subr.bf16.mxu0 0
      %2168 = vmatpush1.bf16.msra.mxu0 0
      %2169 = vmatprep.subr.bf16.mxu0 0
      %2170 = vmatpush1.bf16.msra.mxu0 0
      %2171 = vmatprep.subr.bf16.mxu0 0
      %2172 = vmatpush1.bf16.msra.mxu0 0
      %2173 = vmatprep.mubr.bf16.mxu0 0
      %2174 = vmatmul.mubr.bf16.gmra.mrb[0].mxu0 %v2094
      %v2175 = vpop.f32.mrb[0].mxu0
      %v2176 = vadd.f32 0.0, %v2175
      %v2177 = vpop.f32.mrb[0].mxu0
      %v2178 = vpop.f32.mrb[0].mxu0
      %v2179 = vadd.f32 0.0, %v2178
      %v2180 = vpop.f32.mrb[0].mxu0
      %2181 = vmatprep.mubr.bf16.mxu0 0
      %2182 = vmatmul.mubr.bf16.gmra.mrb[0].mxu0 %v2097
      %v2183 = vpop.f32.mrb[0].mxu0
      %v2184 = vadd.f32 0.0, %v2183
      %v2185 = vpop.f32.mrb[0].mxu0
      %v2186 = vpop.f32.mrb[0].mxu0
      %v2187 = vadd.f32 0.0, %v2186
      %v2188 = vpop.f32.mrb[0].mxu0
      %2189 = vmatprep.mubr.bf16.mxu0 0
      %2190 = vmatmul.mubr.bf16.gmra.mrb[0].mxu0 %v2100
      %v2191 = vpop.f32.mrb[0].mxu0
      %v2192 = vadd.f32 0.0, %v2191
      %v2193 = vpop.f32.mrb[0].mxu0
      %v2194 = vpop.f32.mrb[0].mxu0
      %v2195 = vadd.f32 0.0, %v2194
      %v2196 = vpop.f32.mrb[0].mxu0
      %2197 = vmatprep.mubr.bf16.mxu0 0
      %2198 = vmatmul.mubr.bf16.gmra.mrb[0].mxu0 %v2103
      %v2199 = vpop.f32.mrb[0].mxu0
      %v2200 = vadd.f32 0.0, %v2199
      %v2201 = vpop.f32.mrb[0].mxu0
      %v2202 = vpop.f32.mrb[0].mxu0
      %v2203 = vadd.f32 0.0, %v2202
      %v2204 = vpop.f32.mrb[0].mxu0
      %2205 = vmatprep.mubr.bf16.mxu0 0
      %2206 = vmatmul.mubr.bf16.gmra.mrb[0].mxu0 %v2106
      %v2207 = vpop.f32.mrb[0].mxu0
      %v2208 = vadd.f32 0.0, %v2207
      %v2209 = vpop.f32.mrb[0].mxu0
      %v2210 = vpop.f32.mrb[0].mxu0
      %v2211 = vadd.f32 0.0, %v2210
      %v2212 = vpop.f32.mrb[0].mxu0
      %2213 = vmatprep.mubr.bf16.mxu0 0
      %2214 = vmatmul.mubr.bf16.gmra.mrb[0].mxu0 %v2109
      %v2215 = vpop.f32.mrb[0].mxu0
      %v2216 = vadd.f32 0.0, %v2215
      %v2217 = vpop.f32.mrb[0].mxu0
      %v2218 = vpop.f32.mrb[0].mxu0
      %v2219 = vadd.f32 0.0, %v2218
      %v2220 = vpop.f32.mrb[0].mxu0
      %2221 = vmatprep.mubr.bf16.mxu0 0
      %2222 = vmatmul.mubr.bf16.gmra.mrb[0].mxu0 %v2112
      %v2223 = vpop.f32.mrb[0].mxu0
      %v2224 = vadd.f32 0.0, %v2223
      %v2225 = vpop.f32.mrb[0].mxu0
      %v2226 = vpop.f32.mrb[0].mxu0
      %v2227 = vadd.f32 0.0, %v2226
      %v2228 = vpop.f32.mrb[0].mxu0
      %2229 = vmatprep.mubr.bf16.mxu0 0
      %2230 = vmatmul.mubr.bf16.gmra.mrb[0].mxu0 %v2115
      %v2231 = vpop.f32.mrb[0].mxu0
      %v2232 = vadd.f32 0.0, %v2231
      %v2233 = vpop.f32.mrb[0].mxu0
      %v2234 = vpop.f32.mrb[0].mxu0
      %v2235 = vadd.f32 0.0, %v2234
      %v2236 = vpop.f32.mrb[0].mxu0
      %2237 = vmatprep.mubr.bf16.mxu0 0
      %2238 = vmatmul.mubr.bf16.gmra.mrb[0].mxu0 %v2118
      %v2239 = vpop.f32.mrb[0].mxu0
      %v2240 = vadd.f32 0.0, %v2239
      %v2241 = vpop.f32.mrb[0].mxu0
      %v2242 = vpop.f32.mrb[0].mxu0
      %v2243 = vadd.f32 0.0, %v2242
      %v2244 = vpop.f32.mrb[0].mxu0
      %2245 = vmatprep.mubr.bf16.mxu0 0
      %2246 = vmatmul.mubr.bf16.gmra.mrb[0].mxu0 %v2121
      %v2247 = vpop.f32.mrb[0].mxu0
      %v2248 = vadd.f32 0.0, %v2247
      %v2249 = vpop.f32.mrb[0].mxu0
      %v2250 = vpop.f32.mrb[0].mxu0
      %v2251 = vadd.f32 0.0, %v2250
      %v2252 = vpop.f32.mrb[0].mxu0
      %2253 = vmatprep.mubr.bf16.mxu0 0
      %2254 = vmatmul.mubr.bf16.gmra.mrb[0].mxu0 %v2124
      %v2255 = vpop.f32.mrb[0].mxu0
      %v2256 = vadd.f32 0.0, %v2255
      %v2257 = vpop.f32.mrb[0].mxu0
      %v2258 = vpop.f32.mrb[0].mxu0
      %v2259 = vadd.f32 0.0, %v2258
      %v2260 = vpop.f32.mrb[0].mxu0
      %2261 = vmatprep.mubr.bf16.mxu0 0
      %2262 = vmatmul.mubr.bf16.gmra.mrb[0].mxu0 %v2127
      %v2263 = vpop.f32.mrb[0].mxu0
      %v2264 = vadd.f32 0.0, %v2263
      %v2265 = vpop.f32.mrb[0].mxu0
      %v2266 = vpop.f32.mrb[0].mxu0
      %v2267 = vadd.f32 0.0, %v2266
      %v2268 = vpop.f32.mrb[0].mxu0
      %2269 = vmatprep.mubr.bf16.mxu0 0
      %2270 = vmatmul.mubr.bf16.gmra.mrb[0].mxu0 %v2130
      %v2271 = vpop.f32.mrb[0].mxu0
      %v2272 = vadd.f32 0.0, %v2271
      %v2273 = vpop.f32.mrb[0].mxu0
      %v2274 = vpop.f32.mrb[0].mxu0
      %v2275 = vadd.f32 0.0, %v2274
      %v2276 = vpop.f32.mrb[0].mxu0
      %2277 = vmatprep.mubr.bf16.mxu0 0
      %2278 = vmatmul.mubr.bf16.gmra.mrb[0].mxu0 %v2133
      %v2279 = vpop.f32.mrb[0].mxu0
      %v2280 = vadd.f32 0.0, %v2279
      %v2281 = vpop.f32.mrb[0].mxu0
      %v2282 = vpop.f32.mrb[0].mxu0
      %v2283 = vadd.f32 0.0, %v2282
      %v2284 = vpop.f32.mrb[0].mxu0
      %2285 = vmatprep.mubr.bf16.mxu0 0
      %2286 = vmatmul.mubr.bf16.gmra.mrb[0].mxu0 %v2136
      %v2287 = vpop.f32.mrb[0].mxu0
      %v2288 = vadd.f32 0.0, %v2287
      %v2289 = vpop.f32.mrb[0].mxu0
      %v2290 = vpop.f32.mrb[0].mxu0
      %v2291 = vadd.f32 0.0, %v2290
      %v2292 = vpop.f32.mrb[0].mxu0
      %2293 = vmatprep.mubr.bf16.mxu0 0
      %2294 = vmatmul.mubr.bf16.gmra.mrb[0].mxu0 %v2139
      %v2295 = vpop.f32.mrb[0].mxu0
      %v2296 = vadd.f32 0.0, %v2295
      %v2297 = vpop.f32.mrb[0].mxu0
      %v2298 = vpop.f32.mrb[0].mxu0
      %v2299 = vadd.f32 0.0, %v2298
      %v2300 = vpop.f32.mrb[0].mxu0
      %2301 = vdwg.mxu0
      %v2302 = vmul.f32 %v2176, %v833
      %v2303 = vmul.f32 %v2179, %v833
      %v2304 = vmul.f32 %v2184, %v833
      %v2305 = vmul.f32 %v2187, %v833
      %v2306 = vmul.f32 %v2192, %v833
      %v2307 = vmul.f32 %v2195, %v833
      %v2308 = vmul.f32 %v2200, %v833
      %v2309 = vmul.f32 %v2203, %v833
      %v2310 = vmul.f32 %v2208, %v833
      %v2311 = vmul.f32 %v2211, %v833
      %v2312 = vmul.f32 %v2216, %v833
      %v2313 = vmul.f32 %v2219, %v833
      %v2314 = vmul.f32 %v2224, %v833
      %v2315 = vmul.f32 %v2227, %v833
      %v2316 = vmul.f32 %v2232, %v833
      %v2317 = vmul.f32 %v2235, %v833
      %v2318 = vmul.f32 %v2240, %v833
      %v2319 = vmul.f32 %v2243, %v833
      %v2320 = vmul.f32 %v2248, %v833
      %v2321 = vmul.f32 %v2251, %v833
      %v2322 = vmul.f32 %v2256, %v833
      %v2323 = vmul.f32 %v2259, %v833
      %v2324 = vmul.f32 %v2264, %v833
      %v2325 = vmul.f32 %v2267, %v833
      %v2326 = vmul.f32 %v2272, %v833
      %v2327 = vmul.f32 %v2275, %v833
      %v2328 = vmul.f32 %v2280, %v833
      %v2329 = vmul.f32 %v2283, %v833
      %v2330 = vmul.f32 %v2288, %v833
      %v2331 = vmul.f32 %v2291, %v833
      %v2332 = vmul.f32 %v2296, %v833
      %v2333 = vmul.f32 %v2299, %v833
      %v2334 = vadd.f32 %v2302, %v871
      %v2335 = vadd.f32 %v2303, %v871
      %v2336 = vadd.f32 %v2304, %v871
      %v2337 = vadd.f32 %v2305, %v871
      %v2338 = vadd.f32 %v2306, %v871
      %v2339 = vadd.f32 %v2307, %v871
      %v2340 = vadd.f32 %v2308, %v871
      %v2341 = vadd.f32 %v2309, %v871
      %v2342 = vadd.f32 %v2310, %v871
      %v2343 = vadd.f32 %v2311, %v871
      %v2344 = vadd.f32 %v2312, %v871
      %v2345 = vadd.f32 %v2313, %v871
      %v2346 = vadd.f32 %v2314, %v871
      %v2347 = vadd.f32 %v2315, %v871
      %v2348 = vadd.f32 %v2316, %v871
      %v2349 = vadd.f32 %v2317, %v871
      %v2350 = vadd.f32 %v2318, %v871
      %v2351 = vadd.f32 %v2319, %v871
      %v2352 = vadd.f32 %v2320, %v871
      %v2353 = vadd.f32 %v2321, %v871
      %v2354 = vadd.f32 %v2322, %v871
      %v2355 = vadd.f32 %v2323, %v871
      %v2356 = vadd.f32 %v2324, %v871
      %v2357 = vadd.f32 %v2325, %v871
      %v2358 = vadd.f32 %v2326, %v871
      %v2359 = vadd.f32 %v2327, %v871
      %v2360 = vadd.f32 %v2328, %v871
      %v2361 = vadd.f32 %v2329, %v871
      %v2362 = vadd.f32 %v2330, %v871
      %v2363 = vadd.f32 %v2331, %v871
      %v2364 = vadd.f32 %v2332, %v871
      %v2365 = vadd.f32 %v2333, %v871
      %v2366 = vmax.f32 %v2334, 0.0
      %v2367 = vmax.f32 %v2335, 0.0
      %v2368 = vmax.f32 %v2336, 0.0
      %v2369 = vmax.f32 %v2337, 0.0
      %v2370 = vmax.f32 %v2338, 0.0
      %v2371 = vmax.f32 %v2339, 0.0
      %v2372 = vmax.f32 %v2340, 0.0
      %v2373 = vmax.f32 %v2341, 0.0
      %v2374 = vmax.f32 %v2342, 0.0
      %v2375 = vmax.f32 %v2343, 0.0
      %v2376 = vmax.f32 %v2344, 0.0
      %v2377 = vmax.f32 %v2345, 0.0
      %v2378 = vmax.f32 %v2346, 0.0
      %v2379 = vmax.f32 %v2347, 0.0
      %v2380 = vmax.f32 %v2348, 0.0
      %v2381 = vmax.f32 %v2349, 0.0
      %v2382 = vmax.f32 %v2350, 0.0
      %v2383 = vmax.f32 %v2351, 0.0
      %v2384 = vmax.f32 %v2352, 0.0
      %v2385 = vmax.f32 %v2353, 0.0
      %v2386 = vmax.f32 %v2354, 0.0
      %v2387 = vmax.f32 %v2355, 0.0
      %v2388 = vmax.f32 %v2356, 0.0
      %v2389 = vmax.f32 %v2357, 0.0
      %v2390 = vmax.f32 %v2358, 0.0
      %v2391 = vmax.f32 %v2359, 0.0
      %v2392 = vmax.f32 %v2360, 0.0
      %v2393 = vmax.f32 %v2361, 0.0
      %v2394 = vmax.f32 %v2362, 0.0
      %v2395 = vmax.f32 %v2363, 0.0
      %v2396 = vmax.f32 %v2364, 0.0
      %v2397 = vmax.f32 %v2365, 0.0
      %v2398 = vmax.f32 %v2366, %v2370
      %v2399 = vmax.f32 %v2367, %v2371
      %v2400 = vmax.f32 %v2368, %v2372
      %v2401 = vmax.f32 %v2369, %v2373
      %v2402 = vmax.f32 %v2374, %v2378
      %v2403 = vmax.f32 %v2375, %v2379
      %v2404 = vmax.f32 %v2376, %v2380
      %v2405 = vmax.f32 %v2377, %v2381
      %v2406 = vmax.f32 %v2382, %v2386
      %v2407 = vmax.f32 %v2383, %v2387
      %v2408 = vmax.f32 %v2384, %v2388
      %v2409 = vmax.f32 %v2385, %v2389
      %v2410 = vmax.f32 %v2390, %v2394
      %v2411 = vmax.f32 %v2391, %v2395
      %v2412 = vmax.f32 %v2392, %v2396
      %v2413 = vmax.f32 %v2393, %v2397
      %2414 = vst.msk [vmem:[#allocation4] sm:$0xff] %vm413, %v2398
      %2415 = vst.msk [vmem:[#allocation4 + $0x8] sm:$0xff] %vm413, %v2399
      %2416 = vst.msk [vmem:[#allocation4 + $0x10] sm:$0xff] %vm413, %v2400
      %2417 = vst.msk [vmem:[#allocation4 + $0x18] sm:$0xff] %vm413, %v2401
      %2418 = vst.msk [vmem:[#allocation4 + $0x20] sm:$0xff] %vm413, %v2402
      %2419 = vst.msk [vmem:[#allocation4 + $0x28] sm:$0xff] %vm413, %v2403
      %2420 = vst.msk [vmem:[#allocation4 + $0x30] sm:$0xff] %vm413, %v2404
      %2421 = vst.msk [vmem:[#allocation4 + $0x38] sm:$0xff] %vm413, %v2405
      %2422 = vst.msk [vmem:[#allocation4 + $0x40] sm:$0xff] %vm413, %v2406
      %2423 = vst.msk [vmem:[#allocation4 + $0x48] sm:$0xff] %vm413, %v2407
      %2424 = vst.msk [vmem:[#allocation4 + $0x50] sm:$0xff] %vm413, %v2408
      %2425 = vst.msk [vmem:[#allocation4 + $0x58] sm:$0xff] %vm413, %v2409
      %2426 = vst.msk [vmem:[#allocation4 + $0x60] sm:$0xff] %vm413, %v2410
      %2427 = vst.msk [vmem:[#allocation4 + $0x68] sm:$0xff] %vm413, %v2411
      %2428 = vst.msk [vmem:[#allocation4 + $0x70] sm:$0xff] %vm413, %v2412
      %2429 = vst.msk [vmem:[#allocation4 + $0x78] sm:$0xff] %vm413, %v2413
      %v2430 = vld [vmem:[#allocation4] ss:$2 sm:$0xff]
      %v2431 = vld [vmem:[%s970] ss:$2 sm:$0xff]
      %v2432 = vld [vmem:[%s972] ss:$2 sm:$0xff]
      %v2433 = vld [vmem:[%s974] ss:$2 sm:$0xff]
      %v2434 = vld [vmem:[%s976] ss:$2 sm:$0xff]
      %v2435 = vld [vmem:[%s978] ss:$2 sm:$0xff]
      %v2436 = vld [vmem:[%s980] ss:$2 sm:$0xff]
      %v2437 = vld [vmem:[%s982] ss:$2 sm:$0xff]
      %v2438 = vld [vmem:[%s984] ss:$2 sm:$0xff]
      %v2439 = vld [vmem:[%s986] ss:$2 sm:$0xff]
      %v2440 = vld [vmem:[%s988] ss:$2 sm:$0xff]
      %v2441 = vld [vmem:[%s990] ss:$2 sm:$0xff]
      %v2442 = vld [vmem:[%s992] ss:$2 sm:$0xff]
      %v2443 = vld [vmem:[%s994] ss:$2 sm:$0xff]
      %v2444 = vld [vmem:[%s996] ss:$2 sm:$0xff]
      %v2445 = vld [vmem:[%s998] ss:$2 sm:$0xff]
      %v2446 = vmax.f32 %v2430, %v2438
      %v2447 = vmax.f32 %v2431, %v2439
      %v2448 = vmax.f32 %v2432, %v2440
      %v2449 = vmax.f32 %v2433, %v2441
      %v2450 = vmax.f32 %v2434, %v2442
      %v2451 = vmax.f32 %v2435, %v2443
      %v2452 = vmax.f32 %v2436, %v2444
      %v2453 = vmax.f32 %v2437, %v2445
      %s2454 = scalar_lea.vmem [#allocation2], 312
      %2455 = vst.msk [vmem:[%s2454 + $0x1] sm:$0xff] %vm413, %v2446
      %2456 = vst.msk [vmem:[%s2454 + $0x9] sm:$0xff] %vm413, %v2447
      %2457 = vst.msk [vmem:[%s2454 + $0x19] sm:$0xff] %vm413, %v2448
      %2458 = vst.msk [vmem:[%s2454 + $0x21] sm:$0xff] %vm413, %v2449
      %2459 = vst.msk [vmem:[%s2454 + $0x31] sm:$0xff] %vm413, %v2450
      %2460 = vst.msk [vmem:[%s2454 + $0x39] sm:$0xff] %vm413, %v2451
      %2461 = vst.msk [vmem:[%s2454 + $0x49] sm:$0xff] %vm413, %v2452
      %2462 = vst.msk [vmem:[%s2454 + $0x51] sm:$0xff] %vm413, %v2453
      %v2463 = vld [vmem:[%s5] sm:$0x1]
      %v2464 = vld [vmem:[%s6] sm:$0x1]
      %v2465 = vld [vmem:[#allocation2] sm:$0xff]
      %v2466 = vld [vmem:[#allocation2 + $0x8] sm:$0xff]
      %v2467 = vld [vmem:[#allocation2 + $0x18] sm:$0xff]
      %v2468 = vld [vmem:[#allocation2 + $0x20] sm:$0xff]
      %v2469 = vld [vmem:[#allocation2 + $0x30] sm:$0xff]
      %v2470 = vld [vmem:[#allocation2 + $0x38] sm:$0xff]
      %v2471 = vld [vmem:[#allocation2 + $0x48] sm:$0xff]
      %v2472 = vld [vmem:[#allocation2 + $0x50] sm:$0xff]
      %v2473 = vld [vmem:[#allocation2 + $0x60] sm:$0xff]
      %v2474 = vld [vmem:[#allocation2 + $0x68] sm:$0xff]
      %v2475 = vld [vmem:[#allocation2 + $0x78] sm:$0xff]
      %v2476 = vld [vmem:[#allocation2 + $0x80] sm:$0xff]
      %v2477 = vld [vmem:[#allocation2 + $0x90] sm:$0xff]
      %v2478 = vld [vmem:[#allocation2 + $0x98] sm:$0xff]
      %v2479 = vld [vmem:[#allocation2 + $0xa8] sm:$0xff]
      %v2480 = vld [vmem:[#allocation2 + $0xb0] sm:$0xff]
      %v2481 = vld [vmem:[#allocation2 + $0xc0] sm:$0xff]
      %v2482 = vld [vmem:[#allocation2 + $0xc8] sm:$0xff]
      %v2483 = vld [vmem:[#allocation2 + $0xd8] sm:$0xff]
      %v2484 = vld [vmem:[#allocation2 + $0xe0] sm:$0xff]
      %v2485 = vld [vmem:[#allocation2 + $0xf0] sm:$0xff]
      %v2486 = vld [vmem:[#allocation2 + $0xf8] sm:$0xff]
      %v2487 = vld [vmem:[#allocation2 + $0x108] sm:$0xff]
      %v2488 = vld [vmem:[#allocation2 + $0x110] sm:$0xff]
      %v2489 = vld [vmem:[#allocation2 + $0x120] sm:$0xff]
      %v2490 = vld [vmem:[#allocation2 + $0x128] sm:$0xff]
      %v2491 = vld [vmem:[#allocation2 + $0x138] sm:$0xff]
      %v2492 = vld [vmem:[#allocation2 + $0x140] sm:$0xff]
      %v2493 = vld [vmem:[#allocation2 + $0x150] sm:$0xff]
      %v2494 = vld [vmem:[#allocation2 + $0x158] sm:$0xff]
      %v2495 = vld [vmem:[#allocation2 + $0x168] sm:$0xff]
      %v2496 = vld [vmem:[#allocation2 + $0x170] sm:$0xff]
      %v2497 = vpack.c.bf16 %v2466, %v2465
      %v2498 = vpack.c.bf16 %v2468, %v2467
      %v2499 = vpack.c.bf16 %v2470, %v2469
      %v2500 = vpack.c.bf16 %v2472, %v2471
      %v2501 = vpack.c.bf16 %v2474, %v2473
      %v2502 = vpack.c.bf16 %v2476, %v2475
      %v2503 = vpack.c.bf16 %v2478, %v2477
      %v2504 = vpack.c.bf16 %v2480, %v2479
      %v2505 = vpack.c.bf16 %v2482, %v2481
      %v2506 = vpack.c.bf16 %v2484, %v2483
      %v2507 = vpack.c.bf16 %v2486, %v2485
      %v2508 = vpack.c.bf16 %v2488, %v2487
      %v2509 = vpack.c.bf16 %v2490, %v2489
      %v2510 = vpack.c.bf16 %v2492, %v2491
      %v2511 = vpack.c.bf16 %v2494, %v2493
      %v2512 = vpack.c.bf16 %v2496, %v2495
      %v2513 = vld [vmem:[%s4] sm:$0xf]
      %v2514 = vld [vmem:[%s4 + $0x4] sm:$0xf]
      %v2515 = vld [vmem:[%s4 + $0x8] sm:$0xf]
      %v2516 = vld [vmem:[%s4 + $0xc] sm:$0xf]
      %v2517 = vld [vmem:[#allocation2 + $0x1] sm:$0xff]
      %v2518 = vld [vmem:[#allocation2 + $0x9] sm:$0xff]
      %v2519 = vld [vmem:[#allocation2 + $0x19] sm:$0xff]
      %v2520 = vld [vmem:[#allocation2 + $0x21] sm:$0xff]
      %v2521 = vld [vmem:[#allocation2 + $0x31] sm:$0xff]
      %v2522 = vld [vmem:[#allocation2 + $0x39] sm:$0xff]
      %v2523 = vld [vmem:[#allocation2 + $0x49] sm:$0xff]
      %v2524 = vld [vmem:[#allocation2 + $0x51] sm:$0xff]
      %v2525 = vld [vmem:[#allocation2 + $0x61] sm:$0xff]
      %v2526 = vld [vmem:[#allocation2 + $0x69] sm:$0xff]
      %v2527 = vld [vmem:[#allocation2 + $0x79] sm:$0xff]
      %v2528 = vld [vmem:[#allocation2 + $0x81] sm:$0xff]
      %v2529 = vld [vmem:[#allocation2 + $0x91] sm:$0xff]
      %v2530 = vld [vmem:[#allocation2 + $0x99] sm:$0xff]
      %v2531 = vld [vmem:[#allocation2 + $0xa9] sm:$0xff]
      %v2532 = vld [vmem:[#allocation2 + $0xb1] sm:$0xff]
      %v2533 = vld [vmem:[#allocation2 + $0xc1] sm:$0xff]
      %v2534 = vld [vmem:[#allocation2 + $0xc9] sm:$0xff]
      %v2535 = vld [vmem:[#allocation2 + $0xd9] sm:$0xff]
      %v2536 = vld [vmem:[#allocation2 + $0xe1] sm:$0xff]
      %v2537 = vld [vmem:[#allocation2 + $0xf1] sm:$0xff]
      %v2538 = vld [vmem:[#allocation2 + $0xf9] sm:$0xff]
      %v2539 = vld [vmem:[#allocation2 + $0x109] sm:$0xff]
      %v2540 = vld [vmem:[#allocation2 + $0x111] sm:$0xff]
      %v2541 = vld [vmem:[#allocation2 + $0x121] sm:$0xff]
      %v2542 = vld [vmem:[#allocation2 + $0x129] sm:$0xff]
      %v2543 = vld [vmem:[#allocation2 + $0x139] sm:$0xff]
      %v2544 = vld [vmem:[#allocation2 + $0x141] sm:$0xff]
      %v2545 = vld [vmem:[#allocation2 + $0x151] sm:$0xff]
      %v2546 = vld [vmem:[#allocation2 + $0x159] sm:$0xff]
      %v2547 = vld [vmem:[#allocation2 + $0x169] sm:$0xff]
      %v2548 = vld [vmem:[#allocation2 + $0x171] sm:$0xff]
      %v2549 = vpack.c.bf16 %v2518, %v2517
      %v2550 = vpack.c.bf16 %v2520, %v2519
      %v2551 = vpack.c.bf16 %v2522, %v2521
      %v2552 = vpack.c.bf16 %v2524, %v2523
      %v2553 = vpack.c.bf16 %v2526, %v2525
      %v2554 = vpack.c.bf16 %v2528, %v2527
      %v2555 = vpack.c.bf16 %v2530, %v2529
      %v2556 = vpack.c.bf16 %v2532, %v2531
      %v2557 = vpack.c.bf16 %v2534, %v2533
      %v2558 = vpack.c.bf16 %v2536, %v2535
      %v2559 = vpack.c.bf16 %v2538, %v2537
      %v2560 = vpack.c.bf16 %v2540, %v2539
      %v2561 = vpack.c.bf16 %v2542, %v2541
      %v2562 = vpack.c.bf16 %v2544, %v2543
      %v2563 = vpack.c.bf16 %v2546, %v2545
      %v2564 = vpack.c.bf16 %v2548, %v2547
      %s2565 = scalar_lea.vmem %s4, 16
      %v2566 = vld [vmem:[%s2565] sm:$0xf]
      %v2567 = vld [vmem:[%s2565 + $0x4] sm:$0xf]
      %v2568 = vld [vmem:[%s2565 + $0x8] sm:$0xf]
      %v2569 = vld [vmem:[%s2565 + $0xc] sm:$0xf]
      %v2574 = vunpack.c.l.b16 %v2566
      %v2575 = vunpack.c.l.b16 %v2567
      %v2576 = vunpack.c.l.b16 %v2568
      %v2577 = vunpack.c.l.b16 %v2569
      %v2578 = vpack.c.b16 %v2575, %v2574
      %v2579 = vpack.c.b16 %v2577, %v2576
      %v2583 = vsel %vm413, %v2549, 0
      %v2586 = vsel %vm413, %v2550, 0
      %v2589 = vsel %vm413, %v2551, 0
      %v2592 = vsel %vm413, %v2552, 0
      %v2595 = vsel %vm413, %v2553, 0
      %v2598 = vsel %vm413, %v2554, 0
      %v2601 = vsel %vm413, %v2555, 0
      %v2604 = vsel %vm413, %v2556, 0
      %v2607 = vsel %vm413, %v2557, 0
      %v2610 = vsel %vm413, %v2558, 0
      %v2613 = vsel %vm413, %v2559, 0
      %v2616 = vsel %vm413, %v2560, 0
      %v2619 = vsel %vm413, %v2561, 0
      %v2622 = vsel %vm413, %v2562, 0
      %v2625 = vsel %vm413, %v2563, 0
      %v2628 = vsel %vm413, %v2564, 0
      %2630 = vmatprep.subr.bf16.mxu0 0
      %2631 = vmatpush1.bf16.msra.mxu0 %v2578
      %2632 = vmatprep.subr.bf16.mxu0 0
      %2633 = vmatpush1.bf16.msra.mxu0 %v2579
      %2634 = vmatprep.subr.bf16.mxu0 0
      %2635 = vmatpush1.bf16.msra.mxu0 0
      %2636 = vmatprep.subr.bf16.mxu0 0
      %2637 = vmatpush1.bf16.msra.mxu0 0
      %2638 = vmatprep.subr.bf16.mxu0 0
      %2639 = vmatpush1.bf16.msra.mxu0 0
      %2640 = vmatprep.subr.bf16.mxu0 0
      %2641 = vmatpush1.bf16.msra.mxu0 0
      %2642 = vmatprep.subr.bf16.mxu0 0
      %2643 = vmatpush1.bf16.msra.mxu0 0
      %2644 = vmatprep.subr.bf16.mxu0 0
      %2645 = vmatpush1.bf16.msra.mxu0 0
      %2646 = vmatprep.subr.bf16.mxu0 0
      %2647 = vmatpush1.bf16.msra.mxu0 0
      %2648 = vmatprep.subr.bf16.mxu0 0
      %2649 = vmatpush1.bf16.msra.mxu0 0
      %2650 = vmatprep.subr.bf16.mxu0 0
      %2651 = vmatpush1.bf16.msra.mxu0 0
      %2652 = vmatprep.subr.bf16.mxu0 0
      %2653 = vmatpush1.bf16.msra.mxu0 0
      %2654 = vmatprep.subr.bf16.mxu0 0
      %2655 = vmatpush1.bf16.msra.mxu0 0
      %2656 = vmatprep.subr.bf16.mxu0 0
      %2657 = vmatpush1.bf16.msra.mxu0 0
      %2658 = vmatprep.subr.bf16.mxu0 0
      %2659 = vmatpush1.bf16.msra.mxu0 0
      %2660 = vmatprep.subr.bf16.mxu0 0
      %2661 = vmatpush1.bf16.msra.mxu0 0
      %2662 = vmatprep.mubr.bf16.mxu0 0
      %2663 = vmatmul.mubr.bf16.gmra.mrb[0].mxu0 %v2583
      %v2664 = vpop.f32.mrb[0].mxu0
      %v2665 = vadd.f32 0.0, %v2664
      %v2666 = vpop.f32.mrb[0].mxu0
      %v2667 = vpop.f32.mrb[0].mxu0
      %v2668 = vadd.f32 0.0, %v2667
      %v2669 = vpop.f32.mrb[0].mxu0
      %2670 = vmatprep.mubr.bf16.mxu0 0
      %2671 = vmatmul.mubr.bf16.gmra.mrb[0].mxu0 %v2586
      %v2672 = vpop.f32.mrb[0].mxu0
      %v2673 = vadd.f32 0.0, %v2672
      %v2674 = vpop.f32.mrb[0].mxu0
      %v2675 = vpop.f32.mrb[0].mxu0
      %v2676 = vadd.f32 0.0, %v2675
      %v2677 = vpop.f32.mrb[0].mxu0
      %2678 = vmatprep.mubr.bf16.mxu0 0
      %2679 = vmatmul.mubr.bf16.gmra.mrb[0].mxu0 %v2589
      %v2680 = vpop.f32.mrb[0].mxu0
      %v2681 = vadd.f32 0.0, %v2680
      %v2682 = vpop.f32.mrb[0].mxu0
      %v2683 = vpop.f32.mrb[0].mxu0
      %v2684 = vadd.f32 0.0, %v2683
      %v2685 = vpop.f32.mrb[0].mxu0
      %2686 = vmatprep.mubr.bf16.mxu0 0
      %2687 = vmatmul.mubr.bf16.gmra.mrb[0].mxu0 %v2592
      %v2688 = vpop.f32.mrb[0].mxu0
      %v2689 = vadd.f32 0.0, %v2688
      %v2690 = vpop.f32.mrb[0].mxu0
      %v2691 = vpop.f32.mrb[0].mxu0
      %v2692 = vadd.f32 0.0, %v2691
      %v2693 = vpop.f32.mrb[0].mxu0
      %2694 = vmatprep.mubr.bf16.mxu0 0
      %2695 = vmatmul.mubr.bf16.gmra.mrb[0].mxu0 %v2595
      %v2696 = vpop.f32.mrb[0].mxu0
      %v2697 = vadd.f32 0.0, %v2696
      %v2698 = vpop.f32.mrb[0].mxu0
      %v2699 = vpop.f32.mrb[0].mxu0
      %v2700 = vadd.f32 0.0, %v2699
      %v2701 = vpop.f32.mrb[0].mxu0
      %2702 = vmatprep.mubr.bf16.mxu0 0
      %2703 = vmatmul.mubr.bf16.gmra.mrb[0].mxu0 %v2598
      %v2704 = vpop.f32.mrb[0].mxu0
      %v2705 = vadd.f32 0.0, %v2704
      %v2706 = vpop.f32.mrb[0].mxu0
      %v2707 = vpop.f32.mrb[0].mxu0
      %v2708 = vadd.f32 0.0, %v2707
      %v2709 = vpop.f32.mrb[0].mxu0
      %2710 = vmatprep.mubr.bf16.mxu0 0
      %2711 = vmatmul.mubr.bf16.gmra.mrb[0].mxu0 %v2601
      %v2712 = vpop.f32.mrb[0].mxu0
      %v2713 = vadd.f32 0.0, %v2712
      %v2714 = vpop.f32.mrb[0].mxu0
      %v2715 = vpop.f32.mrb[0].mxu0
      %v2716 = vadd.f32 0.0, %v2715
      %v2717 = vpop.f32.mrb[0].mxu0
      %2718 = vmatprep.mubr.bf16.mxu0 0
      %2719 = vmatmul.mubr.bf16.gmra.mrb[0].mxu0 %v2604
      %v2720 = vpop.f32.mrb[0].mxu0
      %v2721 = vadd.f32 0.0, %v2720
      %v2722 = vpop.f32.mrb[0].mxu0
      %v2723 = vpop.f32.mrb[0].mxu0
      %v2724 = vadd.f32 0.0, %v2723
      %v2725 = vpop.f32.mrb[0].mxu0
      %2726 = vmatprep.mubr.bf16.mxu0 0
      %2727 = vmatmul.mubr.bf16.gmra.mrb[0].mxu0 %v2607
      %v2728 = vpop.f32.mrb[0].mxu0
      %v2729 = vadd.f32 0.0, %v2728
      %v2730 = vpop.f32.mrb[0].mxu0
      %v2731 = vpop.f32.mrb[0].mxu0
      %v2732 = vadd.f32 0.0, %v2731
      %v2733 = vpop.f32.mrb[0].mxu0
      %2734 = vmatprep.mubr.bf16.mxu0 0
      %2735 = vmatmul.mubr.bf16.gmra.mrb[0].mxu0 %v2610
      %v2736 = vpop.f32.mrb[0].mxu0
      %v2737 = vadd.f32 0.0, %v2736
      %v2738 = vpop.f32.mrb[0].mxu0
      %v2739 = vpop.f32.mrb[0].mxu0
      %v2740 = vadd.f32 0.0, %v2739
      %v2741 = vpop.f32.mrb[0].mxu0
      %2742 = vmatprep.mubr.bf16.mxu0 0
      %2743 = vmatmul.mubr.bf16.gmra.mrb[0].mxu0 %v2613
      %v2744 = vpop.f32.mrb[0].mxu0
      %v2745 = vadd.f32 0.0, %v2744
      %v2746 = vpop.f32.mrb[0].mxu0
      %v2747 = vpop.f32.mrb[0].mxu0
      %v2748 = vadd.f32 0.0, %v2747
      %v2749 = vpop.f32.mrb[0].mxu0
      %2750 = vmatprep.mubr.bf16.mxu0 0
      %2751 = vmatmul.mubr.bf16.gmra.mrb[0].mxu0 %v2616
      %v2752 = vpop.f32.mrb[0].mxu0
      %v2753 = vadd.f32 0.0, %v2752
      %v2754 = vpop.f32.mrb[0].mxu0
      %v2755 = vpop.f32.mrb[0].mxu0
      %v2756 = vadd.f32 0.0, %v2755
      %v2757 = vpop.f32.mrb[0].mxu0
      %2758 = vmatprep.mubr.bf16.mxu0 0
      %2759 = vmatmul.mubr.bf16.gmra.mrb[0].mxu0 %v2619
      %v2760 = vpop.f32.mrb[0].mxu0
      %v2761 = vadd.f32 0.0, %v2760
      %v2762 = vpop.f32.mrb[0].mxu0
      %v2763 = vpop.f32.mrb[0].mxu0
      %v2764 = vadd.f32 0.0, %v2763
      %v2765 = vpop.f32.mrb[0].mxu0
      %2766 = vmatprep.mubr.bf16.mxu0 0
      %2767 = vmatmul.mubr.bf16.gmra.mrb[0].mxu0 %v2622
      %v2768 = vpop.f32.mrb[0].mxu0
      %v2769 = vadd.f32 0.0, %v2768
      %v2770 = vpop.f32.mrb[0].mxu0
      %v2771 = vpop.f32.mrb[0].mxu0
      %v2772 = vadd.f32 0.0, %v2771
      %v2773 = vpop.f32.mrb[0].mxu0
      %2774 = vmatprep.mubr.bf16.mxu0 0
      %2775 = vmatmul.mubr.bf16.gmra.mrb[0].mxu0 %v2625
      %v2776 = vpop.f32.mrb[0].mxu0
      %v2777 = vadd.f32 0.0, %v2776
      %v2778 = vpop.f32.mrb[0].mxu0
      %v2779 = vpop.f32.mrb[0].mxu0
      %v2780 = vadd.f32 0.0, %v2779
      %v2781 = vpop.f32.mrb[0].mxu0
      %2782 = vmatprep.mubr.bf16.mxu0 0
      %2783 = vmatmul.mubr.bf16.gmra.mrb[0].mxu0 %v2628
      %v2784 = vpop.f32.mrb[0].mxu0
      %v2785 = vadd.f32 0.0, %v2784
      %v2786 = vpop.f32.mrb[0].mxu0
      %v2787 = vpop.f32.mrb[0].mxu0
      %v2788 = vadd.f32 0.0, %v2787
      %v2789 = vpop.f32.mrb[0].mxu0
      %2790 = vdwg.mxu0
      %v2795 = vunpack.c.l.b16 %v2513
      %v2796 = vunpack.c.l.b16 %v2514
      %v2797 = vunpack.c.l.b16 %v2515
      %v2798 = vunpack.c.l.b16 %v2516
      %v2799 = vpack.c.b16 %v2796, %v2795
      %v2800 = vpack.c.b16 %v2798, %v2797
      %v2804 = vsel %vm413, %v2497, 0
      %v2807 = vsel %vm413, %v2498, 0
      %v2810 = vsel %vm413, %v2499, 0
      %v2813 = vsel %vm413, %v2500, 0
      %v2816 = vsel %vm413, %v2501, 0
      %v2819 = vsel %vm413, %v2502, 0
      %v2822 = vsel %vm413, %v2503, 0
      %v2825 = vsel %vm413, %v2504, 0
      %v2828 = vsel %vm413, %v2505, 0
      %v2831 = vsel %vm413, %v2506, 0
      %v2834 = vsel %vm413, %v2507, 0
      %v2837 = vsel %vm413, %v2508, 0
      %v2840 = vsel %vm413, %v2509, 0
      %v2843 = vsel %vm413, %v2510, 0
      %v2846 = vsel %vm413, %v2511, 0
      %v2849 = vsel %vm413, %v2512, 0
      %2851 = vmatprep.subr.bf16.mxu0 0
      %2852 = vmatpush1.bf16.msra.mxu0 %v2799
      %2853 = vmatprep.subr.bf16.mxu0 0
      %2854 = vmatpush1.bf16.msra.mxu0 %v2800
      %2855 = vmatprep.subr.bf16.mxu0 0
      %2856 = vmatpush1.bf16.msra.mxu0 0
      %2857 = vmatprep.subr.bf16.mxu0 0
      %2858 = vmatpush1.bf16.msra.mxu0 0
      %2859 = vmatprep.subr.bf16.mxu0 0
      %2860 = vmatpush1.bf16.msra.mxu0 0
      %2861 = vmatprep.subr.bf16.mxu0 0
      %2862 = vmatpush1.bf16.msra.mxu0 0
      %2863 = vmatprep.subr.bf16.mxu0 0
      %2864 = vmatpush1.bf16.msra.mxu0 0
      %2865 = vmatprep.subr.bf16.mxu0 0
      %2866 = vmatpush1.bf16.msra.mxu0 0
      %2867 = vmatprep.subr.bf16.mxu0 0
      %2868 = vmatpush1.bf16.msra.mxu0 0
      %2869 = vmatprep.subr.bf16.mxu0 0
      %2870 = vmatpush1.bf16.msra.mxu0 0
      %2871 = vmatprep.subr.bf16.mxu0 0
      %2872 = vmatpush1.bf16.msra.mxu0 0
      %2873 = vmatprep.subr.bf16.mxu0 0
      %2874 = vmatpush1.bf16.msra.mxu0 0
      %2875 = vmatprep.subr.bf16.mxu0 0
      %2876 = vmatpush1.bf16.msra.mxu0 0
      %2877 = vmatprep.subr.bf16.mxu0 0
      %2878 = vmatpush1.bf16.msra.mxu0 0
      %2879 = vmatprep.subr.bf16.mxu0 0
      %2880 = vmatpush1.bf16.msra.mxu0 0
      %2881 = vmatprep.subr.bf16.mxu0 0
      %2882 = vmatpush1.bf16.msra.mxu0 0
      %2883 = vmatprep.mubr.bf16.mxu0 0
      %2884 = vmatmul.mubr.bf16.gmra.mrb[0].mxu0 %v2804
      %v2885 = vpop.f32.mrb[0].mxu0
      %v2886 = vadd.f32 %v2665, %v2885
      %v2887 = vpop.f32.mrb[0].mxu0
      %v2888 = vpop.f32.mrb[0].mxu0
      %v2889 = vadd.f32 %v2668, %v2888
      %v2890 = vpop.f32.mrb[0].mxu0
      %2891 = vmatprep.mubr.bf16.mxu0 0
      %2892 = vmatmul.mubr.bf16.gmra.mrb[0].mxu0 %v2807
      %v2893 = vpop.f32.mrb[0].mxu0
      %v2894 = vadd.f32 %v2673, %v2893
      %v2895 = vpop.f32.mrb[0].mxu0
      %v2896 = vpop.f32.mrb[0].mxu0
      %v2897 = vadd.f32 %v2676, %v2896
      %v2898 = vpop.f32.mrb[0].mxu0
      %2899 = vmatprep.mubr.bf16.mxu0 0
      %2900 = vmatmul.mubr.bf16.gmra.mrb[0].mxu0 %v2810
      %v2901 = vpop.f32.mrb[0].mxu0
      %v2902 = vadd.f32 %v2681, %v2901
      %v2903 = vpop.f32.mrb[0].mxu0
      %v2904 = vpop.f32.mrb[0].mxu0
      %v2905 = vadd.f32 %v2684, %v2904
      %v2906 = vpop.f32.mrb[0].mxu0
      %2907 = vmatprep.mubr.bf16.mxu0 0
      %2908 = vmatmul.mubr.bf16.gmra.mrb[0].mxu0 %v2813
      %v2909 = vpop.f32.mrb[0].mxu0
      %v2910 = vadd.f32 %v2689, %v2909
      %v2911 = vpop.f32.mrb[0].mxu0
      %v2912 = vpop.f32.mrb[0].mxu0
      %v2913 = vadd.f32 %v2692, %v2912
      %v2914 = vpop.f32.mrb[0].mxu0
      %2915 = vmatprep.mubr.bf16.mxu0 0
      %2916 = vmatmul.mubr.bf16.gmra.mrb[0].mxu0 %v2816
      %v2917 = vpop.f32.mrb[0].mxu0
      %v2918 = vadd.f32 %v2697, %v2917
      %v2919 = vpop.f32.mrb[0].mxu0
      %v2920 = vpop.f32.mrb[0].mxu0
      %v2921 = vadd.f32 %v2700, %v2920
      %v2922 = vpop.f32.mrb[0].mxu0
      %2923 = vmatprep.mubr.bf16.mxu0 0
      %2924 = vmatmul.mubr.bf16.gmra.mrb[0].mxu0 %v2819
      %v2925 = vpop.f32.mrb[0].mxu0
      %v2926 = vadd.f32 %v2705, %v2925
      %v2927 = vpop.f32.mrb[0].mxu0
      %v2928 = vpop.f32.mrb[0].mxu0
      %v2929 = vadd.f32 %v2708, %v2928
      %v2930 = vpop.f32.mrb[0].mxu0
      %2931 = vmatprep.mubr.bf16.mxu0 0
      %2932 = vmatmul.mubr.bf16.gmra.mrb[0].mxu0 %v2822
      %v2933 = vpop.f32.mrb[0].mxu0
      %v2934 = vadd.f32 %v2713, %v2933
      %v2935 = vpop.f32.mrb[0].mxu0
      %v2936 = vpop.f32.mrb[0].mxu0
      %v2937 = vadd.f32 %v2716, %v2936
      %v2938 = vpop.f32.mrb[0].mxu0
      %2939 = vmatprep.mubr.bf16.mxu0 0
      %2940 = vmatmul.mubr.bf16.gmra.mrb[0].mxu0 %v2825
      %v2941 = vpop.f32.mrb[0].mxu0
      %v2942 = vadd.f32 %v2721, %v2941
      %v2943 = vpop.f32.mrb[0].mxu0
      %v2944 = vpop.f32.mrb[0].mxu0
      %v2945 = vadd.f32 %v2724, %v2944
      %v2946 = vpop.f32.mrb[0].mxu0
      %2947 = vmatprep.mubr.bf16.mxu0 0
      %2948 = vmatmul.mubr.bf16.gmra.mrb[0].mxu0 %v2828
      %v2949 = vpop.f32.mrb[0].mxu0
      %v2950 = vadd.f32 %v2729, %v2949
      %v2951 = vpop.f32.mrb[0].mxu0
      %v2952 = vpop.f32.mrb[0].mxu0
      %v2953 = vadd.f32 %v2732, %v2952
      %v2954 = vpop.f32.mrb[0].mxu0
      %2955 = vmatprep.mubr.bf16.mxu0 0
      %2956 = vmatmul.mubr.bf16.gmra.mrb[0].mxu0 %v2831
      %v2957 = vpop.f32.mrb[0].mxu0
      %v2958 = vadd.f32 %v2737, %v2957
      %v2959 = vpop.f32.mrb[0].mxu0
      %v2960 = vpop.f32.mrb[0].mxu0
      %v2961 = vadd.f32 %v2740, %v2960
      %v2962 = vpop.f32.mrb[0].mxu0
      %2963 = vmatprep.mubr.bf16.mxu0 0
      %2964 = vmatmul.mubr.bf16.gmra.mrb[0].mxu0 %v2834
      %v2965 = vpop.f32.mrb[0].mxu0
      %v2966 = vadd.f32 %v2745, %v2965
      %v2967 = vpop.f32.mrb[0].mxu0
      %v2968 = vpop.f32.mrb[0].mxu0
      %v2969 = vadd.f32 %v2748, %v2968
      %v2970 = vpop.f32.mrb[0].mxu0
      %2971 = vmatprep.mubr.bf16.mxu0 0
      %2972 = vmatmul.mubr.bf16.gmra.mrb[0].mxu0 %v2837
      %v2973 = vpop.f32.mrb[0].mxu0
      %v2974 = vadd.f32 %v2753, %v2973
      %v2975 = vpop.f32.mrb[0].mxu0
      %v2976 = vpop.f32.mrb[0].mxu0
      %v2977 = vadd.f32 %v2756, %v2976
      %v2978 = vpop.f32.mrb[0].mxu0
      %2979 = vmatprep.mubr.bf16.mxu0 0
      %2980 = vmatmul.mubr.bf16.gmra.mrb[0].mxu0 %v2840
      %v2981 = vpop.f32.mrb[0].mxu0
      %v2982 = vadd.f32 %v2761, %v2981
      %v2983 = vpop.f32.mrb[0].mxu0
      %v2984 = vpop.f32.mrb[0].mxu0
      %v2985 = vadd.f32 %v2764, %v2984
      %v2986 = vpop.f32.mrb[0].mxu0
      %2987 = vmatprep.mubr.bf16.mxu0 0
      %2988 = vmatmul.mubr.bf16.gmra.mrb[0].mxu0 %v2843
      %v2989 = vpop.f32.mrb[0].mxu0
      %v2990 = vadd.f32 %v2769, %v2989
      %v2991 = vpop.f32.mrb[0].mxu0
      %v2992 = vpop.f32.mrb[0].mxu0
      %v2993 = vadd.f32 %v2772, %v2992
      %v2994 = vpop.f32.mrb[0].mxu0
      %2995 = vmatprep.mubr.bf16.mxu0 0
      %2996 = vmatmul.mubr.bf16.gmra.mrb[0].mxu0 %v2846
      %v2997 = vpop.f32.mrb[0].mxu0
      %v2998 = vadd.f32 %v2777, %v2997
      %v2999 = vpop.f32.mrb[0].mxu0
      %v3000 = vpop.f32.mrb[0].mxu0
      %v3001 = vadd.f32 %v2780, %v3000
      %v3002 = vpop.f32.mrb[0].mxu0
      %3003 = vmatprep.mubr.bf16.mxu0 0
      %3004 = vmatmul.mubr.bf16.gmra.mrb[0].mxu0 %v2849
      %v3005 = vpop.f32.mrb[0].mxu0
      %v3006 = vadd.f32 %v2785, %v3005
      %v3007 = vpop.f32.mrb[0].mxu0
      %v3008 = vpop.f32.mrb[0].mxu0
      %v3009 = vadd.f32 %v2788, %v3008
      %v3010 = vpop.f32.mrb[0].mxu0
      %3011 = vdwg.mxu0
      %v3012 = vld [vmem:[#allocation2 + $0x2] sm:$0xff]
      %v3013 = vld [vmem:[#allocation2 + $0xa] sm:$0xff]
      %v3014 = vld [vmem:[#allocation2 + $0x1a] sm:$0xff]
      %v3015 = vld [vmem:[#allocation2 + $0x22] sm:$0xff]
      %v3016 = vld [vmem:[#allocation2 + $0x32] sm:$0xff]
      %v3017 = vld [vmem:[#allocation2 + $0x3a] sm:$0xff]
      %v3018 = vld [vmem:[#allocation2 + $0x4a] sm:$0xff]
      %v3019 = vld [vmem:[#allocation2 + $0x52] sm:$0xff]
      %v3020 = vld [vmem:[#allocation2 + $0x62] sm:$0xff]
      %v3021 = vld [vmem:[#allocation2 + $0x6a] sm:$0xff]
      %v3022 = vld [vmem:[#allocation2 + $0x7a] sm:$0xff]
      %v3023 = vld [vmem:[#allocation2 + $0x82] sm:$0xff]
      %v3024 = vld [vmem:[#allocation2 + $0x92] sm:$0xff]
      %v3025 = vld [vmem:[#allocation2 + $0x9a] sm:$0xff]
      %v3026 = vld [vmem:[#allocation2 + $0xaa] sm:$0xff]
      %v3027 = vld [vmem:[#allocation2 + $0xb2] sm:$0xff]
      %v3028 = vld [vmem:[#allocation2 + $0xc2] sm:$0xff]
      %v3029 = vld [vmem:[#allocation2 + $0xca] sm:$0xff]
      %v3030 = vld [vmem:[#allocation2 + $0xda] sm:$0xff]
      %v3031 = vld [vmem:[#allocation2 + $0xe2] sm:$0xff]
      %v3032 = vld [vmem:[#allocation2 + $0xf2] sm:$0xff]
      %v3033 = vld [vmem:[#allocation2 + $0xfa] sm:$0xff]
      %v3034 = vld [vmem:[#allocation2 + $0x10a] sm:$0xff]
      %v3035 = vld [vmem:[#allocation2 + $0x112] sm:$0xff]
      %v3036 = vld [vmem:[#allocation2 + $0x122] sm:$0xff]
      %v3037 = vld [vmem:[#allocation2 + $0x12a] sm:$0xff]
      %v3038 = vld [vmem:[#allocation2 + $0x13a] sm:$0xff]
      %v3039 = vld [vmem:[#allocation2 + $0x142] sm:$0xff]
      %v3040 = vld [vmem:[#allocation2 + $0x152] sm:$0xff]
      %v3041 = vld [vmem:[#allocation2 + $0x15a] sm:$0xff]
      %v3042 = vld [vmem:[#allocation2 + $0x16a] sm:$0xff]
      %v3043 = vld [vmem:[#allocation2 + $0x172] sm:$0xff]
      %v3044 = vpack.c.bf16 %v3013, %v3012
      %v3045 = vpack.c.bf16 %v3015, %v3014
      %v3046 = vpack.c.bf16 %v3017, %v3016
      %v3047 = vpack.c.bf16 %v3019, %v3018
      %v3048 = vpack.c.bf16 %v3021, %v3020
      %v3049 = vpack.c.bf16 %v3023, %v3022
      %v3050 = vpack.c.bf16 %v3025, %v3024
      %v3051 = vpack.c.bf16 %v3027, %v3026
      %v3052 = vpack.c.bf16 %v3029, %v3028
      %v3053 = vpack.c.bf16 %v3031, %v3030
      %v3054 = vpack.c.bf16 %v3033, %v3032
      %v3055 = vpack.c.bf16 %v3035, %v3034
      %v3056 = vpack.c.bf16 %v3037, %v3036
      %v3057 = vpack.c.bf16 %v3039, %v3038
      %v3058 = vpack.c.bf16 %v3041, %v3040
      %v3059 = vpack.c.bf16 %v3043, %v3042
      %s3060 = scalar_lea.vmem %s4, 32
      %v3061 = vld [vmem:[%s3060] sm:$0xf]
      %v3062 = vld [vmem:[%s3060 + $0x4] sm:$0xf]
      %v3063 = vld [vmem:[%s3060 + $0x8] sm:$0xf]
      %v3064 = vld [vmem:[%s3060 + $0xc] sm:$0xf]
      %v3069 = vunpack.c.l.b16 %v3061
      %v3070 = vunpack.c.l.b16 %v3062
      %v3071 = vunpack.c.l.b16 %v3063
      %v3072 = vunpack.c.l.b16 %v3064
      %v3073 = vpack.c.b16 %v3070, %v3069
      %v3074 = vpack.c.b16 %v3072, %v3071
      %v3078 = vsel %vm413, %v3044, 0
      %v3081 = vsel %vm413, %v3045, 0
      %v3084 = vsel %vm413, %v3046, 0
      %v3087 = vsel %vm413, %v3047, 0
      %v3090 = vsel %vm413, %v3048, 0
      %v3093 = vsel %vm413, %v3049, 0
      %v3096 = vsel %vm413, %v3050, 0
      %v3099 = vsel %vm413, %v3051, 0
      %v3102 = vsel %vm413, %v3052, 0
      %v3105 = vsel %vm413, %v3053, 0
      %v3108 = vsel %vm413, %v3054, 0
      %v3111 = vsel %vm413, %v3055, 0
      %v3114 = vsel %vm413, %v3056, 0
      %v3117 = vsel %vm413, %v3057, 0
      %v3120 = vsel %vm413, %v3058, 0
      %v3123 = vsel %vm413, %v3059, 0
      %3125 = vmatprep.subr.bf16.mxu0 0
      %3126 = vmatpush1.bf16.msra.mxu0 %v3073
      %3127 = vmatprep.subr.bf16.mxu0 0
      %3128 = vmatpush1.bf16.msra.mxu0 %v3074
      %3129 = vmatprep.subr.bf16.mxu0 0
      %3130 = vmatpush1.bf16.msra.mxu0 0
      %3131 = vmatprep.subr.bf16.mxu0 0
      %3132 = vmatpush1.bf16.msra.mxu0 0
      %3133 = vmatprep.subr.bf16.mxu0 0
      %3134 = vmatpush1.bf16.msra.mxu0 0
      %3135 = vmatprep.subr.bf16.mxu0 0
      %3136 = vmatpush1.bf16.msra.mxu0 0
      %3137 = vmatprep.subr.bf16.mxu0 0
      %3138 = vmatpush1.bf16.msra.mxu0 0
      %3139 = vmatprep.subr.bf16.mxu0 0
      %3140 = vmatpush1.bf16.msra.mxu0 0
      %3141 = vmatprep.subr.bf16.mxu0 0
      %3142 = vmatpush1.bf16.msra.mxu0 0
      %3143 = vmatprep.subr.bf16.mxu0 0
      %3144 = vmatpush1.bf16.msra.mxu0 0
      %3145 = vmatprep.subr.bf16.mxu0 0
      %3146 = vmatpush1.bf16.msra.mxu0 0
      %3147 = vmatprep.subr.bf16.mxu0 0
      %3148 = vmatpush1.bf16.msra.mxu0 0
      %3149 = vmatprep.subr.bf16.mxu0 0
      %3150 = vmatpush1.bf16.msra.mxu0 0
      %3151 = vmatprep.subr.bf16.mxu0 0
      %3152 = vmatpush1.bf16.msra.mxu0 0
      %3153 = vmatprep.subr.bf16.mxu0 0
      %3154 = vmatpush1.bf16.msra.mxu0 0
      %3155 = vmatprep.subr.bf16.mxu0 0
      %3156 = vmatpush1.bf16.msra.mxu0 0
      %3157 = vmatprep.mubr.bf16.mxu0 0
      %3158 = vmatmul.mubr.bf16.gmra.mrb[0].mxu0 %v3078
      %v3159 = vpop.f32.mrb[0].mxu0
      %v3160 = vadd.f32 0.0, %v3159
      %v3161 = vpop.f32.mrb[0].mxu0
      %v3162 = vpop.f32.mrb[0].mxu0
      %v3163 = vadd.f32 0.0, %v3162
      %v3164 = vpop.f32.mrb[0].mxu0
      %3165 = vmatprep.mubr.bf16.mxu0 0
      %3166 = vmatmul.mubr.bf16.gmra.mrb[0].mxu0 %v3081
      %v3167 = vpop.f32.mrb[0].mxu0
      %v3168 = vadd.f32 0.0, %v3167
      %v3169 = vpop.f32.mrb[0].mxu0
      %v3170 = vpop.f32.mrb[0].mxu0
      %v3171 = vadd.f32 0.0, %v3170
      %v3172 = vpop.f32.mrb[0].mxu0
      %3173 = vmatprep.mubr.bf16.mxu0 0
      %3174 = vmatmul.mubr.bf16.gmra.mrb[0].mxu0 %v3084
      %v3175 = vpop.f32.mrb[0].mxu0
      %v3176 = vadd.f32 0.0, %v3175
      %v3177 = vpop.f32.mrb[0].mxu0
      %v3178 = vpop.f32.mrb[0].mxu0
      %v3179 = vadd.f32 0.0, %v3178
      %v3180 = vpop.f32.mrb[0].mxu0
      %3181 = vmatprep.mubr.bf16.mxu0 0
      %3182 = vmatmul.mubr.bf16.gmra.mrb[0].mxu0 %v3087
      %v3183 = vpop.f32.mrb[0].mxu0
      %v3184 = vadd.f32 0.0, %v3183
      %v3185 = vpop.f32.mrb[0].mxu0
      %v3186 = vpop.f32.mrb[0].mxu0
      %v3187 = vadd.f32 0.0, %v3186
      %v3188 = vpop.f32.mrb[0].mxu0
      %3189 = vmatprep.mubr.bf16.mxu0 0
      %3190 = vmatmul.mubr.bf16.gmra.mrb[0].mxu0 %v3090
      %v3191 = vpop.f32.mrb[0].mxu0
      %v3192 = vadd.f32 0.0, %v3191
      %v3193 = vpop.f32.mrb[0].mxu0
      %v3194 = vpop.f32.mrb[0].mxu0
      %v3195 = vadd.f32 0.0, %v3194
      %v3196 = vpop.f32.mrb[0].mxu0
      %3197 = vmatprep.mubr.bf16.mxu0 0
      %3198 = vmatmul.mubr.bf16.gmra.mrb[0].mxu0 %v3093
      %v3199 = vpop.f32.mrb[0].mxu0
      %v3200 = vadd.f32 0.0, %v3199
      %v3201 = vpop.f32.mrb[0].mxu0
      %v3202 = vpop.f32.mrb[0].mxu0
      %v3203 = vadd.f32 0.0, %v3202
      %v3204 = vpop.f32.mrb[0].mxu0
      %3205 = vmatprep.mubr.bf16.mxu0 0
      %3206 = vmatmul.mubr.bf16.gmra.mrb[0].mxu0 %v3096
      %v3207 = vpop.f32.mrb[0].mxu0
      %v3208 = vadd.f32 0.0, %v3207
      %v3209 = vpop.f32.mrb[0].mxu0
      %v3210 = vpop.f32.mrb[0].mxu0
      %v3211 = vadd.f32 0.0, %v3210
      %v3212 = vpop.f32.mrb[0].mxu0
      %3213 = vmatprep.mubr.bf16.mxu0 0
      %3214 = vmatmul.mubr.bf16.gmra.mrb[0].mxu0 %v3099
      %v3215 = vpop.f32.mrb[0].mxu0
      %v3216 = vadd.f32 0.0, %v3215
      %v3217 = vpop.f32.mrb[0].mxu0
      %v3218 = vpop.f32.mrb[0].mxu0
      %v3219 = vadd.f32 0.0, %v3218
      %v3220 = vpop.f32.mrb[0].mxu0
      %3221 = vmatprep.mubr.bf16.mxu0 0
      %3222 = vmatmul.mubr.bf16.gmra.mrb[0].mxu0 %v3102
      %v3223 = vpop.f32.mrb[0].mxu0
      %v3224 = vadd.f32 0.0, %v3223
      %v3225 = vpop.f32.mrb[0].mxu0
      %v3226 = vpop.f32.mrb[0].mxu0
      %v3227 = vadd.f32 0.0, %v3226
      %v3228 = vpop.f32.mrb[0].mxu0
      %3229 = vmatprep.mubr.bf16.mxu0 0
      %3230 = vmatmul.mubr.bf16.gmra.mrb[0].mxu0 %v3105
      %v3231 = vpop.f32.mrb[0].mxu0
      %v3232 = vadd.f32 0.0, %v3231
      %v3233 = vpop.f32.mrb[0].mxu0
      %v3234 = vpop.f32.mrb[0].mxu0
      %v3235 = vadd.f32 0.0, %v3234
      %v3236 = vpop.f32.mrb[0].mxu0
      %3237 = vmatprep.mubr.bf16.mxu0 0
      %3238 = vmatmul.mubr.bf16.gmra.mrb[0].mxu0 %v3108
      %v3239 = vpop.f32.mrb[0].mxu0
      %v3240 = vadd.f32 0.0, %v3239
      %v3241 = vpop.f32.mrb[0].mxu0
      %v3242 = vpop.f32.mrb[0].mxu0
      %v3243 = vadd.f32 0.0, %v3242
      %v3244 = vpop.f32.mrb[0].mxu0
      %3245 = vmatprep.mubr.bf16.mxu0 0
      %3246 = vmatmul.mubr.bf16.gmra.mrb[0].mxu0 %v3111
      %v3247 = vpop.f32.mrb[0].mxu0
      %v3248 = vadd.f32 0.0, %v3247
      %v3249 = vpop.f32.mrb[0].mxu0
      %v3250 = vpop.f32.mrb[0].mxu0
      %v3251 = vadd.f32 0.0, %v3250
      %v3252 = vpop.f32.mrb[0].mxu0
      %3253 = vmatprep.mubr.bf16.mxu0 0
      %3254 = vmatmul.mubr.bf16.gmra.mrb[0].mxu0 %v3114
      %v3255 = vpop.f32.mrb[0].mxu0
      %v3256 = vadd.f32 0.0, %v3255
      %v3257 = vpop.f32.mrb[0].mxu0
      %v3258 = vpop.f32.mrb[0].mxu0
      %v3259 = vadd.f32 0.0, %v3258
      %v3260 = vpop.f32.mrb[0].mxu0
      %3261 = vmatprep.mubr.bf16.mxu0 0
      %3262 = vmatmul.mubr.bf16.gmra.mrb[0].mxu0 %v3117
      %v3263 = vpop.f32.mrb[0].mxu0
      %v3264 = vadd.f32 0.0, %v3263
      %v3265 = vpop.f32.mrb[0].mxu0
      %v3266 = vpop.f32.mrb[0].mxu0
      %v3267 = vadd.f32 0.0, %v3266
      %v3268 = vpop.f32.mrb[0].mxu0
      %3269 = vmatprep.mubr.bf16.mxu0 0
      %3270 = vmatmul.mubr.bf16.gmra.mrb[0].mxu0 %v3120
      %v3271 = vpop.f32.mrb[0].mxu0
      %v3272 = vadd.f32 0.0, %v3271
      %v3273 = vpop.f32.mrb[0].mxu0
      %v3274 = vpop.f32.mrb[0].mxu0
      %v3275 = vadd.f32 0.0, %v3274
      %v3276 = vpop.f32.mrb[0].mxu0
      %3277 = vmatprep.mubr.bf16.mxu0 0
      %3278 = vmatmul.mubr.bf16.gmra.mrb[0].mxu0 %v3123
      %v3279 = vpop.f32.mrb[0].mxu0
      %v3280 = vadd.f32 0.0, %v3279
      %v3281 = vpop.f32.mrb[0].mxu0
      %v3282 = vpop.f32.mrb[0].mxu0
      %v3283 = vadd.f32 0.0, %v3282
      %v3284 = vpop.f32.mrb[0].mxu0
      %3285 = vdwg.mxu0
      %v3286 = vadd.f32 %v2886, %v3160
      %v3287 = vadd.f32 %v2889, %v3163
      %v3288 = vadd.f32 %v2894, %v3168
      %v3289 = vadd.f32 %v2897, %v3171
      %v3290 = vadd.f32 %v2902, %v3176
      %v3291 = vadd.f32 %v2905, %v3179
      %v3292 = vadd.f32 %v2910, %v3184
      %v3293 = vadd.f32 %v2913, %v3187
      %v3294 = vadd.f32 %v2918, %v3192
      %v3295 = vadd.f32 %v2921, %v3195
      %v3296 = vadd.f32 %v2926, %v3200
      %v3297 = vadd.f32 %v2929, %v3203
      %v3298 = vadd.f32 %v2934, %v3208
      %v3299 = vadd.f32 %v2937, %v3211
      %v3300 = vadd.f32 %v2942, %v3216
      %v3301 = vadd.f32 %v2945, %v3219
      %v3302 = vadd.f32 %v2950, %v3224
      %v3303 = vadd.f32 %v2953, %v3227
      %v3304 = vadd.f32 %v2958, %v3232
      %v3305 = vadd.f32 %v2961, %v3235
      %v3306 = vadd.f32 %v2966, %v3240
      %v3307 = vadd.f32 %v2969, %v3243
      %v3308 = vadd.f32 %v2974, %v3248
      %v3309 = vadd.f32 %v2977, %v3251
      %v3310 = vadd.f32 %v2982, %v3256
      %v3311 = vadd.f32 %v2985, %v3259
      %v3312 = vadd.f32 %v2990, %v3264
      %v3313 = vadd.f32 %v2993, %v3267
      %v3314 = vadd.f32 %v2998, %v3272
      %v3315 = vadd.f32 %v3001, %v3275
      %v3316 = vadd.f32 %v3006, %v3280
      %v3317 = vadd.f32 %v3009, %v3283
      %v3318 = vld [vmem:[%s1008] sm:$0xff]
      %v3319 = vld [vmem:[%s1008 + $0x8] sm:$0xff]
      %v3320 = vld [vmem:[%s1008 + $0x18] sm:$0xff]
      %v3321 = vld [vmem:[%s1008 + $0x20] sm:$0xff]
      %v3322 = vld [vmem:[%s1008 + $0x30] sm:$0xff]
      %v3323 = vld [vmem:[%s1008 + $0x38] sm:$0xff]
      %v3324 = vld [vmem:[%s1008 + $0x48] sm:$0xff]
      %v3325 = vld [vmem:[%s1008 + $0x50] sm:$0xff]
      %v3326 = vld [vmem:[%s1008 + $0x60] sm:$0xff]
      %v3327 = vld [vmem:[%s1008 + $0x68] sm:$0xff]
      %v3328 = vld [vmem:[%s1008 + $0x78] sm:$0xff]
      %v3329 = vld [vmem:[%s1008 + $0x80] sm:$0xff]
      %v3330 = vld [vmem:[%s1008 + $0x90] sm:$0xff]
      %v3331 = vld [vmem:[%s1008 + $0x98] sm:$0xff]
      %v3332 = vld [vmem:[%s1008 + $0xa8] sm:$0xff]
      %v3333 = vld [vmem:[%s1008 + $0xb0] sm:$0xff]
      %v3334 = vld [vmem:[%s1008 + $0xc0] sm:$0xff]
      %v3335 = vld [vmem:[%s1008 + $0xc8] sm:$0xff]
      %v3336 = vld [vmem:[%s1008 + $0xd8] sm:$0xff]
      %v3337 = vld [vmem:[%s1008 + $0xe0] sm:$0xff]
      %v3338 = vld [vmem:[%s1008 + $0xf0] sm:$0xff]
      %v3339 = vld [vmem:[%s1008 + $0xf8] sm:$0xff]
      %v3340 = vld [vmem:[%s1008 + $0x108] sm:$0xff]
      %v3341 = vld [vmem:[%s1008 + $0x110] sm:$0xff]
      %v3342 = vld [vmem:[%s1008 + $0x120] sm:$0xff]
      %v3343 = vld [vmem:[%s1008 + $0x128] sm:$0xff]
      %v3344 = vld [vmem:[%s1008 + $0x138] sm:$0xff]
      %v3345 = vld [vmem:[%s1008 + $0x140] sm:$0xff]
      %v3346 = vld [vmem:[%s1008 + $0x150] sm:$0xff]
      %v3347 = vld [vmem:[%s1008 + $0x158] sm:$0xff]
      %v3348 = vld [vmem:[%s1008 + $0x168] sm:$0xff]
      %v3349 = vld [vmem:[%s1008 + $0x170] sm:$0xff]
      %v3350 = vpack.c.bf16 %v3319, %v3318
      %v3351 = vpack.c.bf16 %v3321, %v3320
      %v3352 = vpack.c.bf16 %v3323, %v3322
      %v3353 = vpack.c.bf16 %v3325, %v3324
      %v3354 = vpack.c.bf16 %v3327, %v3326
      %v3355 = vpack.c.bf16 %v3329, %v3328
      %v3356 = vpack.c.bf16 %v3331, %v3330
      %v3357 = vpack.c.bf16 %v3333, %v3332
      %v3358 = vpack.c.bf16 %v3335, %v3334
      %v3359 = vpack.c.bf16 %v3337, %v3336
      %v3360 = vpack.c.bf16 %v3339, %v3338
      %v3361 = vpack.c.bf16 %v3341, %v3340
      %v3362 = vpack.c.bf16 %v3343, %v3342
      %v3363 = vpack.c.bf16 %v3345, %v3344
      %v3364 = vpack.c.bf16 %v3347, %v3346
      %v3365 = vpack.c.bf16 %v3349, %v3348
      %s3366 = scalar_lea.vmem %s4, 48
      %v3367 = vld [vmem:[%s3366] sm:$0xf]
      %v3368 = vld [vmem:[%s3366 + $0x4] sm:$0xf]
      %v3369 = vld [vmem:[%s3366 + $0x8] sm:$0xf]
      %v3370 = vld [vmem:[%s3366 + $0xc] sm:$0xf]
      %v3375 = vunpack.c.l.b16 %v3367
      %v3376 = vunpack.c.l.b16 %v3368
      %v3377 = vunpack.c.l.b16 %v3369
      %v3378 = vunpack.c.l.b16 %v3370
      %v3379 = vpack.c.b16 %v3376, %v3375
      %v3380 = vpack.c.b16 %v3378, %v3377
      %v3384 = vsel %vm413, %v3350, 0
      %v3387 = vsel %vm413, %v3351, 0
      %v3390 = vsel %vm413, %v3352, 0
      %v3393 = vsel %vm413, %v3353, 0
      %v3396 = vsel %vm413, %v3354, 0
      %v3399 = vsel %vm413, %v3355, 0
      %v3402 = vsel %vm413, %v3356, 0
      %v3405 = vsel %vm413, %v3357, 0
      %v3408 = vsel %vm413, %v3358, 0
      %v3411 = vsel %vm413, %v3359, 0
      %v3414 = vsel %vm413, %v3360, 0
      %v3417 = vsel %vm413, %v3361, 0
      %v3420 = vsel %vm413, %v3362, 0
      %v3423 = vsel %vm413, %v3363, 0
      %v3426 = vsel %vm413, %v3364, 0
      %v3429 = vsel %vm413, %v3365, 0
      %3431 = vmatprep.subr.bf16.mxu0 0
      %3432 = vmatpush1.bf16.msra.mxu0 %v3379
      %3433 = vmatprep.subr.bf16.mxu0 0
      %3434 = vmatpush1.bf16.msra.mxu0 %v3380
      %3435 = vmatprep.subr.bf16.mxu0 0
      %3436 = vmatpush1.bf16.msra.mxu0 0
      %3437 = vmatprep.subr.bf16.mxu0 0
      %3438 = vmatpush1.bf16.msra.mxu0 0
      %3439 = vmatprep.subr.bf16.mxu0 0
      %3440 = vmatpush1.bf16.msra.mxu0 0
      %3441 = vmatprep.subr.bf16.mxu0 0
      %3442 = vmatpush1.bf16.msra.mxu0 0
      %3443 = vmatprep.subr.bf16.mxu0 0
      %3444 = vmatpush1.bf16.msra.mxu0 0
      %3445 = vmatprep.subr.bf16.mxu0 0
      %3446 = vmatpush1.bf16.msra.mxu0 0
      %3447 = vmatprep.subr.bf16.mxu0 0
      %3448 = vmatpush1.bf16.msra.mxu0 0
      %3449 = vmatprep.subr.bf16.mxu0 0
      %3450 = vmatpush1.bf16.msra.mxu0 0
      %3451 = vmatprep.subr.bf16.mxu0 0
      %3452 = vmatpush1.bf16.msra.mxu0 0
      %3453 = vmatprep.subr.bf16.mxu0 0
      %3454 = vmatpush1.bf16.msra.mxu0 0
      %3455 = vmatprep.subr.bf16.mxu0 0
      %3456 = vmatpush1.bf16.msra.mxu0 0
      %3457 = vmatprep.subr.bf16.mxu0 0
      %3458 = vmatpush1.bf16.msra.mxu0 0
      %3459 = vmatprep.subr.bf16.mxu0 0
      %3460 = vmatpush1.bf16.msra.mxu0 0
      %3461 = vmatprep.subr.bf16.mxu0 0
      %3462 = vmatpush1.bf16.msra.mxu0 0
      %3463 = vmatprep.mubr.bf16.mxu0 0
      %3464 = vmatmul.mubr.bf16.gmra.mrb[0].mxu0 %v3384
      %v3465 = vpop.f32.mrb[0].mxu0
      %v3466 = vadd.f32 0.0, %v3465
      %v3467 = vpop.f32.mrb[0].mxu0
      %v3468 = vpop.f32.mrb[0].mxu0
      %v3469 = vadd.f32 0.0, %v3468
      %v3470 = vpop.f32.mrb[0].mxu0
      %3471 = vmatprep.mubr.bf16.mxu0 0
      %3472 = vmatmul.mubr.bf16.gmra.mrb[0].mxu0 %v3387
      %v3473 = vpop.f32.mrb[0].mxu0
      %v3474 = vadd.f32 0.0, %v3473
      %v3475 = vpop.f32.mrb[0].mxu0
      %v3476 = vpop.f32.mrb[0].mxu0
      %v3477 = vadd.f32 0.0, %v3476
      %v3478 = vpop.f32.mrb[0].mxu0
      %3479 = vmatprep.mubr.bf16.mxu0 0
      %3480 = vmatmul.mubr.bf16.gmra.mrb[0].mxu0 %v3390
      %v3481 = vpop.f32.mrb[0].mxu0
      %v3482 = vadd.f32 0.0, %v3481
      %v3483 = vpop.f32.mrb[0].mxu0
      %v3484 = vpop.f32.mrb[0].mxu0
      %v3485 = vadd.f32 0.0, %v3484
      %v3486 = vpop.f32.mrb[0].mxu0
      %3487 = vmatprep.mubr.bf16.mxu0 0
      %3488 = vmatmul.mubr.bf16.gmra.mrb[0].mxu0 %v3393
      %v3489 = vpop.f32.mrb[0].mxu0
      %v3490 = vadd.f32 0.0, %v3489
      %v3491 = vpop.f32.mrb[0].mxu0
      %v3492 = vpop.f32.mrb[0].mxu0
      %v3493 = vadd.f32 0.0, %v3492
      %v3494 = vpop.f32.mrb[0].mxu0
      %3495 = vmatprep.mubr.bf16.mxu0 0
      %3496 = vmatmul.mubr.bf16.gmra.mrb[0].mxu0 %v3396
      %v3497 = vpop.f32.mrb[0].mxu0
      %v3498 = vadd.f32 0.0, %v3497
      %v3499 = vpop.f32.mrb[0].mxu0
      %v3500 = vpop.f32.mrb[0].mxu0
      %v3501 = vadd.f32 0.0, %v3500
      %v3502 = vpop.f32.mrb[0].mxu0
      %3503 = vmatprep.mubr.bf16.mxu0 0
      %3504 = vmatmul.mubr.bf16.gmra.mrb[0].mxu0 %v3399
      %v3505 = vpop.f32.mrb[0].mxu0
      %v3506 = vadd.f32 0.0, %v3505
      %v3507 = vpop.f32.mrb[0].mxu0
      %v3508 = vpop.f32.mrb[0].mxu0
      %v3509 = vadd.f32 0.0, %v3508
      %v3510 = vpop.f32.mrb[0].mxu0
      %3511 = vmatprep.mubr.bf16.mxu0 0
      %3512 = vmatmul.mubr.bf16.gmra.mrb[0].mxu0 %v3402
      %v3513 = vpop.f32.mrb[0].mxu0
      %v3514 = vadd.f32 0.0, %v3513
      %v3515 = vpop.f32.mrb[0].mxu0
      %v3516 = vpop.f32.mrb[0].mxu0
      %v3517 = vadd.f32 0.0, %v3516
      %v3518 = vpop.f32.mrb[0].mxu0
      %3519 = vmatprep.mubr.bf16.mxu0 0
      %3520 = vmatmul.mubr.bf16.gmra.mrb[0].mxu0 %v3405
      %v3521 = vpop.f32.mrb[0].mxu0
      %v3522 = vadd.f32 0.0, %v3521
      %v3523 = vpop.f32.mrb[0].mxu0
      %v3524 = vpop.f32.mrb[0].mxu0
      %v3525 = vadd.f32 0.0, %v3524
      %v3526 = vpop.f32.mrb[0].mxu0
      %3527 = vmatprep.mubr.bf16.mxu0 0
      %3528 = vmatmul.mubr.bf16.gmra.mrb[0].mxu0 %v3408
      %v3529 = vpop.f32.mrb[0].mxu0
      %v3530 = vadd.f32 0.0, %v3529
      %v3531 = vpop.f32.mrb[0].mxu0
      %v3532 = vpop.f32.mrb[0].mxu0
      %v3533 = vadd.f32 0.0, %v3532
      %v3534 = vpop.f32.mrb[0].mxu0
      %3535 = vmatprep.mubr.bf16.mxu0 0
      %3536 = vmatmul.mubr.bf16.gmra.mrb[0].mxu0 %v3411
      %v3537 = vpop.f32.mrb[0].mxu0
      %v3538 = vadd.f32 0.0, %v3537
      %v3539 = vpop.f32.mrb[0].mxu0
      %v3540 = vpop.f32.mrb[0].mxu0
      %v3541 = vadd.f32 0.0, %v3540
      %v3542 = vpop.f32.mrb[0].mxu0
      %3543 = vmatprep.mubr.bf16.mxu0 0
      %3544 = vmatmul.mubr.bf16.gmra.mrb[0].mxu0 %v3414
      %v3545 = vpop.f32.mrb[0].mxu0
      %v3546 = vadd.f32 0.0, %v3545
      %v3547 = vpop.f32.mrb[0].mxu0
      %v3548 = vpop.f32.mrb[0].mxu0
      %v3549 = vadd.f32 0.0, %v3548
      %v3550 = vpop.f32.mrb[0].mxu0
      %3551 = vmatprep.mubr.bf16.mxu0 0
      %3552 = vmatmul.mubr.bf16.gmra.mrb[0].mxu0 %v3417
      %v3553 = vpop.f32.mrb[0].mxu0
      %v3554 = vadd.f32 0.0, %v3553
      %v3555 = vpop.f32.mrb[0].mxu0
      %v3556 = vpop.f32.mrb[0].mxu0
      %v3557 = vadd.f32 0.0, %v3556
      %v3558 = vpop.f32.mrb[0].mxu0
      %3559 = vmatprep.mubr.bf16.mxu0 0
      %3560 = vmatmul.mubr.bf16.gmra.mrb[0].mxu0 %v3420
      %v3561 = vpop.f32.mrb[0].mxu0
      %v3562 = vadd.f32 0.0, %v3561
      %v3563 = vpop.f32.mrb[0].mxu0
      %v3564 = vpop.f32.mrb[0].mxu0
      %v3565 = vadd.f32 0.0, %v3564
      %v3566 = vpop.f32.mrb[0].mxu0
      %3567 = vmatprep.mubr.bf16.mxu0 0
      %3568 = vmatmul.mubr.bf16.gmra.mrb[0].mxu0 %v3423
      %v3569 = vpop.f32.mrb[0].mxu0
      %v3570 = vadd.f32 0.0, %v3569
      %v3571 = vpop.f32.mrb[0].mxu0
      %v3572 = vpop.f32.mrb[0].mxu0
      %v3573 = vadd.f32 0.0, %v3572
      %v3574 = vpop.f32.mrb[0].mxu0
      %3575 = vmatprep.mubr.bf16.mxu0 0
      %3576 = vmatmul.mubr.bf16.gmra.mrb[0].mxu0 %v3426
      %v3577 = vpop.f32.mrb[0].mxu0
      %v3578 = vadd.f32 0.0, %v3577
      %v3579 = vpop.f32.mrb[0].mxu0
      %v3580 = vpop.f32.mrb[0].mxu0
      %v3581 = vadd.f32 0.0, %v3580
      %v3582 = vpop.f32.mrb[0].mxu0
      %3583 = vmatprep.mubr.bf16.mxu0 0
      %3584 = vmatmul.mubr.bf16.gmra.mrb[0].mxu0 %v3429
      %v3585 = vpop.f32.mrb[0].mxu0
      %v3586 = vadd.f32 0.0, %v3585
      %v3587 = vpop.f32.mrb[0].mxu0
      %v3588 = vpop.f32.mrb[0].mxu0
      %v3589 = vadd.f32 0.0, %v3588
      %v3590 = vpop.f32.mrb[0].mxu0
      %3591 = vdwg.mxu0
      %v3592 = vadd.f32 %v3286, %v3466
      %v3593 = vadd.f32 %v3287, %v3469
      %v3594 = vadd.f32 %v3288, %v3474
      %v3595 = vadd.f32 %v3289, %v3477
      %v3596 = vadd.f32 %v3290, %v3482
      %v3597 = vadd.f32 %v3291, %v3485
      %v3598 = vadd.f32 %v3292, %v3490
      %v3599 = vadd.f32 %v3293, %v3493
      %v3600 = vadd.f32 %v3294, %v3498
      %v3601 = vadd.f32 %v3295, %v3501
      %v3602 = vadd.f32 %v3296, %v3506
      %v3603 = vadd.f32 %v3297, %v3509
      %v3604 = vadd.f32 %v3298, %v3514
      %v3605 = vadd.f32 %v3299, %v3517
      %v3606 = vadd.f32 %v3300, %v3522
      %v3607 = vadd.f32 %v3301, %v3525
      %v3608 = vadd.f32 %v3302, %v3530
      %v3609 = vadd.f32 %v3303, %v3533
      %v3610 = vadd.f32 %v3304, %v3538
      %v3611 = vadd.f32 %v3305, %v3541
      %v3612 = vadd.f32 %v3306, %v3546
      %v3613 = vadd.f32 %v3307, %v3549
      %v3614 = vadd.f32 %v3308, %v3554
      %v3615 = vadd.f32 %v3309, %v3557
      %v3616 = vadd.f32 %v3310, %v3562
      %v3617 = vadd.f32 %v3311, %v3565
      %v3618 = vadd.f32 %v3312, %v3570
      %v3619 = vadd.f32 %v3313, %v3573
      %v3620 = vadd.f32 %v3314, %v3578
      %v3621 = vadd.f32 %v3315, %v3581
      %v3622 = vadd.f32 %v3316, %v3586
      %v3623 = vadd.f32 %v3317, %v3589
      %v3624 = vld [vmem:[%s1008 + $0x1] sm:$0xff]
      %v3625 = vld [vmem:[%s1008 + $0x9] sm:$0xff]
      %v3626 = vld [vmem:[%s1008 + $0x19] sm:$0xff]
      %v3627 = vld [vmem:[%s1008 + $0x21] sm:$0xff]
      %v3628 = vld [vmem:[%s1008 + $0x31] sm:$0xff]
      %v3629 = vld [vmem:[%s1008 + $0x39] sm:$0xff]
      %v3630 = vld [vmem:[%s1008 + $0x49] sm:$0xff]
      %v3631 = vld [vmem:[%s1008 + $0x51] sm:$0xff]
      %v3632 = vld [vmem:[%s1008 + $0x61] sm:$0xff]
      %v3633 = vld [vmem:[%s1008 + $0x69] sm:$0xff]
      %v3634 = vld [vmem:[%s1008 + $0x79] sm:$0xff]
      %v3635 = vld [vmem:[%s1008 + $0x81] sm:$0xff]
      %v3636 = vld [vmem:[%s1008 + $0x91] sm:$0xff]
      %v3637 = vld [vmem:[%s1008 + $0x99] sm:$0xff]
      %v3638 = vld [vmem:[%s1008 + $0xa9] sm:$0xff]
      %v3639 = vld [vmem:[%s1008 + $0xb1] sm:$0xff]
      %v3640 = vld [vmem:[%s1008 + $0xc1] sm:$0xff]
      %v3641 = vld [vmem:[%s1008 + $0xc9] sm:$0xff]
      %v3642 = vld [vmem:[%s1008 + $0xd9] sm:$0xff]
      %v3643 = vld [vmem:[%s1008 + $0xe1] sm:$0xff]
      %v3644 = vld [vmem:[%s1008 + $0xf1] sm:$0xff]
      %v3645 = vld [vmem:[%s1008 + $0xf9] sm:$0xff]
      %v3646 = vld [vmem:[%s1008 + $0x109] sm:$0xff]
      %v3647 = vld [vmem:[%s1008 + $0x111] sm:$0xff]
      %v3648 = vld [vmem:[%s1008 + $0x121] sm:$0xff]
      %v3649 = vld [vmem:[%s1008 + $0x129] sm:$0xff]
      %v3650 = vld [vmem:[%s1008 + $0x139] sm:$0xff]
      %v3651 = vld [vmem:[%s1008 + $0x141] sm:$0xff]
      %v3652 = vld [vmem:[%s1008 + $0x151] sm:$0xff]
      %v3653 = vld [vmem:[%s1008 + $0x159] sm:$0xff]
      %v3654 = vld [vmem:[%s1008 + $0x169] sm:$0xff]
      %v3655 = vld [vmem:[%s1008 + $0x171] sm:$0xff]
      %v3656 = vpack.c.bf16 %v3625, %v3624
      %v3657 = vpack.c.bf16 %v3627, %v3626
      %v3658 = vpack.c.bf16 %v3629, %v3628
      %v3659 = vpack.c.bf16 %v3631, %v3630
      %v3660 = vpack.c.bf16 %v3633, %v3632
      %v3661 = vpack.c.bf16 %v3635, %v3634
      %v3662 = vpack.c.bf16 %v3637, %v3636
      %v3663 = vpack.c.bf16 %v3639, %v3638
      %v3664 = vpack.c.bf16 %v3641, %v3640
      %v3665 = vpack.c.bf16 %v3643, %v3642
      %v3666 = vpack.c.bf16 %v3645, %v3644
      %v3667 = vpack.c.bf16 %v3647, %v3646
      %v3668 = vpack.c.bf16 %v3649, %v3648
      %v3669 = vpack.c.bf16 %v3651, %v3650
      %v3670 = vpack.c.bf16 %v3653, %v3652
      %v3671 = vpack.c.bf16 %v3655, %v3654
      %s3672 = scalar_lea.vmem %s4, 64
      %v3673 = vld [vmem:[%s3672] sm:$0xf]
      %v3674 = vld [vmem:[%s3672 + $0x4] sm:$0xf]
      %v3675 = vld [vmem:[%s3672 + $0x8] sm:$0xf]
      %v3676 = vld [vmem:[%s3672 + $0xc] sm:$0xf]
      %v3681 = vunpack.c.l.b16 %v3673
      %v3682 = vunpack.c.l.b16 %v3674
      %v3683 = vunpack.c.l.b16 %v3675
      %v3684 = vunpack.c.l.b16 %v3676
      %v3685 = vpack.c.b16 %v3682, %v3681
      %v3686 = vpack.c.b16 %v3684, %v3683
      %v3690 = vsel %vm413, %v3656, 0
      %v3693 = vsel %vm413, %v3657, 0
      %v3696 = vsel %vm413, %v3658, 0
      %v3699 = vsel %vm413, %v3659, 0
      %v3702 = vsel %vm413, %v3660, 0
      %v3705 = vsel %vm413, %v3661, 0
      %v3708 = vsel %vm413, %v3662, 0
      %v3711 = vsel %vm413, %v3663, 0
      %v3714 = vsel %vm413, %v3664, 0
      %v3717 = vsel %vm413, %v3665, 0
      %v3720 = vsel %vm413, %v3666, 0
      %v3723 = vsel %vm413, %v3667, 0
      %v3726 = vsel %vm413, %v3668, 0
      %v3729 = vsel %vm413, %v3669, 0
      %v3732 = vsel %vm413, %v3670, 0
      %v3735 = vsel %vm413, %v3671, 0
      %3737 = vmatprep.subr.bf16.mxu0 0
      %3738 = vmatpush1.bf16.msra.mxu0 %v3685
      %3739 = vmatprep.subr.bf16.mxu0 0
      %3740 = vmatpush1.bf16.msra.mxu0 %v3686
      %3741 = vmatprep.subr.bf16.mxu0 0
      %3742 = vmatpush1.bf16.msra.mxu0 0
      %3743 = vmatprep.subr.bf16.mxu0 0
      %3744 = vmatpush1.bf16.msra.mxu0 0
      %3745 = vmatprep.subr.bf16.mxu0 0
      %3746 = vmatpush1.bf16.msra.mxu0 0
      %3747 = vmatprep.subr.bf16.mxu0 0
      %3748 = vmatpush1.bf16.msra.mxu0 0
      %3749 = vmatprep.subr.bf16.mxu0 0
      %3750 = vmatpush1.bf16.msra.mxu0 0
      %3751 = vmatprep.subr.bf16.mxu0 0
      %3752 = vmatpush1.bf16.msra.mxu0 0
      %3753 = vmatprep.subr.bf16.mxu0 0
      %3754 = vmatpush1.bf16.msra.mxu0 0
      %3755 = vmatprep.subr.bf16.mxu0 0
      %3756 = vmatpush1.bf16.msra.mxu0 0
      %3757 = vmatprep.subr.bf16.mxu0 0
      %3758 = vmatpush1.bf16.msra.mxu0 0
      %3759 = vmatprep.subr.bf16.mxu0 0
      %3760 = vmatpush1.bf16.msra.mxu0 0
      %3761 = vmatprep.subr.bf16.mxu0 0
      %3762 = vmatpush1.bf16.msra.mxu0 0
      %3763 = vmatprep.subr.bf16.mxu0 0
      %3764 = vmatpush1.bf16.msra.mxu0 0
      %3765 = vmatprep.subr.bf16.mxu0 0
      %3766 = vmatpush1.bf16.msra.mxu0 0
      %3767 = vmatprep.subr.bf16.mxu0 0
      %3768 = vmatpush1.bf16.msra.mxu0 0
      %3769 = vmatprep.mubr.bf16.mxu0 0
      %3770 = vmatmul.mubr.bf16.gmra.mrb[0].mxu0 %v3690
      %v3771 = vpop.f32.mrb[0].mxu0
      %v3772 = vadd.f32 0.0, %v3771
      %v3773 = vpop.f32.mrb[0].mxu0
      %v3774 = vpop.f32.mrb[0].mxu0
      %v3775 = vadd.f32 0.0, %v3774
      %v3776 = vpop.f32.mrb[0].mxu0
      %3777 = vmatprep.mubr.bf16.mxu0 0
      %3778 = vmatmul.mubr.bf16.gmra.mrb[0].mxu0 %v3693
      %v3779 = vpop.f32.mrb[0].mxu0
      %v3780 = vadd.f32 0.0, %v3779
      %v3781 = vpop.f32.mrb[0].mxu0
      %v3782 = vpop.f32.mrb[0].mxu0
      %v3783 = vadd.f32 0.0, %v3782
      %v3784 = vpop.f32.mrb[0].mxu0
      %3785 = vmatprep.mubr.bf16.mxu0 0
      %3786 = vmatmul.mubr.bf16.gmra.mrb[0].mxu0 %v3696
      %v3787 = vpop.f32.mrb[0].mxu0
      %v3788 = vadd.f32 0.0, %v3787
      %v3789 = vpop.f32.mrb[0].mxu0
      %v3790 = vpop.f32.mrb[0].mxu0
      %v3791 = vadd.f32 0.0, %v3790
      %v3792 = vpop.f32.mrb[0].mxu0
      %3793 = vmatprep.mubr.bf16.mxu0 0
      %3794 = vmatmul.mubr.bf16.gmra.mrb[0].mxu0 %v3699
      %v3795 = vpop.f32.mrb[0].mxu0
      %v3796 = vadd.f32 0.0, %v3795
      %v3797 = vpop.f32.mrb[0].mxu0
      %v3798 = vpop.f32.mrb[0].mxu0
      %v3799 = vadd.f32 0.0, %v3798
      %v3800 = vpop.f32.mrb[0].mxu0
      %3801 = vmatprep.mubr.bf16.mxu0 0
      %3802 = vmatmul.mubr.bf16.gmra.mrb[0].mxu0 %v3702
      %v3803 = vpop.f32.mrb[0].mxu0
      %v3804 = vadd.f32 0.0, %v3803
      %v3805 = vpop.f32.mrb[0].mxu0
      %v3806 = vpop.f32.mrb[0].mxu0
      %v3807 = vadd.f32 0.0, %v3806
      %v3808 = vpop.f32.mrb[0].mxu0
      %3809 = vmatprep.mubr.bf16.mxu0 0
      %3810 = vmatmul.mubr.bf16.gmra.mrb[0].mxu0 %v3705
      %v3811 = vpop.f32.mrb[0].mxu0
      %v3812 = vadd.f32 0.0, %v3811
      %v3813 = vpop.f32.mrb[0].mxu0
      %v3814 = vpop.f32.mrb[0].mxu0
      %v3815 = vadd.f32 0.0, %v3814
      %v3816 = vpop.f32.mrb[0].mxu0
      %3817 = vmatprep.mubr.bf16.mxu0 0
      %3818 = vmatmul.mubr.bf16.gmra.mrb[0].mxu0 %v3708
      %v3819 = vpop.f32.mrb[0].mxu0
      %v3820 = vadd.f32 0.0, %v3819
      %v3821 = vpop.f32.mrb[0].mxu0
      %v3822 = vpop.f32.mrb[0].mxu0
      %v3823 = vadd.f32 0.0, %v3822
      %v3824 = vpop.f32.mrb[0].mxu0
      %3825 = vmatprep.mubr.bf16.mxu0 0
      %3826 = vmatmul.mubr.bf16.gmra.mrb[0].mxu0 %v3711
      %v3827 = vpop.f32.mrb[0].mxu0
      %v3828 = vadd.f32 0.0, %v3827
      %v3829 = vpop.f32.mrb[0].mxu0
      %v3830 = vpop.f32.mrb[0].mxu0
      %v3831 = vadd.f32 0.0, %v3830
      %v3832 = vpop.f32.mrb[0].mxu0
      %3833 = vmatprep.mubr.bf16.mxu0 0
      %3834 = vmatmul.mubr.bf16.gmra.mrb[0].mxu0 %v3714
      %v3835 = vpop.f32.mrb[0].mxu0
      %v3836 = vadd.f32 0.0, %v3835
      %v3837 = vpop.f32.mrb[0].mxu0
      %v3838 = vpop.f32.mrb[0].mxu0
      %v3839 = vadd.f32 0.0, %v3838
      %v3840 = vpop.f32.mrb[0].mxu0
      %3841 = vmatprep.mubr.bf16.mxu0 0
      %3842 = vmatmul.mubr.bf16.gmra.mrb[0].mxu0 %v3717
      %v3843 = vpop.f32.mrb[0].mxu0
      %v3844 = vadd.f32 0.0, %v3843
      %v3845 = vpop.f32.mrb[0].mxu0
      %v3846 = vpop.f32.mrb[0].mxu0
      %v3847 = vadd.f32 0.0, %v3846
      %v3848 = vpop.f32.mrb[0].mxu0
      %3849 = vmatprep.mubr.bf16.mxu0 0
      %3850 = vmatmul.mubr.bf16.gmra.mrb[0].mxu0 %v3720
      %v3851 = vpop.f32.mrb[0].mxu0
      %v3852 = vadd.f32 0.0, %v3851
      %v3853 = vpop.f32.mrb[0].mxu0
      %v3854 = vpop.f32.mrb[0].mxu0
      %v3855 = vadd.f32 0.0, %v3854
      %v3856 = vpop.f32.mrb[0].mxu0
      %3857 = vmatprep.mubr.bf16.mxu0 0
      %3858 = vmatmul.mubr.bf16.gmra.mrb[0].mxu0 %v3723
      %v3859 = vpop.f32.mrb[0].mxu0
      %v3860 = vadd.f32 0.0, %v3859
      %v3861 = vpop.f32.mrb[0].mxu0
      %v3862 = vpop.f32.mrb[0].mxu0
      %v3863 = vadd.f32 0.0, %v3862
      %v3864 = vpop.f32.mrb[0].mxu0
      %3865 = vmatprep.mubr.bf16.mxu0 0
      %3866 = vmatmul.mubr.bf16.gmra.mrb[0].mxu0 %v3726
      %v3867 = vpop.f32.mrb[0].mxu0
      %v3868 = vadd.f32 0.0, %v3867
      %v3869 = vpop.f32.mrb[0].mxu0
      %v3870 = vpop.f32.mrb[0].mxu0
      %v3871 = vadd.f32 0.0, %v3870
      %v3872 = vpop.f32.mrb[0].mxu0
      %3873 = vmatprep.mubr.bf16.mxu0 0
      %3874 = vmatmul.mubr.bf16.gmra.mrb[0].mxu0 %v3729
      %v3875 = vpop.f32.mrb[0].mxu0
      %v3876 = vadd.f32 0.0, %v3875
      %v3877 = vpop.f32.mrb[0].mxu0
      %v3878 = vpop.f32.mrb[0].mxu0
      %v3879 = vadd.f32 0.0, %v3878
      %v3880 = vpop.f32.mrb[0].mxu0
      %3881 = vmatprep.mubr.bf16.mxu0 0
      %3882 = vmatmul.mubr.bf16.gmra.mrb[0].mxu0 %v3732
      %v3883 = vpop.f32.mrb[0].mxu0
      %v3884 = vadd.f32 0.0, %v3883
      %v3885 = vpop.f32.mrb[0].mxu0
      %v3886 = vpop.f32.mrb[0].mxu0
      %v3887 = vadd.f32 0.0, %v3886
      %v3888 = vpop.f32.mrb[0].mxu0
      %3889 = vmatprep.mubr.bf16.mxu0 0
      %3890 = vmatmul.mubr.bf16.gmra.mrb[0].mxu0 %v3735
      %v3891 = vpop.f32.mrb[0].mxu0
      %v3892 = vadd.f32 0.0, %v3891
      %v3893 = vpop.f32.mrb[0].mxu0
      %v3894 = vpop.f32.mrb[0].mxu0
      %v3895 = vadd.f32 0.0, %v3894
      %v3896 = vpop.f32.mrb[0].mxu0
      %3897 = vdwg.mxu0
      %v3898 = vadd.f32 %v3592, %v3772
      %v3899 = vadd.f32 %v3593, %v3775
      %v3900 = vadd.f32 %v3594, %v3780
      %v3901 = vadd.f32 %v3595, %v3783
      %v3902 = vadd.f32 %v3596, %v3788
      %v3903 = vadd.f32 %v3597, %v3791
      %v3904 = vadd.f32 %v3598, %v3796
      %v3905 = vadd.f32 %v3599, %v3799
      %v3906 = vadd.f32 %v3600, %v3804
      %v3907 = vadd.f32 %v3601, %v3807
      %v3908 = vadd.f32 %v3602, %v3812
      %v3909 = vadd.f32 %v3603, %v3815
      %v3910 = vadd.f32 %v3604, %v3820
      %v3911 = vadd.f32 %v3605, %v3823
      %v3912 = vadd.f32 %v3606, %v3828
      %v3913 = vadd.f32 %v3607, %v3831
      %v3914 = vadd.f32 %v3608, %v3836
      %v3915 = vadd.f32 %v3609, %v3839
      %v3916 = vadd.f32 %v3610, %v3844
      %v3917 = vadd.f32 %v3611, %v3847
      %v3918 = vadd.f32 %v3612, %v3852
      %v3919 = vadd.f32 %v3613, %v3855
      %v3920 = vadd.f32 %v3614, %v3860
      %v3921 = vadd.f32 %v3615, %v3863
      %v3922 = vadd.f32 %v3616, %v3868
      %v3923 = vadd.f32 %v3617, %v3871
      %v3924 = vadd.f32 %v3618, %v3876
      %v3925 = vadd.f32 %v3619, %v3879
      %v3926 = vadd.f32 %v3620, %v3884
      %v3927 = vadd.f32 %v3621, %v3887
      %v3928 = vadd.f32 %v3622, %v3892
      %v3929 = vadd.f32 %v3623, %v3895
      %v3930 = vld [vmem:[%s1008 + $0x2] sm:$0xff]
      %v3931 = vld [vmem:[%s1008 + $0xa] sm:$0xff]
      %v3932 = vld [vmem:[%s1008 + $0x1a] sm:$0xff]
      %v3933 = vld [vmem:[%s1008 + $0x22] sm:$0xff]
      %v3934 = vld [vmem:[%s1008 + $0x32] sm:$0xff]
      %v3935 = vld [vmem:[%s1008 + $0x3a] sm:$0xff]
      %v3936 = vld [vmem:[%s1008 + $0x4a] sm:$0xff]
      %v3937 = vld [vmem:[%s1008 + $0x52] sm:$0xff]
      %v3938 = vld [vmem:[%s1008 + $0x62] sm:$0xff]
      %v3939 = vld [vmem:[%s1008 + $0x6a] sm:$0xff]
      %v3940 = vld [vmem:[%s1008 + $0x7a] sm:$0xff]
      %v3941 = vld [vmem:[%s1008 + $0x82] sm:$0xff]
      %v3942 = vld [vmem:[%s1008 + $0x92] sm:$0xff]
      %v3943 = vld [vmem:[%s1008 + $0x9a] sm:$0xff]
      %v3944 = vld [vmem:[%s1008 + $0xaa] sm:$0xff]
      %v3945 = vld [vmem:[%s1008 + $0xb2] sm:$0xff]
      %v3946 = vld [vmem:[%s1008 + $0xc2] sm:$0xff]
      %v3947 = vld [vmem:[%s1008 + $0xca] sm:$0xff]
      %v3948 = vld [vmem:[%s1008 + $0xda] sm:$0xff]
      %v3949 = vld [vmem:[%s1008 + $0xe2] sm:$0xff]
      %v3950 = vld [vmem:[%s1008 + $0xf2] sm:$0xff]
      %v3951 = vld [vmem:[%s1008 + $0xfa] sm:$0xff]
      %v3952 = vld [vmem:[%s1008 + $0x10a] sm:$0xff]
      %v3953 = vld [vmem:[%s1008 + $0x112] sm:$0xff]
      %v3954 = vld [vmem:[%s1008 + $0x122] sm:$0xff]
      %v3955 = vld [vmem:[%s1008 + $0x12a] sm:$0xff]
      %v3956 = vld [vmem:[%s1008 + $0x13a] sm:$0xff]
      %v3957 = vld [vmem:[%s1008 + $0x142] sm:$0xff]
      %v3958 = vld [vmem:[%s1008 + $0x152] sm:$0xff]
      %v3959 = vld [vmem:[%s1008 + $0x15a] sm:$0xff]
      %v3960 = vld [vmem:[%s1008 + $0x16a] sm:$0xff]
      %v3961 = vld [vmem:[%s1008 + $0x172] sm:$0xff]
      %v3962 = vpack.c.bf16 %v3931, %v3930
      %v3963 = vpack.c.bf16 %v3933, %v3932
      %v3964 = vpack.c.bf16 %v3935, %v3934
      %v3965 = vpack.c.bf16 %v3937, %v3936
      %v3966 = vpack.c.bf16 %v3939, %v3938
      %v3967 = vpack.c.bf16 %v3941, %v3940
      %v3968 = vpack.c.bf16 %v3943, %v3942
      %v3969 = vpack.c.bf16 %v3945, %v3944
      %v3970 = vpack.c.bf16 %v3947, %v3946
      %v3971 = vpack.c.bf16 %v3949, %v3948
      %v3972 = vpack.c.bf16 %v3951, %v3950
      %v3973 = vpack.c.bf16 %v3953, %v3952
      %v3974 = vpack.c.bf16 %v3955, %v3954
      %v3975 = vpack.c.bf16 %v3957, %v3956
      %v3976 = vpack.c.bf16 %v3959, %v3958
      %v3977 = vpack.c.bf16 %v3961, %v3960
      %s3978 = scalar_lea.vmem %s4, 80
      %v3979 = vld [vmem:[%s3978] sm:$0xf]
      %v3980 = vld [vmem:[%s3978 + $0x4] sm:$0xf]
      %v3981 = vld [vmem:[%s3978 + $0x8] sm:$0xf]
      %v3982 = vld [vmem:[%s3978 + $0xc] sm:$0xf]
      %v3987 = vunpack.c.l.b16 %v3979
      %v3988 = vunpack.c.l.b16 %v3980
      %v3989 = vunpack.c.l.b16 %v3981
      %v3990 = vunpack.c.l.b16 %v3982
      %v3991 = vpack.c.b16 %v3988, %v3987
      %v3992 = vpack.c.b16 %v3990, %v3989
      %v3996 = vsel %vm413, %v3962, 0
      %v3999 = vsel %vm413, %v3963, 0
      %v4002 = vsel %vm413, %v3964, 0
      %v4005 = vsel %vm413, %v3965, 0
      %v4008 = vsel %vm413, %v3966, 0
      %v4011 = vsel %vm413, %v3967, 0
      %v4014 = vsel %vm413, %v3968, 0
      %v4017 = vsel %vm413, %v3969, 0
      %v4020 = vsel %vm413, %v3970, 0
      %v4023 = vsel %vm413, %v3971, 0
      %v4026 = vsel %vm413, %v3972, 0
      %v4029 = vsel %vm413, %v3973, 0
      %v4032 = vsel %vm413, %v3974, 0
      %v4035 = vsel %vm413, %v3975, 0
      %v4038 = vsel %vm413, %v3976, 0
      %v4041 = vsel %vm413, %v3977, 0
      %4043 = vmatprep.subr.bf16.mxu0 0
      %4044 = vmatpush1.bf16.msra.mxu0 %v3991
      %4045 = vmatprep.subr.bf16.mxu0 0
      %4046 = vmatpush1.bf16.msra.mxu0 %v3992
      %4047 = vmatprep.subr.bf16.mxu0 0
      %4048 = vmatpush1.bf16.msra.mxu0 0
      %4049 = vmatprep.subr.bf16.mxu0 0
      %4050 = vmatpush1.bf16.msra.mxu0 0
      %4051 = vmatprep.subr.bf16.mxu0 0
      %4052 = vmatpush1.bf16.msra.mxu0 0
      %4053 = vmatprep.subr.bf16.mxu0 0
      %4054 = vmatpush1.bf16.msra.mxu0 0
      %4055 = vmatprep.subr.bf16.mxu0 0
      %4056 = vmatpush1.bf16.msra.mxu0 0
      %4057 = vmatprep.subr.bf16.mxu0 0
      %4058 = vmatpush1.bf16.msra.mxu0 0
      %4059 = vmatprep.subr.bf16.mxu0 0
      %4060 = vmatpush1.bf16.msra.mxu0 0
      %4061 = vmatprep.subr.bf16.mxu0 0
      %4062 = vmatpush1.bf16.msra.mxu0 0
      %4063 = vmatprep.subr.bf16.mxu0 0
      %4064 = vmatpush1.bf16.msra.mxu0 0
      %4065 = vmatprep.subr.bf16.mxu0 0
      %4066 = vmatpush1.bf16.msra.mxu0 0
      %4067 = vmatprep.subr.bf16.mxu0 0
      %4068 = vmatpush1.bf16.msra.mxu0 0
      %4069 = vmatprep.subr.bf16.mxu0 0
      %4070 = vmatpush1.bf16.msra.mxu0 0
      %4071 = vmatprep.subr.bf16.mxu0 0
      %4072 = vmatpush1.bf16.msra.mxu0 0
      %4073 = vmatprep.subr.bf16.mxu0 0
      %4074 = vmatpush1.bf16.msra.mxu0 0
      %4075 = vmatprep.mubr.bf16.mxu0 0
      %4076 = vmatmul.mubr.bf16.gmra.mrb[0].mxu0 %v3996
      %v4077 = vpop.f32.mrb[0].mxu0
      %v4078 = vadd.f32 0.0, %v4077
      %v4079 = vpop.f32.mrb[0].mxu0
      %v4080 = vpop.f32.mrb[0].mxu0
      %v4081 = vadd.f32 0.0, %v4080
      %v4082 = vpop.f32.mrb[0].mxu0
      %4083 = vmatprep.mubr.bf16.mxu0 0
      %4084 = vmatmul.mubr.bf16.gmra.mrb[0].mxu0 %v3999
      %v4085 = vpop.f32.mrb[0].mxu0
      %v4086 = vadd.f32 0.0, %v4085
      %v4087 = vpop.f32.mrb[0].mxu0
      %v4088 = vpop.f32.mrb[0].mxu0
      %v4089 = vadd.f32 0.0, %v4088
      %v4090 = vpop.f32.mrb[0].mxu0
      %4091 = vmatprep.mubr.bf16.mxu0 0
      %4092 = vmatmul.mubr.bf16.gmra.mrb[0].mxu0 %v4002
      %v4093 = vpop.f32.mrb[0].mxu0
      %v4094 = vadd.f32 0.0, %v4093
      %v4095 = vpop.f32.mrb[0].mxu0
      %v4096 = vpop.f32.mrb[0].mxu0
      %v4097 = vadd.f32 0.0, %v4096
      %v4098 = vpop.f32.mrb[0].mxu0
      %4099 = vmatprep.mubr.bf16.mxu0 0
      %4100 = vmatmul.mubr.bf16.gmra.mrb[0].mxu0 %v4005
      %v4101 = vpop.f32.mrb[0].mxu0
      %v4102 = vadd.f32 0.0, %v4101
      %v4103 = vpop.f32.mrb[0].mxu0
      %v4104 = vpop.f32.mrb[0].mxu0
      %v4105 = vadd.f32 0.0, %v4104
      %v4106 = vpop.f32.mrb[0].mxu0
      %4107 = vmatprep.mubr.bf16.mxu0 0
      %4108 = vmatmul.mubr.bf16.gmra.mrb[0].mxu0 %v4008
      %v4109 = vpop.f32.mrb[0].mxu0
      %v4110 = vadd.f32 0.0, %v4109
      %v4111 = vpop.f32.mrb[0].mxu0
      %v4112 = vpop.f32.mrb[0].mxu0
      %v4113 = vadd.f32 0.0, %v4112
      %v4114 = vpop.f32.mrb[0].mxu0
      %4115 = vmatprep.mubr.bf16.mxu0 0
      %4116 = vmatmul.mubr.bf16.gmra.mrb[0].mxu0 %v4011
      %v4117 = vpop.f32.mrb[0].mxu0
      %v4118 = vadd.f32 0.0, %v4117
      %v4119 = vpop.f32.mrb[0].mxu0
      %v4120 = vpop.f32.mrb[0].mxu0
      %v4121 = vadd.f32 0.0, %v4120
      %v4122 = vpop.f32.mrb[0].mxu0
      %4123 = vmatprep.mubr.bf16.mxu0 0
      %4124 = vmatmul.mubr.bf16.gmra.mrb[0].mxu0 %v4014
      %v4125 = vpop.f32.mrb[0].mxu0
      %v4126 = vadd.f32 0.0, %v4125
      %v4127 = vpop.f32.mrb[0].mxu0
      %v4128 = vpop.f32.mrb[0].mxu0
      %v4129 = vadd.f32 0.0, %v4128
      %v4130 = vpop.f32.mrb[0].mxu0
      %4131 = vmatprep.mubr.bf16.mxu0 0
      %4132 = vmatmul.mubr.bf16.gmra.mrb[0].mxu0 %v4017
      %v4133 = vpop.f32.mrb[0].mxu0
      %v4134 = vadd.f32 0.0, %v4133
      %v4135 = vpop.f32.mrb[0].mxu0
      %v4136 = vpop.f32.mrb[0].mxu0
      %v4137 = vadd.f32 0.0, %v4136
      %v4138 = vpop.f32.mrb[0].mxu0
      %4139 = vmatprep.mubr.bf16.mxu0 0
      %4140 = vmatmul.mubr.bf16.gmra.mrb[0].mxu0 %v4020
      %v4141 = vpop.f32.mrb[0].mxu0
      %v4142 = vadd.f32 0.0, %v4141
      %v4143 = vpop.f32.mrb[0].mxu0
      %v4144 = vpop.f32.mrb[0].mxu0
      %v4145 = vadd.f32 0.0, %v4144
      %v4146 = vpop.f32.mrb[0].mxu0
      %4147 = vmatprep.mubr.bf16.mxu0 0
      %4148 = vmatmul.mubr.bf16.gmra.mrb[0].mxu0 %v4023
      %v4149 = vpop.f32.mrb[0].mxu0
      %v4150 = vadd.f32 0.0, %v4149
      %v4151 = vpop.f32.mrb[0].mxu0
      %v4152 = vpop.f32.mrb[0].mxu0
      %v4153 = vadd.f32 0.0, %v4152
      %v4154 = vpop.f32.mrb[0].mxu0
      %4155 = vmatprep.mubr.bf16.mxu0 0
      %4156 = vmatmul.mubr.bf16.gmra.mrb[0].mxu0 %v4026
      %v4157 = vpop.f32.mrb[0].mxu0
      %v4158 = vadd.f32 0.0, %v4157
      %v4159 = vpop.f32.mrb[0].mxu0
      %v4160 = vpop.f32.mrb[0].mxu0
      %v4161 = vadd.f32 0.0, %v4160
      %v4162 = vpop.f32.mrb[0].mxu0
      %4163 = vmatprep.mubr.bf16.mxu0 0
      %4164 = vmatmul.mubr.bf16.gmra.mrb[0].mxu0 %v4029
      %v4165 = vpop.f32.mrb[0].mxu0
      %v4166 = vadd.f32 0.0, %v4165
      %v4167 = vpop.f32.mrb[0].mxu0
      %v4168 = vpop.f32.mrb[0].mxu0
      %v4169 = vadd.f32 0.0, %v4168
      %v4170 = vpop.f32.mrb[0].mxu0
      %4171 = vmatprep.mubr.bf16.mxu0 0
      %4172 = vmatmul.mubr.bf16.gmra.mrb[0].mxu0 %v4032
      %v4173 = vpop.f32.mrb[0].mxu0
      %v4174 = vadd.f32 0.0, %v4173
      %v4175 = vpop.f32.mrb[0].mxu0
      %v4176 = vpop.f32.mrb[0].mxu0
      %v4177 = vadd.f32 0.0, %v4176
      %v4178 = vpop.f32.mrb[0].mxu0
      %4179 = vmatprep.mubr.bf16.mxu0 0
      %4180 = vmatmul.mubr.bf16.gmra.mrb[0].mxu0 %v4035
      %v4181 = vpop.f32.mrb[0].mxu0
      %v4182 = vadd.f32 0.0, %v4181
      %v4183 = vpop.f32.mrb[0].mxu0
      %v4184 = vpop.f32.mrb[0].mxu0
      %v4185 = vadd.f32 0.0, %v4184
      %v4186 = vpop.f32.mrb[0].mxu0
      %4187 = vmatprep.mubr.bf16.mxu0 0
      %4188 = vmatmul.mubr.bf16.gmra.mrb[0].mxu0 %v4038
      %v4189 = vpop.f32.mrb[0].mxu0
      %v4190 = vadd.f32 0.0, %v4189
      %v4191 = vpop.f32.mrb[0].mxu0
      %v4192 = vpop.f32.mrb[0].mxu0
      %v4193 = vadd.f32 0.0, %v4192
      %v4194 = vpop.f32.mrb[0].mxu0
      %4195 = vmatprep.mubr.bf16.mxu0 0
      %4196 = vmatmul.mubr.bf16.gmra.mrb[0].mxu0 %v4041
      %v4197 = vpop.f32.mrb[0].mxu0
      %v4198 = vadd.f32 0.0, %v4197
      %v4199 = vpop.f32.mrb[0].mxu0
      %v4200 = vpop.f32.mrb[0].mxu0
      %v4201 = vadd.f32 0.0, %v4200
      %v4202 = vpop.f32.mrb[0].mxu0
      %4203 = vdwg.mxu0
      %v4204 = vadd.f32 %v3898, %v4078
      %v4205 = vadd.f32 %v3899, %v4081
      %v4206 = vadd.f32 %v3900, %v4086
      %v4207 = vadd.f32 %v3901, %v4089
      %v4208 = vadd.f32 %v3902, %v4094
      %v4209 = vadd.f32 %v3903, %v4097
      %v4210 = vadd.f32 %v3904, %v4102
      %v4211 = vadd.f32 %v3905, %v4105
      %v4212 = vadd.f32 %v3906, %v4110
      %v4213 = vadd.f32 %v3907, %v4113
      %v4214 = vadd.f32 %v3908, %v4118
      %v4215 = vadd.f32 %v3909, %v4121
      %v4216 = vadd.f32 %v3910, %v4126
      %v4217 = vadd.f32 %v3911, %v4129
      %v4218 = vadd.f32 %v3912, %v4134
      %v4219 = vadd.f32 %v3913, %v4137
      %v4220 = vadd.f32 %v3914, %v4142
      %v4221 = vadd.f32 %v3915, %v4145
      %v4222 = vadd.f32 %v3916, %v4150
      %v4223 = vadd.f32 %v3917, %v4153
      %v4224 = vadd.f32 %v3918, %v4158
      %v4225 = vadd.f32 %v3919, %v4161
      %v4226 = vadd.f32 %v3920, %v4166
      %v4227 = vadd.f32 %v3921, %v4169
      %v4228 = vadd.f32 %v3922, %v4174
      %v4229 = vadd.f32 %v3923, %v4177
      %v4230 = vadd.f32 %v3924, %v4182
      %v4231 = vadd.f32 %v3925, %v4185
      %v4232 = vadd.f32 %v3926, %v4190
      %v4233 = vadd.f32 %v3927, %v4193
      %v4234 = vadd.f32 %v3928, %v4198
      %v4235 = vadd.f32 %v3929, %v4201
      %s4236 = scalar_lea.vmem [#allocation2], 48
      %v4237 = vld [vmem:[%s4236] sm:$0xff]
      %v4238 = vld [vmem:[%s4236 + $0x8] sm:$0xff]
      %v4239 = vld [vmem:[%s4236 + $0x18] sm:$0xff]
      %v4240 = vld [vmem:[%s4236 + $0x20] sm:$0xff]
      %v4241 = vld [vmem:[%s4236 + $0x30] sm:$0xff]
      %v4242 = vld [vmem:[%s4236 + $0x38] sm:$0xff]
      %v4243 = vld [vmem:[%s4236 + $0x48] sm:$0xff]
      %v4244 = vld [vmem:[%s4236 + $0x50] sm:$0xff]
      %v4245 = vld [vmem:[%s4236 + $0x60] sm:$0xff]
      %v4246 = vld [vmem:[%s4236 + $0x68] sm:$0xff]
      %v4247 = vld [vmem:[%s4236 + $0x78] sm:$0xff]
      %v4248 = vld [vmem:[%s4236 + $0x80] sm:$0xff]
      %v4249 = vld [vmem:[%s4236 + $0x90] sm:$0xff]
      %v4250 = vld [vmem:[%s4236 + $0x98] sm:$0xff]
      %v4251 = vld [vmem:[%s4236 + $0xa8] sm:$0xff]
      %v4252 = vld [vmem:[%s4236 + $0xb0] sm:$0xff]
      %v4253 = vld [vmem:[%s4236 + $0xc0] sm:$0xff]
      %v4254 = vld [vmem:[%s4236 + $0xc8] sm:$0xff]
      %v4255 = vld [vmem:[%s4236 + $0xd8] sm:$0xff]
      %v4256 = vld [vmem:[%s4236 + $0xe0] sm:$0xff]
      %v4257 = vld [vmem:[%s4236 + $0xf0] sm:$0xff]
      %v4258 = vld [vmem:[%s4236 + $0xf8] sm:$0xff]
      %v4259 = vld [vmem:[%s4236 + $0x108] sm:$0xff]
      %v4260 = vld [vmem:[%s4236 + $0x110] sm:$0xff]
      %v4261 = vld [vmem:[%s4236 + $0x120] sm:$0xff]
      %v4262 = vld [vmem:[%s4236 + $0x128] sm:$0xff]
      %v4263 = vld [vmem:[%s4236 + $0x138] sm:$0xff]
      %v4264 = vld [vmem:[%s4236 + $0x140] sm:$0xff]
      %v4265 = vld [vmem:[%s4236 + $0x150] sm:$0xff]
      %v4266 = vld [vmem:[%s4236 + $0x158] sm:$0xff]
      %v4267 = vld [vmem:[%s4236 + $0x168] sm:$0xff]
      %v4268 = vld [vmem:[%s4236 + $0x170] sm:$0xff]
      %v4269 = vpack.c.bf16 %v4238, %v4237
      %v4270 = vpack.c.bf16 %v4240, %v4239
      %v4271 = vpack.c.bf16 %v4242, %v4241
      %v4272 = vpack.c.bf16 %v4244, %v4243
      %v4273 = vpack.c.bf16 %v4246, %v4245
      %v4274 = vpack.c.bf16 %v4248, %v4247
      %v4275 = vpack.c.bf16 %v4250, %v4249
      %v4276 = vpack.c.bf16 %v4252, %v4251
      %v4277 = vpack.c.bf16 %v4254, %v4253
      %v4278 = vpack.c.bf16 %v4256, %v4255
      %v4279 = vpack.c.bf16 %v4258, %v4257
      %v4280 = vpack.c.bf16 %v4260, %v4259
      %v4281 = vpack.c.bf16 %v4262, %v4261
      %v4282 = vpack.c.bf16 %v4264, %v4263
      %v4283 = vpack.c.bf16 %v4266, %v4265
      %v4284 = vpack.c.bf16 %v4268, %v4267
      %s4285 = scalar_lea.vmem %s4, 96
      %v4286 = vld [vmem:[%s4285] sm:$0xf]
      %v4287 = vld [vmem:[%s4285 + $0x4] sm:$0xf]
      %v4288 = vld [vmem:[%s4285 + $0x8] sm:$0xf]
      %v4289 = vld [vmem:[%s4285 + $0xc] sm:$0xf]
      %v4294 = vunpack.c.l.b16 %v4286
      %v4295 = vunpack.c.l.b16 %v4287
      %v4296 = vunpack.c.l.b16 %v4288
      %v4297 = vunpack.c.l.b16 %v4289
      %v4298 = vpack.c.b16 %v4295, %v4294
      %v4299 = vpack.c.b16 %v4297, %v4296
      %v4303 = vsel %vm413, %v4269, 0
      %v4306 = vsel %vm413, %v4270, 0
      %v4309 = vsel %vm413, %v4271, 0
      %v4312 = vsel %vm413, %v4272, 0
      %v4315 = vsel %vm413, %v4273, 0
      %v4318 = vsel %vm413, %v4274, 0
      %v4321 = vsel %vm413, %v4275, 0
      %v4324 = vsel %vm413, %v4276, 0
      %v4327 = vsel %vm413, %v4277, 0
      %v4330 = vsel %vm413, %v4278, 0
      %v4333 = vsel %vm413, %v4279, 0
      %v4336 = vsel %vm413, %v4280, 0
      %v4339 = vsel %vm413, %v4281, 0
      %v4342 = vsel %vm413, %v4282, 0
      %v4345 = vsel %vm413, %v4283, 0
      %v4348 = vsel %vm413, %v4284, 0
      %4350 = vmatprep.subr.bf16.mxu0 0
      %4351 = vmatpush1.bf16.msra.mxu0 %v4298
      %4352 = vmatprep.subr.bf16.mxu0 0
      %4353 = vmatpush1.bf16.msra.mxu0 %v4299
      %4354 = vmatprep.subr.bf16.mxu0 0
      %4355 = vmatpush1.bf16.msra.mxu0 0
      %4356 = vmatprep.subr.bf16.mxu0 0
      %4357 = vmatpush1.bf16.msra.mxu0 0
      %4358 = vmatprep.subr.bf16.mxu0 0
      %4359 = vmatpush1.bf16.msra.mxu0 0
      %4360 = vmatprep.subr.bf16.mxu0 0
      %4361 = vmatpush1.bf16.msra.mxu0 0
      %4362 = vmatprep.subr.bf16.mxu0 0
      %4363 = vmatpush1.bf16.msra.mxu0 0
      %4364 = vmatprep.subr.bf16.mxu0 0
      %4365 = vmatpush1.bf16.msra.mxu0 0
      %4366 = vmatprep.subr.bf16.mxu0 0
      %4367 = vmatpush1.bf16.msra.mxu0 0
      %4368 = vmatprep.subr.bf16.mxu0 0
      %4369 = vmatpush1.bf16.msra.mxu0 0
      %4370 = vmatprep.subr.bf16.mxu0 0
      %4371 = vmatpush1.bf16.msra.mxu0 0
      %4372 = vmatprep.subr.bf16.mxu0 0
      %4373 = vmatpush1.bf16.msra.mxu0 0
      %4374 = vmatprep.subr.bf16.mxu0 0
      %4375 = vmatpush1.bf16.msra.mxu0 0
      %4376 = vmatprep.subr.bf16.mxu0 0
      %4377 = vmatpush1.bf16.msra.mxu0 0
      %4378 = vmatprep.subr.bf16.mxu0 0
      %4379 = vmatpush1.bf16.msra.mxu0 0
      %4380 = vmatprep.subr.bf16.mxu0 0
      %4381 = vmatpush1.bf16.msra.mxu0 0
      %4382 = vmatprep.mubr.bf16.mxu0 0
      %4383 = vmatmul.mubr.bf16.gmra.mrb[0].mxu0 %v4303
      %v4384 = vpop.f32.mrb[0].mxu0
      %v4385 = vadd.f32 0.0, %v4384
      %v4386 = vpop.f32.mrb[0].mxu0
      %v4387 = vpop.f32.mrb[0].mxu0
      %v4388 = vadd.f32 0.0, %v4387
      %v4389 = vpop.f32.mrb[0].mxu0
      %4390 = vmatprep.mubr.bf16.mxu0 0
      %4391 = vmatmul.mubr.bf16.gmra.mrb[0].mxu0 %v4306
      %v4392 = vpop.f32.mrb[0].mxu0
      %v4393 = vadd.f32 0.0, %v4392
      %v4394 = vpop.f32.mrb[0].mxu0
      %v4395 = vpop.f32.mrb[0].mxu0
      %v4396 = vadd.f32 0.0, %v4395
      %v4397 = vpop.f32.mrb[0].mxu0
      %4398 = vmatprep.mubr.bf16.mxu0 0
      %4399 = vmatmul.mubr.bf16.gmra.mrb[0].mxu0 %v4309
      %v4400 = vpop.f32.mrb[0].mxu0
      %v4401 = vadd.f32 0.0, %v4400
      %v4402 = vpop.f32.mrb[0].mxu0
      %v4403 = vpop.f32.mrb[0].mxu0
      %v4404 = vadd.f32 0.0, %v4403
      %v4405 = vpop.f32.mrb[0].mxu0
      %4406 = vmatprep.mubr.bf16.mxu0 0
      %4407 = vmatmul.mubr.bf16.gmra.mrb[0].mxu0 %v4312
      %v4408 = vpop.f32.mrb[0].mxu0
      %v4409 = vadd.f32 0.0, %v4408
      %v4410 = vpop.f32.mrb[0].mxu0
      %v4411 = vpop.f32.mrb[0].mxu0
      %v4412 = vadd.f32 0.0, %v4411
      %v4413 = vpop.f32.mrb[0].mxu0
      %4414 = vmatprep.mubr.bf16.mxu0 0
      %4415 = vmatmul.mubr.bf16.gmra.mrb[0].mxu0 %v4315
      %v4416 = vpop.f32.mrb[0].mxu0
      %v4417 = vadd.f32 0.0, %v4416
      %v4418 = vpop.f32.mrb[0].mxu0
      %v4419 = vpop.f32.mrb[0].mxu0
      %v4420 = vadd.f32 0.0, %v4419
      %v4421 = vpop.f32.mrb[0].mxu0
      %4422 = vmatprep.mubr.bf16.mxu0 0
      %4423 = vmatmul.mubr.bf16.gmra.mrb[0].mxu0 %v4318
      %v4424 = vpop.f32.mrb[0].mxu0
      %v4425 = vadd.f32 0.0, %v4424
      %v4426 = vpop.f32.mrb[0].mxu0
      %v4427 = vpop.f32.mrb[0].mxu0
      %v4428 = vadd.f32 0.0, %v4427
      %v4429 = vpop.f32.mrb[0].mxu0
      %4430 = vmatprep.mubr.bf16.mxu0 0
      %4431 = vmatmul.mubr.bf16.gmra.mrb[0].mxu0 %v4321
      %v4432 = vpop.f32.mrb[0].mxu0
      %v4433 = vadd.f32 0.0, %v4432
      %v4434 = vpop.f32.mrb[0].mxu0
      %v4435 = vpop.f32.mrb[0].mxu0
      %v4436 = vadd.f32 0.0, %v4435
      %v4437 = vpop.f32.mrb[0].mxu0
      %4438 = vmatprep.mubr.bf16.mxu0 0
      %4439 = vmatmul.mubr.bf16.gmra.mrb[0].mxu0 %v4324
      %v4440 = vpop.f32.mrb[0].mxu0
      %v4441 = vadd.f32 0.0, %v4440
      %v4442 = vpop.f32.mrb[0].mxu0
      %v4443 = vpop.f32.mrb[0].mxu0
      %v4444 = vadd.f32 0.0, %v4443
      %v4445 = vpop.f32.mrb[0].mxu0
      %4446 = vmatprep.mubr.bf16.mxu0 0
      %4447 = vmatmul.mubr.bf16.gmra.mrb[0].mxu0 %v4327
      %v4448 = vpop.f32.mrb[0].mxu0
      %v4449 = vadd.f32 0.0, %v4448
      %v4450 = vpop.f32.mrb[0].mxu0
      %v4451 = vpop.f32.mrb[0].mxu0
      %v4452 = vadd.f32 0.0, %v4451
      %v4453 = vpop.f32.mrb[0].mxu0
      %4454 = vmatprep.mubr.bf16.mxu0 0
      %4455 = vmatmul.mubr.bf16.gmra.mrb[0].mxu0 %v4330
      %v4456 = vpop.f32.mrb[0].mxu0
      %v4457 = vadd.f32 0.0, %v4456
      %v4458 = vpop.f32.mrb[0].mxu0
      %v4459 = vpop.f32.mrb[0].mxu0
      %v4460 = vadd.f32 0.0, %v4459
      %v4461 = vpop.f32.mrb[0].mxu0
      %4462 = vmatprep.mubr.bf16.mxu0 0
      %4463 = vmatmul.mubr.bf16.gmra.mrb[0].mxu0 %v4333
      %v4464 = vpop.f32.mrb[0].mxu0
      %v4465 = vadd.f32 0.0, %v4464
      %v4466 = vpop.f32.mrb[0].mxu0
      %v4467 = vpop.f32.mrb[0].mxu0
      %v4468 = vadd.f32 0.0, %v4467
      %v4469 = vpop.f32.mrb[0].mxu0
      %4470 = vmatprep.mubr.bf16.mxu0 0
      %4471 = vmatmul.mubr.bf16.gmra.mrb[0].mxu0 %v4336
      %v4472 = vpop.f32.mrb[0].mxu0
      %v4473 = vadd.f32 0.0, %v4472
      %v4474 = vpop.f32.mrb[0].mxu0
      %v4475 = vpop.f32.mrb[0].mxu0
      %v4476 = vadd.f32 0.0, %v4475
      %v4477 = vpop.f32.mrb[0].mxu0
      %4478 = vmatprep.mubr.bf16.mxu0 0
      %4479 = vmatmul.mubr.bf16.gmra.mrb[0].mxu0 %v4339
      %v4480 = vpop.f32.mrb[0].mxu0
      %v4481 = vadd.f32 0.0, %v4480
      %v4482 = vpop.f32.mrb[0].mxu0
      %v4483 = vpop.f32.mrb[0].mxu0
      %v4484 = vadd.f32 0.0, %v4483
      %v4485 = vpop.f32.mrb[0].mxu0
      %4486 = vmatprep.mubr.bf16.mxu0 0
      %4487 = vmatmul.mubr.bf16.gmra.mrb[0].mxu0 %v4342
      %v4488 = vpop.f32.mrb[0].mxu0
      %v4489 = vadd.f32 0.0, %v4488
      %v4490 = vpop.f32.mrb[0].mxu0
      %v4491 = vpop.f32.mrb[0].mxu0
      %v4492 = vadd.f32 0.0, %v4491
      %v4493 = vpop.f32.mrb[0].mxu0
      %4494 = vmatprep.mubr.bf16.mxu0 0
      %4495 = vmatmul.mubr.bf16.gmra.mrb[0].mxu0 %v4345
      %v4496 = vpop.f32.mrb[0].mxu0
      %v4497 = vadd.f32 0.0, %v4496
      %v4498 = vpop.f32.mrb[0].mxu0
      %v4499 = vpop.f32.mrb[0].mxu0
      %v4500 = vadd.f32 0.0, %v4499
      %v4501 = vpop.f32.mrb[0].mxu0
      %4502 = vmatprep.mubr.bf16.mxu0 0
      %4503 = vmatmul.mubr.bf16.gmra.mrb[0].mxu0 %v4348
      %v4504 = vpop.f32.mrb[0].mxu0
      %v4505 = vadd.f32 0.0, %v4504
      %v4506 = vpop.f32.mrb[0].mxu0
      %v4507 = vpop.f32.mrb[0].mxu0
      %v4508 = vadd.f32 0.0, %v4507
      %v4509 = vpop.f32.mrb[0].mxu0
      %4510 = vdwg.mxu0
      %v4511 = vadd.f32 %v4204, %v4385
      %v4512 = vadd.f32 %v4205, %v4388
      %v4513 = vadd.f32 %v4206, %v4393
      %v4514 = vadd.f32 %v4207, %v4396
      %v4515 = vadd.f32 %v4208, %v4401
      %v4516 = vadd.f32 %v4209, %v4404
      %v4517 = vadd.f32 %v4210, %v4409
      %v4518 = vadd.f32 %v4211, %v4412
      %v4519 = vadd.f32 %v4212, %v4417
      %v4520 = vadd.f32 %v4213, %v4420
      %v4521 = vadd.f32 %v4214, %v4425
      %v4522 = vadd.f32 %v4215, %v4428
      %v4523 = vadd.f32 %v4216, %v4433
      %v4524 = vadd.f32 %v4217, %v4436
      %v4525 = vadd.f32 %v4218, %v4441
      %v4526 = vadd.f32 %v4219, %v4444
      %v4527 = vadd.f32 %v4220, %v4449
      %v4528 = vadd.f32 %v4221, %v4452
      %v4529 = vadd.f32 %v4222, %v4457
      %v4530 = vadd.f32 %v4223, %v4460
      %v4531 = vadd.f32 %v4224, %v4465
      %v4532 = vadd.f32 %v4225, %v4468
      %v4533 = vadd.f32 %v4226, %v4473
      %v4534 = vadd.f32 %v4227, %v4476
      %v4535 = vadd.f32 %v4228, %v4481
      %v4536 = vadd.f32 %v4229, %v4484
      %v4537 = vadd.f32 %v4230, %v4489
      %v4538 = vadd.f32 %v4231, %v4492
      %v4539 = vadd.f32 %v4232, %v4497
      %v4540 = vadd.f32 %v4233, %v4500
      %v4541 = vadd.f32 %v4234, %v4505
      %v4542 = vadd.f32 %v4235, %v4508
      %v4543 = vld [vmem:[%s4236 + $0x1] sm:$0xff]
      %v4544 = vld [vmem:[%s4236 + $0x9] sm:$0xff]
      %v4545 = vld [vmem:[%s4236 + $0x19] sm:$0xff]
      %v4546 = vld [vmem:[%s4236 + $0x21] sm:$0xff]
      %v4547 = vld [vmem:[%s4236 + $0x31] sm:$0xff]
      %v4548 = vld [vmem:[%s4236 + $0x39] sm:$0xff]
      %v4549 = vld [vmem:[%s4236 + $0x49] sm:$0xff]
      %v4550 = vld [vmem:[%s4236 + $0x51] sm:$0xff]
      %v4551 = vld [vmem:[%s4236 + $0x61] sm:$0xff]
      %v4552 = vld [vmem:[%s4236 + $0x69] sm:$0xff]
      %v4553 = vld [vmem:[%s4236 + $0x79] sm:$0xff]
      %v4554 = vld [vmem:[%s4236 + $0x81] sm:$0xff]
      %v4555 = vld [vmem:[%s4236 + $0x91] sm:$0xff]
      %v4556 = vld [vmem:[%s4236 + $0x99] sm:$0xff]
      %v4557 = vld [vmem:[%s4236 + $0xa9] sm:$0xff]
      %v4558 = vld [vmem:[%s4236 + $0xb1] sm:$0xff]
      %v4559 = vld [vmem:[%s4236 + $0xc1] sm:$0xff]
      %v4560 = vld [vmem:[%s4236 + $0xc9] sm:$0xff]
      %v4561 = vld [vmem:[%s4236 + $0xd9] sm:$0xff]
      %v4562 = vld [vmem:[%s4236 + $0xe1] sm:$0xff]
      %v4563 = vld [vmem:[%s4236 + $0xf1] sm:$0xff]
      %v4564 = vld [vmem:[%s4236 + $0xf9] sm:$0xff]
      %v4565 = vld [vmem:[%s4236 + $0x109] sm:$0xff]
      %v4566 = vld [vmem:[%s4236 + $0x111] sm:$0xff]
      %v4567 = vld [vmem:[%s4236 + $0x121] sm:$0xff]
      %v4568 = vld [vmem:[%s4236 + $0x129] sm:$0xff]
      %v4569 = vld [vmem:[%s4236 + $0x139] sm:$0xff]
      %v4570 = vld [vmem:[%s4236 + $0x141] sm:$0xff]
      %v4571 = vld [vmem:[%s4236 + $0x151] sm:$0xff]
      %v4572 = vld [vmem:[%s4236 + $0x159] sm:$0xff]
      %v4573 = vld [vmem:[%s4236 + $0x169] sm:$0xff]
      %v4574 = vld [vmem:[%s4236 + $0x171] sm:$0xff]
      %v4575 = vpack.c.bf16 %v4544, %v4543
      %v4576 = vpack.c.bf16 %v4546, %v4545
      %v4577 = vpack.c.bf16 %v4548, %v4547
      %v4578 = vpack.c.bf16 %v4550, %v4549
      %v4579 = vpack.c.bf16 %v4552, %v4551
      %v4580 = vpack.c.bf16 %v4554, %v4553
      %v4581 = vpack.c.bf16 %v4556, %v4555
      %v4582 = vpack.c.bf16 %v4558, %v4557
      %v4583 = vpack.c.bf16 %v4560, %v4559
      %v4584 = vpack.c.bf16 %v4562, %v4561
      %v4585 = vpack.c.bf16 %v4564, %v4563
      %v4586 = vpack.c.bf16 %v4566, %v4565
      %v4587 = vpack.c.bf16 %v4568, %v4567
      %v4588 = vpack.c.bf16 %v4570, %v4569
      %v4589 = vpack.c.bf16 %v4572, %v4571
      %v4590 = vpack.c.bf16 %v4574, %v4573
      %s4591 = scalar_lea.vmem %s4, 112
      %v4592 = vld [vmem:[%s4591] sm:$0xf]
      %v4593 = vld [vmem:[%s4591 + $0x4] sm:$0xf]
      %v4594 = vld [vmem:[%s4591 + $0x8] sm:$0xf]
      %v4595 = vld [vmem:[%s4591 + $0xc] sm:$0xf]
      %v4600 = vunpack.c.l.b16 %v4592
      %v4601 = vunpack.c.l.b16 %v4593
      %v4602 = vunpack.c.l.b16 %v4594
      %v4603 = vunpack.c.l.b16 %v4595
      %v4604 = vpack.c.b16 %v4601, %v4600
      %v4605 = vpack.c.b16 %v4603, %v4602
      %v4609 = vsel %vm413, %v4575, 0
      %v4612 = vsel %vm413, %v4576, 0
      %v4615 = vsel %vm413, %v4577, 0
      %v4618 = vsel %vm413, %v4578, 0
      %v4621 = vsel %vm413, %v4579, 0
      %v4624 = vsel %vm413, %v4580, 0
      %v4627 = vsel %vm413, %v4581, 0
      %v4630 = vsel %vm413, %v4582, 0
      %v4633 = vsel %vm413, %v4583, 0
      %v4636 = vsel %vm413, %v4584, 0
      %v4639 = vsel %vm413, %v4585, 0
      %v4642 = vsel %vm413, %v4586, 0
      %v4645 = vsel %vm413, %v4587, 0
      %v4648 = vsel %vm413, %v4588, 0
      %v4651 = vsel %vm413, %v4589, 0
      %v4654 = vsel %vm413, %v4590, 0
      %4656 = vmatprep.subr.bf16.mxu0 0
      %4657 = vmatpush1.bf16.msra.mxu0 %v4604
      %4658 = vmatprep.subr.bf16.mxu0 0
      %4659 = vmatpush1.bf16.msra.mxu0 %v4605
      %4660 = vmatprep.subr.bf16.mxu0 0
      %4661 = vmatpush1.bf16.msra.mxu0 0
      %4662 = vmatprep.subr.bf16.mxu0 0
      %4663 = vmatpush1.bf16.msra.mxu0 0
      %4664 = vmatprep.subr.bf16.mxu0 0
      %4665 = vmatpush1.bf16.msra.mxu0 0
      %4666 = vmatprep.subr.bf16.mxu0 0
      %4667 = vmatpush1.bf16.msra.mxu0 0
      %4668 = vmatprep.subr.bf16.mxu0 0
      %4669 = vmatpush1.bf16.msra.mxu0 0
      %4670 = vmatprep.subr.bf16.mxu0 0
      %4671 = vmatpush1.bf16.msra.mxu0 0
      %4672 = vmatprep.subr.bf16.mxu0 0
      %4673 = vmatpush1.bf16.msra.mxu0 0
      %4674 = vmatprep.subr.bf16.mxu0 0
      %4675 = vmatpush1.bf16.msra.mxu0 0
      %4676 = vmatprep.subr.bf16.mxu0 0
      %4677 = vmatpush1.bf16.msra.mxu0 0
      %4678 = vmatprep.subr.bf16.mxu0 0
      %4679 = vmatpush1.bf16.msra.mxu0 0
      %4680 = vmatprep.subr.bf16.mxu0 0
      %4681 = vmatpush1.bf16.msra.mxu0 0
      %4682 = vmatprep.subr.bf16.mxu0 0
      %4683 = vmatpush1.bf16.msra.mxu0 0
      %4684 = vmatprep.subr.bf16.mxu0 0
      %4685 = vmatpush1.bf16.msra.mxu0 0
      %4686 = vmatprep.subr.bf16.mxu0 0
      %4687 = vmatpush1.bf16.msra.mxu0 0
      %4688 = vmatprep.mubr.bf16.mxu0 0
      %4689 = vmatmul.mubr.bf16.gmra.mrb[0].mxu0 %v4609
      %v4690 = vpop.f32.mrb[0].mxu0
      %v4691 = vadd.f32 0.0, %v4690
      %v4692 = vpop.f32.mrb[0].mxu0
      %v4693 = vpop.f32.mrb[0].mxu0
      %v4694 = vadd.f32 0.0, %v4693
      %v4695 = vpop.f32.mrb[0].mxu0
      %4696 = vmatprep.mubr.bf16.mxu0 0
      %4697 = vmatmul.mubr.bf16.gmra.mrb[0].mxu0 %v4612
      %v4698 = vpop.f32.mrb[0].mxu0
      %v4699 = vadd.f32 0.0, %v4698
      %v4700 = vpop.f32.mrb[0].mxu0
      %v4701 = vpop.f32.mrb[0].mxu0
      %v4702 = vadd.f32 0.0, %v4701
      %v4703 = vpop.f32.mrb[0].mxu0
      %4704 = vmatprep.mubr.bf16.mxu0 0
      %4705 = vmatmul.mubr.bf16.gmra.mrb[0].mxu0 %v4615
      %v4706 = vpop.f32.mrb[0].mxu0
      %v4707 = vadd.f32 0.0, %v4706
      %v4708 = vpop.f32.mrb[0].mxu0
      %v4709 = vpop.f32.mrb[0].mxu0
      %v4710 = vadd.f32 0.0, %v4709
      %v4711 = vpop.f32.mrb[0].mxu0
      %4712 = vmatprep.mubr.bf16.mxu0 0
      %4713 = vmatmul.mubr.bf16.gmra.mrb[0].mxu0 %v4618
      %v4714 = vpop.f32.mrb[0].mxu0
      %v4715 = vadd.f32 0.0, %v4714
      %v4716 = vpop.f32.mrb[0].mxu0
      %v4717 = vpop.f32.mrb[0].mxu0
      %v4718 = vadd.f32 0.0, %v4717
      %v4719 = vpop.f32.mrb[0].mxu0
      %4720 = vmatprep.mubr.bf16.mxu0 0
      %4721 = vmatmul.mubr.bf16.gmra.mrb[0].mxu0 %v4621
      %v4722 = vpop.f32.mrb[0].mxu0
      %v4723 = vadd.f32 0.0, %v4722
      %v4724 = vpop.f32.mrb[0].mxu0
      %v4725 = vpop.f32.mrb[0].mxu0
      %v4726 = vadd.f32 0.0, %v4725
      %v4727 = vpop.f32.mrb[0].mxu0
      %4728 = vmatprep.mubr.bf16.mxu0 0
      %4729 = vmatmul.mubr.bf16.gmra.mrb[0].mxu0 %v4624
      %v4730 = vpop.f32.mrb[0].mxu0
      %v4731 = vadd.f32 0.0, %v4730
      %v4732 = vpop.f32.mrb[0].mxu0
      %v4733 = vpop.f32.mrb[0].mxu0
      %v4734 = vadd.f32 0.0, %v4733
      %v4735 = vpop.f32.mrb[0].mxu0
      %4736 = vmatprep.mubr.bf16.mxu0 0
      %4737 = vmatmul.mubr.bf16.gmra.mrb[0].mxu0 %v4627
      %v4738 = vpop.f32.mrb[0].mxu0
      %v4739 = vadd.f32 0.0, %v4738
      %v4740 = vpop.f32.mrb[0].mxu0
      %v4741 = vpop.f32.mrb[0].mxu0
      %v4742 = vadd.f32 0.0, %v4741
      %v4743 = vpop.f32.mrb[0].mxu0
      %4744 = vmatprep.mubr.bf16.mxu0 0
      %4745 = vmatmul.mubr.bf16.gmra.mrb[0].mxu0 %v4630
      %v4746 = vpop.f32.mrb[0].mxu0
      %v4747 = vadd.f32 0.0, %v4746
      %v4748 = vpop.f32.mrb[0].mxu0
      %v4749 = vpop.f32.mrb[0].mxu0
      %v4750 = vadd.f32 0.0, %v4749
      %v4751 = vpop.f32.mrb[0].mxu0
      %4752 = vmatprep.mubr.bf16.mxu0 0
      %4753 = vmatmul.mubr.bf16.gmra.mrb[0].mxu0 %v4633
      %v4754 = vpop.f32.mrb[0].mxu0
      %v4755 = vadd.f32 0.0, %v4754
      %v4756 = vpop.f32.mrb[0].mxu0
      %v4757 = vpop.f32.mrb[0].mxu0
      %v4758 = vadd.f32 0.0, %v4757
      %v4759 = vpop.f32.mrb[0].mxu0
      %4760 = vmatprep.mubr.bf16.mxu0 0
      %4761 = vmatmul.mubr.bf16.gmra.mrb[0].mxu0 %v4636
      %v4762 = vpop.f32.mrb[0].mxu0
      %v4763 = vadd.f32 0.0, %v4762
      %v4764 = vpop.f32.mrb[0].mxu0
      %v4765 = vpop.f32.mrb[0].mxu0
      %v4766 = vadd.f32 0.0, %v4765
      %v4767 = vpop.f32.mrb[0].mxu0
      %4768 = vmatprep.mubr.bf16.mxu0 0
      %4769 = vmatmul.mubr.bf16.gmra.mrb[0].mxu0 %v4639
      %v4770 = vpop.f32.mrb[0].mxu0
      %v4771 = vadd.f32 0.0, %v4770
      %v4772 = vpop.f32.mrb[0].mxu0
      %v4773 = vpop.f32.mrb[0].mxu0
      %v4774 = vadd.f32 0.0, %v4773
      %v4775 = vpop.f32.mrb[0].mxu0
      %4776 = vmatprep.mubr.bf16.mxu0 0
      %4777 = vmatmul.mubr.bf16.gmra.mrb[0].mxu0 %v4642
      %v4778 = vpop.f32.mrb[0].mxu0
      %v4779 = vadd.f32 0.0, %v4778
      %v4780 = vpop.f32.mrb[0].mxu0
      %v4781 = vpop.f32.mrb[0].mxu0
      %v4782 = vadd.f32 0.0, %v4781
      %v4783 = vpop.f32.mrb[0].mxu0
      %4784 = vmatprep.mubr.bf16.mxu0 0
      %4785 = vmatmul.mubr.bf16.gmra.mrb[0].mxu0 %v4645
      %v4786 = vpop.f32.mrb[0].mxu0
      %v4787 = vadd.f32 0.0, %v4786
      %v4788 = vpop.f32.mrb[0].mxu0
      %v4789 = vpop.f32.mrb[0].mxu0
      %v4790 = vadd.f32 0.0, %v4789
      %v4791 = vpop.f32.mrb[0].mxu0
      %4792 = vmatprep.mubr.bf16.mxu0 0
      %4793 = vmatmul.mubr.bf16.gmra.mrb[0].mxu0 %v4648
      %v4794 = vpop.f32.mrb[0].mxu0
      %v4795 = vadd.f32 0.0, %v4794
      %v4796 = vpop.f32.mrb[0].mxu0
      %v4797 = vpop.f32.mrb[0].mxu0
      %v4798 = vadd.f32 0.0, %v4797
      %v4799 = vpop.f32.mrb[0].mxu0
      %4800 = vmatprep.mubr.bf16.mxu0 0
      %4801 = vmatmul.mubr.bf16.gmra.mrb[0].mxu0 %v4651
      %v4802 = vpop.f32.mrb[0].mxu0
      %v4803 = vadd.f32 0.0, %v4802
      %v4804 = vpop.f32.mrb[0].mxu0
      %v4805 = vpop.f32.mrb[0].mxu0
      %v4806 = vadd.f32 0.0, %v4805
      %v4807 = vpop.f32.mrb[0].mxu0
      %4808 = vmatprep.mubr.bf16.mxu0 0
      %4809 = vmatmul.mubr.bf16.gmra.mrb[0].mxu0 %v4654
      %v4810 = vpop.f32.mrb[0].mxu0
      %v4811 = vadd.f32 0.0, %v4810
      %v4812 = vpop.f32.mrb[0].mxu0
      %v4813 = vpop.f32.mrb[0].mxu0
      %v4814 = vadd.f32 0.0, %v4813
      %v4815 = vpop.f32.mrb[0].mxu0
      %4816 = vdwg.mxu0
      %v4817 = vadd.f32 %v4511, %v4691
      %v4818 = vadd.f32 %v4512, %v4694
      %v4819 = vadd.f32 %v4513, %v4699
      %v4820 = vadd.f32 %v4514, %v4702
      %v4821 = vadd.f32 %v4515, %v4707
      %v4822 = vadd.f32 %v4516, %v4710
      %v4823 = vadd.f32 %v4517, %v4715
      %v4824 = vadd.f32 %v4518, %v4718
      %v4825 = vadd.f32 %v4519, %v4723
      %v4826 = vadd.f32 %v4520, %v4726
      %v4827 = vadd.f32 %v4521, %v4731
      %v4828 = vadd.f32 %v4522, %v4734
      %v4829 = vadd.f32 %v4523, %v4739
      %v4830 = vadd.f32 %v4524, %v4742
      %v4831 = vadd.f32 %v4525, %v4747
      %v4832 = vadd.f32 %v4526, %v4750
      %v4833 = vadd.f32 %v4527, %v4755
      %v4834 = vadd.f32 %v4528, %v4758
      %v4835 = vadd.f32 %v4529, %v4763
      %v4836 = vadd.f32 %v4530, %v4766
      %v4837 = vadd.f32 %v4531, %v4771
      %v4838 = vadd.f32 %v4532, %v4774
      %v4839 = vadd.f32 %v4533, %v4779
      %v4840 = vadd.f32 %v4534, %v4782
      %v4841 = vadd.f32 %v4535, %v4787
      %v4842 = vadd.f32 %v4536, %v4790
      %v4843 = vadd.f32 %v4537, %v4795
      %v4844 = vadd.f32 %v4538, %v4798
      %v4845 = vadd.f32 %v4539, %v4803
      %v4846 = vadd.f32 %v4540, %v4806
      %v4847 = vadd.f32 %v4541, %v4811
      %v4848 = vadd.f32 %v4542, %v4814
      %v4849 = vld [vmem:[%s4236 + $0x2] sm:$0xff]
      %v4850 = vld [vmem:[%s4236 + $0xa] sm:$0xff]
      %v4851 = vld [vmem:[%s4236 + $0x1a] sm:$0xff]
      %v4852 = vld [vmem:[%s4236 + $0x22] sm:$0xff]
      %v4853 = vld [vmem:[%s4236 + $0x32] sm:$0xff]
      %v4854 = vld [vmem:[%s4236 + $0x3a] sm:$0xff]
      %v4855 = vld [vmem:[%s4236 + $0x4a] sm:$0xff]
      %v4856 = vld [vmem:[%s4236 + $0x52] sm:$0xff]
      %v4857 = vld [vmem:[%s4236 + $0x62] sm:$0xff]
      %v4858 = vld [vmem:[%s4236 + $0x6a] sm:$0xff]
      %v4859 = vld [vmem:[%s4236 + $0x7a] sm:$0xff]
      %v4860 = vld [vmem:[%s4236 + $0x82] sm:$0xff]
      %v4861 = vld [vmem:[%s4236 + $0x92] sm:$0xff]
      %v4862 = vld [vmem:[%s4236 + $0x9a] sm:$0xff]
      %v4863 = vld [vmem:[%s4236 + $0xaa] sm:$0xff]
      %v4864 = vld [vmem:[%s4236 + $0xb2] sm:$0xff]
      %v4865 = vld [vmem:[%s4236 + $0xc2] sm:$0xff]
      %v4866 = vld [vmem:[%s4236 + $0xca] sm:$0xff]
      %v4867 = vld [vmem:[%s4236 + $0xda] sm:$0xff]
      %v4868 = vld [vmem:[%s4236 + $0xe2] sm:$0xff]
      %v4869 = vld [vmem:[%s4236 + $0xf2] sm:$0xff]
      %v4870 = vld [vmem:[%s4236 + $0xfa] sm:$0xff]
      %v4871 = vld [vmem:[%s4236 + $0x10a] sm:$0xff]
      %v4872 = vld [vmem:[%s4236 + $0x112] sm:$0xff]
      %v4873 = vld [vmem:[%s4236 + $0x122] sm:$0xff]
      %v4874 = vld [vmem:[%s4236 + $0x12a] sm:$0xff]
      %v4875 = vld [vmem:[%s4236 + $0x13a] sm:$0xff]
      %v4876 = vld [vmem:[%s4236 + $0x142] sm:$0xff]
      %v4877 = vld [vmem:[%s4236 + $0x152] sm:$0xff]
      %v4878 = vld [vmem:[%s4236 + $0x15a] sm:$0xff]
      %v4879 = vld [vmem:[%s4236 + $0x16a] sm:$0xff]
      %v4880 = vld [vmem:[%s4236 + $0x172] sm:$0xff]
      %v4881 = vpack.c.bf16 %v4850, %v4849
      %v4882 = vpack.c.bf16 %v4852, %v4851
      %v4883 = vpack.c.bf16 %v4854, %v4853
      %v4884 = vpack.c.bf16 %v4856, %v4855
      %v4885 = vpack.c.bf16 %v4858, %v4857
      %v4886 = vpack.c.bf16 %v4860, %v4859
      %v4887 = vpack.c.bf16 %v4862, %v4861
      %v4888 = vpack.c.bf16 %v4864, %v4863
      %v4889 = vpack.c.bf16 %v4866, %v4865
      %v4890 = vpack.c.bf16 %v4868, %v4867
      %v4891 = vpack.c.bf16 %v4870, %v4869
      %v4892 = vpack.c.bf16 %v4872, %v4871
      %v4893 = vpack.c.bf16 %v4874, %v4873
      %v4894 = vpack.c.bf16 %v4876, %v4875
      %v4895 = vpack.c.bf16 %v4878, %v4877
      %v4896 = vpack.c.bf16 %v4880, %v4879
      %s4897 = scalar_lea.vmem %s4, 128
      %v4898 = vld [vmem:[%s4897] sm:$0xf]
      %v4899 = vld [vmem:[%s4897 + $0x4] sm:$0xf]
      %v4900 = vld [vmem:[%s4897 + $0x8] sm:$0xf]
      %v4901 = vld [vmem:[%s4897 + $0xc] sm:$0xf]
      %v4906 = vunpack.c.l.b16 %v4898
      %v4907 = vunpack.c.l.b16 %v4899
      %v4908 = vunpack.c.l.b16 %v4900
      %v4909 = vunpack.c.l.b16 %v4901
      %v4910 = vpack.c.b16 %v4907, %v4906
      %v4911 = vpack.c.b16 %v4909, %v4908
      %v4915 = vsel %vm413, %v4881, 0
      %v4918 = vsel %vm413, %v4882, 0
      %v4921 = vsel %vm413, %v4883, 0
      %v4924 = vsel %vm413, %v4884, 0
      %v4927 = vsel %vm413, %v4885, 0
      %v4930 = vsel %vm413, %v4886, 0
      %v4933 = vsel %vm413, %v4887, 0
      %v4936 = vsel %vm413, %v4888, 0
      %v4939 = vsel %vm413, %v4889, 0
      %v4942 = vsel %vm413, %v4890, 0
      %v4945 = vsel %vm413, %v4891, 0
      %v4948 = vsel %vm413, %v4892, 0
      %v4951 = vsel %vm413, %v4893, 0
      %v4954 = vsel %vm413, %v4894, 0
      %v4957 = vsel %vm413, %v4895, 0
      %v4960 = vsel %vm413, %v4896, 0
      %4962 = vmatprep.subr.bf16.mxu0 0
      %4963 = vmatpush1.bf16.msra.mxu0 %v4910
      %4964 = vmatprep.subr.bf16.mxu0 0
      %4965 = vmatpush1.bf16.msra.mxu0 %v4911
      %4966 = vmatprep.subr.bf16.mxu0 0
      %4967 = vmatpush1.bf16.msra.mxu0 0
      %4968 = vmatprep.subr.bf16.mxu0 0
      %4969 = vmatpush1.bf16.msra.mxu0 0
      %4970 = vmatprep.subr.bf16.mxu0 0
      %4971 = vmatpush1.bf16.msra.mxu0 0
      %4972 = vmatprep.subr.bf16.mxu0 0
      %4973 = vmatpush1.bf16.msra.mxu0 0
      %4974 = vmatprep.subr.bf16.mxu0 0
      %4975 = vmatpush1.bf16.msra.mxu0 0
      %4976 = vmatprep.subr.bf16.mxu0 0
      %4977 = vmatpush1.bf16.msra.mxu0 0
      %4978 = vmatprep.subr.bf16.mxu0 0
      %4979 = vmatpush1.bf16.msra.mxu0 0
      %4980 = vmatprep.subr.bf16.mxu0 0
      %4981 = vmatpush1.bf16.msra.mxu0 0
      %4982 = vmatprep.subr.bf16.mxu0 0
      %4983 = vmatpush1.bf16.msra.mxu0 0
      %4984 = vmatprep.subr.bf16.mxu0 0
      %4985 = vmatpush1.bf16.msra.mxu0 0
      %4986 = vmatprep.subr.bf16.mxu0 0
      %4987 = vmatpush1.bf16.msra.mxu0 0
      %4988 = vmatprep.subr.bf16.mxu0 0
      %4989 = vmatpush1.bf16.msra.mxu0 0
      %4990 = vmatprep.subr.bf16.mxu0 0
      %4991 = vmatpush1.bf16.msra.mxu0 0
      %4992 = vmatprep.subr.bf16.mxu0 0
      %4993 = vmatpush1.bf16.msra.mxu0 0
      %4994 = vmatprep.mubr.bf16.mxu0 0
      %4995 = vmatmul.mubr.bf16.gmra.mrb[0].mxu0 %v4915
      %v4996 = vpop.f32.mrb[0].mxu0
      %v4997 = vadd.f32 0.0, %v4996
      %v4998 = vpop.f32.mrb[0].mxu0
      %v4999 = vpop.f32.mrb[0].mxu0
      %v5000 = vadd.f32 0.0, %v4999
      %v5001 = vpop.f32.mrb[0].mxu0
      %5002 = vmatprep.mubr.bf16.mxu0 0
      %5003 = vmatmul.mubr.bf16.gmra.mrb[0].mxu0 %v4918
      %v5004 = vpop.f32.mrb[0].mxu0
      %v5005 = vadd.f32 0.0, %v5004
      %v5006 = vpop.f32.mrb[0].mxu0
      %v5007 = vpop.f32.mrb[0].mxu0
      %v5008 = vadd.f32 0.0, %v5007
      %v5009 = vpop.f32.mrb[0].mxu0
      %5010 = vmatprep.mubr.bf16.mxu0 0
      %5011 = vmatmul.mubr.bf16.gmra.mrb[0].mxu0 %v4921
      %v5012 = vpop.f32.mrb[0].mxu0
      %v5013 = vadd.f32 0.0, %v5012
      %v5014 = vpop.f32.mrb[0].mxu0
      %v5015 = vpop.f32.mrb[0].mxu0
      %v5016 = vadd.f32 0.0, %v5015
      %v5017 = vpop.f32.mrb[0].mxu0
      %5018 = vmatprep.mubr.bf16.mxu0 0
      %5019 = vmatmul.mubr.bf16.gmra.mrb[0].mxu0 %v4924
      %v5020 = vpop.f32.mrb[0].mxu0
      %v5021 = vadd.f32 0.0, %v5020
      %v5022 = vpop.f32.mrb[0].mxu0
      %v5023 = vpop.f32.mrb[0].mxu0
      %v5024 = vadd.f32 0.0, %v5023
      %v5025 = vpop.f32.mrb[0].mxu0
      %5026 = vmatprep.mubr.bf16.mxu0 0
      %5027 = vmatmul.mubr.bf16.gmra.mrb[0].mxu0 %v4927
      %v5028 = vpop.f32.mrb[0].mxu0
      %v5029 = vadd.f32 0.0, %v5028
      %v5030 = vpop.f32.mrb[0].mxu0
      %v5031 = vpop.f32.mrb[0].mxu0
      %v5032 = vadd.f32 0.0, %v5031
      %v5033 = vpop.f32.mrb[0].mxu0
      %5034 = vmatprep.mubr.bf16.mxu0 0
      %5035 = vmatmul.mubr.bf16.gmra.mrb[0].mxu0 %v4930
      %v5036 = vpop.f32.mrb[0].mxu0
      %v5037 = vadd.f32 0.0, %v5036
      %v5038 = vpop.f32.mrb[0].mxu0
      %v5039 = vpop.f32.mrb[0].mxu0
      %v5040 = vadd.f32 0.0, %v5039
      %v5041 = vpop.f32.mrb[0].mxu0
      %5042 = vmatprep.mubr.bf16.mxu0 0
      %5043 = vmatmul.mubr.bf16.gmra.mrb[0].mxu0 %v4933
      %v5044 = vpop.f32.mrb[0].mxu0
      %v5045 = vadd.f32 0.0, %v5044
      %v5046 = vpop.f32.mrb[0].mxu0
      %v5047 = vpop.f32.mrb[0].mxu0
      %v5048 = vadd.f32 0.0, %v5047
      %v5049 = vpop.f32.mrb[0].mxu0
      %5050 = vmatprep.mubr.bf16.mxu0 0
      %5051 = vmatmul.mubr.bf16.gmra.mrb[0].mxu0 %v4936
      %v5052 = vpop.f32.mrb[0].mxu0
      %v5053 = vadd.f32 0.0, %v5052
      %v5054 = vpop.f32.mrb[0].mxu0
      %v5055 = vpop.f32.mrb[0].mxu0
      %v5056 = vadd.f32 0.0, %v5055
      %v5057 = vpop.f32.mrb[0].mxu0
      %5058 = vmatprep.mubr.bf16.mxu0 0
      %5059 = vmatmul.mubr.bf16.gmra.mrb[0].mxu0 %v4939
      %v5060 = vpop.f32.mrb[0].mxu0
      %v5061 = vadd.f32 0.0, %v5060
      %v5062 = vpop.f32.mrb[0].mxu0
      %v5063 = vpop.f32.mrb[0].mxu0
      %v5064 = vadd.f32 0.0, %v5063
      %v5065 = vpop.f32.mrb[0].mxu0
      %5066 = vmatprep.mubr.bf16.mxu0 0
      %5067 = vmatmul.mubr.bf16.gmra.mrb[0].mxu0 %v4942
      %v5068 = vpop.f32.mrb[0].mxu0
      %v5069 = vadd.f32 0.0, %v5068
      %v5070 = vpop.f32.mrb[0].mxu0
      %v5071 = vpop.f32.mrb[0].mxu0
      %v5072 = vadd.f32 0.0, %v5071
      %v5073 = vpop.f32.mrb[0].mxu0
      %5074 = vmatprep.mubr.bf16.mxu0 0
      %5075 = vmatmul.mubr.bf16.gmra.mrb[0].mxu0 %v4945
      %v5076 = vpop.f32.mrb[0].mxu0
      %v5077 = vadd.f32 0.0, %v5076
      %v5078 = vpop.f32.mrb[0].mxu0
      %v5079 = vpop.f32.mrb[0].mxu0
      %v5080 = vadd.f32 0.0, %v5079
      %v5081 = vpop.f32.mrb[0].mxu0
      %5082 = vmatprep.mubr.bf16.mxu0 0
      %5083 = vmatmul.mubr.bf16.gmra.mrb[0].mxu0 %v4948
      %v5084 = vpop.f32.mrb[0].mxu0
      %v5085 = vadd.f32 0.0, %v5084
      %v5086 = vpop.f32.mrb[0].mxu0
      %v5087 = vpop.f32.mrb[0].mxu0
      %v5088 = vadd.f32 0.0, %v5087
      %v5089 = vpop.f32.mrb[0].mxu0
      %5090 = vmatprep.mubr.bf16.mxu0 0
      %5091 = vmatmul.mubr.bf16.gmra.mrb[0].mxu0 %v4951
      %v5092 = vpop.f32.mrb[0].mxu0
      %v5093 = vadd.f32 0.0, %v5092
      %v5094 = vpop.f32.mrb[0].mxu0
      %v5095 = vpop.f32.mrb[0].mxu0
      %v5096 = vadd.f32 0.0, %v5095
      %v5097 = vpop.f32.mrb[0].mxu0
      %5098 = vmatprep.mubr.bf16.mxu0 0
      %5099 = vmatmul.mubr.bf16.gmra.mrb[0].mxu0 %v4954
      %v5100 = vpop.f32.mrb[0].mxu0
      %v5101 = vadd.f32 0.0, %v5100
      %v5102 = vpop.f32.mrb[0].mxu0
      %v5103 = vpop.f32.mrb[0].mxu0
      %v5104 = vadd.f32 0.0, %v5103
      %v5105 = vpop.f32.mrb[0].mxu0
      %5106 = vmatprep.mubr.bf16.mxu0 0
      %5107 = vmatmul.mubr.bf16.gmra.mrb[0].mxu0 %v4957
      %v5108 = vpop.f32.mrb[0].mxu0
      %v5109 = vadd.f32 0.0, %v5108
      %v5110 = vpop.f32.mrb[0].mxu0
      %v5111 = vpop.f32.mrb[0].mxu0
      %v5112 = vadd.f32 0.0, %v5111
      %v5113 = vpop.f32.mrb[0].mxu0
      %5114 = vmatprep.mubr.bf16.mxu0 0
      %5115 = vmatmul.mubr.bf16.gmra.mrb[0].mxu0 %v4960
      %v5116 = vpop.f32.mrb[0].mxu0
      %v5117 = vadd.f32 0.0, %v5116
      %v5118 = vpop.f32.mrb[0].mxu0
      %v5119 = vpop.f32.mrb[0].mxu0
      %v5120 = vadd.f32 0.0, %v5119
      %v5121 = vpop.f32.mrb[0].mxu0
      %5122 = vdwg.mxu0
      %v5123 = vadd.f32 %v4817, %v4997
      %v5124 = vadd.f32 %v4818, %v5000
      %v5125 = vadd.f32 %v4819, %v5005
      %v5126 = vadd.f32 %v4820, %v5008
      %v5127 = vadd.f32 %v4821, %v5013
      %v5128 = vadd.f32 %v4822, %v5016
      %v5129 = vadd.f32 %v4823, %v5021
      %v5130 = vadd.f32 %v4824, %v5024
      %v5131 = vadd.f32 %v4825, %v5029
      %v5132 = vadd.f32 %v4826, %v5032
      %v5133 = vadd.f32 %v4827, %v5037
      %v5134 = vadd.f32 %v4828, %v5040
      %v5135 = vadd.f32 %v4829, %v5045
      %v5136 = vadd.f32 %v4830, %v5048
      %v5137 = vadd.f32 %v4831, %v5053
      %v5138 = vadd.f32 %v4832, %v5056
      %v5139 = vadd.f32 %v4833, %v5061
      %v5140 = vadd.f32 %v4834, %v5064
      %v5141 = vadd.f32 %v4835, %v5069
      %v5142 = vadd.f32 %v4836, %v5072
      %v5143 = vadd.f32 %v4837, %v5077
      %v5144 = vadd.f32 %v4838, %v5080
      %v5145 = vadd.f32 %v4839, %v5085
      %v5146 = vadd.f32 %v4840, %v5088
      %v5147 = vadd.f32 %v4841, %v5093
      %v5148 = vadd.f32 %v4842, %v5096
      %v5149 = vadd.f32 %v4843, %v5101
      %v5150 = vadd.f32 %v4844, %v5104
      %v5151 = vadd.f32 %v4845, %v5109
      %v5152 = vadd.f32 %v4846, %v5112
      %v5153 = vadd.f32 %v4847, %v5117
      %v5154 = vadd.f32 %v4848, %v5120
      %v5156 = vlaneseq
      %v5157 = vshrl.u32 %v5156, 7
      %v5158 = vsub.s32 0, %v5157
      %v5159 = vrot.slane %v2463, %v5158
      %v5161 = vmul.f32 %v5123, %v5159
      %v5162 = vmul.f32 %v5124, %v5159
      %v5163 = vmul.f32 %v5125, %v5159
      %v5164 = vmul.f32 %v5126, %v5159
      %v5165 = vmul.f32 %v5127, %v5159
      %v5166 = vmul.f32 %v5128, %v5159
      %v5167 = vmul.f32 %v5129, %v5159
      %v5168 = vmul.f32 %v5130, %v5159
      %v5169 = vmul.f32 %v5131, %v5159
      %v5170 = vmul.f32 %v5132, %v5159
      %v5171 = vmul.f32 %v5133, %v5159
      %v5172 = vmul.f32 %v5134, %v5159
      %v5173 = vmul.f32 %v5135, %v5159
      %v5174 = vmul.f32 %v5136, %v5159
      %v5175 = vmul.f32 %v5137, %v5159
      %v5176 = vmul.f32 %v5138, %v5159
      %v5177 = vmul.f32 %v5139, %v5159
      %v5178 = vmul.f32 %v5140, %v5159
      %v5179 = vmul.f32 %v5141, %v5159
      %v5180 = vmul.f32 %v5142, %v5159
      %v5181 = vmul.f32 %v5143, %v5159
      %v5182 = vmul.f32 %v5144, %v5159
      %v5183 = vmul.f32 %v5145, %v5159
      %v5184 = vmul.f32 %v5146, %v5159
      %v5185 = vmul.f32 %v5147, %v5159
      %v5186 = vmul.f32 %v5148, %v5159
      %v5187 = vmul.f32 %v5149, %v5159
      %v5188 = vmul.f32 %v5150, %v5159
      %v5189 = vmul.f32 %v5151, %v5159
      %v5190 = vmul.f32 %v5152, %v5159
      %v5191 = vmul.f32 %v5153, %v5159
      %v5192 = vmul.f32 %v5154, %v5159
      %v5194 = vlaneseq
      %v5195 = vshrl.u32 %v5194, 7
      %v5196 = vsub.s32 0, %v5195
      %v5197 = vrot.slane %v2464, %v5196
      %v5199 = vadd.f32 %v5161, %v5197
      %v5200 = vadd.f32 %v5162, %v5197
      %v5201 = vadd.f32 %v5163, %v5197
      %v5202 = vadd.f32 %v5164, %v5197
      %v5203 = vadd.f32 %v5165, %v5197
      %v5204 = vadd.f32 %v5166, %v5197
      %v5205 = vadd.f32 %v5167, %v5197
      %v5206 = vadd.f32 %v5168, %v5197
      %v5207 = vadd.f32 %v5169, %v5197
      %v5208 = vadd.f32 %v5170, %v5197
      %v5209 = vadd.f32 %v5171, %v5197
      %v5210 = vadd.f32 %v5172, %v5197
      %v5211 = vadd.f32 %v5173, %v5197
      %v5212 = vadd.f32 %v5174, %v5197
      %v5213 = vadd.f32 %v5175, %v5197
      %v5214 = vadd.f32 %v5176, %v5197
      %v5215 = vadd.f32 %v5177, %v5197
      %v5216 = vadd.f32 %v5178, %v5197
      %v5217 = vadd.f32 %v5179, %v5197
      %v5218 = vadd.f32 %v5180, %v5197
      %v5219 = vadd.f32 %v5181, %v5197
      %v5220 = vadd.f32 %v5182, %v5197
      %v5221 = vadd.f32 %v5183, %v5197
      %v5222 = vadd.f32 %v5184, %v5197
      %v5223 = vadd.f32 %v5185, %v5197
      %v5224 = vadd.f32 %v5186, %v5197
      %v5225 = vadd.f32 %v5187, %v5197
      %v5226 = vadd.f32 %v5188, %v5197
      %v5227 = vadd.f32 %v5189, %v5197
      %v5228 = vadd.f32 %v5190, %v5197
      %v5229 = vadd.f32 %v5191, %v5197
      %v5230 = vadd.f32 %v5192, %v5197
      %v5231 = vmax.f32 %v5199, 0.0
      %v5232 = vmax.f32 %v5200, 0.0
      %v5233 = vmax.f32 %v5201, 0.0
      %v5234 = vmax.f32 %v5202, 0.0
      %v5235 = vmax.f32 %v5203, 0.0
      %v5236 = vmax.f32 %v5204, 0.0
      %v5237 = vmax.f32 %v5205, 0.0
      %v5238 = vmax.f32 %v5206, 0.0
      %v5239 = vmax.f32 %v5207, 0.0
      %v5240 = vmax.f32 %v5208, 0.0
      %v5241 = vmax.f32 %v5209, 0.0
      %v5242 = vmax.f32 %v5210, 0.0
      %v5243 = vmax.f32 %v5211, 0.0
      %v5244 = vmax.f32 %v5212, 0.0
      %v5245 = vmax.f32 %v5213, 0.0
      %v5246 = vmax.f32 %v5214, 0.0
      %v5247 = vmax.f32 %v5215, 0.0
      %v5248 = vmax.f32 %v5216, 0.0
      %v5249 = vmax.f32 %v5217, 0.0
      %v5250 = vmax.f32 %v5218, 0.0
      %v5251 = vmax.f32 %v5219, 0.0
      %v5252 = vmax.f32 %v5220, 0.0
      %v5253 = vmax.f32 %v5221, 0.0
      %v5254 = vmax.f32 %v5222, 0.0
      %v5255 = vmax.f32 %v5223, 0.0
      %v5256 = vmax.f32 %v5224, 0.0
      %v5257 = vmax.f32 %v5225, 0.0
      %v5258 = vmax.f32 %v5226, 0.0
      %v5259 = vmax.f32 %v5227, 0.0
      %v5260 = vmax.f32 %v5228, 0.0
      %v5261 = vmax.f32 %v5229, 0.0
      %v5262 = vmax.f32 %v5230, 0.0
      %v5263 = vmax.f32 %v5231, %v5233
      %v5264 = vmax.f32 %v5232, %v5234
      %v5265 = vmax.f32 %v5235, %v5237
      %v5266 = vmax.f32 %v5236, %v5238
      %v5267 = vmax.f32 %v5239, %v5241
      %v5268 = vmax.f32 %v5240, %v5242
      %v5269 = vmax.f32 %v5243, %v5245
      %v5270 = vmax.f32 %v5244, %v5246
      %v5271 = vmax.f32 %v5247, %v5249
      %v5272 = vmax.f32 %v5248, %v5250
      %v5273 = vmax.f32 %v5251, %v5253
      %v5274 = vmax.f32 %v5252, %v5254
      %v5275 = vmax.f32 %v5255, %v5257
      %v5276 = vmax.f32 %v5256, %v5258
      %v5277 = vmax.f32 %v5259, %v5261
      %v5278 = vmax.f32 %v5260, %v5262
      %5279 = vst.msk [vmem:[#allocation5] sm:$0xff] %vm469, %v5263
      %5280 = vst.msk [vmem:[#allocation5 + $0x8] sm:$0xff] %vm469, %v5264
      %5281 = vst.msk [vmem:[#allocation5 + $0x10] sm:$0xff] %vm469, %v5265
      %5282 = vst.msk [vmem:[#allocation5 + $0x18] sm:$0xff] %vm469, %v5266
      %5283 = vst.msk [vmem:[#allocation5 + $0x20] sm:$0xff] %vm469, %v5267
      %5284 = vst.msk [vmem:[#allocation5 + $0x28] sm:$0xff] %vm469, %v5268
      %5285 = vst.msk [vmem:[#allocation5 + $0x30] sm:$0xff] %vm469, %v5269
      %5286 = vst.msk [vmem:[#allocation5 + $0x38] sm:$0xff] %vm469, %v5270
      %5287 = vst.msk [vmem:[#allocation5 + $0x40] sm:$0xff] %vm469, %v5271
      %5288 = vst.msk [vmem:[#allocation5 + $0x48] sm:$0xff] %vm469, %v5272
      %5289 = vst.msk [vmem:[#allocation5 + $0x50] sm:$0xff] %vm469, %v5273
      %5290 = vst.msk [vmem:[#allocation5 + $0x58] sm:$0xff] %vm469, %v5274
      %5291 = vst.msk [vmem:[#allocation5 + $0x60] sm:$0xff] %vm469, %v5275
      %5292 = vst.msk [vmem:[#allocation5 + $0x68] sm:$0xff] %vm469, %v5276
      %5293 = vst.msk [vmem:[#allocation5 + $0x70] sm:$0xff] %vm469, %v5277
      %5294 = vst.msk [vmem:[#allocation5 + $0x78] sm:$0xff] %vm469, %v5278
      %v5295 = vld [vmem:[#allocation5] ss:$2 sm:$0xff]
      %s5296 = scalar_lea.vmem [#allocation5], 16
      %v5297 = vld [vmem:[%s5296] ss:$2 sm:$0xff]
      %s5298 = scalar_lea.vmem [#allocation5], 32
      %v5299 = vld [vmem:[%s5298] ss:$2 sm:$0xff]
      %s5300 = scalar_lea.vmem [#allocation5], 48
      %v5301 = vld [vmem:[%s5300] ss:$2 sm:$0xff]
      %s5302 = scalar_lea.vmem [#allocation5], 64
      %v5303 = vld [vmem:[%s5302] ss:$2 sm:$0xff]
      %s5304 = scalar_lea.vmem [#allocation5], 80
      %v5305 = vld [vmem:[%s5304] ss:$2 sm:$0xff]
      %s5306 = scalar_lea.vmem [#allocation5], 96
      %v5307 = vld [vmem:[%s5306] ss:$2 sm:$0xff]
      %s5308 = scalar_lea.vmem [#allocation5], 112
      %v5309 = vld [vmem:[%s5308] ss:$2 sm:$0xff]
      %s5310 = scalar_lea.vmem [#allocation5], 1
      %v5311 = vld [vmem:[%s5310] ss:$2 sm:$0xff]
      %s5312 = scalar_lea.vmem [#allocation5], 17
      %v5313 = vld [vmem:[%s5312] ss:$2 sm:$0xff]
      %s5314 = scalar_lea.vmem [#allocation5], 33
      %v5315 = vld [vmem:[%s5314] ss:$2 sm:$0xff]
      %s5316 = scalar_lea.vmem [#allocation5], 49
      %v5317 = vld [vmem:[%s5316] ss:$2 sm:$0xff]
      %s5318 = scalar_lea.vmem [#allocation5], 65
      %v5319 = vld [vmem:[%s5318] ss:$2 sm:$0xff]
      %s5320 = scalar_lea.vmem [#allocation5], 81
      %v5321 = vld [vmem:[%s5320] ss:$2 sm:$0xff]
      %s5322 = scalar_lea.vmem [#allocation5], 97
      %v5323 = vld [vmem:[%s5322] ss:$2 sm:$0xff]
      %s5324 = scalar_lea.vmem [#allocation5], 113
      %v5325 = vld [vmem:[%s5324] ss:$2 sm:$0xff]
      %v5326 = vmax.f32 %v5295, %v5311
      %v5327 = vmax.f32 %v5297, %v5313
      %v5328 = vmax.f32 %v5299, %v5315
      %v5329 = vmax.f32 %v5301, %v5317
      %v5330 = vmax.f32 %v5303, %v5319
      %v5331 = vmax.f32 %v5305, %v5321
      %v5332 = vmax.f32 %v5307, %v5323
      %v5333 = vmax.f32 %v5309, %v5325
      %s5334 = scalar_lea.vmem [#allocation3], 16
      %5335 = vst.msk [vmem:[%s5334 + $0x1] sm:$0xff] %vm469, %v5326
      %5336 = vst.msk [vmem:[%s5334 + $0x11] sm:$0xff] %vm469, %v5327
      %5337 = vst.msk [vmem:[%s5334 + $0x21] sm:$0xff] %vm469, %v5328
      %5338 = vst.msk [vmem:[%s5334 + $0x31] sm:$0xff] %vm469, %v5329
      %5339 = vst.msk [vmem:[%s5334 + $0x41] sm:$0xff] %vm469, %v5330
      %5340 = vst.msk [vmem:[%s5334 + $0x51] sm:$0xff] %vm469, %v5331
      %5341 = vst.msk [vmem:[%s5334 + $0x61] sm:$0xff] %vm469, %v5332
      %5342 = vst.msk [vmem:[%s5334 + $0x71] sm:$0xff] %vm469, %v5333
      %v5343 = vld [vmem:[%s8] sm:$0x1]
      %v5344 = vld [vmem:[%s9] sm:$0x1]
      %v5345 = vld [vmem:[#allocation3] sm:$0xff]
      %v5346 = vld [vmem:[#allocation3 + $0x10] sm:$0xff]
      %v5347 = vld [vmem:[#allocation3 + $0x20] sm:$0xff]
      %v5348 = vld [vmem:[#allocation3 + $0x30] sm:$0xff]
      %v5349 = vld [vmem:[#allocation3 + $0x40] sm:$0xff]
      %v5350 = vld [vmem:[#allocation3 + $0x50] sm:$0xff]
      %v5351 = vld [vmem:[#allocation3 + $0x60] sm:$0xff]
      %v5352 = vld [vmem:[#allocation3 + $0x70] sm:$0xff]
      %v5353 = vpack.c.bf16 %v5345, %v5345
      %v5354 = vpack.c.bf16 %v5346, %v5346
      %v5355 = vpack.c.bf16 %v5347, %v5347
      %v5356 = vpack.c.bf16 %v5348, %v5348
      %v5357 = vpack.c.bf16 %v5349, %v5349
      %v5358 = vpack.c.bf16 %v5350, %v5350
      %v5359 = vpack.c.bf16 %v5351, %v5351
      %v5360 = vpack.c.bf16 %v5352, %v5352
      %v5361 = vld [vmem:[%s7] sm:$0xf]
      %v5362 = vld [vmem:[%s7 + $0x4] sm:$0xf]
      %v5363 = vld [vmem:[%s7 + $0x8] sm:$0xf]
      %v5364 = vld [vmem:[%s7 + $0xc] sm:$0xf]
      %v5365 = vld [vmem:[%s7 + $0x10] sm:$0xf]
      %v5366 = vld [vmem:[%s7 + $0x14] sm:$0xf]
      %v5367 = vld [vmem:[%s7 + $0x18] sm:$0xf]
      %v5368 = vld [vmem:[%s7 + $0x1c] sm:$0xf]
      %v5369 = vld [vmem:[#allocation3 + $0x1] sm:$0xff]
      %v5370 = vld [vmem:[#allocation3 + $0x11] sm:$0xff]
      %v5371 = vld [vmem:[#allocation3 + $0x21] sm:$0xff]
      %v5372 = vld [vmem:[#allocation3 + $0x31] sm:$0xff]
      %v5373 = vld [vmem:[#allocation3 + $0x41] sm:$0xff]
      %v5374 = vld [vmem:[#allocation3 + $0x51] sm:$0xff]
      %v5375 = vld [vmem:[#allocation3 + $0x61] sm:$0xff]
      %v5376 = vld [vmem:[#allocation3 + $0x71] sm:$0xff]
      %v5377 = vpack.c.bf16 %v5369, %v5369
      %v5378 = vpack.c.bf16 %v5370, %v5370
      %v5379 = vpack.c.bf16 %v5371, %v5371
      %v5380 = vpack.c.bf16 %v5372, %v5372
      %v5381 = vpack.c.bf16 %v5373, %v5373
      %v5382 = vpack.c.bf16 %v5374, %v5374
      %v5383 = vpack.c.bf16 %v5375, %v5375
      %v5384 = vpack.c.bf16 %v5376, %v5376
      %s5385 = scalar_lea.vmem %s7, 32
      %v5386 = vld [vmem:[%s5385] sm:$0xf]
      %v5387 = vld [vmem:[%s5385 + $0x4] sm:$0xf]
      %v5388 = vld [vmem:[%s5385 + $0x8] sm:$0xf]
      %v5389 = vld [vmem:[%s5385 + $0xc] sm:$0xf]
      %v5390 = vld [vmem:[%s5385 + $0x10] sm:$0xf]
      %v5391 = vld [vmem:[%s5385 + $0x14] sm:$0xf]
      %v5392 = vld [vmem:[%s5385 + $0x18] sm:$0xf]
      %v5393 = vld [vmem:[%s5385 + $0x1c] sm:$0xf]
      %v5402 = vunpack.c.l.b16 %v5377
      %v5403 = vunpack.c.l.b16 %v5378
      %v5404 = vunpack.c.l.b16 %v5379
      %v5405 = vunpack.c.l.b16 %v5380
      %v5406 = vunpack.c.l.b16 %v5381
      %v5407 = vunpack.c.l.b16 %v5382
      %v5408 = vunpack.c.l.b16 %v5383
      %v5409 = vunpack.c.l.b16 %v5384
      %v5410 = vpack.c.b16 %v5403, %v5402
      %v5411 = vpack.c.b16 %v5405, %v5404
      %v5412 = vpack.c.b16 %v5407, %v5406
      %v5413 = vpack.c.b16 %v5409, %v5408
      %v5422 = vunpack.c.l.b16 %v5386
      %v5423 = vunpack.c.l.b16 %v5387
      %v5424 = vunpack.c.l.b16 %v5388
      %v5425 = vunpack.c.l.b16 %v5389
      %v5426 = vunpack.c.l.b16 %v5390
      %v5427 = vunpack.c.l.b16 %v5391
      %v5428 = vunpack.c.l.b16 %v5392
      %v5429 = vunpack.c.l.b16 %v5393
      %v5430 = vpack.c.b16 %v5423, %v5422
      %v5431 = vpack.c.b16 %v5425, %v5424
      %v5432 = vpack.c.b16 %v5427, %v5426
      %v5433 = vpack.c.b16 %v5429, %v5428
      %v5439 = vsel %vm469, %v5410, 0
      %v5442 = vsel %vm469, %v5411, 0
      %v5445 = vsel %vm469, %v5412, 0
      %v5448 = vsel %vm469, %v5413, 0
      %5450 = vmatprep.subr.bf16.mxu0 0
      %5451 = vmatpush1.bf16.msra.mxu0 %v5430
      %5452 = vmatprep.subr.bf16.mxu0 0
      %5453 = vmatpush1.bf16.msra.mxu0 %v5431
      %5454 = vmatprep.subr.bf16.mxu0 0
      %5455 = vmatpush1.bf16.msra.mxu0 %v5432
      %5456 = vmatprep.subr.bf16.mxu0 0
      %5457 = vmatpush1.bf16.msra.mxu0 %v5433
      %5458 = vmatprep.subr.bf16.mxu0 0
      %5459 = vmatpush1.bf16.msra.mxu0 0
      %5460 = vmatprep.subr.bf16.mxu0 0
      %5461 = vmatpush1.bf16.msra.mxu0 0
      %5462 = vmatprep.subr.bf16.mxu0 0
      %5463 = vmatpush1.bf16.msra.mxu0 0
      %5464 = vmatprep.subr.bf16.mxu0 0
      %5465 = vmatpush1.bf16.msra.mxu0 0
      %5466 = vmatprep.subr.bf16.mxu0 0
      %5467 = vmatpush1.bf16.msra.mxu0 0
      %5468 = vmatprep.subr.bf16.mxu0 0
      %5469 = vmatpush1.bf16.msra.mxu0 0
      %5470 = vmatprep.subr.bf16.mxu0 0
      %5471 = vmatpush1.bf16.msra.mxu0 0
      %5472 = vmatprep.subr.bf16.mxu0 0
      %5473 = vmatpush1.bf16.msra.mxu0 0
      %5474 = vmatprep.subr.bf16.mxu0 0
      %5475 = vmatpush1.bf16.msra.mxu0 0
      %5476 = vmatprep.subr.bf16.mxu0 0
      %5477 = vmatpush1.bf16.msra.mxu0 0
      %5478 = vmatprep.subr.bf16.mxu0 0
      %5479 = vmatpush1.bf16.msra.mxu0 0
      %5480 = vmatprep.subr.bf16.mxu0 0
      %5481 = vmatpush1.bf16.msra.mxu0 0
      %5482 = vmatprep.mubr.bf16.mxu0 0
      %5483 = vmatmul.mubr.bf16.gmra.mrb[0].mxu0 %v5439
      %v5484 = vpop.f32.mrb[0].mxu0
      %v5485 = vadd.f32 0.0, %v5484
      %v5486 = vpop.f32.mrb[0].mxu0
      %v5487 = vpop.f32.mrb[0].mxu0
      %v5488 = vadd.f32 0.0, %v5487
      %v5489 = vpop.f32.mrb[0].mxu0
      %5490 = vmatprep.mubr.bf16.mxu0 0
      %5491 = vmatmul.mubr.bf16.gmra.mrb[0].mxu0 %v5442
      %v5492 = vpop.f32.mrb[0].mxu0
      %v5493 = vadd.f32 0.0, %v5492
      %v5494 = vpop.f32.mrb[0].mxu0
      %v5495 = vpop.f32.mrb[0].mxu0
      %v5496 = vadd.f32 0.0, %v5495
      %v5497 = vpop.f32.mrb[0].mxu0
      %5498 = vmatprep.mubr.bf16.mxu0 0
      %5499 = vmatmul.mubr.bf16.gmra.mrb[0].mxu0 %v5445
      %v5500 = vpop.f32.mrb[0].mxu0
      %v5501 = vadd.f32 0.0, %v5500
      %v5502 = vpop.f32.mrb[0].mxu0
      %v5503 = vpop.f32.mrb[0].mxu0
      %v5504 = vadd.f32 0.0, %v5503
      %v5505 = vpop.f32.mrb[0].mxu0
      %5506 = vmatprep.mubr.bf16.mxu0 0
      %5507 = vmatmul.mubr.bf16.gmra.mrb[0].mxu0 %v5448
      %v5508 = vpop.f32.mrb[0].mxu0
      %v5509 = vadd.f32 0.0, %v5508
      %v5510 = vpop.f32.mrb[0].mxu0
      %v5511 = vpop.f32.mrb[0].mxu0
      %v5512 = vadd.f32 0.0, %v5511
      %v5513 = vpop.f32.mrb[0].mxu0
      %5514 = vdwg.mxu0
      %v5523 = vunpack.c.l.b16 %v5353
      %v5524 = vunpack.c.l.b16 %v5354
      %v5525 = vunpack.c.l.b16 %v5355
      %v5526 = vunpack.c.l.b16 %v5356
      %v5527 = vunpack.c.l.b16 %v5357
      %v5528 = vunpack.c.l.b16 %v5358
      %v5529 = vunpack.c.l.b16 %v5359
      %v5530 = vunpack.c.l.b16 %v5360
      %v5531 = vpack.c.b16 %v5524, %v5523
      %v5532 = vpack.c.b16 %v5526, %v5525
      %v5533 = vpack.c.b16 %v5528, %v5527
      %v5534 = vpack.c.b16 %v5530, %v5529
      %v5543 = vunpack.c.l.b16 %v5361
      %v5544 = vunpack.c.l.b16 %v5362
      %v5545 = vunpack.c.l.b16 %v5363
      %v5546 = vunpack.c.l.b16 %v5364
      %v5547 = vunpack.c.l.b16 %v5365
      %v5548 = vunpack.c.l.b16 %v5366
      %v5549 = vunpack.c.l.b16 %v5367
      %v5550 = vunpack.c.l.b16 %v5368
      %v5551 = vpack.c.b16 %v5544, %v5543
      %v5552 = vpack.c.b16 %v5546, %v5545
      %v5553 = vpack.c.b16 %v5548, %v5547
      %v5554 = vpack.c.b16 %v5550, %v5549
      %v5560 = vsel %vm469, %v5531, 0
      %v5563 = vsel %vm469, %v5532, 0
      %v5566 = vsel %vm469, %v5533, 0
      %v5569 = vsel %vm469, %v5534, 0
      %5571 = vmatprep.subr.bf16.mxu0 0
      %5572 = vmatpush1.bf16.msra.mxu0 %v5551
      %5573 = vmatprep.subr.bf16.mxu0 0
      %5574 = vmatpush1.bf16.msra.mxu0 %v5552
      %5575 = vmatprep.subr.bf16.mxu0 0
      %5576 = vmatpush1.bf16.msra.mxu0 %v5553
      %5577 = vmatprep.subr.bf16.mxu0 0
      %5578 = vmatpush1.bf16.msra.mxu0 %v5554
      %5579 = vmatprep.subr.bf16.mxu0 0
      %5580 = vmatpush1.bf16.msra.mxu0 0
      %5581 = vmatprep.subr.bf16.mxu0 0
      %5582 = vmatpush1.bf16.msra.mxu0 0
      %5583 = vmatprep.subr.bf16.mxu0 0
      %5584 = vmatpush1.bf16.msra.mxu0 0
      %5585 = vmatprep.subr.bf16.mxu0 0
      %5586 = vmatpush1.bf16.msra.mxu0 0
      %5587 = vmatprep.subr.bf16.mxu0 0
      %5588 = vmatpush1.bf16.msra.mxu0 0
      %5589 = vmatprep.subr.bf16.mxu0 0
      %5590 = vmatpush1.bf16.msra.mxu0 0
      %5591 = vmatprep.subr.bf16.mxu0 0
      %5592 = vmatpush1.bf16.msra.mxu0 0
      %5593 = vmatprep.subr.bf16.mxu0 0
      %5594 = vmatpush1.bf16.msra.mxu0 0
      %5595 = vmatprep.subr.bf16.mxu0 0
      %5596 = vmatpush1.bf16.msra.mxu0 0
      %5597 = vmatprep.subr.bf16.mxu0 0
      %5598 = vmatpush1.bf16.msra.mxu0 0
      %5599 = vmatprep.subr.bf16.mxu0 0
      %5600 = vmatpush1.bf16.msra.mxu0 0
      %5601 = vmatprep.subr.bf16.mxu0 0
      %5602 = vmatpush1.bf16.msra.mxu0 0
      %5603 = vmatprep.mubr.bf16.mxu0 0
      %5604 = vmatmul.mubr.bf16.gmra.mrb[0].mxu0 %v5560
      %v5605 = vpop.f32.mrb[0].mxu0
      %v5606 = vadd.f32 %v5485, %v5605
      %v5607 = vpop.f32.mrb[0].mxu0
      %v5608 = vpop.f32.mrb[0].mxu0
      %v5609 = vadd.f32 %v5488, %v5608
      %v5610 = vpop.f32.mrb[0].mxu0
      %5611 = vmatprep.mubr.bf16.mxu0 0
      %5612 = vmatmul.mubr.bf16.gmra.mrb[0].mxu0 %v5563
      %v5613 = vpop.f32.mrb[0].mxu0
      %v5614 = vadd.f32 %v5493, %v5613
      %v5615 = vpop.f32.mrb[0].mxu0
      %v5616 = vpop.f32.mrb[0].mxu0
      %v5617 = vadd.f32 %v5496, %v5616
      %v5618 = vpop.f32.mrb[0].mxu0
      %5619 = vmatprep.mubr.bf16.mxu0 0
      %5620 = vmatmul.mubr.bf16.gmra.mrb[0].mxu0 %v5566
      %v5621 = vpop.f32.mrb[0].mxu0
      %v5622 = vadd.f32 %v5501, %v5621
      %v5623 = vpop.f32.mrb[0].mxu0
      %v5624 = vpop.f32.mrb[0].mxu0
      %v5625 = vadd.f32 %v5504, %v5624
      %v5626 = vpop.f32.mrb[0].mxu0
      %5627 = vmatprep.mubr.bf16.mxu0 0
      %5628 = vmatmul.mubr.bf16.gmra.mrb[0].mxu0 %v5569
      %v5629 = vpop.f32.mrb[0].mxu0
      %v5630 = vadd.f32 %v5509, %v5629
      %v5631 = vpop.f32.mrb[0].mxu0
      %v5632 = vpop.f32.mrb[0].mxu0
      %v5633 = vadd.f32 %v5512, %v5632
      %v5634 = vpop.f32.mrb[0].mxu0
      %5635 = vdwg.mxu0
      %v5636 = vld [vmem:[#allocation3 + $0x2] sm:$0xff]
      %v5637 = vld [vmem:[#allocation3 + $0x12] sm:$0xff]
      %v5638 = vld [vmem:[#allocation3 + $0x22] sm:$0xff]
      %v5639 = vld [vmem:[#allocation3 + $0x32] sm:$0xff]
      %v5640 = vld [vmem:[#allocation3 + $0x42] sm:$0xff]
      %v5641 = vld [vmem:[#allocation3 + $0x52] sm:$0xff]
      %v5642 = vld [vmem:[#allocation3 + $0x62] sm:$0xff]
      %v5643 = vld [vmem:[#allocation3 + $0x72] sm:$0xff]
      %v5644 = vpack.c.bf16 %v5636, %v5636
      %v5645 = vpack.c.bf16 %v5637, %v5637
      %v5646 = vpack.c.bf16 %v5638, %v5638
      %v5647 = vpack.c.bf16 %v5639, %v5639
      %v5648 = vpack.c.bf16 %v5640, %v5640
      %v5649 = vpack.c.bf16 %v5641, %v5641
      %v5650 = vpack.c.bf16 %v5642, %v5642
      %v5651 = vpack.c.bf16 %v5643, %v5643
      %s5652 = scalar_lea.vmem %s7, 64
      %v5653 = vld [vmem:[%s5652] sm:$0xf]
      %v5654 = vld [vmem:[%s5652 + $0x4] sm:$0xf]
      %v5655 = vld [vmem:[%s5652 + $0x8] sm:$0xf]
      %v5656 = vld [vmem:[%s5652 + $0xc] sm:$0xf]
      %v5657 = vld [vmem:[%s5652 + $0x10] sm:$0xf]
      %v5658 = vld [vmem:[%s5652 + $0x14] sm:$0xf]
      %v5659 = vld [vmem:[%s5652 + $0x18] sm:$0xf]
      %v5660 = vld [vmem:[%s5652 + $0x1c] sm:$0xf]
      %v5669 = vunpack.c.l.b16 %v5644
      %v5670 = vunpack.c.l.b16 %v5645
      %v5671 = vunpack.c.l.b16 %v5646
      %v5672 = vunpack.c.l.b16 %v5647
      %v5673 = vunpack.c.l.b16 %v5648
      %v5674 = vunpack.c.l.b16 %v5649
      %v5675 = vunpack.c.l.b16 %v5650
      %v5676 = vunpack.c.l.b16 %v5651
      %v5677 = vpack.c.b16 %v5670, %v5669
      %v5678 = vpack.c.b16 %v5672, %v5671
      %v5679 = vpack.c.b16 %v5674, %v5673
      %v5680 = vpack.c.b16 %v5676, %v5675
      %v5689 = vunpack.c.l.b16 %v5653
      %v5690 = vunpack.c.l.b16 %v5654
      %v5691 = vunpack.c.l.b16 %v5655
      %v5692 = vunpack.c.l.b16 %v5656
      %v5693 = vunpack.c.l.b16 %v5657
      %v5694 = vunpack.c.l.b16 %v5658
      %v5695 = vunpack.c.l.b16 %v5659
      %v5696 = vunpack.c.l.b16 %v5660
      %v5697 = vpack.c.b16 %v5690, %v5689
      %v5698 = vpack.c.b16 %v5692, %v5691
      %v5699 = vpack.c.b16 %v5694, %v5693
      %v5700 = vpack.c.b16 %v5696, %v5695
      %v5706 = vsel %vm469, %v5677, 0
      %v5709 = vsel %vm469, %v5678, 0
      %v5712 = vsel %vm469, %v5679, 0
      %v5715 = vsel %vm469, %v5680, 0
      %5717 = vmatprep.subr.bf16.mxu0 0
      %5718 = vmatpush1.bf16.msra.mxu0 %v5697
      %5719 = vmatprep.subr.bf16.mxu0 0
      %5720 = vmatpush1.bf16.msra.mxu0 %v5698
      %5721 = vmatprep.subr.bf16.mxu0 0
      %5722 = vmatpush1.bf16.msra.mxu0 %v5699
      %5723 = vmatprep.subr.bf16.mxu0 0
      %5724 = vmatpush1.bf16.msra.mxu0 %v5700
      %5725 = vmatprep.subr.bf16.mxu0 0
      %5726 = vmatpush1.bf16.msra.mxu0 0
      %5727 = vmatprep.subr.bf16.mxu0 0
      %5728 = vmatpush1.bf16.msra.mxu0 0
      %5729 = vmatprep.subr.bf16.mxu0 0
      %5730 = vmatpush1.bf16.msra.mxu0 0
      %5731 = vmatprep.subr.bf16.mxu0 0
      %5732 = vmatpush1.bf16.msra.mxu0 0
      %5733 = vmatprep.subr.bf16.mxu0 0
      %5734 = vmatpush1.bf16.msra.mxu0 0
      %5735 = vmatprep.subr.bf16.mxu0 0
      %5736 = vmatpush1.bf16.msra.mxu0 0
      %5737 = vmatprep.subr.bf16.mxu0 0
      %5738 = vmatpush1.bf16.msra.mxu0 0
      %5739 = vmatprep.subr.bf16.mxu0 0
      %5740 = vmatpush1.bf16.msra.mxu0 0
      %5741 = vmatprep.subr.bf16.mxu0 0
      %5742 = vmatpush1.bf16.msra.mxu0 0
      %5743 = vmatprep.subr.bf16.mxu0 0
      %5744 = vmatpush1.bf16.msra.mxu0 0
      %5745 = vmatprep.subr.bf16.mxu0 0
      %5746 = vmatpush1.bf16.msra.mxu0 0
      %5747 = vmatprep.subr.bf16.mxu0 0
      %5748 = vmatpush1.bf16.msra.mxu0 0
      %5749 = vmatprep.mubr.bf16.mxu0 0
      %5750 = vmatmul.mubr.bf16.gmra.mrb[0].mxu0 %v5706
      %v5751 = vpop.f32.mrb[0].mxu0
      %v5752 = vadd.f32 0.0, %v5751
      %v5753 = vpop.f32.mrb[0].mxu0
      %v5754 = vpop.f32.mrb[0].mxu0
      %v5755 = vadd.f32 0.0, %v5754
      %v5756 = vpop.f32.mrb[0].mxu0
      %5757 = vmatprep.mubr.bf16.mxu0 0
      %5758 = vmatmul.mubr.bf16.gmra.mrb[0].mxu0 %v5709
      %v5759 = vpop.f32.mrb[0].mxu0
      %v5760 = vadd.f32 0.0, %v5759
      %v5761 = vpop.f32.mrb[0].mxu0
      %v5762 = vpop.f32.mrb[0].mxu0
      %v5763 = vadd.f32 0.0, %v5762
      %v5764 = vpop.f32.mrb[0].mxu0
      %5765 = vmatprep.mubr.bf16.mxu0 0
      %5766 = vmatmul.mubr.bf16.gmra.mrb[0].mxu0 %v5712
      %v5767 = vpop.f32.mrb[0].mxu0
      %v5768 = vadd.f32 0.0, %v5767
      %v5769 = vpop.f32.mrb[0].mxu0
      %v5770 = vpop.f32.mrb[0].mxu0
      %v5771 = vadd.f32 0.0, %v5770
      %v5772 = vpop.f32.mrb[0].mxu0
      %5773 = vmatprep.mubr.bf16.mxu0 0
      %5774 = vmatmul.mubr.bf16.gmra.mrb[0].mxu0 %v5715
      %v5775 = vpop.f32.mrb[0].mxu0
      %v5776 = vadd.f32 0.0, %v5775
      %v5777 = vpop.f32.mrb[0].mxu0
      %v5778 = vpop.f32.mrb[0].mxu0
      %v5779 = vadd.f32 0.0, %v5778
      %v5780 = vpop.f32.mrb[0].mxu0
      %5781 = vdwg.mxu0
      %v5782 = vadd.f32 %v5606, %v5752
      %v5783 = vadd.f32 %v5609, %v5755
      %v5784 = vadd.f32 %v5614, %v5760
      %v5785 = vadd.f32 %v5617, %v5763
      %v5786 = vadd.f32 %v5622, %v5768
      %v5787 = vadd.f32 %v5625, %v5771
      %v5788 = vadd.f32 %v5630, %v5776
      %v5789 = vadd.f32 %v5633, %v5779
      %v5790 = vld [vmem:[%s5334] sm:$0xff]
      %v5791 = vld [vmem:[%s5334 + $0x10] sm:$0xff]
      %v5792 = vld [vmem:[%s5334 + $0x20] sm:$0xff]
      %v5793 = vld [vmem:[%s5334 + $0x30] sm:$0xff]
      %v5794 = vld [vmem:[%s5334 + $0x40] sm:$0xff]
      %v5795 = vld [vmem:[%s5334 + $0x50] sm:$0xff]
      %v5796 = vld [vmem:[%s5334 + $0x60] sm:$0xff]
      %v5797 = vld [vmem:[%s5334 + $0x70] sm:$0xff]
      %v5798 = vpack.c.bf16 %v5790, %v5790
      %v5799 = vpack.c.bf16 %v5791, %v5791
      %v5800 = vpack.c.bf16 %v5792, %v5792
      %v5801 = vpack.c.bf16 %v5793, %v5793
      %v5802 = vpack.c.bf16 %v5794, %v5794
      %v5803 = vpack.c.bf16 %v5795, %v5795
      %v5804 = vpack.c.bf16 %v5796, %v5796
      %v5805 = vpack.c.bf16 %v5797, %v5797
      %s5806 = scalar_lea.vmem %s7, 96
      %v5807 = vld [vmem:[%s5806] sm:$0xf]
      %v5808 = vld [vmem:[%s5806 + $0x4] sm:$0xf]
      %v5809 = vld [vmem:[%s5806 + $0x8] sm:$0xf]
      %v5810 = vld [vmem:[%s5806 + $0xc] sm:$0xf]
      %v5811 = vld [vmem:[%s5806 + $0x10] sm:$0xf]
      %v5812 = vld [vmem:[%s5806 + $0x14] sm:$0xf]
      %v5813 = vld [vmem:[%s5806 + $0x18] sm:$0xf]
      %v5814 = vld [vmem:[%s5806 + $0x1c] sm:$0xf]
      %v5823 = vunpack.c.l.b16 %v5798
      %v5824 = vunpack.c.l.b16 %v5799
      %v5825 = vunpack.c.l.b16 %v5800
      %v5826 = vunpack.c.l.b16 %v5801
      %v5827 = vunpack.c.l.b16 %v5802
      %v5828 = vunpack.c.l.b16 %v5803
      %v5829 = vunpack.c.l.b16 %v5804
      %v5830 = vunpack.c.l.b16 %v5805
      %v5831 = vpack.c.b16 %v5824, %v5823
      %v5832 = vpack.c.b16 %v5826, %v5825
      %v5833 = vpack.c.b16 %v5828, %v5827
      %v5834 = vpack.c.b16 %v5830, %v5829
      %v5843 = vunpack.c.l.b16 %v5807
      %v5844 = vunpack.c.l.b16 %v5808
      %v5845 = vunpack.c.l.b16 %v5809
      %v5846 = vunpack.c.l.b16 %v5810
      %v5847 = vunpack.c.l.b16 %v5811
      %v5848 = vunpack.c.l.b16 %v5812
      %v5849 = vunpack.c.l.b16 %v5813
      %v5850 = vunpack.c.l.b16 %v5814
      %v5851 = vpack.c.b16 %v5844, %v5843
      %v5852 = vpack.c.b16 %v5846, %v5845
      %v5853 = vpack.c.b16 %v5848, %v5847
      %v5854 = vpack.c.b16 %v5850, %v5849
      %v5860 = vsel %vm469, %v5831, 0
      %v5863 = vsel %vm469, %v5832, 0
      %v5866 = vsel %vm469, %v5833, 0
      %v5869 = vsel %vm469, %v5834, 0
      %5871 = vmatprep.subr.bf16.mxu0 0
      %5872 = vmatpush1.bf16.msra.mxu0 %v5851
      %5873 = vmatprep.subr.bf16.mxu0 0
      %5874 = vmatpush1.bf16.msra.mxu0 %v5852
      %5875 = vmatprep.subr.bf16.mxu0 0
      %5876 = vmatpush1.bf16.msra.mxu0 %v5853
      %5877 = vmatprep.subr.bf16.mxu0 0
      %5878 = vmatpush1.bf16.msra.mxu0 %v5854
      %5879 = vmatprep.subr.bf16.mxu0 0
      %5880 = vmatpush1.bf16.msra.mxu0 0
      %5881 = vmatprep.subr.bf16.mxu0 0
      %5882 = vmatpush1.bf16.msra.mxu0 0
      %5883 = vmatprep.subr.bf16.mxu0 0
      %5884 = vmatpush1.bf16.msra.mxu0 0
      %5885 = vmatprep.subr.bf16.mxu0 0
      %5886 = vmatpush1.bf16.msra.mxu0 0
      %5887 = vmatprep.subr.bf16.mxu0 0
      %5888 = vmatpush1.bf16.msra.mxu0 0
      %5889 = vmatprep.subr.bf16.mxu0 0
      %5890 = vmatpush1.bf16.msra.mxu0 0
      %5891 = vmatprep.subr.bf16.mxu0 0
      %5892 = vmatpush1.bf16.msra.mxu0 0
      %5893 = vmatprep.subr.bf16.mxu0 0
      %5894 = vmatpush1.bf16.msra.mxu0 0
      %5895 = vmatprep.subr.bf16.mxu0 0
      %5896 = vmatpush1.bf16.msra.mxu0 0
      %5897 = vmatprep.subr.bf16.mxu0 0
      %5898 = vmatpush1.bf16.msra.mxu0 0
      %5899 = vmatprep.subr.bf16.mxu0 0
      %5900 = vmatpush1.bf16.msra.mxu0 0
      %5901 = vmatprep.subr.bf16.mxu0 0
      %5902 = vmatpush1.bf16.msra.mxu0 0
      %5903 = vmatprep.mubr.bf16.mxu0 0
      %5904 = vmatmul.mubr.bf16.gmra.mrb[0].mxu0 %v5860
      %v5905 = vpop.f32.mrb[0].mxu0
      %v5906 = vadd.f32 0.0, %v5905
      %v5907 = vpop.f32.mrb[0].mxu0
      %v5908 = vpop.f32.mrb[0].mxu0
      %v5909 = vadd.f32 0.0, %v5908
      %v5910 = vpop.f32.mrb[0].mxu0
      %5911 = vmatprep.mubr.bf16.mxu0 0
      %5912 = vmatmul.mubr.bf16.gmra.mrb[0].mxu0 %v5863
      %v5913 = vpop.f32.mrb[0].mxu0
      %v5914 = vadd.f32 0.0, %v5913
      %v5915 = vpop.f32.mrb[0].mxu0
      %v5916 = vpop.f32.mrb[0].mxu0
      %v5917 = vadd.f32 0.0, %v5916
      %v5918 = vpop.f32.mrb[0].mxu0
      %5919 = vmatprep.mubr.bf16.mxu0 0
      %5920 = vmatmul.mubr.bf16.gmra.mrb[0].mxu0 %v5866
      %v5921 = vpop.f32.mrb[0].mxu0
      %v5922 = vadd.f32 0.0, %v5921
      %v5923 = vpop.f32.mrb[0].mxu0
      %v5924 = vpop.f32.mrb[0].mxu0
      %v5925 = vadd.f32 0.0, %v5924
      %v5926 = vpop.f32.mrb[0].mxu0
      %5927 = vmatprep.mubr.bf16.mxu0 0
      %5928 = vmatmul.mubr.bf16.gmra.mrb[0].mxu0 %v5869
      %v5929 = vpop.f32.mrb[0].mxu0
      %v5930 = vadd.f32 0.0, %v5929
      %v5931 = vpop.f32.mrb[0].mxu0
      %v5932 = vpop.f32.mrb[0].mxu0
      %v5933 = vadd.f32 0.0, %v5932
      %v5934 = vpop.f32.mrb[0].mxu0
      %5935 = vdwg.mxu0
      %v5936 = vadd.f32 %v5782, %v5906
      %v5937 = vadd.f32 %v5783, %v5909
      %v5938 = vadd.f32 %v5784, %v5914
      %v5939 = vadd.f32 %v5785, %v5917
      %v5940 = vadd.f32 %v5786, %v5922
      %v5941 = vadd.f32 %v5787, %v5925
      %v5942 = vadd.f32 %v5788, %v5930
      %v5943 = vadd.f32 %v5789, %v5933
      %v5944 = vld [vmem:[%s5334 + $0x1] sm:$0xff]
      %v5945 = vld [vmem:[%s5334 + $0x11] sm:$0xff]
      %v5946 = vld [vmem:[%s5334 + $0x21] sm:$0xff]
      %v5947 = vld [vmem:[%s5334 + $0x31] sm:$0xff]
      %v5948 = vld [vmem:[%s5334 + $0x41] sm:$0xff]
      %v5949 = vld [vmem:[%s5334 + $0x51] sm:$0xff]
      %v5950 = vld [vmem:[%s5334 + $0x61] sm:$0xff]
      %v5951 = vld [vmem:[%s5334 + $0x71] sm:$0xff]
      %v5952 = vpack.c.bf16 %v5944, %v5944
      %v5953 = vpack.c.bf16 %v5945, %v5945
      %v5954 = vpack.c.bf16 %v5946, %v5946
      %v5955 = vpack.c.bf16 %v5947, %v5947
      %v5956 = vpack.c.bf16 %v5948, %v5948
      %v5957 = vpack.c.bf16 %v5949, %v5949
      %v5958 = vpack.c.bf16 %v5950, %v5950
      %v5959 = vpack.c.bf16 %v5951, %v5951
      %s5960 = scalar_lea.vmem %s7, 128
      %v5961 = vld [vmem:[%s5960] sm:$0xf]
      %v5962 = vld [vmem:[%s5960 + $0x4] sm:$0xf]
      %v5963 = vld [vmem:[%s5960 + $0x8] sm:$0xf]
      %v5964 = vld [vmem:[%s5960 + $0xc] sm:$0xf]
      %v5965 = vld [vmem:[%s5960 + $0x10] sm:$0xf]
      %v5966 = vld [vmem:[%s5960 + $0x14] sm:$0xf]
      %v5967 = vld [vmem:[%s5960 + $0x18] sm:$0xf]
      %v5968 = vld [vmem:[%s5960 + $0x1c] sm:$0xf]
      %v5977 = vunpack.c.l.b16 %v5952
      %v5978 = vunpack.c.l.b16 %v5953
      %v5979 = vunpack.c.l.b16 %v5954
      %v5980 = vunpack.c.l.b16 %v5955
      %v5981 = vunpack.c.l.b16 %v5956
      %v5982 = vunpack.c.l.b16 %v5957
      %v5983 = vunpack.c.l.b16 %v5958
      %v5984 = vunpack.c.l.b16 %v5959
      %v5985 = vpack.c.b16 %v5978, %v5977
      %v5986 = vpack.c.b16 %v5980, %v5979
      %v5987 = vpack.c.b16 %v5982, %v5981
      %v5988 = vpack.c.b16 %v5984, %v5983
      %v5997 = vunpack.c.l.b16 %v5961
      %v5998 = vunpack.c.l.b16 %v5962
      %v5999 = vunpack.c.l.b16 %v5963
      %v6000 = vunpack.c.l.b16 %v5964
      %v6001 = vunpack.c.l.b16 %v5965
      %v6002 = vunpack.c.l.b16 %v5966
      %v6003 = vunpack.c.l.b16 %v5967
      %v6004 = vunpack.c.l.b16 %v5968
      %v6005 = vpack.c.b16 %v5998, %v5997
      %v6006 = vpack.c.b16 %v6000, %v5999
      %v6007 = vpack.c.b16 %v6002, %v6001
      %v6008 = vpack.c.b16 %v6004, %v6003
      %v6014 = vsel %vm469, %v5985, 0
      %v6017 = vsel %vm469, %v5986, 0
      %v6020 = vsel %vm469, %v5987, 0
      %v6023 = vsel %vm469, %v5988, 0
      %6025 = vmatprep.subr.bf16.mxu0 0
      %6026 = vmatpush1.bf16.msra.mxu0 %v6005
      %6027 = vmatprep.subr.bf16.mxu0 0
      %6028 = vmatpush1.bf16.msra.mxu0 %v6006
      %6029 = vmatprep.subr.bf16.mxu0 0
      %6030 = vmatpush1.bf16.msra.mxu0 %v6007
      %6031 = vmatprep.subr.bf16.mxu0 0
      %6032 = vmatpush1.bf16.msra.mxu0 %v6008
      %6033 = vmatprep.subr.bf16.mxu0 0
      %6034 = vmatpush1.bf16.msra.mxu0 0
      %6035 = vmatprep.subr.bf16.mxu0 0
      %6036 = vmatpush1.bf16.msra.mxu0 0
      %6037 = vmatprep.subr.bf16.mxu0 0
      %6038 = vmatpush1.bf16.msra.mxu0 0
      %6039 = vmatprep.subr.bf16.mxu0 0
      %6040 = vmatpush1.bf16.msra.mxu0 0
      %6041 = vmatprep.subr.bf16.mxu0 0
      %6042 = vmatpush1.bf16.msra.mxu0 0
      %6043 = vmatprep.subr.bf16.mxu0 0
      %6044 = vmatpush1.bf16.msra.mxu0 0
      %6045 = vmatprep.subr.bf16.mxu0 0
      %6046 = vmatpush1.bf16.msra.mxu0 0
      %6047 = vmatprep.subr.bf16.mxu0 0
      %6048 = vmatpush1.bf16.msra.mxu0 0
      %6049 = vmatprep.subr.bf16.mxu0 0
      %6050 = vmatpush1.bf16.msra.mxu0 0
      %6051 = vmatprep.subr.bf16.mxu0 0
      %6052 = vmatpush1.bf16.msra.mxu0 0
      %6053 = vmatprep.subr.bf16.mxu0 0
      %6054 = vmatpush1.bf16.msra.mxu0 0
      %6055 = vmatprep.subr.bf16.mxu0 0
      %6056 = vmatpush1.bf16.msra.mxu0 0
      %6057 = vmatprep.mubr.bf16.mxu0 0
      %6058 = vmatmul.mubr.bf16.gmra.mrb[0].mxu0 %v6014
      %v6059 = vpop.f32.mrb[0].mxu0
      %v6060 = vadd.f32 0.0, %v6059
      %v6061 = vpop.f32.mrb[0].mxu0
      %v6062 = vpop.f32.mrb[0].mxu0
      %v6063 = vadd.f32 0.0, %v6062
      %v6064 = vpop.f32.mrb[0].mxu0
      %6065 = vmatprep.mubr.bf16.mxu0 0
      %6066 = vmatmul.mubr.bf16.gmra.mrb[0].mxu0 %v6017
      %v6067 = vpop.f32.mrb[0].mxu0
      %v6068 = vadd.f32 0.0, %v6067
      %v6069 = vpop.f32.mrb[0].mxu0
      %v6070 = vpop.f32.mrb[0].mxu0
      %v6071 = vadd.f32 0.0, %v6070
      %v6072 = vpop.f32.mrb[0].mxu0
      %6073 = vmatprep.mubr.bf16.mxu0 0
      %6074 = vmatmul.mubr.bf16.gmra.mrb[0].mxu0 %v6020
      %v6075 = vpop.f32.mrb[0].mxu0
      %v6076 = vadd.f32 0.0, %v6075
      %v6077 = vpop.f32.mrb[0].mxu0
      %v6078 = vpop.f32.mrb[0].mxu0
      %v6079 = vadd.f32 0.0, %v6078
      %v6080 = vpop.f32.mrb[0].mxu0
      %6081 = vmatprep.mubr.bf16.mxu0 0
      %6082 = vmatmul.mubr.bf16.gmra.mrb[0].mxu0 %v6023
      %v6083 = vpop.f32.mrb[0].mxu0
      %v6084 = vadd.f32 0.0, %v6083
      %v6085 = vpop.f32.mrb[0].mxu0
      %v6086 = vpop.f32.mrb[0].mxu0
      %v6087 = vadd.f32 0.0, %v6086
      %v6088 = vpop.f32.mrb[0].mxu0
      %6089 = vdwg.mxu0
      %v6090 = vadd.f32 %v5936, %v6060
      %v6091 = vadd.f32 %v5937, %v6063
      %v6092 = vadd.f32 %v5938, %v6068
      %v6093 = vadd.f32 %v5939, %v6071
      %v6094 = vadd.f32 %v5940, %v6076
      %v6095 = vadd.f32 %v5941, %v6079
      %v6096 = vadd.f32 %v5942, %v6084
      %v6097 = vadd.f32 %v5943, %v6087
      %v6098 = vld [vmem:[%s5334 + $0x2] sm:$0xff]
      %v6099 = vld [vmem:[%s5334 + $0x12] sm:$0xff]
      %v6100 = vld [vmem:[%s5334 + $0x22] sm:$0xff]
      %v6101 = vld [vmem:[%s5334 + $0x32] sm:$0xff]
      %v6102 = vld [vmem:[%s5334 + $0x42] sm:$0xff]
      %v6103 = vld [vmem:[%s5334 + $0x52] sm:$0xff]
      %v6104 = vld [vmem:[%s5334 + $0x62] sm:$0xff]
      %v6105 = vld [vmem:[%s5334 + $0x72] sm:$0xff]
      %v6106 = vpack.c.bf16 %v6098, %v6098
      %v6107 = vpack.c.bf16 %v6099, %v6099
      %v6108 = vpack.c.bf16 %v6100, %v6100
      %v6109 = vpack.c.bf16 %v6101, %v6101
      %v6110 = vpack.c.bf16 %v6102, %v6102
      %v6111 = vpack.c.bf16 %v6103, %v6103
      %v6112 = vpack.c.bf16 %v6104, %v6104
      %v6113 = vpack.c.bf16 %v6105, %v6105
      %s6114 = scalar_lea.vmem %s7, 160
      %v6115 = vld [vmem:[%s6114] sm:$0xf]
      %v6116 = vld [vmem:[%s6114 + $0x4] sm:$0xf]
      %v6117 = vld [vmem:[%s6114 + $0x8] sm:$0xf]
      %v6118 = vld [vmem:[%s6114 + $0xc] sm:$0xf]
      %v6119 = vld [vmem:[%s6114 + $0x10] sm:$0xf]
      %v6120 = vld [vmem:[%s6114 + $0x14] sm:$0xf]
      %v6121 = vld [vmem:[%s6114 + $0x18] sm:$0xf]
      %v6122 = vld [vmem:[%s6114 + $0x1c] sm:$0xf]
      %v6131 = vunpack.c.l.b16 %v6106
      %v6132 = vunpack.c.l.b16 %v6107
      %v6133 = vunpack.c.l.b16 %v6108
      %v6134 = vunpack.c.l.b16 %v6109
      %v6135 = vunpack.c.l.b16 %v6110
      %v6136 = vunpack.c.l.b16 %v6111
      %v6137 = vunpack.c.l.b16 %v6112
      %v6138 = vunpack.c.l.b16 %v6113
      %v6139 = vpack.c.b16 %v6132, %v6131
      %v6140 = vpack.c.b16 %v6134, %v6133
      %v6141 = vpack.c.b16 %v6136, %v6135
      %v6142 = vpack.c.b16 %v6138, %v6137
      %v6151 = vunpack.c.l.b16 %v6115
      %v6152 = vunpack.c.l.b16 %v6116
      %v6153 = vunpack.c.l.b16 %v6117
      %v6154 = vunpack.c.l.b16 %v6118
      %v6155 = vunpack.c.l.b16 %v6119
      %v6156 = vunpack.c.l.b16 %v6120
      %v6157 = vunpack.c.l.b16 %v6121
      %v6158 = vunpack.c.l.b16 %v6122
      %v6159 = vpack.c.b16 %v6152, %v6151
      %v6160 = vpack.c.b16 %v6154, %v6153
      %v6161 = vpack.c.b16 %v6156, %v6155
      %v6162 = vpack.c.b16 %v6158, %v6157
      %v6168 = vsel %vm469, %v6139, 0
      %v6171 = vsel %vm469, %v6140, 0
      %v6174 = vsel %vm469, %v6141, 0
      %v6177 = vsel %vm469, %v6142, 0
      %6179 = vmatprep.subr.bf16.mxu0 0
      %6180 = vmatpush1.bf16.msra.mxu0 %v6159
      %6181 = vmatprep.subr.bf16.mxu0 0
      %6182 = vmatpush1.bf16.msra.mxu0 %v6160
      %6183 = vmatprep.subr.bf16.mxu0 0
      %6184 = vmatpush1.bf16.msra.mxu0 %v6161
      %6185 = vmatprep.subr.bf16.mxu0 0
      %6186 = vmatpush1.bf16.msra.mxu0 %v6162
      %6187 = vmatprep.subr.bf16.mxu0 0
      %6188 = vmatpush1.bf16.msra.mxu0 0
      %6189 = vmatprep.subr.bf16.mxu0 0
      %6190 = vmatpush1.bf16.msra.mxu0 0
      %6191 = vmatprep.subr.bf16.mxu0 0
      %6192 = vmatpush1.bf16.msra.mxu0 0
      %6193 = vmatprep.subr.bf16.mxu0 0
      %6194 = vmatpush1.bf16.msra.mxu0 0
      %6195 = vmatprep.subr.bf16.mxu0 0
      %6196 = vmatpush1.bf16.msra.mxu0 0
      %6197 = vmatprep.subr.bf16.mxu0 0
      %6198 = vmatpush1.bf16.msra.mxu0 0
      %6199 = vmatprep.subr.bf16.mxu0 0
      %6200 = vmatpush1.bf16.msra.mxu0 0
      %6201 = vmatprep.subr.bf16.mxu0 0
      %6202 = vmatpush1.bf16.msra.mxu0 0
      %6203 = vmatprep.subr.bf16.mxu0 0
      %6204 = vmatpush1.bf16.msra.mxu0 0
      %6205 = vmatprep.subr.bf16.mxu0 0
      %6206 = vmatpush1.bf16.msra.mxu0 0
      %6207 = vmatprep.subr.bf16.mxu0 0
      %6208 = vmatpush1.bf16.msra.mxu0 0
      %6209 = vmatprep.subr.bf16.mxu0 0
      %6210 = vmatpush1.bf16.msra.mxu0 0
      %6211 = vmatprep.mubr.bf16.mxu0 0
      %6212 = vmatmul.mubr.bf16.gmra.mrb[0].mxu0 %v6168
      %v6213 = vpop.f32.mrb[0].mxu0
      %v6214 = vadd.f32 0.0, %v6213
      %v6215 = vpop.f32.mrb[0].mxu0
      %v6216 = vpop.f32.mrb[0].mxu0
      %v6217 = vadd.f32 0.0, %v6216
      %v6218 = vpop.f32.mrb[0].mxu0
      %6219 = vmatprep.mubr.bf16.mxu0 0
      %6220 = vmatmul.mubr.bf16.gmra.mrb[0].mxu0 %v6171
      %v6221 = vpop.f32.mrb[0].mxu0
      %v6222 = vadd.f32 0.0, %v6221
      %v6223 = vpop.f32.mrb[0].mxu0
      %v6224 = vpop.f32.mrb[0].mxu0
      %v6225 = vadd.f32 0.0, %v6224
      %v6226 = vpop.f32.mrb[0].mxu0
      %6227 = vmatprep.mubr.bf16.mxu0 0
      %6228 = vmatmul.mubr.bf16.gmra.mrb[0].mxu0 %v6174
      %v6229 = vpop.f32.mrb[0].mxu0
      %v6230 = vadd.f32 0.0, %v6229
      %v6231 = vpop.f32.mrb[0].mxu0
      %v6232 = vpop.f32.mrb[0].mxu0
      %v6233 = vadd.f32 0.0, %v6232
      %v6234 = vpop.f32.mrb[0].mxu0
      %6235 = vmatprep.mubr.bf16.mxu0 0
      %6236 = vmatmul.mubr.bf16.gmra.mrb[0].mxu0 %v6177
      %v6237 = vpop.f32.mrb[0].mxu0
      %v6238 = vadd.f32 0.0, %v6237
      %v6239 = vpop.f32.mrb[0].mxu0
      %v6240 = vpop.f32.mrb[0].mxu0
      %v6241 = vadd.f32 0.0, %v6240
      %v6242 = vpop.f32.mrb[0].mxu0
      %6243 = vdwg.mxu0
      %v6244 = vadd.f32 %v6090, %v6214
      %v6245 = vadd.f32 %v6091, %v6217
      %v6246 = vadd.f32 %v6092, %v6222
      %v6247 = vadd.f32 %v6093, %v6225
      %v6248 = vadd.f32 %v6094, %v6230
      %v6249 = vadd.f32 %v6095, %v6233
      %v6250 = vadd.f32 %v6096, %v6238
      %v6251 = vadd.f32 %v6097, %v6241
      %s6252 = scalar_lea.vmem [#allocation3], 32
      %v6253 = vld [vmem:[%s6252] sm:$0xff]
      %v6254 = vld [vmem:[%s6252 + $0x10] sm:$0xff]
      %v6255 = vld [vmem:[%s6252 + $0x20] sm:$0xff]
      %v6256 = vld [vmem:[%s6252 + $0x30] sm:$0xff]
      %v6257 = vld [vmem:[%s6252 + $0x40] sm:$0xff]
      %v6258 = vld [vmem:[%s6252 + $0x50] sm:$0xff]
      %v6259 = vld [vmem:[%s6252 + $0x60] sm:$0xff]
      %v6260 = vld [vmem:[%s6252 + $0x70] sm:$0xff]
      %v6261 = vpack.c.bf16 %v6253, %v6253
      %v6262 = vpack.c.bf16 %v6254, %v6254
      %v6263 = vpack.c.bf16 %v6255, %v6255
      %v6264 = vpack.c.bf16 %v6256, %v6256
      %v6265 = vpack.c.bf16 %v6257, %v6257
      %v6266 = vpack.c.bf16 %v6258, %v6258
      %v6267 = vpack.c.bf16 %v6259, %v6259
      %v6268 = vpack.c.bf16 %v6260, %v6260
      %s6269 = scalar_lea.vmem %s7, 192
      %v6270 = vld [vmem:[%s6269] sm:$0xf]
      %v6271 = vld [vmem:[%s6269 + $0x4] sm:$0xf]
      %v6272 = vld [vmem:[%s6269 + $0x8] sm:$0xf]
      %v6273 = vld [vmem:[%s6269 + $0xc] sm:$0xf]
      %v6274 = vld [vmem:[%s6269 + $0x10] sm:$0xf]
      %v6275 = vld [vmem:[%s6269 + $0x14] sm:$0xf]
      %v6276 = vld [vmem:[%s6269 + $0x18] sm:$0xf]
      %v6277 = vld [vmem:[%s6269 + $0x1c] sm:$0xf]
      %v6286 = vunpack.c.l.b16 %v6261
      %v6287 = vunpack.c.l.b16 %v6262
      %v6288 = vunpack.c.l.b16 %v6263
      %v6289 = vunpack.c.l.b16 %v6264
      %v6290 = vunpack.c.l.b16 %v6265
      %v6291 = vunpack.c.l.b16 %v6266
      %v6292 = vunpack.c.l.b16 %v6267
      %v6293 = vunpack.c.l.b16 %v6268
      %v6294 = vpack.c.b16 %v6287, %v6286
      %v6295 = vpack.c.b16 %v6289, %v6288
      %v6296 = vpack.c.b16 %v6291, %v6290
      %v6297 = vpack.c.b16 %v6293, %v6292
      %v6306 = vunpack.c.l.b16 %v6270
      %v6307 = vunpack.c.l.b16 %v6271
      %v6308 = vunpack.c.l.b16 %v6272
      %v6309 = vunpack.c.l.b16 %v6273
      %v6310 = vunpack.c.l.b16 %v6274
      %v6311 = vunpack.c.l.b16 %v6275
      %v6312 = vunpack.c.l.b16 %v6276
      %v6313 = vunpack.c.l.b16 %v6277
      %v6314 = vpack.c.b16 %v6307, %v6306
      %v6315 = vpack.c.b16 %v6309, %v6308
      %v6316 = vpack.c.b16 %v6311, %v6310
      %v6317 = vpack.c.b16 %v6313, %v6312
      %v6323 = vsel %vm469, %v6294, 0
      %v6326 = vsel %vm469, %v6295, 0
      %v6329 = vsel %vm469, %v6296, 0
      %v6332 = vsel %vm469, %v6297, 0
      %6334 = vmatprep.subr.bf16.mxu0 0
      %6335 = vmatpush1.bf16.msra.mxu0 %v6314
      %6336 = vmatprep.subr.bf16.mxu0 0
      %6337 = vmatpush1.bf16.msra.mxu0 %v6315
      %6338 = vmatprep.subr.bf16.mxu0 0
      %6339 = vmatpush1.bf16.msra.mxu0 %v6316
      %6340 = vmatprep.subr.bf16.mxu0 0
      %6341 = vmatpush1.bf16.msra.mxu0 %v6317
      %6342 = vmatprep.subr.bf16.mxu0 0
      %6343 = vmatpush1.bf16.msra.mxu0 0
      %6344 = vmatprep.subr.bf16.mxu0 0
      %6345 = vmatpush1.bf16.msra.mxu0 0
      %6346 = vmatprep.subr.bf16.mxu0 0
      %6347 = vmatpush1.bf16.msra.mxu0 0
      %6348 = vmatprep.subr.bf16.mxu0 0
      %6349 = vmatpush1.bf16.msra.mxu0 0
      %6350 = vmatprep.subr.bf16.mxu0 0
      %6351 = vmatpush1.bf16.msra.mxu0 0
      %6352 = vmatprep.subr.bf16.mxu0 0
      %6353 = vmatpush1.bf16.msra.mxu0 0
      %6354 = vmatprep.subr.bf16.mxu0 0
      %6355 = vmatpush1.bf16.msra.mxu0 0
      %6356 = vmatprep.subr.bf16.mxu0 0
      %6357 = vmatpush1.bf16.msra.mxu0 0
      %6358 = vmatprep.subr.bf16.mxu0 0
      %6359 = vmatpush1.bf16.msra.mxu0 0
      %6360 = vmatprep.subr.bf16.mxu0 0
      %6361 = vmatpush1.bf16.msra.mxu0 0
      %6362 = vmatprep.subr.bf16.mxu0 0
      %6363 = vmatpush1.bf16.msra.mxu0 0
      %6364 = vmatprep.subr.bf16.mxu0 0
      %6365 = vmatpush1.bf16.msra.mxu0 0
      %6366 = vmatprep.mubr.bf16.mxu0 0
      %6367 = vmatmul.mubr.bf16.gmra.mrb[0].mxu0 %v6323
      %v6368 = vpop.f32.mrb[0].mxu0
      %v6369 = vadd.f32 0.0, %v6368
      %v6370 = vpop.f32.mrb[0].mxu0
      %v6371 = vpop.f32.mrb[0].mxu0
      %v6372 = vadd.f32 0.0, %v6371
      %v6373 = vpop.f32.mrb[0].mxu0
      %6374 = vmatprep.mubr.bf16.mxu0 0
      %6375 = vmatmul.mubr.bf16.gmra.mrb[0].mxu0 %v6326
      %v6376 = vpop.f32.mrb[0].mxu0
      %v6377 = vadd.f32 0.0, %v6376
      %v6378 = vpop.f32.mrb[0].mxu0
      %v6379 = vpop.f32.mrb[0].mxu0
      %v6380 = vadd.f32 0.0, %v6379
      %v6381 = vpop.f32.mrb[0].mxu0
      %6382 = vmatprep.mubr.bf16.mxu0 0
      %6383 = vmatmul.mubr.bf16.gmra.mrb[0].mxu0 %v6329
      %v6384 = vpop.f32.mrb[0].mxu0
      %v6385 = vadd.f32 0.0, %v6384
      %v6386 = vpop.f32.mrb[0].mxu0
      %v6387 = vpop.f32.mrb[0].mxu0
      %v6388 = vadd.f32 0.0, %v6387
      %v6389 = vpop.f32.mrb[0].mxu0
      %6390 = vmatprep.mubr.bf16.mxu0 0
      %6391 = vmatmul.mubr.bf16.gmra.mrb[0].mxu0 %v6332
      %v6392 = vpop.f32.mrb[0].mxu0
      %v6393 = vadd.f32 0.0, %v6392
      %v6394 = vpop.f32.mrb[0].mxu0
      %v6395 = vpop.f32.mrb[0].mxu0
      %v6396 = vadd.f32 0.0, %v6395
      %v6397 = vpop.f32.mrb[0].mxu0
      %6398 = vdwg.mxu0
      %v6399 = vadd.f32 %v6244, %v6369
      %v6400 = vadd.f32 %v6245, %v6372
      %v6401 = vadd.f32 %v6246, %v6377
      %v6402 = vadd.f32 %v6247, %v6380
      %v6403 = vadd.f32 %v6248, %v6385
      %v6404 = vadd.f32 %v6249, %v6388
      %v6405 = vadd.f32 %v6250, %v6393
      %v6406 = vadd.f32 %v6251, %v6396
      %v6407 = vld [vmem:[%s6252 + $0x1] sm:$0xff]
      %v6408 = vld [vmem:[%s6252 + $0x11] sm:$0xff]
      %v6409 = vld [vmem:[%s6252 + $0x21] sm:$0xff]
      %v6410 = vld [vmem:[%s6252 + $0x31] sm:$0xff]
      %v6411 = vld [vmem:[%s6252 + $0x41] sm:$0xff]
      %v6412 = vld [vmem:[%s6252 + $0x51] sm:$0xff]
      %v6413 = vld [vmem:[%s6252 + $0x61] sm:$0xff]
      %v6414 = vld [vmem:[%s6252 + $0x71] sm:$0xff]
      %v6415 = vpack.c.bf16 %v6407, %v6407
      %v6416 = vpack.c.bf16 %v6408, %v6408
      %v6417 = vpack.c.bf16 %v6409, %v6409
      %v6418 = vpack.c.bf16 %v6410, %v6410
      %v6419 = vpack.c.bf16 %v6411, %v6411
      %v6420 = vpack.c.bf16 %v6412, %v6412
      %v6421 = vpack.c.bf16 %v6413, %v6413
      %v6422 = vpack.c.bf16 %v6414, %v6414
      %s6423 = scalar_lea.vmem %s7, 224
      %v6424 = vld [vmem:[%s6423] sm:$0xf]
      %v6425 = vld [vmem:[%s6423 + $0x4] sm:$0xf]
      %v6426 = vld [vmem:[%s6423 + $0x8] sm:$0xf]
      %v6427 = vld [vmem:[%s6423 + $0xc] sm:$0xf]
      %v6428 = vld [vmem:[%s6423 + $0x10] sm:$0xf]
      %v6429 = vld [vmem:[%s6423 + $0x14] sm:$0xf]
      %v6430 = vld [vmem:[%s6423 + $0x18] sm:$0xf]
      %v6431 = vld [vmem:[%s6423 + $0x1c] sm:$0xf]
      %v6440 = vunpack.c.l.b16 %v6415
      %v6441 = vunpack.c.l.b16 %v6416
      %v6442 = vunpack.c.l.b16 %v6417
      %v6443 = vunpack.c.l.b16 %v6418
      %v6444 = vunpack.c.l.b16 %v6419
      %v6445 = vunpack.c.l.b16 %v6420
      %v6446 = vunpack.c.l.b16 %v6421
      %v6447 = vunpack.c.l.b16 %v6422
      %v6448 = vpack.c.b16 %v6441, %v6440
      %v6449 = vpack.c.b16 %v6443, %v6442
      %v6450 = vpack.c.b16 %v6445, %v6444
      %v6451 = vpack.c.b16 %v6447, %v6446
      %v6460 = vunpack.c.l.b16 %v6424
      %v6461 = vunpack.c.l.b16 %v6425
      %v6462 = vunpack.c.l.b16 %v6426
      %v6463 = vunpack.c.l.b16 %v6427
      %v6464 = vunpack.c.l.b16 %v6428
      %v6465 = vunpack.c.l.b16 %v6429
      %v6466 = vunpack.c.l.b16 %v6430
      %v6467 = vunpack.c.l.b16 %v6431
      %v6468 = vpack.c.b16 %v6461, %v6460
      %v6469 = vpack.c.b16 %v6463, %v6462
      %v6470 = vpack.c.b16 %v6465, %v6464
      %v6471 = vpack.c.b16 %v6467, %v6466
      %v6477 = vsel %vm469, %v6448, 0
      %v6480 = vsel %vm469, %v6449, 0
      %v6483 = vsel %vm469, %v6450, 0
      %v6486 = vsel %vm469, %v6451, 0
      %6488 = vmatprep.subr.bf16.mxu0 0
      %6489 = vmatpush1.bf16.msra.mxu0 %v6468
      %6490 = vmatprep.subr.bf16.mxu0 0
      %6491 = vmatpush1.bf16.msra.mxu0 %v6469
      %6492 = vmatprep.subr.bf16.mxu0 0
      %6493 = vmatpush1.bf16.msra.mxu0 %v6470
      %6494 = vmatprep.subr.bf16.mxu0 0
      %6495 = vmatpush1.bf16.msra.mxu0 %v6471
      %6496 = vmatprep.subr.bf16.mxu0 0
      %6497 = vmatpush1.bf16.msra.mxu0 0
      %6498 = vmatprep.subr.bf16.mxu0 0
      %6499 = vmatpush1.bf16.msra.mxu0 0
      %6500 = vmatprep.subr.bf16.mxu0 0
      %6501 = vmatpush1.bf16.msra.mxu0 0
      %6502 = vmatprep.subr.bf16.mxu0 0
      %6503 = vmatpush1.bf16.msra.mxu0 0
      %6504 = vmatprep.subr.bf16.mxu0 0
      %6505 = vmatpush1.bf16.msra.mxu0 0
      %6506 = vmatprep.subr.bf16.mxu0 0
      %6507 = vmatpush1.bf16.msra.mxu0 0
      %6508 = vmatprep.subr.bf16.mxu0 0
      %6509 = vmatpush1.bf16.msra.mxu0 0
      %6510 = vmatprep.subr.bf16.mxu0 0
      %6511 = vmatpush1.bf16.msra.mxu0 0
      %6512 = vmatprep.subr.bf16.mxu0 0
      %6513 = vmatpush1.bf16.msra.mxu0 0
      %6514 = vmatprep.subr.bf16.mxu0 0
      %6515 = vmatpush1.bf16.msra.mxu0 0
      %6516 = vmatprep.subr.bf16.mxu0 0
      %6517 = vmatpush1.bf16.msra.mxu0 0
      %6518 = vmatprep.subr.bf16.mxu0 0
      %6519 = vmatpush1.bf16.msra.mxu0 0
      %6520 = vmatprep.mubr.bf16.mxu0 0
      %6521 = vmatmul.mubr.bf16.gmra.mrb[0].mxu0 %v6477
      %v6522 = vpop.f32.mrb[0].mxu0
      %v6523 = vadd.f32 0.0, %v6522
      %v6524 = vpop.f32.mrb[0].mxu0
      %v6525 = vpop.f32.mrb[0].mxu0
      %v6526 = vadd.f32 0.0, %v6525
      %v6527 = vpop.f32.mrb[0].mxu0
      %6528 = vmatprep.mubr.bf16.mxu0 0
      %6529 = vmatmul.mubr.bf16.gmra.mrb[0].mxu0 %v6480
      %v6530 = vpop.f32.mrb[0].mxu0
      %v6531 = vadd.f32 0.0, %v6530
      %v6532 = vpop.f32.mrb[0].mxu0
      %v6533 = vpop.f32.mrb[0].mxu0
      %v6534 = vadd.f32 0.0, %v6533
      %v6535 = vpop.f32.mrb[0].mxu0
      %6536 = vmatprep.mubr.bf16.mxu0 0
      %6537 = vmatmul.mubr.bf16.gmra.mrb[0].mxu0 %v6483
      %v6538 = vpop.f32.mrb[0].mxu0
      %v6539 = vadd.f32 0.0, %v6538
      %v6540 = vpop.f32.mrb[0].mxu0
      %v6541 = vpop.f32.mrb[0].mxu0
      %v6542 = vadd.f32 0.0, %v6541
      %v6543 = vpop.f32.mrb[0].mxu0
      %6544 = vmatprep.mubr.bf16.mxu0 0
      %6545 = vmatmul.mubr.bf16.gmra.mrb[0].mxu0 %v6486
      %v6546 = vpop.f32.mrb[0].mxu0
      %v6547 = vadd.f32 0.0, %v6546
      %v6548 = vpop.f32.mrb[0].mxu0
      %v6549 = vpop.f32.mrb[0].mxu0
      %v6550 = vadd.f32 0.0, %v6549
      %v6551 = vpop.f32.mrb[0].mxu0
      %6552 = vdwg.mxu0
      %v6553 = vadd.f32 %v6399, %v6523
      %v6554 = vadd.f32 %v6400, %v6526
      %v6555 = vadd.f32 %v6401, %v6531
      %v6556 = vadd.f32 %v6402, %v6534
      %v6557 = vadd.f32 %v6403, %v6539
      %v6558 = vadd.f32 %v6404, %v6542
      %v6559 = vadd.f32 %v6405, %v6547
      %v6560 = vadd.f32 %v6406, %v6550
      %v6561 = vld [vmem:[%s6252 + $0x2] sm:$0xff]
      %v6562 = vld [vmem:[%s6252 + $0x12] sm:$0xff]
      %v6563 = vld [vmem:[%s6252 + $0x22] sm:$0xff]
      %v6564 = vld [vmem:[%s6252 + $0x32] sm:$0xff]
      %v6565 = vld [vmem:[%s6252 + $0x42] sm:$0xff]
      %v6566 = vld [vmem:[%s6252 + $0x52] sm:$0xff]
      %v6567 = vld [vmem:[%s6252 + $0x62] sm:$0xff]
      %v6568 = vld [vmem:[%s6252 + $0x72] sm:$0xff]
      %v6569 = vpack.c.bf16 %v6561, %v6561
      %v6570 = vpack.c.bf16 %v6562, %v6562
      %v6571 = vpack.c.bf16 %v6563, %v6563
      %v6572 = vpack.c.bf16 %v6564, %v6564
      %v6573 = vpack.c.bf16 %v6565, %v6565
      %v6574 = vpack.c.bf16 %v6566, %v6566
      %v6575 = vpack.c.bf16 %v6567, %v6567
      %v6576 = vpack.c.bf16 %v6568, %v6568
      %s6577 = scalar_lea.vmem %s7, 256
      %v6578 = vld [vmem:[%s6577] sm:$0xf]
      %v6579 = vld [vmem:[%s6577 + $0x4] sm:$0xf]
      %v6580 = vld [vmem:[%s6577 + $0x8] sm:$0xf]
      %v6581 = vld [vmem:[%s6577 + $0xc] sm:$0xf]
      %v6582 = vld [vmem:[%s6577 + $0x10] sm:$0xf]
      %v6583 = vld [vmem:[%s6577 + $0x14] sm:$0xf]
      %v6584 = vld [vmem:[%s6577 + $0x18] sm:$0xf]
      %v6585 = vld [vmem:[%s6577 + $0x1c] sm:$0xf]
      %v6594 = vunpack.c.l.b16 %v6569
      %v6595 = vunpack.c.l.b16 %v6570
      %v6596 = vunpack.c.l.b16 %v6571
      %v6597 = vunpack.c.l.b16 %v6572
      %v6598 = vunpack.c.l.b16 %v6573
      %v6599 = vunpack.c.l.b16 %v6574
      %v6600 = vunpack.c.l.b16 %v6575
      %v6601 = vunpack.c.l.b16 %v6576
      %v6602 = vpack.c.b16 %v6595, %v6594
      %v6603 = vpack.c.b16 %v6597, %v6596
      %v6604 = vpack.c.b16 %v6599, %v6598
      %v6605 = vpack.c.b16 %v6601, %v6600
      %v6614 = vunpack.c.l.b16 %v6578
      %v6615 = vunpack.c.l.b16 %v6579
      %v6616 = vunpack.c.l.b16 %v6580
      %v6617 = vunpack.c.l.b16 %v6581
      %v6618 = vunpack.c.l.b16 %v6582
      %v6619 = vunpack.c.l.b16 %v6583
      %v6620 = vunpack.c.l.b16 %v6584
      %v6621 = vunpack.c.l.b16 %v6585
      %v6622 = vpack.c.b16 %v6615, %v6614
      %v6623 = vpack.c.b16 %v6617, %v6616
      %v6624 = vpack.c.b16 %v6619, %v6618
      %v6625 = vpack.c.b16 %v6621, %v6620
      %v6631 = vsel %vm469, %v6602, 0
      %v6634 = vsel %vm469, %v6603, 0
      %v6637 = vsel %vm469, %v6604, 0
      %v6640 = vsel %vm469, %v6605, 0
      %6642 = vmatprep.subr.bf16.mxu0 0
      %6643 = vmatpush1.bf16.msra.mxu0 %v6622
      %6644 = vmatprep.subr.bf16.mxu0 0
      %6645 = vmatpush1.bf16.msra.mxu0 %v6623
      %6646 = vmatprep.subr.bf16.mxu0 0
      %6647 = vmatpush1.bf16.msra.mxu0 %v6624
      %6648 = vmatprep.subr.bf16.mxu0 0
      %6649 = vmatpush1.bf16.msra.mxu0 %v6625
      %6650 = vmatprep.subr.bf16.mxu0 0
      %6651 = vmatpush1.bf16.msra.mxu0 0
      %6652 = vmatprep.subr.bf16.mxu0 0
      %6653 = vmatpush1.bf16.msra.mxu0 0
      %6654 = vmatprep.subr.bf16.mxu0 0
      %6655 = vmatpush1.bf16.msra.mxu0 0
      %6656 = vmatprep.subr.bf16.mxu0 0
      %6657 = vmatpush1.bf16.msra.mxu0 0
      %6658 = vmatprep.subr.bf16.mxu0 0
      %6659 = vmatpush1.bf16.msra.mxu0 0
      %6660 = vmatprep.subr.bf16.mxu0 0
      %6661 = vmatpush1.bf16.msra.mxu0 0
      %6662 = vmatprep.subr.bf16.mxu0 0
      %6663 = vmatpush1.bf16.msra.mxu0 0
      %6664 = vmatprep.subr.bf16.mxu0 0
      %6665 = vmatpush1.bf16.msra.mxu0 0
      %6666 = vmatprep.subr.bf16.mxu0 0
      %6667 = vmatpush1.bf16.msra.mxu0 0
      %6668 = vmatprep.subr.bf16.mxu0 0
      %6669 = vmatpush1.bf16.msra.mxu0 0
      %6670 = vmatprep.subr.bf16.mxu0 0
      %6671 = vmatpush1.bf16.msra.mxu0 0
      %6672 = vmatprep.subr.bf16.mxu0 0
      %6673 = vmatpush1.bf16.msra.mxu0 0
      %6674 = vmatprep.mubr.bf16.mxu0 0
      %6675 = vmatmul.mubr.bf16.gmra.mrb[0].mxu0 %v6631
      %v6676 = vpop.f32.mrb[0].mxu0
      %v6677 = vadd.f32 0.0, %v6676
      %v6678 = vpop.f32.mrb[0].mxu0
      %v6679 = vpop.f32.mrb[0].mxu0
      %v6680 = vadd.f32 0.0, %v6679
      %v6681 = vpop.f32.mrb[0].mxu0
      %6682 = vmatprep.mubr.bf16.mxu0 0
      %6683 = vmatmul.mubr.bf16.gmra.mrb[0].mxu0 %v6634
      %v6684 = vpop.f32.mrb[0].mxu0
      %v6685 = vadd.f32 0.0, %v6684
      %v6686 = vpop.f32.mrb[0].mxu0
      %v6687 = vpop.f32.mrb[0].mxu0
      %v6688 = vadd.f32 0.0, %v6687
      %v6689 = vpop.f32.mrb[0].mxu0
      %6690 = vmatprep.mubr.bf16.mxu0 0
      %6691 = vmatmul.mubr.bf16.gmra.mrb[0].mxu0 %v6637
      %v6692 = vpop.f32.mrb[0].mxu0
      %v6693 = vadd.f32 0.0, %v6692
      %v6694 = vpop.f32.mrb[0].mxu0
      %v6695 = vpop.f32.mrb[0].mxu0
      %v6696 = vadd.f32 0.0, %v6695
      %v6697 = vpop.f32.mrb[0].mxu0
      %6698 = vmatprep.mubr.bf16.mxu0 0
      %6699 = vmatmul.mubr.bf16.gmra.mrb[0].mxu0 %v6640
      %v6700 = vpop.f32.mrb[0].mxu0
      %v6701 = vadd.f32 0.0, %v6700
      %v6702 = vpop.f32.mrb[0].mxu0
      %v6703 = vpop.f32.mrb[0].mxu0
      %v6704 = vadd.f32 0.0, %v6703
      %v6705 = vpop.f32.mrb[0].mxu0
      %6706 = vdwg.mxu0
      %v6707 = vadd.f32 %v6553, %v6677
      %v6708 = vadd.f32 %v6554, %v6680
      %v6709 = vadd.f32 %v6555, %v6685
      %v6710 = vadd.f32 %v6556, %v6688
      %v6711 = vadd.f32 %v6557, %v6693
      %v6712 = vadd.f32 %v6558, %v6696
      %v6713 = vadd.f32 %v6559, %v6701
      %v6714 = vadd.f32 %v6560, %v6704
      %v6716 = vlaneseq
      %v6717 = vshrl.u32 %v6716, 7
      %v6718 = vsub.s32 0, %v6717
      %v6719 = vrot.slane %v5343, %v6718
      %v6721 = vmul.f32 %v6707, %v6719
      %v6722 = vmul.f32 %v6708, %v6719
      %v6723 = vmul.f32 %v6709, %v6719
      %v6724 = vmul.f32 %v6710, %v6719
      %v6725 = vmul.f32 %v6711, %v6719
      %v6726 = vmul.f32 %v6712, %v6719
      %v6727 = vmul.f32 %v6713, %v6719
      %v6728 = vmul.f32 %v6714, %v6719
      %v6730 = vlaneseq
      %v6731 = vshrl.u32 %v6730, 7
      %v6732 = vsub.s32 0, %v6731
      %v6733 = vrot.slane %v5344, %v6732
      %v6735 = vadd.f32 %v6721, %v6733
      %v6736 = vadd.f32 %v6722, %v6733
      %v6737 = vadd.f32 %v6723, %v6733
      %v6738 = vadd.f32 %v6724, %v6733
      %v6739 = vadd.f32 %v6725, %v6733
      %v6740 = vadd.f32 %v6726, %v6733
      %v6741 = vadd.f32 %v6727, %v6733
      %v6742 = vadd.f32 %v6728, %v6733
      %v6743 = vmax.f32 %v6735, 0.0
      %v6744 = vmax.f32 %v6736, 0.0
      %v6745 = vmax.f32 %v6737, 0.0
      %v6746 = vmax.f32 %v6738, 0.0
      %v6747 = vmax.f32 %v6739, 0.0
      %v6748 = vmax.f32 %v6740, 0.0
      %v6749 = vmax.f32 %v6741, 0.0
      %v6750 = vmax.f32 %v6742, 0.0
      %v6751 = vmax.f32 %v6743, %v6744
      %v6752 = vmax.f32 %v6745, %v6746
      %v6753 = vmax.f32 %v6747, %v6748
      %v6754 = vmax.f32 %v6749, %v6750
      %6755 = vst [vmem:[#allocation6] sm:$0xff] %v6751
      %6756 = vst [vmem:[#allocation6 + $0x8] sm:$0xff] %v6752
      %6757 = vst [vmem:[#allocation6 + $0x10] sm:$0xff] %v6753
      %6758 = vst [vmem:[#allocation6 + $0x18] sm:$0xff] %v6754
      %v6759 = vld [vmem:[#allocation6] ss:$2 sm:$0xff]
      %s6760 = scalar_lea.vmem [#allocation6], 16
      %v6761 = vld [vmem:[%s6760] ss:$2 sm:$0xff]
      %s6762 = scalar_lea.vmem [#allocation6], 1
      %v6763 = vld [vmem:[%s6762] ss:$2 sm:$0xff]
      %s6764 = scalar_lea.vmem [#allocation6], 17
      %v6765 = vld [vmem:[%s6764] ss:$2 sm:$0xff]
      %v6766 = vmax.f32 %v6759, %v6763
      %v6767 = vmax.f32 %v6761, %v6765
      %v6770 = vcombine.high %v6766, %v6766
      %v6771 = vcombine.high %v6767, %v6767
      %v6774 = vpack.c.bf16 %v6766, %v6766
      %v6775 = vld [vmem:[%s10] sm:$0xf]
      %v6776 = vld [vmem:[%s10 + $0x4] sm:$0xf]
      %v6777 = vld [vmem:[%s10 + $0x8] sm:$0xf]
      %v6778 = vld [vmem:[%s10 + $0xc] sm:$0xf]
      %v6779 = vld [vmem:[%s10 + $0x10] sm:$0xf]
      %v6780 = vld [vmem:[%s10 + $0x14] sm:$0xf]
      %v6781 = vld [vmem:[%s10 + $0x18] sm:$0xf]
      %v6782 = vld [vmem:[%s10 + $0x1c] sm:$0xf]
      %v6783 = vld [vmem:[%s10 + $0x20] sm:$0xf]
      %v6784 = vld [vmem:[%s10 + $0x24] sm:$0xf]
      %v6785 = vld [vmem:[%s10 + $0x28] sm:$0xf]
      %v6786 = vld [vmem:[%s10 + $0x2c] sm:$0xf]
      %v6787 = vld [vmem:[%s10 + $0x30] sm:$0xf]
      %v6788 = vld [vmem:[%s10 + $0x34] sm:$0xf]
      %v6789 = vld [vmem:[%s10 + $0x38] sm:$0xf]
      %v6790 = vld [vmem:[%s10 + $0x3c] sm:$0xf]
      %v6791 = vpack.c.bf16 %v6770, %v6770
      %s6792 = scalar_lea.vmem %s10, 64
      %v6793 = vld [vmem:[%s6792] sm:$0xf]
      %v6794 = vld [vmem:[%s6792 + $0x4] sm:$0xf]
      %v6795 = vld [vmem:[%s6792 + $0x8] sm:$0xf]
      %v6796 = vld [vmem:[%s6792 + $0xc] sm:$0xf]
      %v6797 = vld [vmem:[%s6792 + $0x10] sm:$0xf]
      %v6798 = vld [vmem:[%s6792 + $0x14] sm:$0xf]
      %v6799 = vld [vmem:[%s6792 + $0x18] sm:$0xf]
      %v6800 = vld [vmem:[%s6792 + $0x1c] sm:$0xf]
      %v6801 = vld [vmem:[%s6792 + $0x20] sm:$0xf]
      %v6802 = vld [vmem:[%s6792 + $0x24] sm:$0xf]
      %v6803 = vld [vmem:[%s6792 + $0x28] sm:$0xf]
      %v6804 = vld [vmem:[%s6792 + $0x2c] sm:$0xf]
      %v6805 = vld [vmem:[%s6792 + $0x30] sm:$0xf]
      %v6806 = vld [vmem:[%s6792 + $0x34] sm:$0xf]
      %v6807 = vld [vmem:[%s6792 + $0x38] sm:$0xf]
      %v6808 = vld [vmem:[%s6792 + $0x3c] sm:$0xf]
      %v6825 = vunpack.c.l.b16 %v6793
      %v6826 = vunpack.c.l.b16 %v6794
      %v6827 = vunpack.c.l.b16 %v6795
      %v6828 = vunpack.c.l.b16 %v6796
      %v6829 = vunpack.c.l.b16 %v6797
      %v6830 = vunpack.c.l.b16 %v6798
      %v6831 = vunpack.c.l.b16 %v6799
      %v6832 = vunpack.c.l.b16 %v6800
      %v6833 = vunpack.c.l.b16 %v6801
      %v6834 = vunpack.c.l.b16 %v6802
      %v6835 = vunpack.c.l.b16 %v6803
      %v6836 = vunpack.c.l.b16 %v6804
      %v6837 = vunpack.c.l.b16 %v6805
      %v6838 = vunpack.c.l.b16 %v6806
      %v6839 = vunpack.c.l.b16 %v6807
      %v6840 = vunpack.c.l.b16 %v6808
      %v6841 = vpack.c.b16 %v6826, %v6825
      %v6842 = vpack.c.b16 %v6828, %v6827
      %v6843 = vpack.c.b16 %v6830, %v6829
      %v6844 = vpack.c.b16 %v6832, %v6831
      %v6845 = vpack.c.b16 %v6834, %v6833
      %v6846 = vpack.c.b16 %v6836, %v6835
      %v6847 = vpack.c.b16 %v6838, %v6837
      %v6848 = vpack.c.b16 %v6840, %v6839
      %6857 = vmatprep.subr.bf16.mxu0 0
      %6858 = vmatpush1.bf16.msra.mxu0 %v6841
      %6859 = vmatprep.subr.bf16.mxu0 0
      %6860 = vmatpush1.bf16.msra.mxu0 %v6842
      %6861 = vmatprep.subr.bf16.mxu0 0
      %6862 = vmatpush1.bf16.msra.mxu0 %v6843
      %6863 = vmatprep.subr.bf16.mxu0 0
      %6864 = vmatpush1.bf16.msra.mxu0 %v6844
      %6865 = vmatprep.subr.bf16.mxu0 0
      %6866 = vmatpush1.bf16.msra.mxu0 %v6845
      %6867 = vmatprep.subr.bf16.mxu0 0
      %6868 = vmatpush1.bf16.msra.mxu0 %v6846
      %6869 = vmatprep.subr.bf16.mxu0 0
      %6870 = vmatpush1.bf16.msra.mxu0 %v6847
      %6871 = vmatprep.subr.bf16.mxu0 0
      %6872 = vmatpush1.bf16.msra.mxu0 %v6848
      %6873 = vmatprep.subr.bf16.mxu0 0
      %6874 = vmatpush1.bf16.msra.mxu0 0
      %6875 = vmatprep.subr.bf16.mxu0 0
      %6876 = vmatpush1.bf16.msra.mxu0 0
      %6877 = vmatprep.subr.bf16.mxu0 0
      %6878 = vmatpush1.bf16.msra.mxu0 0
      %6879 = vmatprep.subr.bf16.mxu0 0
      %6880 = vmatpush1.bf16.msra.mxu0 0
      %6881 = vmatprep.subr.bf16.mxu0 0
      %6882 = vmatpush1.bf16.msra.mxu0 0
      %6883 = vmatprep.subr.bf16.mxu0 0
      %6884 = vmatpush1.bf16.msra.mxu0 0
      %6885 = vmatprep.subr.bf16.mxu0 0
      %6886 = vmatpush1.bf16.msra.mxu0 0
      %6887 = vmatprep.subr.bf16.mxu0 0
      %6888 = vmatpush1.bf16.msra.mxu0 0
      %6889 = vmatprep.mubr.bf16.mxu0 0
      %6890 = vmatmul.mubr.bf16.gmra.mrb[0].mxu0 %v6791
      %v6891 = vpop.f32.mrb[0].mxu0
      %v6892 = vadd.f32 0.0, %v6891
      %v6893 = vpop.f32.mrb[0].mxu0
      %v6894 = vpop.f32.mrb[0].mxu0
      %v6895 = vpop.f32.mrb[0].mxu0
      %6896 = vdwg.mxu0
      %v6913 = vunpack.c.l.b16 %v6775
      %v6914 = vunpack.c.l.b16 %v6776
      %v6915 = vunpack.c.l.b16 %v6777
      %v6916 = vunpack.c.l.b16 %v6778
      %v6917 = vunpack.c.l.b16 %v6779
      %v6918 = vunpack.c.l.b16 %v6780
      %v6919 = vunpack.c.l.b16 %v6781
      %v6920 = vunpack.c.l.b16 %v6782
      %v6921 = vunpack.c.l.b16 %v6783
      %v6922 = vunpack.c.l.b16 %v6784
      %v6923 = vunpack.c.l.b16 %v6785
      %v6924 = vunpack.c.l.b16 %v6786
      %v6925 = vunpack.c.l.b16 %v6787
      %v6926 = vunpack.c.l.b16 %v6788
      %v6927 = vunpack.c.l.b16 %v6789
      %v6928 = vunpack.c.l.b16 %v6790
      %v6929 = vpack.c.b16 %v6914, %v6913
      %v6930 = vpack.c.b16 %v6916, %v6915
      %v6931 = vpack.c.b16 %v6918, %v6917
      %v6932 = vpack.c.b16 %v6920, %v6919
      %v6933 = vpack.c.b16 %v6922, %v6921
      %v6934 = vpack.c.b16 %v6924, %v6923
      %v6935 = vpack.c.b16 %v6926, %v6925
      %v6936 = vpack.c.b16 %v6928, %v6927
      %6945 = vmatprep.subr.bf16.mxu0 0
      %6946 = vmatpush1.bf16.msra.mxu0 %v6929
      %6947 = vmatprep.subr.bf16.mxu0 0
      %6948 = vmatpush1.bf16.msra.mxu0 %v6930
      %6949 = vmatprep.subr.bf16.mxu0 0
      %6950 = vmatpush1.bf16.msra.mxu0 %v6931
      %6951 = vmatprep.subr.bf16.mxu0 0
      %6952 = vmatpush1.bf16.msra.mxu0 %v6932
      %6953 = vmatprep.subr.bf16.mxu0 0
      %6954 = vmatpush1.bf16.msra.mxu0 %v6933
      %6955 = vmatprep.subr.bf16.mxu0 0
      %6956 = vmatpush1.bf16.msra.mxu0 %v6934
      %6957 = vmatprep.subr.bf16.mxu0 0
      %6958 = vmatpush1.bf16.msra.mxu0 %v6935
      %6959 = vmatprep.subr.bf16.mxu0 0
      %6960 = vmatpush1.bf16.msra.mxu0 %v6936
      %6961 = vmatprep.subr.bf16.mxu0 0
      %6962 = vmatpush1.bf16.msra.mxu0 0
      %6963 = vmatprep.subr.bf16.mxu0 0
      %6964 = vmatpush1.bf16.msra.mxu0 0
      %6965 = vmatprep.subr.bf16.mxu0 0
      %6966 = vmatpush1.bf16.msra.mxu0 0
      %6967 = vmatprep.subr.bf16.mxu0 0
      %6968 = vmatpush1.bf16.msra.mxu0 0
      %6969 = vmatprep.subr.bf16.mxu0 0
      %6970 = vmatpush1.bf16.msra.mxu0 0
      %6971 = vmatprep.subr.bf16.mxu0 0
      %6972 = vmatpush1.bf16.msra.mxu0 0
      %6973 = vmatprep.subr.bf16.mxu0 0
      %6974 = vmatpush1.bf16.msra.mxu0 0
      %6975 = vmatprep.subr.bf16.mxu0 0
      %6976 = vmatpush1.bf16.msra.mxu0 0
      %6977 = vmatprep.mubr.bf16.mxu0 0
      %6978 = vmatmul.mubr.bf16.gmra.mrb[0].mxu0 %v6774
      %v6979 = vpop.f32.mrb[0].mxu0
      %v6980 = vadd.f32 %v6892, %v6979
      %v6981 = vpop.f32.mrb[0].mxu0
      %v6982 = vpop.f32.mrb[0].mxu0
      %v6983 = vpop.f32.mrb[0].mxu0
      %6984 = vdwg.mxu0
      %v6985 = vpack.c.bf16 %v6767, %v6767
      %s6986 = scalar_lea.vmem %s10, 128
      %v6987 = vld [vmem:[%s6986] sm:$0xf]
      %v6988 = vld [vmem:[%s6986 + $0x4] sm:$0xf]
      %v6989 = vld [vmem:[%s6986 + $0x8] sm:$0xf]
      %v6990 = vld [vmem:[%s6986 + $0xc] sm:$0xf]
      %v6991 = vld [vmem:[%s6986 + $0x10] sm:$0xf]
      %v6992 = vld [vmem:[%s6986 + $0x14] sm:$0xf]
      %v6993 = vld [vmem:[%s6986 + $0x18] sm:$0xf]
      %v6994 = vld [vmem:[%s6986 + $0x1c] sm:$0xf]
      %v6995 = vld [vmem:[%s6986 + $0x20] sm:$0xf]
      %v6996 = vld [vmem:[%s6986 + $0x24] sm:$0xf]
      %v6997 = vld [vmem:[%s6986 + $0x28] sm:$0xf]
      %v6998 = vld [vmem:[%s6986 + $0x2c] sm:$0xf]
      %v6999 = vld [vmem:[%s6986 + $0x30] sm:$0xf]
      %v7000 = vld [vmem:[%s6986 + $0x34] sm:$0xf]
      %v7001 = vld [vmem:[%s6986 + $0x38] sm:$0xf]
      %v7002 = vld [vmem:[%s6986 + $0x3c] sm:$0xf]
      %v7019 = vunpack.c.l.b16 %v6987
      %v7020 = vunpack.c.l.b16 %v6988
      %v7021 = vunpack.c.l.b16 %v6989
      %v7022 = vunpack.c.l.b16 %v6990
      %v7023 = vunpack.c.l.b16 %v6991
      %v7024 = vunpack.c.l.b16 %v6992
      %v7025 = vunpack.c.l.b16 %v6993
      %v7026 = vunpack.c.l.b16 %v6994
      %v7027 = vunpack.c.l.b16 %v6995
      %v7028 = vunpack.c.l.b16 %v6996
      %v7029 = vunpack.c.l.b16 %v6997
      %v7030 = vunpack.c.l.b16 %v6998
      %v7031 = vunpack.c.l.b16 %v6999
      %v7032 = vunpack.c.l.b16 %v7000
      %v7033 = vunpack.c.l.b16 %v7001
      %v7034 = vunpack.c.l.b16 %v7002
      %v7035 = vpack.c.b16 %v7020, %v7019
      %v7036 = vpack.c.b16 %v7022, %v7021
      %v7037 = vpack.c.b16 %v7024, %v7023
      %v7038 = vpack.c.b16 %v7026, %v7025
      %v7039 = vpack.c.b16 %v7028, %v7027
      %v7040 = vpack.c.b16 %v7030, %v7029
      %v7041 = vpack.c.b16 %v7032, %v7031
      %v7042 = vpack.c.b16 %v7034, %v7033
      %7051 = vmatprep.subr.bf16.mxu0 0
      %7052 = vmatpush1.bf16.msra.mxu0 %v7035
      %7053 = vmatprep.subr.bf16.mxu0 0
      %7054 = vmatpush1.bf16.msra.mxu0 %v7036
      %7055 = vmatprep.subr.bf16.mxu0 0
      %7056 = vmatpush1.bf16.msra.mxu0 %v7037
      %7057 = vmatprep.subr.bf16.mxu0 0
      %7058 = vmatpush1.bf16.msra.mxu0 %v7038
      %7059 = vmatprep.subr.bf16.mxu0 0
      %7060 = vmatpush1.bf16.msra.mxu0 %v7039
      %7061 = vmatprep.subr.bf16.mxu0 0
      %7062 = vmatpush1.bf16.msra.mxu0 %v7040
      %7063 = vmatprep.subr.bf16.mxu0 0
      %7064 = vmatpush1.bf16.msra.mxu0 %v7041
      %7065 = vmatprep.subr.bf16.mxu0 0
      %7066 = vmatpush1.bf16.msra.mxu0 %v7042
      %7067 = vmatprep.subr.bf16.mxu0 0
      %7068 = vmatpush1.bf16.msra.mxu0 0
      %7069 = vmatprep.subr.bf16.mxu0 0
      %7070 = vmatpush1.bf16.msra.mxu0 0
      %7071 = vmatprep.subr.bf16.mxu0 0
      %7072 = vmatpush1.bf16.msra.mxu0 0
      %7073 = vmatprep.subr.bf16.mxu0 0
      %7074 = vmatpush1.bf16.msra.mxu0 0
      %7075 = vmatprep.subr.bf16.mxu0 0
      %7076 = vmatpush1.bf16.msra.mxu0 0
      %7077 = vmatprep.subr.bf16.mxu0 0
      %7078 = vmatpush1.bf16.msra.mxu0 0
      %7079 = vmatprep.subr.bf16.mxu0 0
      %7080 = vmatpush1.bf16.msra.mxu0 0
      %7081 = vmatprep.subr.bf16.mxu0 0
      %7082 = vmatpush1.bf16.msra.mxu0 0
      %7083 = vmatprep.mubr.bf16.mxu0 0
      %7084 = vmatmul.mubr.bf16.gmra.mrb[0].mxu0 %v6985
      %v7085 = vpop.f32.mrb[0].mxu0
      %v7086 = vadd.f32 0.0, %v7085
      %v7087 = vpop.f32.mrb[0].mxu0
      %v7088 = vpop.f32.mrb[0].mxu0
      %v7089 = vpop.f32.mrb[0].mxu0
      %7090 = vdwg.mxu0
      %v7091 = vadd.f32 %v6980, %v7086
      %v7092 = vpack.c.bf16 %v6771, %v6771
      %s7093 = scalar_lea.vmem %s10, 192
      %v7094 = vld [vmem:[%s7093] sm:$0xf]
      %v7095 = vld [vmem:[%s7093 + $0x4] sm:$0xf]
      %v7096 = vld [vmem:[%s7093 + $0x8] sm:$0xf]
      %v7097 = vld [vmem:[%s7093 + $0xc] sm:$0xf]
      %v7098 = vld [vmem:[%s7093 + $0x10] sm:$0xf]
      %v7099 = vld [vmem:[%s7093 + $0x14] sm:$0xf]
      %v7100 = vld [vmem:[%s7093 + $0x18] sm:$0xf]
      %v7101 = vld [vmem:[%s7093 + $0x1c] sm:$0xf]
      %v7102 = vld [vmem:[%s7093 + $0x20] sm:$0xf]
      %v7103 = vld [vmem:[%s7093 + $0x24] sm:$0xf]
      %v7104 = vld [vmem:[%s7093 + $0x28] sm:$0xf]
      %v7105 = vld [vmem:[%s7093 + $0x2c] sm:$0xf]
      %v7106 = vld [vmem:[%s7093 + $0x30] sm:$0xf]
      %v7107 = vld [vmem:[%s7093 + $0x34] sm:$0xf]
      %v7108 = vld [vmem:[%s7093 + $0x38] sm:$0xf]
      %v7109 = vld [vmem:[%s7093 + $0x3c] sm:$0xf]
      %v7126 = vunpack.c.l.b16 %v7094
      %v7127 = vunpack.c.l.b16 %v7095
      %v7128 = vunpack.c.l.b16 %v7096
      %v7129 = vunpack.c.l.b16 %v7097
      %v7130 = vunpack.c.l.b16 %v7098
      %v7131 = vunpack.c.l.b16 %v7099
      %v7132 = vunpack.c.l.b16 %v7100
      %v7133 = vunpack.c.l.b16 %v7101
      %v7134 = vunpack.c.l.b16 %v7102
      %v7135 = vunpack.c.l.b16 %v7103
      %v7136 = vunpack.c.l.b16 %v7104
      %v7137 = vunpack.c.l.b16 %v7105
      %v7138 = vunpack.c.l.b16 %v7106
      %v7139 = vunpack.c.l.b16 %v7107
      %v7140 = vunpack.c.l.b16 %v7108
      %v7141 = vunpack.c.l.b16 %v7109
      %v7142 = vpack.c.b16 %v7127, %v7126
      %v7143 = vpack.c.b16 %v7129, %v7128
      %v7144 = vpack.c.b16 %v7131, %v7130
      %v7145 = vpack.c.b16 %v7133, %v7132
      %v7146 = vpack.c.b16 %v7135, %v7134
      %v7147 = vpack.c.b16 %v7137, %v7136
      %v7148 = vpack.c.b16 %v7139, %v7138
      %v7149 = vpack.c.b16 %v7141, %v7140
      %7158 = vmatprep.subr.bf16.mxu0 0
      %7159 = vmatpush1.bf16.msra.mxu0 %v7142
      %7160 = vmatprep.subr.bf16.mxu0 0
      %7161 = vmatpush1.bf16.msra.mxu0 %v7143
      %7162 = vmatprep.subr.bf16.mxu0 0
      %7163 = vmatpush1.bf16.msra.mxu0 %v7144
      %7164 = vmatprep.subr.bf16.mxu0 0
      %7165 = vmatpush1.bf16.msra.mxu0 %v7145
      %7166 = vmatprep.subr.bf16.mxu0 0
      %7167 = vmatpush1.bf16.msra.mxu0 %v7146
      %7168 = vmatprep.subr.bf16.mxu0 0
      %7169 = vmatpush1.bf16.msra.mxu0 %v7147
      %7170 = vmatprep.subr.bf16.mxu0 0
      %7171 = vmatpush1.bf16.msra.mxu0 %v7148
      %7172 = vmatprep.subr.bf16.mxu0 0
      %7173 = vmatpush1.bf16.msra.mxu0 %v7149
      %7174 = vmatprep.subr.bf16.mxu0 0
      %7175 = vmatpush1.bf16.msra.mxu0 0
      %7176 = vmatprep.subr.bf16.mxu0 0
      %7177 = vmatpush1.bf16.msra.mxu0 0
      %7178 = vmatprep.subr.bf16.mxu0 0
      %7179 = vmatpush1.bf16.msra.mxu0 0
      %7180 = vmatprep.subr.bf16.mxu0 0
      %7181 = vmatpush1.bf16.msra.mxu0 0
      %7182 = vmatprep.subr.bf16.mxu0 0
      %7183 = vmatpush1.bf16.msra.mxu0 0
      %7184 = vmatprep.subr.bf16.mxu0 0
      %7185 = vmatpush1.bf16.msra.mxu0 0
      %7186 = vmatprep.subr.bf16.mxu0 0
      %7187 = vmatpush1.bf16.msra.mxu0 0
      %7188 = vmatprep.subr.bf16.mxu0 0
      %7189 = vmatpush1.bf16.msra.mxu0 0
      %7190 = vmatprep.mubr.bf16.mxu0 0
      %7191 = vmatmul.mubr.bf16.gmra.mrb[0].mxu0 %v7092
      %v7192 = vpop.f32.mrb[0].mxu0
      %v7193 = vadd.f32 0.0, %v7192
      %v7194 = vpop.f32.mrb[0].mxu0
      %v7195 = vpop.f32.mrb[0].mxu0
      %v7196 = vpop.f32.mrb[0].mxu0
      %7197 = vdwg.mxu0
      %v7198 = vadd.f32 %v7091, %v7193
      %v7199 = vld [vmem:[%s11] sm:$0x1]
      %v7201 = vlaneseq
      %v7202 = vshrl.u32 %v7201, 7
      %v7203 = vsub.s32 0, %v7202
      %v7204 = vrot.slane %v7199, %v7203
      %v7206 = vadd.f32 %v7198, %v7204
      %v7207 = vmax.f32 %v7206, 0.0
      %vm7208 = vcmask 519168
      %7209 = vst.msk [vmem:[%s411] sm:$0xf] %vm7208, %v7207
      %p7210 = scmp.lt.s32.totalorder %s23, 1
      %s7211 = scalar_select %p7210, %s23, 1
      %s7212 = smul.addr %s7211, 4
      %s7213 = scalar_lea.vmem %s12, %s7212
      // Predicated region
      $region69: #{overall_forward.2} parent=67 // pred_check
        %p7214 = pneg %p298
      $region70: #{overall_forward.2} parent=67 // pred_check_branch
        %7216 = sbr.rel (%p7214) target = $region72
      $region71: #{overall_forward.2} parent=67 // pred_region
        _
      $region72: #{overall_forward.2} parent=67 // pred_fallthru
        _
    $region68: #{overall_forward.2} parent=5 // pred_fallthru
      _
    %p7217 = scmp.le.s32.totalorder 2, %s18
    // Predicated region
    $region73: #{overall_forward.2} parent=5 // pred_check
      %p7218 = pneg %p7217
    $region74: #{overall_forward.2} parent=5 // pred_check_branch
      %7220 = sbr.rel (%p7218) target = $region76
    $region75: #{overall_forward.2} parent=5 // pred_region
      %s7221 = ssub.s32 %s18, 2
      // Predicated region
      $region77: #{overall_forward.2} parent=75 // pred_check
        %p7222 = pneg %p304
      $region78: #{overall_forward.2} parent=75 // pred_check_branch
        %7224 = sbr.rel (%p7222) target = $region80
      $region79: #{overall_forward.2} parent=75 // pred_region
        %p7225 = scmp.lt.s32.totalorder %s24, 1
        %s7226 = scalar_select %p7225, %s24, 1
        %s7227 = smul.addr %s7226, 4
        %s7228 = scalar_lea.vmem %s12, %s7227
      $region80: #{overall_forward.2} parent=75 // pred_fallthru
        _
    $region76: #{overall_forward.2} parent=5 // pred_fallthru
      _
  $region6: #{overall_forward.2} parent=0 // loop_footer
    %s22 = sadd.s32 1, %s18
  $region7: #{overall_forward.2} parent=0 // loop_footer_branch
    %17 = sbr.rel target = $region3
  $region8: #{overall_forward.2} parent=0 // loop_exit
    _

</llo_original>
